<compile_context>
chip_gen: v7x
topology: tpu7x:2x2x1
jax: 0.10.0
libtpu: 0.0.40
codegen_flags: <defaults>
</compile_context>

<pallas_src>
import numpy as np
import jax
import jax.numpy as jnp
from jax.experimental import pallas as pl
from jax.experimental.pallas import tpu as pltpu

EPS = 1e-5


# ----------------------------------------------------------------------------- kernel
def _attention_net_kernel(
    x_ref,                                   # (1, B*T, L)   x[b*T+t, l] = X[b, l, t]
    e_ref, tt_ref, ft_ref, ti_ref,           # (B,2D) (B,D) (B,D) (B,4)
    et_ref, tvt_ref, fvt_ref,                # (2D,L) (D,T) (D,L)
    repb_ref, aggt_ref,                      # (BT,B) (B,BT)   t-replicate / t-sum
    selp_ref, selpt_ref,                     # (LP,P) (P,LP)   lane%P selectors
    sell_ref, sellt_ref,                     # (LP,L) (L,LP)   lane//P selectors
    tmask_ref,                               # (BT,T)          [r, t] = (t == r % T)
    ws1_ref, wt1_ref, we1_ref,               # (1,2D,2D)
    wt3_ref, we3_ref,                        # (1,D,D)
    vsk_ref, vtk_ref,                        # (1,LP,LP) = kron(I_L, V.T)
    spa_ref, tem_ref, ext_ref,               # (1,3,LP) (1,4,LP) (1,4,LP) lane-mapped W,b
    fus_ref,                                 # (1,1,4)  [fw0, fw1, fw2, fb]
    w1h_ref, w1r_ref, w3h_ref,               # (1,LP,P) (1,5,P) (1,P,1)
    h_ref, part_ref,                         # (1,B,LP) (1,B,1)
):
    def mm(a, b):
        return jnp.dot(a, b, preferred_element_type=jnp.float32)

    x_btl = x_ref[0]                                     # (BT, L)
    BT, L = x_btl.shape
    e = e_ref[...]
    B = e.shape[0]
    T = BT // B
    ti = ti_ref[...]
    ET, TvT, FvT = et_ref[...], tvt_ref[...], fvt_ref[...]
    RepB, AggT = repb_ref[...], aggt_ref[...]
    SelP, SelPT = selp_ref[...], selpt_ref[...]
    SelL, SelLT = sell_ref[...], sellt_ref[...]
    LP = SelLT.shape[1]
    P = LP // L

    # ---- target / road-vector correlations (tiny MXU matmuls) --------------------
    spat = mm(mm(e, ws1_ref[0]), ET)                     # (B, L)
    tsp = mm(mm(e, wt1_ref[0]), ET)                      # (B, L)
    esp = mm(mm(e, we1_ref[0]), ET)                      # (B, L)
    ecor = mm(mm(ft_ref[...], we3_ref[0]), FvT)          # (B, L)
    tcor = mm(mm(tt_ref[...], wt3_ref[0]), TvT)          # (B, T)  (MXU, no (T,B,D) bcast)

    # lane / row expansions done on the MXU (no materialized VPU broadcasts)
    x_lane = mm(x_btl, SelLT)                            # (BT, LP): X[b,l,t] bcast over p
    tcor_col = jnp.sum(mm(RepB, tcor) * tmask_ref[...],
                       axis=1, keepdims=True)            # (BT, 1):  tcor[b, t] per row

    # shared per-road sums of the raw signal (used by every branch's BN)
    sx = jnp.sum(x_btl, axis=0, keepdims=True)           # (1, L)
    qx = jnp.sum(x_btl * x_btl, axis=0, keepdims=True)   # (1, L)

    def bn_lanes(sum_l, sqsum_l, count):
        # training-mode BatchNorm2d(L) stats from analytic sums, mapped to lanes
        mean = sum_l * (1.0 / count)
        var = sqsum_l * (1.0 / count) - mean * mean
        inv = jax.lax.rsqrt(var + EPS)
        return mm(mean, SelLT), mm(inv, SelLT)           # (1, LP) each

    def softmax_roads(score):
        # softmax over the L roads for every (b, t, p): lane-segmented via selectors
        score = score - jnp.max(jnp.max(score, axis=1, keepdims=True),
                                axis=0, keepdims=True)
        ex = jnp.exp(score)
        den = mm(ex, SelP)                               # (BT, P)
        rec = pl.reciprocal(den, approx=True)            # EUP
        rec = rec * (2.0 - den * rec)                    # 1 Newton step on the tiny array
        return ex * mm(rec, SelPT)

    def softmax_time(score):
        # softmax over T for every (b, l, p): row-segmented inside each batch block
        score = score - jnp.max(jnp.max(score, axis=1, keepdims=True),
                                axis=0, keepdims=True)
        ex = jnp.exp(score)
        den = mm(AggT, ex)                               # (B, LP)
        rec = pl.reciprocal(den, approx=True)
        rec = rec * (2.0 - den * rec)
        return ex * mm(RepB, rec)

    # ---- spatial attention (channels: [spatial_corr, x]) -------------------------
    spa = spa_ref[0]
    w0, w1, bias = spa[0:1], spa[1:2], spa[2:3]
    mean_l, inv_l = bn_lanes(T * jnp.sum(spat, axis=0, keepdims=True) + sx,
                             T * jnp.sum(spat * spat, axis=0, keepdims=True) + qx,
                             2 * B * T)
    pre = inv_l * (mm(RepB, mm(spat, SelLT) * w0) + w1 * x_lane) \
        + (bias - inv_l * mean_l * (w0 + w1))
    sm_s = softmax_roads(mm(jnp.tanh(pre), vsk_ref[0]))

    # ---- temporal attention (channels: [temporal_s, temporal_corr, x]) -----------
    tem = tem_ref[0]
    w0, w1, w2, bias = tem[0:1], tem[1:2], tem[2:3], tem[3:4]
    s_tc = jnp.sum(jnp.sum(tcor, axis=1, keepdims=True), axis=0, keepdims=True)
    q_tc = jnp.sum(jnp.sum(tcor * tcor, axis=1, keepdims=True), axis=0, keepdims=True)
    mean_l, inv_l = bn_lanes(T * jnp.sum(tsp, axis=0, keepdims=True) + s_tc + sx,
                             T * jnp.sum(tsp * tsp, axis=0, keepdims=True) + q_tc + qx,
                             3 * B * T)
    pre = inv_l * (mm(RepB, mm(tsp, SelLT) * w0) + w1 * tcor_col + w2 * x_lane) \
        + (bias - inv_l * mean_l * (w0 + w1 + w2))
    sm_t = softmax_time(mm(jnp.tanh(pre), vtk_ref[0]))

    # ---- external attention (channels: [external_s, external_corr, x]) -----------
    ext = ext_ref[0]
    w0, w1, w2, bias = ext[0:1], ext[1:2], ext[2:3], ext[3:4]
    mean_l, inv_l = bn_lanes(T * jnp.sum(esp + ecor, axis=0, keepdims=True) + sx,
                             T * jnp.sum(esp * esp + ecor * ecor, axis=0, keepdims=True) + qx,
                             3 * B * T)
    pre = inv_l * (mm(RepB, mm(esp, SelLT) * w0 + mm(ecor, SelLT) * w1) + w2 * x_lane) \
        + (bias - inv_l * mean_l * (w0 + w1 + w2))
    # NOTE: the original torch module scores the external branch with Vt (not Ve).
    sm_e = softmax_roads(mm(jnp.tanh(pre), vtk_ref[0]))

    # ---- attention summaries + fusion (BatchNorm2d(L) + Linear(3,1) + ReLU) ------
    hs = mm(AggT, sm_s * x_lane)                         # (B, LP)  Sum_t sm * x
    ht = mm(AggT, sm_t * x_lane)
    he = mm(AggT, sm_e * x_lane)

    fus = fus_ref[0]                                     # (1, 4)
    f0, f1, f2, fb = fus[:, 0:1], fus[:, 1:2], fus[:, 2:3], fus[:, 3:4]
    cnt = 3 * B * P
    mean_f = mm(jnp.sum(hs + ht + he, axis=0, keepdims=True), SelL) * (1.0 / cnt)
    var_f = mm(jnp.sum(hs * hs + ht * ht + he * he, axis=0, keepdims=True),
               SelL) * (1.0 / cnt) - mean_f * mean_f
    inv_f = jax.lax.rsqrt(var_f + EPS)
    mean_fl, inv_fl = mm(mean_f, SelLT), mm(inv_f, SelLT)
    h_l = jnp.maximum(inv_fl * (f0 * hs + f1 * ht + f2 * he)
                      + (fb - inv_fl * mean_fl * (f0 + f1 + f2)), 0.0)   # (B, LP)
    h_ref[0] = h_l                                       # lane-dense (B, L*P) output

    # ---- fc1_i (BN1d + Linear + ReLU) and this layer's half of fc2_1 --------------
    def bn_cols(z):                                      # per-feature BN over the batch
        mu = jnp.sum(z, axis=0, keepdims=True) * (1.0 / z.shape[0])
        d = z - mu
        var = jnp.sum(d * d, axis=0, keepdims=True) * (1.0 / z.shape[0])
        return d * jax.lax.rsqrt(var + EPS)

    # BN1d(cat(h, time)) is per-feature, so the two column groups normalize
    # independently and the Linear splits accordingly (no lane concat needed).
    w1r = w1r_ref[0]                                     # (5, P): W1[:, LP:].T rows + b1
    x_i = jnp.maximum(mm(bn_cols(h_l), w1h_ref[0]) + mm(bn_cols(ti), w1r[0:4]) + w1r[4:5],
                      0.0)                               # (B, P)
    # BN1d(cat(x1, x2)) is also per-feature -> each half contributes independently.
    part_ref[0] = mm(bn_cols(x_i), w3h_ref[0])           # (B, 1)


# ----------------------------------------------------------------------------- params
def init_params(key, L, T, K, P, D):
    ks = iter(jax.random.split(key, 48))

    def rand(shape):
        return jax.random.uniform(next(ks), shape, jnp.float32)

    def randn(shape):
        return jax.random.normal(next(ks), shape, jnp.float32)

    def linear(out_f, in_f):
        bound = 1.0 / np.sqrt(in_f)
        W = jax.random.uniform(next(ks), (out_f, in_f), jnp.float32, -bound, bound)
        b = jax.random.uniform(next(ks), (out_f,), jnp.float32, -bound, bound)
        return W, b

    def layer(wt3_normal):
        p = dict(Ws1=rand((2 * D, 2 * D)), Wt1=rand((2 * D, 2 * D)),
                 Wt3=randn((D, D)) if wt3_normal else rand((D, D)),
                 We1=rand((2 * D, 2 * D)), We3=rand((D, D)),
                 Vs=rand((P, P)), Vt=rand((P, P)),
                 Ve=rand((P, P)))    # defined by the module but unused in forward
        p['sW'], p['sb'] = linear(P, 2)
        p['tW'], p['tb'] = linear(P, 3)
        p['eW'], p['eb'] = linear(P, 3)
        p['fW'], p['fb'] = linear(1, 3)
        return p

    p1 = layer(True)      # Wt3_1 uses torch.randn in the original __init__
    p2 = layer(False)     # Wt3_2 uses torch.rand
    fc = {}
    fc['W1'], fc['b1'] = linear(P, L * P + 4)
    fc['W2'], fc['b2'] = linear(P, L * P + 4)
    fc['W3'], fc['b3'] = linear(1, P * K)
    return p1, p2, fc


def pack_params(params, L, T, P, B):
    """One-time repack of torch-style parameters into kernel-friendly constants."""
    p1, p2, fc = params
    LP = L * P
    eyeL = jnp.eye(L, dtype=jnp.float32)

    def lane(v):                                 # (P,) -> (LP,), value[l*P + p] = v[p]
        return jnp.tile(v, L)

    def branch(W, b):                            # Linear(C, P) -> (C+1, LP) lane-mapped
        return jnp.stack([lane(W[:, c]) for c in range(W.shape[1])] + [lane(b)], axis=0)

    def per_layer(fn):
        return jnp.stack([fn(p1), fn(p2)], axis=0)

    packed = {
        'Ws1': per_layer(lambda p: p['Ws1']),
        'Wt1': per_layer(lambda p: p['Wt1']),
        'We1': per_layer(lambda p: p['We1']),
        'Wt3': per_layer(lambda p: p['Wt3']),
        'We3': per_layer(lambda p: p['We3']),
        'VsK': per_layer(lambda p: jnp.kron(eyeL, p['Vs'].T)),      # (2, LP, LP)
        'VtK': per_layer(lambda p: jnp.kron(eyeL, p['Vt'].T)),
        'spa': per_layer(lambda p: branch(p['sW'], p['sb'])),       # (2, 3, LP)
        'tem': per_layer(lambda p: branch(p['tW'], p['tb'])),       # (2, 4, LP)
        'ext': per_layer(lambda p: branch(p['eW'], p['eb'])),       # (2, 4, LP)
        'fus': per_layer(lambda p: jnp.concatenate([p['fW'][0], p['fb']])[None, :]),
        'W1h': jnp.stack([fc['W1'][:, :LP].T, fc['W2'][:, :LP].T]),             # (2,LP,P)
        'W1r': jnp.stack(
            [jnp.concatenate([fc['W1'][:, LP:].T, fc['b1'][None, :]], axis=0),
             jnp.concatenate([fc['W2'][:, LP:].T, fc['b2'][None, :]], axis=0)]),  # (2,5,P)
        'W3h': jnp.stack([fc['W3'][:, :P].T, fc['W3'][:, P:2 * P].T]),           # (2,P,1)
        'b3': fc['b3'],
        # fixed broadcast / segmented-reduce selector matrices (MXU operands)
        'RepB': jnp.kron(jnp.eye(B, dtype=jnp.float32), jnp.ones((T, 1), jnp.float32)),
        'SelP': jnp.tile(jnp.eye(P, dtype=jnp.float32), (L, 1)),
        'SelL': jnp.kron(jnp.eye(L, dtype=jnp.float32), jnp.ones((P, 1), jnp.float32)),
        'TMask': jnp.tile(jnp.eye(T, dtype=jnp.float32), (B, 1)),
    }
    packed['AggT'] = packed['RepB'].T
    packed['SelPT'] = packed['SelP'].T
    packed['SelLT'] = packed['SelL'].T
    return packed


# ----------------------------------------------------------------------------- wrapper
def attention_net_forward(packed, X1, X2, e_t, t_t, f_t, E, Tv, Fv, time_info):
    B, L, T = X1.shape
    LP = packed['SelLT'].shape[1]
    BT = B * T

    # single lane-dense relayout of the raw series: x[i, b*T + t, l] = X_i[b, l, t]
    x_btl = jnp.transpose(jnp.stack([X1, X2]), (0, 1, 3, 2)).reshape(2, BT, L)

    def shared(a):
        nd = a.ndim
        return (a, pl.BlockSpec(a.shape, lambda i: (0,) * nd))

    def layered(a):
        nd = a.ndim
        return (a, pl.BlockSpec((1,) + a.shape[1:], lambda i: (i,) + (0,) * (nd - 1)))

    items = [
        layered(x_btl),
        shared(e_t), shared(t_t), shared(f_t), shared(time_info),
        shared(E.T), shared(Tv.T), shared(Fv.T),
        shared(packed['RepB']), shared(packed['AggT']),
        shared(packed['SelP']), shared(packed['SelPT']),
        shared(packed['SelL']), shared(packed['SelLT']),
        shared(packed['TMask']),
        layered(packed['Ws1']), layered(packed['Wt1']), layered(packed['We1']),
        layered(packed['Wt3']), layered(packed['We3']),
        layered(packed['VsK']), layered(packed['VtK']),
        layered(packed['spa']), layered(packed['tem']), layered(packed['ext']),
        layered(packed['fus']),
        layered(packed['W1h']), layered(packed['W1r']), layered(packed['W3h']),
    ]
    arrays = [a for a, _ in items]
    specs = [s for _, s in items]

    h, part = pl.pallas_call(
        _attention_net_kernel,
        grid=(2,),
        in_specs=specs,
        out_specs=(pl.BlockSpec((1, B, LP), lambda i: (i, 0, 0)),
                   pl.BlockSpec((1, B, 1), lambda i: (i, 0, 0))),
        out_shape=(jax.ShapeDtypeStruct((2, B, LP), jnp.float32),
                   jax.ShapeDtypeStruct((2, B, 1), jnp.float32)),
        compiler_params=pltpu.CompilerParams(dimension_semantics=("parallel",)),
    )(*arrays)

    # fc2_1 epilogue: the two halves may have run on different cores, so the final
    # (B,1) add + bias + ReLU stays in XLA (a single tiny fused op).
    out = jnp.maximum(part[0] + part[1] + packed['b3'][None, :], 0.0)
    return out, h[0], h[1]


# ----------------------------------------------------------------------------- reference
def reference_forward(params, X1, X2, e, t, f, E, Tv, Fv, time_info):
    """Pure-JAX (XLA) mirror of the PyTorch module (training-mode BatchNorm)."""
    p1, p2, fc = params
    B, L, T = X1.shape

    def bn(x, axes):
        mean = jnp.mean(x, axis=axes, keepdims=True)
        var = jnp.mean((x - mean) ** 2, axis=axes, keepdims=True)
        return (x - mean) / jnp.sqrt(var + EPS)

    def layer(X, p):
        data = X[..., None]                                          # (B, L, T, 1)
        spat = (e @ p['Ws1']) @ E.T
        spat_e = jnp.broadcast_to(spat[:, :, None, None], (B, L, T, 1))
        sp = jnp.tanh(bn(jnp.concatenate([spat_e, data], 3), (0, 2, 3)) @ p['sW'].T + p['sb'])
        sm_s = jax.nn.softmax(jnp.einsum('pq,bltq->bltp', p['Vs'], sp), axis=1)

        tsp = (e @ p['Wt1']) @ E.T
        tsp_e = jnp.broadcast_to(tsp[:, :, None, None], (B, L, T, 1))
        tcor = (t @ p['Wt3']) @ Tv.T
        tcor_e = jnp.broadcast_to(tcor[:, None, :, None], (B, L, T, 1))
        tm = jnp.tanh(bn(jnp.concatenate([tsp_e, tcor_e, data], 3), (0, 2, 3)) @ p['tW'].T + p['tb'])
        sm_t = jax.nn.softmax(jnp.einsum('pq,bltq->bltp', p['Vt'], tm), axis=2)

        esp = (e @ p['We1']) @ E.T
        esp_e = jnp.broadcast_to(esp[:, :, None, None], (B, L, T, 1))
        ecor = (f @ p['We3']) @ Fv.T
        ecor_e = jnp.broadcast_to(ecor[:, :, None, None], (B, L, T, 1))
        ex = jnp.tanh(bn(jnp.concatenate([esp_e, ecor_e, data], 3), (0, 2, 3)) @ p['eW'].T + p['eb'])
        sm_e = jax.nn.softmax(jnp.einsum('pq,bltq->bltp', p['Vt'], ex), axis=1)   # Vt, as in torch

        hs = jnp.sum(sm_s * data, axis=2)[..., None]
        ht = jnp.sum(sm_t * data, axis=2)[..., None]
        he = jnp.sum(sm_e * data, axis=2)[..., None]
        fin = jnp.concatenate([hs, ht, he], axis=3)                  # (B, L, P, 3)
        return jax.nn.relu(bn(fin, (0, 2, 3)) @ p['fW'].T + p['fb'])[..., 0]

    h1 = layer(X1, p1)
    h2 = layer(X2, p2)
    z1 = jnp.concatenate([h1.reshape(B, -1), time_info], axis=1)
    z2 = jnp.concatenate([h2.reshape(B, -1), time_info], axis=1)
    x1 = jax.nn.relu(bn(z1, (0,)) @ fc['W1'].T + fc['b1'])
    x2 = jax.nn.relu(bn(z2, (0,)) @ fc['W2'].T + fc['b2'])
    xc = jnp.concatenate([x1, x2], axis=1)
    out = jax.nn.relu(bn(xc, (0,)) @ fc['W3'].T + fc['b3'])
    return h1, h2, out


# ----------------------------------------------------------------------------- main
if __name__ == "__main__":
    # M_size must equal L; K must be 2 so x_c.view(-1, P*K) keeps the batch dim.
    # Shapes chosen so the kernel slabs are exactly (B*T, L*P) = (128, 128).
    L, T, K, P, D = 16, 8, 2, 8, 16
    M_size = L
    B = 16
    assert K == 2

    key = jax.random.PRNGKey(0)
    kp, kd = jax.random.split(key)
    params = init_params(kp, L, T, K, P, D)
    packed = pack_params(params, L=L, T=T, P=P, B=B)

    ks = jax.random.split(kd, 9)
    X1 = jax.random.normal(ks[0], (B, L, T), jnp.float32)
    X2 = jax.random.normal(ks[1], (B, L, T), jnp.float32)
    e_target = jax.random.normal(ks[2], (B, 2 * D), jnp.float32)     # torch: (B, 1, 2D)
    t_target = jax.random.normal(ks[3], (B, D), jnp.float32)         # torch: (B, 1, D)
    f_target = jax.random.normal(ks[4], (B, D), jnp.float32)         # torch: (B, 1, D)
    E_vecs = jax.random.normal(ks[5], (L, 2 * D), jnp.float32)
    T_vecs = jax.random.normal(ks[6], (T, D), jnp.float32)           # torch: (1, T, D)
    F_vecs = jax.random.normal(ks[7], (L, D), jnp.float32)
    time_info = jax.random.normal(ks[8], (B, 4), jnp.float32)

    fwd = jax.jit(attention_net_forward)
    out, h1, h2 = fwd(packed, X1, X2, e_target, t_target, f_target,
                      E_vecs, T_vecs, F_vecs, time_info)
    out = jax.block_until_ready(out)

    h1_r, h2_r, out_r = reference_forward(params, X1, X2, e_target, t_target, f_target,
                                          E_vecs, T_vecs, F_vecs, time_info)
    np.testing.assert_allclose(np.asarray(h1), np.asarray(h1_r).reshape(B, -1),
                               rtol=2e-4, atol=2e-4)
    np.testing.assert_allclose(np.asarray(h2), np.asarray(h2_r).reshape(B, -1),
                               rtol=2e-4, atol=2e-4)
    # the fc head normalizes by per-feature batch std twice, which amplifies
    # ulp-level transcendental / accumulation-order differences slightly
    np.testing.assert_allclose(np.asarray(out), np.asarray(out_r),
                               rtol=2e-3, atol=2e-3)
    assert out.shape == (B, 1)

    print("KERNEL_OK")
</pallas_src>

<mosaic_0001>
module attributes {stable_mosaic.version = 11 : i64} {
  func.func @_attention_net_kernel(%arg0: i32, %arg1: memref<1x128x16xf32, #tpu.memory_space<vmem>>, %arg2: memref<16x32xf32, #tpu.memory_space<vmem>>, %arg3: memref<16x16xf32, #tpu.memory_space<vmem>>, %arg4: memref<16x16xf32, #tpu.memory_space<vmem>>, %arg5: memref<16x4xf32, #tpu.memory_space<vmem>>, %arg6: memref<32x16xf32, #tpu.memory_space<vmem>>, %arg7: memref<16x8xf32, #tpu.memory_space<vmem>>, %arg8: memref<16x16xf32, #tpu.memory_space<vmem>>, %arg9: memref<128x16xf32, #tpu.memory_space<vmem>>, %arg10: memref<16x128xf32, #tpu.memory_space<vmem>>, %arg11: memref<128x8xf32, #tpu.memory_space<vmem>>, %arg12: memref<8x128xf32, #tpu.memory_space<vmem>>, %arg13: memref<128x16xf32, #tpu.memory_space<vmem>>, %arg14: memref<16x128xf32, #tpu.memory_space<vmem>>, %arg15: memref<128x8xf32, #tpu.memory_space<vmem>>, %arg16: memref<1x32x32xf32, #tpu.memory_space<vmem>>, %arg17: memref<1x32x32xf32, #tpu.memory_space<vmem>>, %arg18: memref<1x32x32xf32, #tpu.memory_space<vmem>>, %arg19: memref<1x16x16xf32, #tpu.memory_space<vmem>>, %arg20: memref<1x16x16xf32, #tpu.memory_space<vmem>>, %arg21: memref<1x128x128xf32, #tpu.memory_space<vmem>>, %arg22: memref<1x128x128xf32, #tpu.memory_space<vmem>>, %arg23: memref<1x3x128xf32, #tpu.memory_space<vmem>>, %arg24: memref<1x4x128xf32, #tpu.memory_space<vmem>>, %arg25: memref<1x4x128xf32, #tpu.memory_space<vmem>>, %arg26: memref<1x1x4xf32, #tpu.memory_space<vmem>>, %arg27: memref<1x128x8xf32, #tpu.memory_space<vmem>>, %arg28: memref<1x5x8xf32, #tpu.memory_space<vmem>>, %arg29: memref<1x8x1xf32, #tpu.memory_space<vmem>>, %arg30: memref<1x16x128xf32, #tpu.memory_space<vmem>>, %arg31: memref<1x16x1xf32, #tpu.memory_space<vmem>>) attributes {dimension_semantics = [#tpu.dimension_semantics<parallel>], iteration_bounds = array<i64: 2>, scalar_prefetch = 0 : i64, scratch_operands = 0 : i64, tpu.core_type = #tpu.core_type<tc>, window_params = [{transform_indices = @transform_0, window_bounds = array<i64: 1, 128, 16>}, {pipeline_mode = #tpu.pipeline_mode<synchronous>, transform_indices = @transform_1, window_bounds = array<i64: 16, 32>}, {pipeline_mode = #tpu.pipeline_mode<synchronous>, transform_indices = @transform_2, window_bounds = array<i64: 16, 16>}, {pipeline_mode = #tpu.pipeline_mode<synchronous>, transform_indices = @transform_3, window_bounds = array<i64: 16, 16>}, {pipeline_mode = #tpu.pipeline_mode<synchronous>, transform_indices = @transform_4, window_bounds = array<i64: 16, 4>}, {pipeline_mode = #tpu.pipeline_mode<synchronous>, transform_indices = @transform_5, window_bounds = array<i64: 32, 16>}, {pipeline_mode = #tpu.pipeline_mode<synchronous>, transform_indices = @transform_6, window_bounds = array<i64: 16, 8>}, {pipeline_mode = #tpu.pipeline_mode<synchronous>, transform_indices = @transform_7, window_bounds = array<i64: 16, 16>}, {pipeline_mode = #tpu.pipeline_mode<synchronous>, transform_indices = @transform_8, window_bounds = array<i64: 128, 16>}, {pipeline_mode = #tpu.pipeline_mode<synchronous>, transform_indices = @transform_9, window_bounds = array<i64: 16, 128>}, {pipeline_mode = #tpu.pipeline_mode<synchronous>, transform_indices = @transform_10, window_bounds = array<i64: 128, 8>}, {pipeline_mode = #tpu.pipeline_mode<synchronous>, transform_indices = @transform_11, window_bounds = array<i64: 8, 128>}, {pipeline_mode = #tpu.pipeline_mode<synchronous>, transform_indices = @transform_12, window_bounds = array<i64: 128, 16>}, {pipeline_mode = #tpu.pipeline_mode<synchronous>, transform_indices = @transform_13, window_bounds = array<i64: 16, 128>}, {pipeline_mode = #tpu.pipeline_mode<synchronous>, transform_indices = @transform_14, window_bounds = array<i64: 128, 8>}, {transform_indices = @transform_15, window_bounds = array<i64: 1, 32, 32>}, {transform_indices = @transform_16, window_bounds = array<i64: 1, 32, 32>}, {transform_indices = @transform_17, window_bounds = array<i64: 1, 32, 32>}, {transform_indices = @transform_18, window_bounds = array<i64: 1, 16, 16>}, {transform_indices = @transform_19, window_bounds = array<i64: 1, 16, 16>}, {transform_indices = @transform_20, window_bounds = array<i64: 1, 128, 128>}, {transform_indices = @transform_21, window_bounds = array<i64: 1, 128, 128>}, {transform_indices = @transform_22, window_bounds = array<i64: 1, 3, 128>}, {transform_indices = @transform_23, window_bounds = array<i64: 1, 4, 128>}, {transform_indices = @transform_24, window_bounds = array<i64: 1, 4, 128>}, {transform_indices = @transform_25, window_bounds = array<i64: 1, 1, 4>}, {transform_indices = @transform_26, window_bounds = array<i64: 1, 128, 8>}, {transform_indices = @transform_27, window_bounds = array<i64: 1, 5, 8>}, {transform_indices = @transform_28, window_bounds = array<i64: 1, 8, 1>}, {transform_indices = @transform_29, window_bounds = array<i64: 1, 16, 128>}, {transform_indices = @transform_30, window_bounds = array<i64: 1, 16, 1>}]} {
    %c0 = arith.constant 0 : index
    %c0_0 = arith.constant 0 : index
    %c0_1 = arith.constant 0 : index
    %0 = vector.load %arg1[%c0, %c0_0, %c0_1] : memref<1x128x16xf32, #tpu.memory_space<vmem>>, vector<1x128x16xf32>
    %1 = vector.shape_cast %0 : vector<1x128x16xf32> to vector<128x16xf32>
    %c0_2 = arith.constant 0 : index
    %c0_3 = arith.constant 0 : index
    %2 = vector.load %arg2[%c0_2, %c0_3] : memref<16x32xf32, #tpu.memory_space<vmem>>, vector<16x32xf32>
    %c0_4 = arith.constant 0 : index
    %c0_5 = arith.constant 0 : index
    %3 = vector.load %arg5[%c0_4, %c0_5] : memref<16x4xf32, #tpu.memory_space<vmem>>, vector<16x4xf32>
    %c0_6 = arith.constant 0 : index
    %c0_7 = arith.constant 0 : index
    %4 = vector.load %arg6[%c0_6, %c0_7] : memref<32x16xf32, #tpu.memory_space<vmem>>, vector<32x16xf32>
    %c0_8 = arith.constant 0 : index
    %c0_9 = arith.constant 0 : index
    %5 = vector.load %arg7[%c0_8, %c0_9] : memref<16x8xf32, #tpu.memory_space<vmem>>, vector<16x8xf32>
    %c0_10 = arith.constant 0 : index
    %c0_11 = arith.constant 0 : index
    %6 = vector.load %arg8[%c0_10, %c0_11] : memref<16x16xf32, #tpu.memory_space<vmem>>, vector<16x16xf32>
    %c0_12 = arith.constant 0 : index
    %c0_13 = arith.constant 0 : index
    %7 = vector.load %arg9[%c0_12, %c0_13] : memref<128x16xf32, #tpu.memory_space<vmem>>, vector<128x16xf32>
    %c0_14 = arith.constant 0 : index
    %c0_15 = arith.constant 0 : index
    %8 = vector.load %arg10[%c0_14, %c0_15] : memref<16x128xf32, #tpu.memory_space<vmem>>, vector<16x128xf32>
    %c0_16 = arith.constant 0 : index
    %c0_17 = arith.constant 0 : index
    %9 = vector.load %arg11[%c0_16, %c0_17] : memref<128x8xf32, #tpu.memory_space<vmem>>, vector<128x8xf32>
    %c0_18 = arith.constant 0 : index
    %c0_19 = arith.constant 0 : index
    %10 = vector.load %arg12[%c0_18, %c0_19] : memref<8x128xf32, #tpu.memory_space<vmem>>, vector<8x128xf32>
    %c0_20 = arith.constant 0 : index
    %c0_21 = arith.constant 0 : index
    %11 = vector.load %arg13[%c0_20, %c0_21] : memref<128x16xf32, #tpu.memory_space<vmem>>, vector<128x16xf32>
    %c0_22 = arith.constant 0 : index
    %c0_23 = arith.constant 0 : index
    %12 = vector.load %arg14[%c0_22, %c0_23] : memref<16x128xf32, #tpu.memory_space<vmem>>, vector<16x128xf32>
    %c0_24 = arith.constant 0 : index
    %c0_25 = arith.constant 0 : index
    %c0_26 = arith.constant 0 : index
    %13 = vector.load %arg16[%c0_24, %c0_25, %c0_26] : memref<1x32x32xf32, #tpu.memory_space<vmem>>, vector<1x32x32xf32>
    %14 = vector.shape_cast %13 : vector<1x32x32xf32> to vector<32x32xf32>
    %cst = arith.constant dense<0.000000e+00> : vector<16x32xf32>
    %15 = tpu.matmul %2, %14, %cst {dimension_numbers = #tpu.dot_dimension_numbers<[1], [0], [0], [1], [0, 0, 1, 1], [], []>} : vector<16x32xf32>, vector<32x32xf32>, vector<16x32xf32> -> vector<16x32xf32>
    %cst_27 = arith.constant dense<0.000000e+00> : vector<16x16xf32>
    %16 = tpu.matmul %15, %4, %cst_27 {dimension_numbers = #tpu.dot_dimension_numbers<[1], [0], [0], [1], [0, 0, 1, 1], [], []>} : vector<16x32xf32>, vector<32x16xf32>, vector<16x16xf32> -> vector<16x16xf32>
    %c0_28 = arith.constant 0 : index
    %c0_29 = arith.constant 0 : index
    %c0_30 = arith.constant 0 : index
    %17 = vector.load %arg17[%c0_28, %c0_29, %c0_30] : memref<1x32x32xf32, #tpu.memory_space<vmem>>, vector<1x32x32xf32>
    %18 = vector.shape_cast %17 : vector<1x32x32xf32> to vector<32x32xf32>
    %cst_31 = arith.constant dense<0.000000e+00> : vector<16x32xf32>
    %19 = tpu.matmul %2, %18, %cst_31 {dimension_numbers = #tpu.dot_dimension_numbers<[1], [0], [0], [1], [0, 0, 1, 1], [], []>} : vector<16x32xf32>, vector<32x32xf32>, vector<16x32xf32> -> vector<16x32xf32>
    %cst_32 = arith.constant dense<0.000000e+00> : vector<16x16xf32>
    %20 = tpu.matmul %19, %4, %cst_32 {dimension_numbers = #tpu.dot_dimension_numbers<[1], [0], [0], [1], [0, 0, 1, 1], [], []>} : vector<16x32xf32>, vector<32x16xf32>, vector<16x16xf32> -> vector<16x16xf32>
    %c0_33 = arith.constant 0 : index
    %c0_34 = arith.constant 0 : index
    %c0_35 = arith.constant 0 : index
    %21 = vector.load %arg18[%c0_33, %c0_34, %c0_35] : memref<1x32x32xf32, #tpu.memory_space<vmem>>, vector<1x32x32xf32>
    %22 = vector.shape_cast %21 : vector<1x32x32xf32> to vector<32x32xf32>
    %cst_36 = arith.constant dense<0.000000e+00> : vector<16x32xf32>
    %23 = tpu.matmul %2, %22, %cst_36 {dimension_numbers = #tpu.dot_dimension_numbers<[1], [0], [0], [1], [0, 0, 1, 1], [], []>} : vector<16x32xf32>, vector<32x32xf32>, vector<16x32xf32> -> vector<16x32xf32>
    %cst_37 = arith.constant dense<0.000000e+00> : vector<16x16xf32>
    %24 = tpu.matmul %23, %4, %cst_37 {dimension_numbers = #tpu.dot_dimension_numbers<[1], [0], [0], [1], [0, 0, 1, 1], [], []>} : vector<16x32xf32>, vector<32x16xf32>, vector<16x16xf32> -> vector<16x16xf32>
    %c0_38 = arith.constant 0 : index
    %c0_39 = arith.constant 0 : index
    %25 = vector.load %arg4[%c0_38, %c0_39] : memref<16x16xf32, #tpu.memory_space<vmem>>, vector<16x16xf32>
    %c0_40 = arith.constant 0 : index
    %c0_41 = arith.constant 0 : index
    %c0_42 = arith.constant 0 : index
    %26 = vector.load %arg20[%c0_40, %c0_41, %c0_42] : memref<1x16x16xf32, #tpu.memory_space<vmem>>, vector<1x16x16xf32>
    %27 = vector.shape_cast %26 : vector<1x16x16xf32> to vector<16x16xf32>
    %cst_43 = arith.constant dense<0.000000e+00> : vector<16x16xf32>
    %28 = tpu.matmul %25, %27, %cst_43 {dimension_numbers = #tpu.dot_dimension_numbers<[1], [0], [0], [1], [0, 0, 1, 1], [], []>} : vector<16x16xf32>, vector<16x16xf32>, vector<16x16xf32> -> vector<16x16xf32>
    %cst_44 = arith.constant dense<0.000000e+00> : vector<16x16xf32>
    %29 = tpu.matmul %28, %6, %cst_44 {dimension_numbers = #tpu.dot_dimension_numbers<[1], [0], [0], [1], [0, 0, 1, 1], [], []>} : vector<16x16xf32>, vector<16x16xf32>, vector<16x16xf32> -> vector<16x16xf32>
    %c0_45 = arith.constant 0 : index
    %c0_46 = arith.constant 0 : index
    %30 = vector.load %arg3[%c0_45, %c0_46] : memref<16x16xf32, #tpu.memory_space<vmem>>, vector<16x16xf32>
    %c0_47 = arith.constant 0 : index
    %c0_48 = arith.constant 0 : index
    %c0_49 = arith.constant 0 : index
    %31 = vector.load %arg19[%c0_47, %c0_48, %c0_49] : memref<1x16x16xf32, #tpu.memory_space<vmem>>, vector<1x16x16xf32>
    %32 = vector.shape_cast %31 : vector<1x16x16xf32> to vector<16x16xf32>
    %cst_50 = arith.constant dense<0.000000e+00> : vector<16x16xf32>
    %33 = tpu.matmul %30, %32, %cst_50 {dimension_numbers = #tpu.dot_dimension_numbers<[1], [0], [0], [1], [0, 0, 1, 1], [], []>} : vector<16x16xf32>, vector<16x16xf32>, vector<16x16xf32> -> vector<16x16xf32>
    %cst_51 = arith.constant dense<0.000000e+00> : vector<16x8xf32>
    %34 = tpu.matmul %33, %5, %cst_51 {dimension_numbers = #tpu.dot_dimension_numbers<[1], [0], [0], [1], [0, 0, 1, 1], [], []>} : vector<16x16xf32>, vector<16x8xf32>, vector<16x8xf32> -> vector<16x8xf32>
    %cst_52 = arith.constant dense<0.000000e+00> : vector<128x128xf32>
    %35 = tpu.matmul %1, %12, %cst_52 {dimension_numbers = #tpu.dot_dimension_numbers<[1], [0], [0], [1], [0, 0, 1, 1], [], []>} : vector<128x16xf32>, vector<16x128xf32>, vector<128x128xf32> -> vector<128x128xf32>
    %cst_53 = arith.constant dense<0.000000e+00> : vector<128x8xf32>
    %36 = tpu.matmul %7, %34, %cst_53 {dimension_numbers = #tpu.dot_dimension_numbers<[1], [0], [0], [1], [0, 0, 1, 1], [], []>} : vector<128x16xf32>, vector<16x8xf32>, vector<128x8xf32> -> vector<128x8xf32>
    %c0_54 = arith.constant 0 : index
    %c0_55 = arith.constant 0 : index
    %37 = vector.load %arg15[%c0_54, %c0_55] : memref<128x8xf32, #tpu.memory_space<vmem>>, vector<128x8xf32>
    %38 = arith.mulf %36, %37 : vector<128x8xf32>
    %cst_56 = arith.constant dense<0.000000e+00> : vector<128xf32>
    %39 = vector.multi_reduction <add>, %38, %cst_56 [1] : vector<128x8xf32> to vector<128xf32>
    %40 = vector.shape_cast %39 : vector<128xf32> to vector<128x1xf32>
    %cst_57 = arith.constant dense<0.000000e+00> : vector<16xf32>
    %41 = vector.multi_reduction <add>, %1, %cst_57 [0] : vector<128x16xf32> to vector<16xf32>
    %42 = vector.shape_cast %41 : vector<16xf32> to vector<1x16xf32>
    %43 = arith.mulf %1, %1 : vector<128x16xf32>
    %cst_58 = arith.constant dense<0.000000e+00> : vector<16xf32>
    %44 = vector.multi_reduction <add>, %43, %cst_58 [0] : vector<128x16xf32> to vector<16xf32>
    %45 = vector.shape_cast %44 : vector<16xf32> to vector<1x16xf32>
    %c0_59 = arith.constant 0 : index
    %c0_60 = arith.constant 0 : index
    %c0_61 = arith.constant 0 : index
    %46 = vector.load %arg23[%c0_59, %c0_60, %c0_61] : memref<1x3x128xf32, #tpu.memory_space<vmem>>, vector<1x3x128xf32>
    %47 = vector.shape_cast %46 : vector<1x3x128xf32> to vector<3x128xf32>
    %48 = vector.extract_strided_slice %47 {offsets = [0, 0], sizes = [1, 128], strides = [1, 1]} : vector<3x128xf32> to vector<1x128xf32>
    %49 = vector.extract_strided_slice %47 {offsets = [1, 0], sizes = [1, 128], strides = [1, 1]} : vector<3x128xf32> to vector<1x128xf32>
    %50 = vector.extract_strided_slice %47 {offsets = [2, 0], sizes = [1, 128], strides = [1, 1]} : vector<3x128xf32> to vector<1x128xf32>
    %cst_62 = arith.constant dense<0.000000e+00> : vector<16xf32>
    %51 = vector.multi_reduction <add>, %16, %cst_62 [0] : vector<16x16xf32> to vector<16xf32>
    %52 = vector.shape_cast %51 : vector<16xf32> to vector<1x16xf32>
    %cst_63 = arith.constant 8.000000e+00 : f32
    %53 = vector.broadcast %cst_63 : f32 to vector<1x16xf32>
    %54 = arith.mulf %53, %52 : vector<1x16xf32>
    %55 = arith.addf %54, %42 : vector<1x16xf32>
    %56 = arith.mulf %16, %16 : vector<16x16xf32>
    %cst_64 = arith.constant dense<0.000000e+00> : vector<16xf32>
    %57 = vector.multi_reduction <add>, %56, %cst_64 [0] : vector<16x16xf32> to vector<16xf32>
    %58 = vector.shape_cast %57 : vector<16xf32> to vector<1x16xf32>
    %cst_65 = arith.constant 8.000000e+00 : f32
    %59 = vector.broadcast %cst_65 : f32 to vector<1x16xf32>
    %60 = arith.mulf %59, %58 : vector<1x16xf32>
    %61 = arith.addf %60, %45 : vector<1x16xf32>
    %cst_66 = arith.constant 3.906250e-03 : f32
    %62 = vector.broadcast %cst_66 : f32 to vector<1x16xf32>
    %63 = arith.mulf %55, %62 : vector<1x16xf32>
    %cst_67 = arith.constant 3.906250e-03 : f32
    %64 = vector.broadcast %cst_67 : f32 to vector<1x16xf32>
    %65 = arith.mulf %61, %64 : vector<1x16xf32>
    %66 = arith.mulf %63, %63 : vector<1x16xf32>
    %67 = arith.subf %65, %66 : vector<1x16xf32>
    %cst_68 = arith.constant 9.99999974E-6 : f32
    %68 = vector.broadcast %cst_68 : f32 to vector<1x16xf32>
    %69 = arith.addf %67, %68 : vector<1x16xf32>
    %70 = math.rsqrt %69 : vector<1x16xf32>
    %cst_69 = arith.constant dense<0.000000e+00> : vector<1x128xf32>
    %71 = tpu.matmul %63, %12, %cst_69 {dimension_numbers = #tpu.dot_dimension_numbers<[1], [0], [0], [1], [0, 0, 1, 1], [], []>} : vector<1x16xf32>, vector<16x128xf32>, vector<1x128xf32> -> vector<1x128xf32>
    %cst_70 = arith.constant dense<0.000000e+00> : vector<1x128xf32>
    %72 = tpu.matmul %70, %12, %cst_70 {dimension_numbers = #tpu.dot_dimension_numbers<[1], [0], [0], [1], [0, 0, 1, 1], [], []>} : vector<1x16xf32>, vector<16x128xf32>, vector<1x128xf32> -> vector<1x128xf32>
    %cst_71 = arith.constant dense<0.000000e+00> : vector<16x128xf32>
    %73 = tpu.matmul %16, %12, %cst_71 {dimension_numbers = #tpu.dot_dimension_numbers<[1], [0], [0], [1], [0, 0, 1, 1], [], []>} : vector<16x16xf32>, vector<16x128xf32>, vector<16x128xf32> -> vector<16x128xf32>
    %74 = vector.broadcast %48 : vector<1x128xf32> to vector<16x128xf32>
    %75 = arith.mulf %73, %74 : vector<16x128xf32>
    %cst_72 = arith.constant dense<0.000000e+00> : vector<128x128xf32>
    %76 = tpu.matmul %7, %75, %cst_72 {dimension_numbers = #tpu.dot_dimension_numbers<[1], [0], [0], [1], [0, 0, 1, 1], [], []>} : vector<128x16xf32>, vector<16x128xf32>, vector<128x128xf32> -> vector<128x128xf32>
    %77 = vector.broadcast %49 : vector<1x128xf32> to vector<128x128xf32>
    %78 = arith.mulf %77, %35 : vector<128x128xf32>
    %79 = arith.addf %76, %78 : vector<128x128xf32>
    %80 = vector.broadcast %72 : vector<1x128xf32> to vector<128x128xf32>
    %81 = arith.mulf %80, %79 : vector<128x128xf32>
    %82 = arith.mulf %72, %71 : vector<1x128xf32>
    %83 = arith.addf %48, %49 : vector<1x128xf32>
    %84 = arith.mulf %82, %83 : vector<1x128xf32>
    %85 = arith.subf %50, %84 : vector<1x128xf32>
    %86 = vector.broadcast %85 : vector<1x128xf32> to vector<128x128xf32>
    %87 = arith.addf %81, %86 : vector<128x128xf32>
    %88 = math.tanh %87 : vector<128x128xf32>
    %c0_73 = arith.constant 0 : index
    %c0_74 = arith.constant 0 : index
    %c0_75 = arith.constant 0 : index
    %89 = vector.load %arg21[%c0_73, %c0_74, %c0_75] : memref<1x128x128xf32, #tpu.memory_space<vmem>>, vector<1x128x128xf32>
    %90 = vector.shape_cast %89 : vector<1x128x128xf32> to vector<128x128xf32>
    %cst_76 = arith.constant dense<0.000000e+00> : vector<128x128xf32>
    %91 = tpu.matmul %88, %90, %cst_76 {dimension_numbers = #tpu.dot_dimension_numbers<[1], [0], [0], [1], [0, 0, 1, 1], [], []>} : vector<128x128xf32>, vector<128x128xf32>, vector<128x128xf32> -> vector<128x128xf32>
    %cst_77 = arith.constant dense<0xFF800000> : vector<128xf32>
    %92 = vector.multi_reduction <maximumf>, %91, %cst_77 [1] : vector<128x128xf32> to vector<128xf32>
    %93 = vector.shape_cast %92 : vector<128xf32> to vector<128x1xf32>
    %cst_78 = arith.constant dense<0xFF800000> : vector<1xf32>
    %94 = vector.multi_reduction <maximumf>, %93, %cst_78 [0] : vector<128x1xf32> to vector<1xf32>
    %95 = vector.shape_cast %94 : vector<1xf32> to vector<1x1xf32>
    %96 = vector.broadcast %95 : vector<1x1xf32> to vector<128x128xf32>
    %97 = arith.subf %91, %96 : vector<128x128xf32>
    %98 = math.exp %97 : vector<128x128xf32>
    %cst_79 = arith.constant dense<0.000000e+00> : vector<128x8xf32>
    %99 = tpu.matmul %98, %9, %cst_79 {dimension_numbers = #tpu.dot_dimension_numbers<[1], [0], [0], [1], [0, 0, 1, 1], [], []>} : vector<128x128xf32>, vector<128x8xf32>, vector<128x8xf32> -> vector<128x8xf32>
    %100 = tpu.reciprocal %99 {approx = true} : vector<128x8xf32> -> vector<128x8xf32>
    %101 = arith.mulf %99, %100 : vector<128x8xf32>
    %cst_80 = arith.constant 2.000000e+00 : f32
    %102 = vector.broadcast %cst_80 : f32 to vector<128x8xf32>
    %103 = arith.subf %102, %101 : vector<128x8xf32>
    %104 = arith.mulf %100, %103 : vector<128x8xf32>
    %cst_81 = arith.constant dense<0.000000e+00> : vector<128x128xf32>
    %105 = tpu.matmul %104, %10, %cst_81 {dimension_numbers = #tpu.dot_dimension_numbers<[1], [0], [0], [1], [0, 0, 1, 1], [], []>} : vector<128x8xf32>, vector<8x128xf32>, vector<128x128xf32> -> vector<128x128xf32>
    %106 = arith.mulf %98, %105 : vector<128x128xf32>
    %c0_82 = arith.constant 0 : index
    %c0_83 = arith.constant 0 : index
    %c0_84 = arith.constant 0 : index
    %107 = vector.load %arg24[%c0_82, %c0_83, %c0_84] : memref<1x4x128xf32, #tpu.memory_space<vmem>>, vector<1x4x128xf32>
    %108 = vector.shape_cast %107 : vector<1x4x128xf32> to vector<4x128xf32>
    %109 = vector.extract_strided_slice %108 {offsets = [0, 0], sizes = [1, 128], strides = [1, 1]} : vector<4x128xf32> to vector<1x128xf32>
    %110 = vector.extract_strided_slice %108 {offsets = [1, 0], sizes = [1, 128], strides = [1, 1]} : vector<4x128xf32> to vector<1x128xf32>
    %111 = vector.extract_strided_slice %108 {offsets = [2, 0], sizes = [1, 128], strides = [1, 1]} : vector<4x128xf32> to vector<1x128xf32>
    %112 = vector.extract_strided_slice %108 {offsets = [3, 0], sizes = [1, 128], strides = [1, 1]} : vector<4x128xf32> to vector<1x128xf32>
    %cst_85 = arith.constant dense<0.000000e+00> : vector<16xf32>
    %113 = vector.multi_reduction <add>, %34, %cst_85 [1] : vector<16x8xf32> to vector<16xf32>
    %114 = vector.shape_cast %113 : vector<16xf32> to vector<16x1xf32>
    %cst_86 = arith.constant dense<0.000000e+00> : vector<1xf32>
    %115 = vector.multi_reduction <add>, %114, %cst_86 [0] : vector<16x1xf32> to vector<1xf32>
    %116 = vector.shape_cast %115 : vector<1xf32> to vector<1x1xf32>
    %117 = arith.mulf %34, %34 : vector<16x8xf32>
    %cst_87 = arith.constant dense<0.000000e+00> : vector<16xf32>
    %118 = vector.multi_reduction <add>, %117, %cst_87 [1] : vector<16x8xf32> to vector<16xf32>
    %119 = vector.shape_cast %118 : vector<16xf32> to vector<16x1xf32>
    %cst_88 = arith.constant dense<0.000000e+00> : vector<1xf32>
    %120 = vector.multi_reduction <add>, %119, %cst_88 [0] : vector<16x1xf32> to vector<1xf32>
    %121 = vector.shape_cast %120 : vector<1xf32> to vector<1x1xf32>
    %cst_89 = arith.constant dense<0.000000e+00> : vector<16xf32>
    %122 = vector.multi_reduction <add>, %20, %cst_89 [0] : vector<16x16xf32> to vector<16xf32>
    %123 = vector.shape_cast %122 : vector<16xf32> to vector<1x16xf32>
    %cst_90 = arith.constant 8.000000e+00 : f32
    %124 = vector.broadcast %cst_90 : f32 to vector<1x16xf32>
    %125 = arith.mulf %124, %123 : vector<1x16xf32>
    %126 = vector.broadcast %116 : vector<1x1xf32> to vector<1x16xf32>
    %127 = arith.addf %125, %126 : vector<1x16xf32>
    %128 = arith.addf %127, %42 : vector<1x16xf32>
    %129 = arith.mulf %20, %20 : vector<16x16xf32>
    %cst_91 = arith.constant dense<0.000000e+00> : vector<16xf32>
    %130 = vector.multi_reduction <add>, %129, %cst_91 [0] : vector<16x16xf32> to vector<16xf32>
    %131 = vector.shape_cast %130 : vector<16xf32> to vector<1x16xf32>
    %cst_92 = arith.constant 8.000000e+00 : f32
    %132 = vector.broadcast %cst_92 : f32 to vector<1x16xf32>
    %133 = arith.mulf %132, %131 : vector<1x16xf32>
    %134 = vector.broadcast %121 : vector<1x1xf32> to vector<1x16xf32>
    %135 = arith.addf %133, %134 : vector<1x16xf32>
    %136 = arith.addf %135, %45 : vector<1x16xf32>
    %cst_93 = arith.constant 0.00260416674 : f32
    %137 = vector.broadcast %cst_93 : f32 to vector<1x16xf32>
    %138 = arith.mulf %128, %137 : vector<1x16xf32>
    %cst_94 = arith.constant 0.00260416674 : f32
    %139 = vector.broadcast %cst_94 : f32 to vector<1x16xf32>
    %140 = arith.mulf %136, %139 : vector<1x16xf32>
    %141 = arith.mulf %138, %138 : vector<1x16xf32>
    %142 = arith.subf %140, %141 : vector<1x16xf32>
    %cst_95 = arith.constant 9.99999974E-6 : f32
    %143 = vector.broadcast %cst_95 : f32 to vector<1x16xf32>
    %144 = arith.addf %142, %143 : vector<1x16xf32>
    %145 = math.rsqrt %144 : vector<1x16xf32>
    %cst_96 = arith.constant dense<0.000000e+00> : vector<1x128xf32>
    %146 = tpu.matmul %138, %12, %cst_96 {dimension_numbers = #tpu.dot_dimension_numbers<[1], [0], [0], [1], [0, 0, 1, 1], [], []>} : vector<1x16xf32>, vector<16x128xf32>, vector<1x128xf32> -> vector<1x128xf32>
    %cst_97 = arith.constant dense<0.000000e+00> : vector<1x128xf32>
    %147 = tpu.matmul %145, %12, %cst_97 {dimension_numbers = #tpu.dot_dimension_numbers<[1], [0], [0], [1], [0, 0, 1, 1], [], []>} : vector<1x16xf32>, vector<16x128xf32>, vector<1x128xf32> -> vector<1x128xf32>
    %cst_98 = arith.constant dense<0.000000e+00> : vector<16x128xf32>
    %148 = tpu.matmul %20, %12, %cst_98 {dimension_numbers = #tpu.dot_dimension_numbers<[1], [0], [0], [1], [0, 0, 1, 1], [], []>} : vector<16x16xf32>, vector<16x128xf32>, vector<16x128xf32> -> vector<16x128xf32>
    %149 = vector.broadcast %109 : vector<1x128xf32> to vector<16x128xf32>
    %150 = arith.mulf %148, %149 : vector<16x128xf32>
    %cst_99 = arith.constant dense<0.000000e+00> : vector<128x128xf32>
    %151 = tpu.matmul %7, %150, %cst_99 {dimension_numbers = #tpu.dot_dimension_numbers<[1], [0], [0], [1], [0, 0, 1, 1], [], []>} : vector<128x16xf32>, vector<16x128xf32>, vector<128x128xf32> -> vector<128x128xf32>
    %152 = vector.broadcast %110 : vector<1x128xf32> to vector<128x128xf32>
    %153 = vector.broadcast %40 : vector<128x1xf32> to vector<128x128xf32>
    %154 = arith.mulf %152, %153 : vector<128x128xf32>
    %155 = arith.addf %151, %154 : vector<128x128xf32>
    %156 = vector.broadcast %111 : vector<1x128xf32> to vector<128x128xf32>
    %157 = arith.mulf %156, %35 : vector<128x128xf32>
    %158 = arith.addf %155, %157 : vector<128x128xf32>
    %159 = vector.broadcast %147 : vector<1x128xf32> to vector<128x128xf32>
    %160 = arith.mulf %159, %158 : vector<128x128xf32>
    %161 = arith.mulf %147, %146 : vector<1x128xf32>
    %162 = arith.addf %109, %110 : vector<1x128xf32>
    %163 = arith.addf %162, %111 : vector<1x128xf32>
    %164 = arith.mulf %161, %163 : vector<1x128xf32>
    %165 = arith.subf %112, %164 : vector<1x128xf32>
    %166 = vector.broadcast %165 : vector<1x128xf32> to vector<128x128xf32>
    %167 = arith.addf %160, %166 : vector<128x128xf32>
    %168 = math.tanh %167 : vector<128x128xf32>
    %c0_100 = arith.constant 0 : index
    %c0_101 = arith.constant 0 : index
    %c0_102 = arith.constant 0 : index
    %169 = vector.load %arg22[%c0_100, %c0_101, %c0_102] : memref<1x128x128xf32, #tpu.memory_space<vmem>>, vector<1x128x128xf32>
    %170 = vector.shape_cast %169 : vector<1x128x128xf32> to vector<128x128xf32>
    %cst_103 = arith.constant dense<0.000000e+00> : vector<128x128xf32>
    %171 = tpu.matmul %168, %170, %cst_103 {dimension_numbers = #tpu.dot_dimension_numbers<[1], [0], [0], [1], [0, 0, 1, 1], [], []>} : vector<128x128xf32>, vector<128x128xf32>, vector<128x128xf32> -> vector<128x128xf32>
    %cst_104 = arith.constant dense<0xFF800000> : vector<128xf32>
    %172 = vector.multi_reduction <maximumf>, %171, %cst_104 [1] : vector<128x128xf32> to vector<128xf32>
    %173 = vector.shape_cast %172 : vector<128xf32> to vector<128x1xf32>
    %cst_105 = arith.constant dense<0xFF800000> : vector<1xf32>
    %174 = vector.multi_reduction <maximumf>, %173, %cst_105 [0] : vector<128x1xf32> to vector<1xf32>
    %175 = vector.shape_cast %174 : vector<1xf32> to vector<1x1xf32>
    %176 = vector.broadcast %175 : vector<1x1xf32> to vector<128x128xf32>
    %177 = arith.subf %171, %176 : vector<128x128xf32>
    %178 = math.exp %177 : vector<128x128xf32>
    %cst_106 = arith.constant dense<0.000000e+00> : vector<16x128xf32>
    %179 = tpu.matmul %8, %178, %cst_106 {dimension_numbers = #tpu.dot_dimension_numbers<[1], [0], [0], [1], [0, 0, 1, 1], [], []>} : vector<16x128xf32>, vector<128x128xf32>, vector<16x128xf32> -> vector<16x128xf32>
    %180 = tpu.reciprocal %179 {approx = true} : vector<16x128xf32> -> vector<16x128xf32>
    %181 = arith.mulf %179, %180 : vector<16x128xf32>
    %cst_107 = arith.constant 2.000000e+00 : f32
    %182 = vector.broadcast %cst_107 : f32 to vector<16x128xf32>
    %183 = arith.subf %182, %181 : vector<16x128xf32>
    %184 = arith.mulf %180, %183 : vector<16x128xf32>
    %cst_108 = arith.constant dense<0.000000e+00> : vector<128x128xf32>
    %185 = tpu.matmul %7, %184, %cst_108 {dimension_numbers = #tpu.dot_dimension_numbers<[1], [0], [0], [1], [0, 0, 1, 1], [], []>} : vector<128x16xf32>, vector<16x128xf32>, vector<128x128xf32> -> vector<128x128xf32>
    %186 = arith.mulf %178, %185 : vector<128x128xf32>
    %c0_109 = arith.constant 0 : index
    %c0_110 = arith.constant 0 : index
    %c0_111 = arith.constant 0 : index
    %187 = vector.load %arg25[%c0_109, %c0_110, %c0_111] : memref<1x4x128xf32, #tpu.memory_space<vmem>>, vector<1x4x128xf32>
    %188 = vector.shape_cast %187 : vector<1x4x128xf32> to vector<4x128xf32>
    %189 = vector.extract_strided_slice %188 {offsets = [0, 0], sizes = [1, 128], strides = [1, 1]} : vector<4x128xf32> to vector<1x128xf32>
    %190 = vector.extract_strided_slice %188 {offsets = [1, 0], sizes = [1, 128], strides = [1, 1]} : vector<4x128xf32> to vector<1x128xf32>
    %191 = vector.extract_strided_slice %188 {offsets = [2, 0], sizes = [1, 128], strides = [1, 1]} : vector<4x128xf32> to vector<1x128xf32>
    %192 = vector.extract_strided_slice %188 {offsets = [3, 0], sizes = [1, 128], strides = [1, 1]} : vector<4x128xf32> to vector<1x128xf32>
    %193 = arith.addf %24, %29 : vector<16x16xf32>
    %cst_112 = arith.constant dense<0.000000e+00> : vector<16xf32>
    %194 = vector.multi_reduction <add>, %193, %cst_112 [0] : vector<16x16xf32> to vector<16xf32>
    %195 = vector.shape_cast %194 : vector<16xf32> to vector<1x16xf32>
    %cst_113 = arith.constant 8.000000e+00 : f32
    %196 = vector.broadcast %cst_113 : f32 to vector<1x16xf32>
    %197 = arith.mulf %196, %195 : vector<1x16xf32>
    %198 = arith.addf %197, %42 : vector<1x16xf32>
    %199 = arith.mulf %24, %24 : vector<16x16xf32>
    %200 = arith.mulf %29, %29 : vector<16x16xf32>
    %201 = arith.addf %199, %200 : vector<16x16xf32>
    %cst_114 = arith.constant dense<0.000000e+00> : vector<16xf32>
    %202 = vector.multi_reduction <add>, %201, %cst_114 [0] : vector<16x16xf32> to vector<16xf32>
    %203 = vector.shape_cast %202 : vector<16xf32> to vector<1x16xf32>
    %cst_115 = arith.constant 8.000000e+00 : f32
    %204 = vector.broadcast %cst_115 : f32 to vector<1x16xf32>
    %205 = arith.mulf %204, %203 : vector<1x16xf32>
    %206 = arith.addf %205, %45 : vector<1x16xf32>
    %cst_116 = arith.constant 0.00260416674 : f32
    %207 = vector.broadcast %cst_116 : f32 to vector<1x16xf32>
    %208 = arith.mulf %198, %207 : vector<1x16xf32>
    %cst_117 = arith.constant 0.00260416674 : f32
    %209 = vector.broadcast %cst_117 : f32 to vector<1x16xf32>
    %210 = arith.mulf %206, %209 : vector<1x16xf32>
    %211 = arith.mulf %208, %208 : vector<1x16xf32>
    %212 = arith.subf %210, %211 : vector<1x16xf32>
    %cst_118 = arith.constant 9.99999974E-6 : f32
    %213 = vector.broadcast %cst_118 : f32 to vector<1x16xf32>
    %214 = arith.addf %212, %213 : vector<1x16xf32>
    %215 = math.rsqrt %214 : vector<1x16xf32>
    %cst_119 = arith.constant dense<0.000000e+00> : vector<1x128xf32>
    %216 = tpu.matmul %208, %12, %cst_119 {dimension_numbers = #tpu.dot_dimension_numbers<[1], [0], [0], [1], [0, 0, 1, 1], [], []>} : vector<1x16xf32>, vector<16x128xf32>, vector<1x128xf32> -> vector<1x128xf32>
    %cst_120 = arith.constant dense<0.000000e+00> : vector<1x128xf32>
    %217 = tpu.matmul %215, %12, %cst_120 {dimension_numbers = #tpu.dot_dimension_numbers<[1], [0], [0], [1], [0, 0, 1, 1], [], []>} : vector<1x16xf32>, vector<16x128xf32>, vector<1x128xf32> -> vector<1x128xf32>
    %cst_121 = arith.constant dense<0.000000e+00> : vector<16x128xf32>
    %218 = tpu.matmul %24, %12, %cst_121 {dimension_numbers = #tpu.dot_dimension_numbers<[1], [0], [0], [1], [0, 0, 1, 1], [], []>} : vector<16x16xf32>, vector<16x128xf32>, vector<16x128xf32> -> vector<16x128xf32>
    %219 = vector.broadcast %189 : vector<1x128xf32> to vector<16x128xf32>
    %220 = arith.mulf %218, %219 : vector<16x128xf32>
    %cst_122 = arith.constant dense<0.000000e+00> : vector<16x128xf32>
    %221 = tpu.matmul %29, %12, %cst_122 {dimension_numbers = #tpu.dot_dimension_numbers<[1], [0], [0], [1], [0, 0, 1, 1], [], []>} : vector<16x16xf32>, vector<16x128xf32>, vector<16x128xf32> -> vector<16x128xf32>
    %222 = vector.broadcast %190 : vector<1x128xf32> to vector<16x128xf32>
    %223 = arith.mulf %221, %222 : vector<16x128xf32>
    %224 = arith.addf %220, %223 : vector<16x128xf32>
    %cst_123 = arith.constant dense<0.000000e+00> : vector<128x128xf32>
    %225 = tpu.matmul %7, %224, %cst_123 {dimension_numbers = #tpu.dot_dimension_numbers<[1], [0], [0], [1], [0, 0, 1, 1], [], []>} : vector<128x16xf32>, vector<16x128xf32>, vector<128x128xf32> -> vector<128x128xf32>
    %226 = vector.broadcast %191 : vector<1x128xf32> to vector<128x128xf32>
    %227 = arith.mulf %226, %35 : vector<128x128xf32>
    %228 = arith.addf %225, %227 : vector<128x128xf32>
    %229 = vector.broadcast %217 : vector<1x128xf32> to vector<128x128xf32>
    %230 = arith.mulf %229, %228 : vector<128x128xf32>
    %231 = arith.mulf %217, %216 : vector<1x128xf32>
    %232 = arith.addf %189, %190 : vector<1x128xf32>
    %233 = arith.addf %232, %191 : vector<1x128xf32>
    %234 = arith.mulf %231, %233 : vector<1x128xf32>
    %235 = arith.subf %192, %234 : vector<1x128xf32>
    %236 = vector.broadcast %235 : vector<1x128xf32> to vector<128x128xf32>
    %237 = arith.addf %230, %236 : vector<128x128xf32>
    %238 = math.tanh %237 : vector<128x128xf32>
    %c0_124 = arith.constant 0 : index
    %c0_125 = arith.constant 0 : index
    %c0_126 = arith.constant 0 : index
    %239 = vector.load %arg22[%c0_124, %c0_125, %c0_126] : memref<1x128x128xf32, #tpu.memory_space<vmem>>, vector<1x128x128xf32>
    %240 = vector.shape_cast %239 : vector<1x128x128xf32> to vector<128x128xf32>
    %cst_127 = arith.constant dense<0.000000e+00> : vector<128x128xf32>
    %241 = tpu.matmul %238, %240, %cst_127 {dimension_numbers = #tpu.dot_dimension_numbers<[1], [0], [0], [1], [0, 0, 1, 1], [], []>} : vector<128x128xf32>, vector<128x128xf32>, vector<128x128xf32> -> vector<128x128xf32>
    %cst_128 = arith.constant dense<0xFF800000> : vector<128xf32>
    %242 = vector.multi_reduction <maximumf>, %241, %cst_128 [1] : vector<128x128xf32> to vector<128xf32>
    %243 = vector.shape_cast %242 : vector<128xf32> to vector<128x1xf32>
    %cst_129 = arith.constant dense<0xFF800000> : vector<1xf32>
    %244 = vector.multi_reduction <maximumf>, %243, %cst_129 [0] : vector<128x1xf32> to vector<1xf32>
    %245 = vector.shape_cast %244 : vector<1xf32> to vector<1x1xf32>
    %246 = vector.broadcast %245 : vector<1x1xf32> to vector<128x128xf32>
    %247 = arith.subf %241, %246 : vector<128x128xf32>
    %248 = math.exp %247 : vector<128x128xf32>
    %cst_130 = arith.constant dense<0.000000e+00> : vector<128x8xf32>
    %249 = tpu.matmul %248, %9, %cst_130 {dimension_numbers = #tpu.dot_dimension_numbers<[1], [0], [0], [1], [0, 0, 1, 1], [], []>} : vector<128x128xf32>, vector<128x8xf32>, vector<128x8xf32> -> vector<128x8xf32>
    %250 = tpu.reciprocal %249 {approx = true} : vector<128x8xf32> -> vector<128x8xf32>
    %251 = arith.mulf %249, %250 : vector<128x8xf32>
    %cst_131 = arith.constant 2.000000e+00 : f32
    %252 = vector.broadcast %cst_131 : f32 to vector<128x8xf32>
    %253 = arith.subf %252, %251 : vector<128x8xf32>
    %254 = arith.mulf %250, %253 : vector<128x8xf32>
    %cst_132 = arith.constant dense<0.000000e+00> : vector<128x128xf32>
    %255 = tpu.matmul %254, %10, %cst_132 {dimension_numbers = #tpu.dot_dimension_numbers<[1], [0], [0], [1], [0, 0, 1, 1], [], []>} : vector<128x8xf32>, vector<8x128xf32>, vector<128x128xf32> -> vector<128x128xf32>
    %256 = arith.mulf %248, %255 : vector<128x128xf32>
    %257 = arith.mulf %106, %35 : vector<128x128xf32>
    %cst_133 = arith.constant dense<0.000000e+00> : vector<16x128xf32>
    %258 = tpu.matmul %8, %257, %cst_133 {dimension_numbers = #tpu.dot_dimension_numbers<[1], [0], [0], [1], [0, 0, 1, 1], [], []>} : vector<16x128xf32>, vector<128x128xf32>, vector<16x128xf32> -> vector<16x128xf32>
    %259 = arith.mulf %186, %35 : vector<128x128xf32>
    %cst_134 = arith.constant dense<0.000000e+00> : vector<16x128xf32>
    %260 = tpu.matmul %8, %259, %cst_134 {dimension_numbers = #tpu.dot_dimension_numbers<[1], [0], [0], [1], [0, 0, 1, 1], [], []>} : vector<16x128xf32>, vector<128x128xf32>, vector<16x128xf32> -> vector<16x128xf32>
    %261 = arith.mulf %256, %35 : vector<128x128xf32>
    %cst_135 = arith.constant dense<0.000000e+00> : vector<16x128xf32>
    %262 = tpu.matmul %8, %261, %cst_135 {dimension_numbers = #tpu.dot_dimension_numbers<[1], [0], [0], [1], [0, 0, 1, 1], [], []>} : vector<16x128xf32>, vector<128x128xf32>, vector<16x128xf32> -> vector<16x128xf32>
    %c0_136 = arith.constant 0 : index
    %c0_137 = arith.constant 0 : index
    %c0_138 = arith.constant 0 : index
    %263 = vector.load %arg26[%c0_136, %c0_137, %c0_138] : memref<1x1x4xf32, #tpu.memory_space<vmem>>, vector<1x1x4xf32>
    %264 = vector.shape_cast %263 : vector<1x1x4xf32> to vector<1x4xf32>
    %265 = vector.extract_strided_slice %264 {offsets = [0, 0], sizes = [1, 1], strides = [1, 1]} : vector<1x4xf32> to vector<1x1xf32>
    %266 = vector.extract_strided_slice %264 {offsets = [0, 1], sizes = [1, 1], strides = [1, 1]} : vector<1x4xf32> to vector<1x1xf32>
    %267 = vector.extract_strided_slice %264 {offsets = [0, 2], sizes = [1, 1], strides = [1, 1]} : vector<1x4xf32> to vector<1x1xf32>
    %268 = vector.extract_strided_slice %264 {offsets = [0, 3], sizes = [1, 1], strides = [1, 1]} : vector<1x4xf32> to vector<1x1xf32>
    %269 = arith.addf %258, %260 : vector<16x128xf32>
    %270 = arith.addf %269, %262 : vector<16x128xf32>
    %cst_139 = arith.constant dense<0.000000e+00> : vector<128xf32>
    %271 = vector.multi_reduction <add>, %270, %cst_139 [0] : vector<16x128xf32> to vector<128xf32>
    %272 = vector.shape_cast %271 : vector<128xf32> to vector<1x128xf32>
    %cst_140 = arith.constant dense<0.000000e+00> : vector<1x16xf32>
    %273 = tpu.matmul %272, %11, %cst_140 {dimension_numbers = #tpu.dot_dimension_numbers<[1], [0], [0], [1], [0, 0, 1, 1], [], []>} : vector<1x128xf32>, vector<128x16xf32>, vector<1x16xf32> -> vector<1x16xf32>
    %cst_141 = arith.constant 0.00260416674 : f32
    %274 = vector.broadcast %cst_141 : f32 to vector<1x16xf32>
    %275 = arith.mulf %273, %274 : vector<1x16xf32>
    %276 = arith.mulf %258, %258 : vector<16x128xf32>
    %277 = arith.mulf %260, %260 : vector<16x128xf32>
    %278 = arith.addf %276, %277 : vector<16x128xf32>
    %279 = arith.mulf %262, %262 : vector<16x128xf32>
    %280 = arith.addf %278, %279 : vector<16x128xf32>
    %cst_142 = arith.constant dense<0.000000e+00> : vector<128xf32>
    %281 = vector.multi_reduction <add>, %280, %cst_142 [0] : vector<16x128xf32> to vector<128xf32>
    %282 = vector.shape_cast %281 : vector<128xf32> to vector<1x128xf32>
    %cst_143 = arith.constant dense<0.000000e+00> : vector<1x16xf32>
    %283 = tpu.matmul %282, %11, %cst_143 {dimension_numbers = #tpu.dot_dimension_numbers<[1], [0], [0], [1], [0, 0, 1, 1], [], []>} : vector<1x128xf32>, vector<128x16xf32>, vector<1x16xf32> -> vector<1x16xf32>
    %cst_144 = arith.constant 0.00260416674 : f32
    %284 = vector.broadcast %cst_144 : f32 to vector<1x16xf32>
    %285 = arith.mulf %283, %284 : vector<1x16xf32>
    %286 = arith.mulf %275, %275 : vector<1x16xf32>
    %287 = arith.subf %285, %286 : vector<1x16xf32>
    %cst_145 = arith.constant 9.99999974E-6 : f32
    %288 = vector.broadcast %cst_145 : f32 to vector<1x16xf32>
    %289 = arith.addf %287, %288 : vector<1x16xf32>
    %290 = math.rsqrt %289 : vector<1x16xf32>
    %cst_146 = arith.constant dense<0.000000e+00> : vector<1x128xf32>
    %291 = tpu.matmul %275, %12, %cst_146 {dimension_numbers = #tpu.dot_dimension_numbers<[1], [0], [0], [1], [0, 0, 1, 1], [], []>} : vector<1x16xf32>, vector<16x128xf32>, vector<1x128xf32> -> vector<1x128xf32>
    %cst_147 = arith.constant dense<0.000000e+00> : vector<1x128xf32>
    %292 = tpu.matmul %290, %12, %cst_147 {dimension_numbers = #tpu.dot_dimension_numbers<[1], [0], [0], [1], [0, 0, 1, 1], [], []>} : vector<1x16xf32>, vector<16x128xf32>, vector<1x128xf32> -> vector<1x128xf32>
    %293 = vector.broadcast %265 : vector<1x1xf32> to vector<16x128xf32>
    %294 = arith.mulf %293, %258 : vector<16x128xf32>
    %295 = vector.broadcast %266 : vector<1x1xf32> to vector<16x128xf32>
    %296 = arith.mulf %295, %260 : vector<16x128xf32>
    %297 = arith.addf %294, %296 : vector<16x128xf32>
    %298 = vector.broadcast %267 : vector<1x1xf32> to vector<16x128xf32>
    %299 = arith.mulf %298, %262 : vector<16x128xf32>
    %300 = arith.addf %297, %299 : vector<16x128xf32>
    %301 = vector.broadcast %292 : vector<1x128xf32> to vector<16x128xf32>
    %302 = arith.mulf %301, %300 : vector<16x128xf32>
    %303 = arith.mulf %292, %291 : vector<1x128xf32>
    %304 = arith.addf %265, %266 : vector<1x1xf32>
    %305 = arith.addf %304, %267 : vector<1x1xf32>
    %306 = vector.broadcast %305 : vector<1x1xf32> to vector<1x128xf32>
    %307 = arith.mulf %303, %306 : vector<1x128xf32>
    %308 = vector.broadcast %268 : vector<1x1xf32> to vector<1x128xf32>
    %309 = arith.subf %308, %307 : vector<1x128xf32>
    %310 = vector.broadcast %309 : vector<1x128xf32> to vector<16x128xf32>
    %311 = arith.addf %302, %310 : vector<16x128xf32>
    %cst_148 = arith.constant 0.000000e+00 : f32
    %312 = vector.broadcast %cst_148 : f32 to vector<16x128xf32>
    %313 = arith.maximumf %311, %312 : vector<16x128xf32>
    %c0_149 = arith.constant 0 : index
    %c0_150 = arith.constant 0 : index
    %c0_151 = arith.constant 0 : index
    %314 = vector.load %arg30[%c0_149, %c0_150, %c0_151] : memref<1x16x128xf32, #tpu.memory_space<vmem>>, vector<1x16x128xf32>
    %315 = vector.shape_cast %314 : vector<1x16x128xf32> to vector<16x128xf32>
    %316 = vector.shape_cast %313 : vector<16x128xf32> to vector<1x16x128xf32>
    tpu.vector_store %arg30[%c0_149, %c0_150, %c0_151], %316 {strides = array<i32>} : memref<1x16x128xf32, #tpu.memory_space<vmem>>, vector<1x16x128xf32>,
    %c0_152 = arith.constant 0 : index
    %c0_153 = arith.constant 0 : index
    %c0_154 = arith.constant 0 : index
    %317 = vector.load %arg28[%c0_152, %c0_153, %c0_154] : memref<1x5x8xf32, #tpu.memory_space<vmem>>, vector<1x5x8xf32>
    %318 = vector.shape_cast %317 : vector<1x5x8xf32> to vector<5x8xf32>
    %cst_155 = arith.constant dense<0.000000e+00> : vector<128xf32>
    %319 = vector.multi_reduction <add>, %313, %cst_155 [0] : vector<16x128xf32> to vector<128xf32>
    %320 = vector.shape_cast %319 : vector<128xf32> to vector<1x128xf32>
    %cst_156 = arith.constant 6.250000e-02 : f32
    %321 = vector.broadcast %cst_156 : f32 to vector<1x128xf32>
    %322 = arith.mulf %320, %321 : vector<1x128xf32>
    %323 = vector.broadcast %322 : vector<1x128xf32> to vector<16x128xf32>
    %324 = arith.subf %313, %323 : vector<16x128xf32>
    %325 = arith.mulf %324, %324 : vector<16x128xf32>
    %cst_157 = arith.constant dense<0.000000e+00> : vector<128xf32>
    %326 = vector.multi_reduction <add>, %325, %cst_157 [0] : vector<16x128xf32> to vector<128xf32>
    %327 = vector.shape_cast %326 : vector<128xf32> to vector<1x128xf32>
    %cst_158 = arith.constant 6.250000e-02 : f32
    %328 = vector.broadcast %cst_158 : f32 to vector<1x128xf32>
    %329 = arith.mulf %327, %328 : vector<1x128xf32>
    %cst_159 = arith.constant 9.99999974E-6 : f32
    %330 = vector.broadcast %cst_159 : f32 to vector<1x128xf32>
    %331 = arith.addf %329, %330 : vector<1x128xf32>
    %332 = math.rsqrt %331 : vector<1x128xf32>
    %333 = vector.broadcast %332 : vector<1x128xf32> to vector<16x128xf32>
    %334 = arith.mulf %324, %333 : vector<16x128xf32>
    %c0_160 = arith.constant 0 : index
    %c0_161 = arith.constant 0 : index
    %c0_162 = arith.constant 0 : index
    %335 = vector.load %arg27[%c0_160, %c0_161, %c0_162] : memref<1x128x8xf32, #tpu.memory_space<vmem>>, vector<1x128x8xf32>
    %336 = vector.shape_cast %335 : vector<1x128x8xf32> to vector<128x8xf32>
    %cst_163 = arith.constant dense<0.000000e+00> : vector<16x8xf32>
    %337 = tpu.matmul %334, %336, %cst_163 {dimension_numbers = #tpu.dot_dimension_numbers<[1], [0], [0], [1], [0, 0, 1, 1], [], []>} : vector<16x128xf32>, vector<128x8xf32>, vector<16x8xf32> -> vector<16x8xf32>
    %cst_164 = arith.constant dense<0.000000e+00> : vector<4xf32>
    %338 = vector.multi_reduction <add>, %3, %cst_164 [0] : vector<16x4xf32> to vector<4xf32>
    %339 = vector.shape_cast %338 : vector<4xf32> to vector<1x4xf32>
    %cst_165 = arith.constant 6.250000e-02 : f32
    %340 = vector.broadcast %cst_165 : f32 to vector<1x4xf32>
    %341 = arith.mulf %339, %340 : vector<1x4xf32>
    %342 = vector.broadcast %341 : vector<1x4xf32> to vector<16x4xf32>
    %343 = arith.subf %3, %342 : vector<16x4xf32>
    %344 = arith.mulf %343, %343 : vector<16x4xf32>
    %cst_166 = arith.constant dense<0.000000e+00> : vector<4xf32>
    %345 = vector.multi_reduction <add>, %344, %cst_166 [0] : vector<16x4xf32> to vector<4xf32>
    %346 = vector.shape_cast %345 : vector<4xf32> to vector<1x4xf32>
    %cst_167 = arith.constant 6.250000e-02 : f32
    %347 = vector.broadcast %cst_167 : f32 to vector<1x4xf32>
    %348 = arith.mulf %346, %347 : vector<1x4xf32>
    %cst_168 = arith.constant 9.99999974E-6 : f32
    %349 = vector.broadcast %cst_168 : f32 to vector<1x4xf32>
    %350 = arith.addf %348, %349 : vector<1x4xf32>
    %351 = math.rsqrt %350 : vector<1x4xf32>
    %352 = vector.broadcast %351 : vector<1x4xf32> to vector<16x4xf32>
    %353 = arith.mulf %343, %352 : vector<16x4xf32>
    %354 = vector.extract_strided_slice %318 {offsets = [0, 0], sizes = [4, 8], strides = [1, 1]} : vector<5x8xf32> to vector<4x8xf32>
    %cst_169 = arith.constant dense<0.000000e+00> : vector<16x8xf32>
    %355 = tpu.matmul %353, %354, %cst_169 {dimension_numbers = #tpu.dot_dimension_numbers<[1], [0], [0], [1], [0, 0, 1, 1], [], []>} : vector<16x4xf32>, vector<4x8xf32>, vector<16x8xf32> -> vector<16x8xf32>
    %356 = arith.addf %337, %355 : vector<16x8xf32>
    %357 = vector.extract_strided_slice %318 {offsets = [4, 0], sizes = [1, 8], strides = [1, 1]} : vector<5x8xf32> to vector<1x8xf32>
    %358 = vector.broadcast %357 : vector<1x8xf32> to vector<16x8xf32>
    %359 = arith.addf %356, %358 : vector<16x8xf32>
    %cst_170 = arith.constant 0.000000e+00 : f32
    %360 = vector.broadcast %cst_170 : f32 to vector<16x8xf32>
    %361 = arith.maximumf %359, %360 : vector<16x8xf32>
    %cst_171 = arith.constant dense<0.000000e+00> : vector<8xf32>
    %362 = vector.multi_reduction <add>, %361, %cst_171 [0] : vector<16x8xf32> to vector<8xf32>
    %363 = vector.shape_cast %362 : vector<8xf32> to vector<1x8xf32>
    %cst_172 = arith.constant 6.250000e-02 : f32
    %364 = vector.broadcast %cst_172 : f32 to vector<1x8xf32>
    %365 = arith.mulf %363, %364 : vector<1x8xf32>
    %366 = vector.broadcast %365 : vector<1x8xf32> to vector<16x8xf32>
    %367 = arith.subf %361, %366 : vector<16x8xf32>
    %368 = arith.mulf %367, %367 : vector<16x8xf32>
    %cst_173 = arith.constant dense<0.000000e+00> : vector<8xf32>
    %369 = vector.multi_reduction <add>, %368, %cst_173 [0] : vector<16x8xf32> to vector<8xf32>
    %370 = vector.shape_cast %369 : vector<8xf32> to vector<1x8xf32>
    %cst_174 = arith.constant 6.250000e-02 : f32
    %371 = vector.broadcast %cst_174 : f32 to vector<1x8xf32>
    %372 = arith.mulf %370, %371 : vector<1x8xf32>
    %cst_175 = arith.constant 9.99999974E-6 : f32
    %373 = vector.broadcast %cst_175 : f32 to vector<1x8xf32>
    %374 = arith.addf %372, %373 : vector<1x8xf32>
    %375 = math.rsqrt %374 : vector<1x8xf32>
    %376 = vector.broadcast %375 : vector<1x8xf32> to vector<16x8xf32>
    %377 = arith.mulf %367, %376 : vector<16x8xf32>
    %c0_176 = arith.constant 0 : index
    %c0_177 = arith.constant 0 : index
    %c0_178 = arith.constant 0 : index
    %378 = vector.load %arg29[%c0_176, %c0_177, %c0_178] : memref<1x8x1xf32, #tpu.memory_space<vmem>>, vector<1x8x1xf32>
    %379 = vector.shape_cast %378 : vector<1x8x1xf32> to vector<8x1xf32>
    %cst_179 = arith.constant dense<0.000000e+00> : vector<16x1xf32>
    %380 = tpu.matmul %377, %379, %cst_179 {dimension_numbers = #tpu.dot_dimension_numbers<[1], [0], [0], [1], [0, 0, 1, 1], [], []>} : vector<16x8xf32>, vector<8x1xf32>, vector<16x1xf32> -> vector<16x1xf32>
    %c0_180 = arith.constant 0 : index
    %c0_181 = arith.constant 0 : index
    %c0_182 = arith.constant 0 : index
    %381 = vector.load %arg31[%c0_180, %c0_181, %c0_182] : memref<1x16x1xf32, #tpu.memory_space<vmem>>, vector<1x16x1xf32>
    %382 = vector.shape_cast %381 : vector<1x16x1xf32> to vector<16x1xf32>
    %383 = vector.shape_cast %380 : vector<16x1xf32> to vector<1x16x1xf32>
    tpu.vector_store %arg31[%c0_180, %c0_181, %c0_182], %383 {strides = array<i32>} : memref<1x16x1xf32, #tpu.memory_space<vmem>>, vector<1x16x1xf32>,
    return
  }
  func.func @transform_0(%arg0: i32) -> (i32, i32, i32) {
    %c0_i32 = arith.constant 0 : i32
    %c0_i32_0 = arith.constant 0 : i32
    %c0_i32_1 = arith.constant 0 : i32
    return %arg0, %c0_i32, %c0_i32_0 : i32, i32, i32
  }
  func.func @transform_1(%arg0: i32) -> (i32, i32) {
    %c0_i32 = arith.constant 0 : i32
    %c0_i32_0 = arith.constant 0 : i32
    %c0_i32_1 = arith.constant 0 : i32
    return %c0_i32, %c0_i32_0 : i32, i32
  }
  func.func @transform_2(%arg0: i32) -> (i32, i32) {
    %c0_i32 = arith.constant 0 : i32
    %c0_i32_0 = arith.constant 0 : i32
    %c0_i32_1 = arith.constant 0 : i32
    return %c0_i32, %c0_i32_0 : i32, i32
  }
  func.func @transform_3(%arg0: i32) -> (i32, i32) {
    %c0_i32 = arith.constant 0 : i32
    %c0_i32_0 = arith.constant 0 : i32
    %c0_i32_1 = arith.constant 0 : i32
    return %c0_i32, %c0_i32_0 : i32, i32
  }
  func.func @transform_4(%arg0: i32) -> (i32, i32) {
    %c0_i32 = arith.constant 0 : i32
    %c0_i32_0 = arith.constant 0 : i32
    %c0_i32_1 = arith.constant 0 : i32
    return %c0_i32, %c0_i32_0 : i32, i32
  }
  func.func @transform_5(%arg0: i32) -> (i32, i32) {
    %c0_i32 = arith.constant 0 : i32
    %c0_i32_0 = arith.constant 0 : i32
    %c0_i32_1 = arith.constant 0 : i32
    return %c0_i32, %c0_i32_0 : i32, i32
  }
  func.func @transform_6(%arg0: i32) -> (i32, i32) {
    %c0_i32 = arith.constant 0 : i32
    %c0_i32_0 = arith.constant 0 : i32
    %c0_i32_1 = arith.constant 0 : i32
    return %c0_i32, %c0_i32_0 : i32, i32
  }
  func.func @transform_7(%arg0: i32) -> (i32, i32) {
    %c0_i32 = arith.constant 0 : i32
    %c0_i32_0 = arith.constant 0 : i32
    %c0_i32_1 = arith.constant 0 : i32
    return %c0_i32, %c0_i32_0 : i32, i32
  }
  func.func @transform_8(%arg0: i32) -> (i32, i32) {
    %c0_i32 = arith.constant 0 : i32
    %c0_i32_0 = arith.constant 0 : i32
    %c0_i32_1 = arith.constant 0 : i32
    return %c0_i32, %c0_i32_0 : i32, i32
  }
  func.func @transform_9(%arg0: i32) -> (i32, i32) {
    %c0_i32 = arith.constant 0 : i32
    %c0_i32_0 = arith.constant 0 : i32
    %c0_i32_1 = arith.constant 0 : i32
    return %c0_i32, %c0_i32_0 : i32, i32
  }
  func.func @transform_10(%arg0: i32) -> (i32, i32) {
    %c0_i32 = arith.constant 0 : i32
    %c0_i32_0 = arith.constant 0 : i32
    %c0_i32_1 = arith.constant 0 : i32
    return %c0_i32, %c0_i32_0 : i32, i32
  }
  func.func @transform_11(%arg0: i32) -> (i32, i32) {
    %c0_i32 = arith.constant 0 : i32
    %c0_i32_0 = arith.constant 0 : i32
    %c0_i32_1 = arith.constant 0 : i32
    return %c0_i32, %c0_i32_0 : i32, i32
  }
  func.func @transform_12(%arg0: i32) -> (i32, i32) {
    %c0_i32 = arith.constant 0 : i32
    %c0_i32_0 = arith.constant 0 : i32
    %c0_i32_1 = arith.constant 0 : i32
    return %c0_i32, %c0_i32_0 : i32, i32
  }
  func.func @transform_13(%arg0: i32) -> (i32, i32) {
    %c0_i32 = arith.constant 0 : i32
    %c0_i32_0 = arith.constant 0 : i32
    %c0_i32_1 = arith.constant 0 : i32
    return %c0_i32, %c0_i32_0 : i32, i32
  }
  func.func @transform_14(%arg0: i32) -> (i32, i32) {
    %c0_i32 = arith.constant 0 : i32
    %c0_i32_0 = arith.constant 0 : i32
    %c0_i32_1 = arith.constant 0 : i32
    return %c0_i32, %c0_i32_0 : i32, i32
  }
  func.func @transform_15(%arg0: i32) -> (i32, i32, i32) {
    %c0_i32 = arith.constant 0 : i32
    %c0_i32_0 = arith.constant 0 : i32
    %c0_i32_1 = arith.constant 0 : i32
    return %arg0, %c0_i32, %c0_i32_0 : i32, i32, i32
  }
  func.func @transform_16(%arg0: i32) -> (i32, i32, i32) {
    %c0_i32 = arith.constant 0 : i32
    %c0_i32_0 = arith.constant 0 : i32
    %c0_i32_1 = arith.constant 0 : i32
    return %arg0, %c0_i32, %c0_i32_0 : i32, i32, i32
  }
  func.func @transform_17(%arg0: i32) -> (i32, i32, i32) {
    %c0_i32 = arith.constant 0 : i32
    %c0_i32_0 = arith.constant 0 : i32
    %c0_i32_1 = arith.constant 0 : i32
    return %arg0, %c0_i32, %c0_i32_0 : i32, i32, i32
  }
  func.func @transform_18(%arg0: i32) -> (i32, i32, i32) {
    %c0_i32 = arith.constant 0 : i32
    %c0_i32_0 = arith.constant 0 : i32
    %c0_i32_1 = arith.constant 0 : i32
    return %arg0, %c0_i32, %c0_i32_0 : i32, i32, i32
  }
  func.func @transform_19(%arg0: i32) -> (i32, i32, i32) {
    %c0_i32 = arith.constant 0 : i32
    %c0_i32_0 = arith.constant 0 : i32
    %c0_i32_1 = arith.constant 0 : i32
    return %arg0, %c0_i32, %c0_i32_0 : i32, i32, i32
  }
  func.func @transform_20(%arg0: i32) -> (i32, i32, i32) {
    %c0_i32 = arith.constant 0 : i32
    %c0_i32_0 = arith.constant 0 : i32
    %c0_i32_1 = arith.constant 0 : i32
    return %arg0, %c0_i32, %c0_i32_0 : i32, i32, i32
  }
  func.func @transform_21(%arg0: i32) -> (i32, i32, i32) {
    %c0_i32 = arith.constant 0 : i32
    %c0_i32_0 = arith.constant 0 : i32
    %c0_i32_1 = arith.constant 0 : i32
    return %arg0, %c0_i32, %c0_i32_0 : i32, i32, i32
  }
  func.func @transform_22(%arg0: i32) -> (i32, i32, i32) {
    %c0_i32 = arith.constant 0 : i32
    %c0_i32_0 = arith.constant 0 : i32
    %c0_i32_1 = arith.constant 0 : i32
    return %arg0, %c0_i32, %c0_i32_0 : i32, i32, i32
  }
  func.func @transform_23(%arg0: i32) -> (i32, i32, i32) {
    %c0_i32 = arith.constant 0 : i32
    %c0_i32_0 = arith.constant 0 : i32
    %c0_i32_1 = arith.constant 0 : i32
    return %arg0, %c0_i32, %c0_i32_0 : i32, i32, i32
  }
  func.func @transform_24(%arg0: i32) -> (i32, i32, i32) {
    %c0_i32 = arith.constant 0 : i32
    %c0_i32_0 = arith.constant 0 : i32
    %c0_i32_1 = arith.constant 0 : i32
    return %arg0, %c0_i32, %c0_i32_0 : i32, i32, i32
  }
  func.func @transform_25(%arg0: i32) -> (i32, i32, i32) {
    %c0_i32 = arith.constant 0 : i32
    %c0_i32_0 = arith.constant 0 : i32
    %c0_i32_1 = arith.constant 0 : i32
    return %arg0, %c0_i32, %c0_i32_0 : i32, i32, i32
  }
  func.func @transform_26(%arg0: i32) -> (i32, i32, i32) {
    %c0_i32 = arith.constant 0 : i32
    %c0_i32_0 = arith.constant 0 : i32
    %c0_i32_1 = arith.constant 0 : i32
    return %arg0, %c0_i32, %c0_i32_0 : i32, i32, i32
  }
  func.func @transform_27(%arg0: i32) -> (i32, i32, i32) {
    %c0_i32 = arith.constant 0 : i32
    %c0_i32_0 = arith.constant 0 : i32
    %c0_i32_1 = arith.constant 0 : i32
    return %arg0, %c0_i32, %c0_i32_0 : i32, i32, i32
  }
  func.func @transform_28(%arg0: i32) -> (i32, i32, i32) {
    %c0_i32 = arith.constant 0 : i32
    %c0_i32_0 = arith.constant 0 : i32
    %c0_i32_1 = arith.constant 0 : i32
    return %arg0, %c0_i32, %c0_i32_0 : i32, i32, i32
  }
  func.func @transform_29(%arg0: i32) -> (i32, i32, i32) {
    %c0_i32 = arith.constant 0 : i32
    %c0_i32_0 = arith.constant 0 : i32
    %c0_i32_1 = arith.constant 0 : i32
    return %arg0, %c0_i32, %c0_i32_0 : i32, i32, i32
  }
  func.func @transform_30(%arg0: i32) -> (i32, i32, i32) {
    %c0_i32 = arith.constant 0 : i32
    %c0_i32_0 = arith.constant 0 : i32
    %c0_i32_1 = arith.constant 0 : i32
    return %arg0, %c0_i32, %c0_i32_0 : i32, i32, i32
  }
}

</mosaic_0001>

<llo_original>
// kernel: attention_net_forward.1
$region0: #{attention_net_forward.1}
  #allocation0 [shape = 'u32[]', space=smem, size = 0x4, offset = 0x4, fixed_abs, tag = 'smem constant byte address 0x4 - core index']
  #allocation1 [shape = 'u32[144,128]{1,0:T(1,128)}', space=vmem, size = 0x12000, scoped, tag = 'internal scratch']
  %s0 = inlined_call_operand.smem [shape: u32[31], index: -1, kind: input, shape index: {}]
  %s1 = sld [smem:[%s0]]
  %s2 = scalar_lea.smem %s0, 1
  %s3 = sld [smem:[%s2]]
  %s4 = scalar_lea.smem %s0, 2
  %s5 = sld [smem:[%s4]]
  %s6 = scalar_lea.smem %s0, 3
  %s7 = sld [smem:[%s6]]
  %s8 = scalar_lea.smem %s0, 4
  %s9 = sld [smem:[%s8]]
  %s10 = scalar_lea.smem %s0, 5
  %s11 = sld [smem:[%s10]]
  %s12 = scalar_lea.smem %s0, 6
  %s13 = sld [smem:[%s12]]
  %s14 = scalar_lea.smem %s0, 7
  %s15 = sld [smem:[%s14]]
  %s16 = scalar_lea.smem %s0, 8
  %s17 = sld [smem:[%s16]]
  %s18 = scalar_lea.smem %s0, 9
  %s19 = sld [smem:[%s18]]
  %s20 = scalar_lea.smem %s0, 10
  %s21 = sld [smem:[%s20]]
  %s22 = scalar_lea.smem %s0, 11
  %s23 = sld [smem:[%s22]]
  %s24 = scalar_lea.smem %s0, 12
  %s25 = sld [smem:[%s24]]
  %s26 = scalar_lea.smem %s0, 13
  %s27 = sld [smem:[%s26]]
  %s28 = scalar_lea.smem %s0, 14
  %s29 = sld [smem:[%s28]]
  %s30 = scalar_lea.smem %s0, 15
  %s31 = sld [smem:[%s30]]
  %s32 = scalar_lea.smem %s0, 16
  %s33 = sld [smem:[%s32]]
  %s34 = scalar_lea.smem %s0, 17
  %s35 = sld [smem:[%s34]]
  %s36 = scalar_lea.smem %s0, 18
  %s37 = sld [smem:[%s36]]
  %s38 = scalar_lea.smem %s0, 19
  %s39 = sld [smem:[%s38]]
  %s40 = scalar_lea.smem %s0, 20
  %s41 = sld [smem:[%s40]]
  %s42 = scalar_lea.smem %s0, 21
  %s43 = sld [smem:[%s42]]
  %s44 = scalar_lea.smem %s0, 22
  %s45 = sld [smem:[%s44]]
  %s46 = scalar_lea.smem %s0, 23
  %s47 = sld [smem:[%s46]]
  %s48 = scalar_lea.smem %s0, 24
  %s49 = sld [smem:[%s48]]
  %s50 = scalar_lea.smem %s0, 25
  %s51 = sld [smem:[%s50]]
  %s52 = scalar_lea.smem %s0, 26
  %s53 = sld [smem:[%s52]]
  %s54 = scalar_lea.smem %s0, 27
  %s55 = sld [smem:[%s54]]
  %s56 = scalar_lea.smem %s0, 28
  %s57 = sld [smem:[%s56]]
  %s58 = scalar_lea.smem %s0, 29
  %s59 = sld [smem:[%s58]]
  %s60 = scalar_lea.smem %s0, 30
  %s61 = sld [smem:[%s60]]
  %62 = xla_tuple %s59, %s61
  %s63 = sld [smem:[#allocation0]]
  $region157: #{attention_net_forward.1} parent=0
    _
  %s65 = ssub.s32 1, %s63
  %s66 = scalar_select 0, %s65, %s63
  loop: start=0, step=1, limit=4
  $region2: #{attention_net_forward.1} parent=0 // loop_pre_header
    _
  $region3: #{attention_net_forward.1} parent=0 // loop_header
    %s68 = sphi 0, %s72
    %p69 = scmp.ge.s32.totalorder %s68, 4
    %s78 = sphi 0, %s80
    %s81 = sphi 0, %s78
    %s82 = sphi 0, %s81
    %s98 = sphi 0, %s82
    %s102 = sphi 0, %s102
    %s104 = sphi 0, %s102
    %s105 = sphi 0, %s104
    %s119 = sphi 0, %s105
    %s123 = sphi 0, %s123
    %s125 = sphi 0, %s123
    %s126 = sphi 0, %s125
    %s140 = sphi 0, %s126
    %s144 = sphi 0, %s144
    %s146 = sphi 0, %s144
    %s147 = sphi 0, %s146
    %s161 = sphi 0, %s147
    %s165 = sphi 0, %s165
    %s167 = sphi 0, %s165
    %s168 = sphi 0, %s167
    %s182 = sphi 0, %s168
    %s186 = sphi 0, %s186
    %s188 = sphi 0, %s186
    %s189 = sphi 0, %s188
    %s203 = sphi 0, %s189
    %s207 = sphi 0, %s207
    %s209 = sphi 0, %s207
    %s210 = sphi 0, %s209
    %s224 = sphi 0, %s210
    %s228 = sphi 0, %s228
    %s230 = sphi 0, %s228
    %s231 = sphi 0, %s230
    %s245 = sphi 0, %s231
    %s249 = sphi 0, %s249
    %s251 = sphi 0, %s249
    %s252 = sphi 0, %s251
    %s266 = sphi 0, %s252
    %s270 = sphi 0, %s270
    %s272 = sphi 0, %s270
    %s273 = sphi 0, %s272
    %s287 = sphi 0, %s273
    %s291 = sphi 0, %s291
    %s293 = sphi 0, %s291
    %s294 = sphi 0, %s293
    %s308 = sphi 0, %s294
    %s312 = sphi 0, %s312
    %s314 = sphi 0, %s312
    %s315 = sphi 0, %s314
    %s329 = sphi 0, %s315
    %s333 = sphi 0, %s333
    %s335 = sphi 0, %s333
    %s336 = sphi 0, %s335
    %s350 = sphi 0, %s336
    %s354 = sphi 0, %s354
    %s356 = sphi 0, %s354
    %s357 = sphi 0, %s356
    %s371 = sphi 0, %s357
    %s375 = sphi 0, %s375
    %s377 = sphi 0, %s375
    %s378 = sphi 0, %s377
    %s392 = sphi 0, %s378
    %s398 = sphi 0, %s400
    %s401 = sphi 0, %s398
    %s402 = sphi 0, %s401
    %s418 = sphi 0, %s402
    %s424 = sphi 0, %s426
    %s427 = sphi 0, %s424
    %s428 = sphi 0, %s427
    %s444 = sphi 0, %s428
    %s450 = sphi 0, %s452
    %s453 = sphi 0, %s450
    %s454 = sphi 0, %s453
    %s470 = sphi 0, %s454
    %s476 = sphi 0, %s478
    %s479 = sphi 0, %s476
    %s480 = sphi 0, %s479
    %s496 = sphi 0, %s480
    %s502 = sphi 0, %s504
    %s505 = sphi 0, %s502
    %s506 = sphi 0, %s505
    %s522 = sphi 0, %s506
    %s528 = sphi 0, %s530
    %s531 = sphi 0, %s528
    %s532 = sphi 0, %s531
    %s548 = sphi 0, %s532
    %s554 = sphi 0, %s556
    %s557 = sphi 0, %s554
    %s558 = sphi 0, %s557
    %s574 = sphi 0, %s558
    %s580 = sphi 0, %s582
    %s583 = sphi 0, %s580
    %s584 = sphi 0, %s583
    %s600 = sphi 0, %s584
    %s606 = sphi 0, %s608
    %s609 = sphi 0, %s606
    %s610 = sphi 0, %s609
    %s626 = sphi 0, %s610
    %s632 = sphi 0, %s634
    %s635 = sphi 0, %s632
    %s636 = sphi 0, %s635
    %s652 = sphi 0, %s636
    %s658 = sphi 0, %s660
    %s661 = sphi 0, %s658
    %s662 = sphi 0, %s661
    %s678 = sphi 0, %s662
    %s684 = sphi 0, %s686
    %s687 = sphi 0, %s684
    %s688 = sphi 0, %s687
    %s704 = sphi 0, %s688
    %s710 = sphi 0, %s712
    %s713 = sphi 0, %s710
    %s714 = sphi 0, %s713
    %s730 = sphi 0, %s714
    %s736 = sphi 0, %s738
    %s739 = sphi 0, %s736
    %s740 = sphi 0, %s739
    %s756 = sphi 0, %s740
    %s762 = sphi 0, %s764
    %s765 = sphi 0, %s762
    %s766 = sphi 0, %s765
    %s782 = sphi 0, %s766
    %s788 = sphi 0, %s790
    %s791 = sphi 0, %s788
    %s792 = sphi 0, %s791
    %s808 = sphi 0, %s792
  $region4: #{attention_net_forward.1} parent=0 // loop_header_branch
    %71 = sbr.rel (%p69) target = $region8
  $region5: #{attention_net_forward.1} parent=0 // loop_body
    %s73 = ssub.s32 %s68, 1
    %s74 = ssub.s32 %s68, 2
    %s75 = sadd.s32 %s68, 1
    %s76 = ssub.s32 %s68, %s75
    %p77 = scmp.eq.s32.totalorder %s76, 0
    %s79 = sadd.s32 %s78, 1
    %s80 = scalar_select %p77, %s78, %s79
    %p83 = pneg %p77
    %p84 = scmp.eq.s32.totalorder %s68, 1
    %p85 = por %p83, %p84
    %p86 = scmp.ne.s32.totalorder %s78, %s81
    %p87 = scmp.eq.s32.totalorder %s68, 0
    %p88 = por %p86, %p87
    %p89 = scmp.ne.s32.totalorder %s78, %s81
    %p90 = scmp.eq.s32.totalorder %s73, 1
    %p91 = por %p89, %p90
    %p92 = scmp.ne.s32.totalorder %s81, %s82
    %p93 = scmp.eq.s32.totalorder %s73, 0
    %p94 = por %p92, %p93
    %p95 = scmp.ne.s32.totalorder %s81, %s82
    %p96 = scmp.eq.s32.totalorder %s74, 1
    %p97 = por %p95, %p96
    %p99 = scmp.ne.s32.totalorder %s82, %s98
    %p100 = scmp.eq.s32.totalorder %s74, 0
    %p101 = por %p99, %p100
    %s103 = sadd.s32 %s102, 1
    %p106 = scmp.eq.s32.totalorder %s68, 1
    %p107 = scmp.ne.s32.totalorder %s102, %s104
    %p108 = scmp.eq.s32.totalorder %s68, 0
    %p109 = por %p107, %p108
    %p110 = scmp.ne.s32.totalorder %s102, %s104
    %p111 = scmp.eq.s32.totalorder %s73, 1
    %p112 = por %p110, %p111
    %p113 = scmp.ne.s32.totalorder %s104, %s105
    %p114 = scmp.eq.s32.totalorder %s73, 0
    %p115 = por %p113, %p114
    %p116 = scmp.ne.s32.totalorder %s104, %s105
    %p117 = scmp.eq.s32.totalorder %s74, 1
    %p118 = por %p116, %p117
    %p120 = scmp.ne.s32.totalorder %s105, %s119
    %p121 = scmp.eq.s32.totalorder %s74, 0
    %p122 = por %p120, %p121
    %s124 = sadd.s32 %s123, 1
    %p127 = scmp.eq.s32.totalorder %s68, 1
    %p128 = scmp.ne.s32.totalorder %s123, %s125
    %p129 = scmp.eq.s32.totalorder %s68, 0
    %p130 = por %p128, %p129
    %p131 = scmp.ne.s32.totalorder %s123, %s125
    %p132 = scmp.eq.s32.totalorder %s73, 1
    %p133 = por %p131, %p132
    %p134 = scmp.ne.s32.totalorder %s125, %s126
    %p135 = scmp.eq.s32.totalorder %s73, 0
    %p136 = por %p134, %p135
    %p137 = scmp.ne.s32.totalorder %s125, %s126
    %p138 = scmp.eq.s32.totalorder %s74, 1
    %p139 = por %p137, %p138
    %p141 = scmp.ne.s32.totalorder %s126, %s140
    %p142 = scmp.eq.s32.totalorder %s74, 0
    %p143 = por %p141, %p142
    %s145 = sadd.s32 %s144, 1
    %p148 = scmp.eq.s32.totalorder %s68, 1
    %p149 = scmp.ne.s32.totalorder %s144, %s146
    %p150 = scmp.eq.s32.totalorder %s68, 0
    %p151 = por %p149, %p150
    %p152 = scmp.ne.s32.totalorder %s144, %s146
    %p153 = scmp.eq.s32.totalorder %s73, 1
    %p154 = por %p152, %p153
    %p155 = scmp.ne.s32.totalorder %s146, %s147
    %p156 = scmp.eq.s32.totalorder %s73, 0
    %p157 = por %p155, %p156
    %p158 = scmp.ne.s32.totalorder %s146, %s147
    %p159 = scmp.eq.s32.totalorder %s74, 1
    %p160 = por %p158, %p159
    %p162 = scmp.ne.s32.totalorder %s147, %s161
    %p163 = scmp.eq.s32.totalorder %s74, 0
    %p164 = por %p162, %p163
    %s166 = sadd.s32 %s165, 1
    %p169 = scmp.eq.s32.totalorder %s68, 1
    %p170 = scmp.ne.s32.totalorder %s165, %s167
    %p171 = scmp.eq.s32.totalorder %s68, 0
    %p172 = por %p170, %p171
    %p173 = scmp.ne.s32.totalorder %s165, %s167
    %p174 = scmp.eq.s32.totalorder %s73, 1
    %p175 = por %p173, %p174
    %p176 = scmp.ne.s32.totalorder %s167, %s168
    %p177 = scmp.eq.s32.totalorder %s73, 0
    %p178 = por %p176, %p177
    %p179 = scmp.ne.s32.totalorder %s167, %s168
    %p180 = scmp.eq.s32.totalorder %s74, 1
    %p181 = por %p179, %p180
    %p183 = scmp.ne.s32.totalorder %s168, %s182
    %p184 = scmp.eq.s32.totalorder %s74, 0
    %p185 = por %p183, %p184
    %s187 = sadd.s32 %s186, 1
    %p190 = scmp.eq.s32.totalorder %s68, 1
    %p191 = scmp.ne.s32.totalorder %s186, %s188
    %p192 = scmp.eq.s32.totalorder %s68, 0
    %p193 = por %p191, %p192
    %p194 = scmp.ne.s32.totalorder %s186, %s188
    %p195 = scmp.eq.s32.totalorder %s73, 1
    %p196 = por %p194, %p195
    %p197 = scmp.ne.s32.totalorder %s188, %s189
    %p198 = scmp.eq.s32.totalorder %s73, 0
    %p199 = por %p197, %p198
    %p200 = scmp.ne.s32.totalorder %s188, %s189
    %p201 = scmp.eq.s32.totalorder %s74, 1
    %p202 = por %p200, %p201
    %p204 = scmp.ne.s32.totalorder %s189, %s203
    %p205 = scmp.eq.s32.totalorder %s74, 0
    %p206 = por %p204, %p205
    %s208 = sadd.s32 %s207, 1
    %p211 = scmp.eq.s32.totalorder %s68, 1
    %p212 = scmp.ne.s32.totalorder %s207, %s209
    %p213 = scmp.eq.s32.totalorder %s68, 0
    %p214 = por %p212, %p213
    %p215 = scmp.ne.s32.totalorder %s207, %s209
    %p216 = scmp.eq.s32.totalorder %s73, 1
    %p217 = por %p215, %p216
    %p218 = scmp.ne.s32.totalorder %s209, %s210
    %p219 = scmp.eq.s32.totalorder %s73, 0
    %p220 = por %p218, %p219
    %p221 = scmp.ne.s32.totalorder %s209, %s210
    %p222 = scmp.eq.s32.totalorder %s74, 1
    %p223 = por %p221, %p222
    %p225 = scmp.ne.s32.totalorder %s210, %s224
    %p226 = scmp.eq.s32.totalorder %s74, 0
    %p227 = por %p225, %p226
    %s229 = sadd.s32 %s228, 1
    %p232 = scmp.eq.s32.totalorder %s68, 1
    %p233 = scmp.ne.s32.totalorder %s228, %s230
    %p234 = scmp.eq.s32.totalorder %s68, 0
    %p235 = por %p233, %p234
    %p236 = scmp.ne.s32.totalorder %s228, %s230
    %p237 = scmp.eq.s32.totalorder %s73, 1
    %p238 = por %p236, %p237
    %p239 = scmp.ne.s32.totalorder %s230, %s231
    %p240 = scmp.eq.s32.totalorder %s73, 0
    %p241 = por %p239, %p240
    %p242 = scmp.ne.s32.totalorder %s230, %s231
    %p243 = scmp.eq.s32.totalorder %s74, 1
    %p244 = por %p242, %p243
    %p246 = scmp.ne.s32.totalorder %s231, %s245
    %p247 = scmp.eq.s32.totalorder %s74, 0
    %p248 = por %p246, %p247
    %s250 = sadd.s32 %s249, 1
    %p253 = scmp.eq.s32.totalorder %s68, 1
    %p254 = scmp.ne.s32.totalorder %s249, %s251
    %p255 = scmp.eq.s32.totalorder %s68, 0
    %p256 = por %p254, %p255
    %p257 = scmp.ne.s32.totalorder %s249, %s251
    %p258 = scmp.eq.s32.totalorder %s73, 1
    %p259 = por %p257, %p258
    %p260 = scmp.ne.s32.totalorder %s251, %s252
    %p261 = scmp.eq.s32.totalorder %s73, 0
    %p262 = por %p260, %p261
    %p263 = scmp.ne.s32.totalorder %s251, %s252
    %p264 = scmp.eq.s32.totalorder %s74, 1
    %p265 = por %p263, %p264
    %p267 = scmp.ne.s32.totalorder %s252, %s266
    %p268 = scmp.eq.s32.totalorder %s74, 0
    %p269 = por %p267, %p268
    %s271 = sadd.s32 %s270, 1
    %p274 = scmp.eq.s32.totalorder %s68, 1
    %p275 = scmp.ne.s32.totalorder %s270, %s272
    %p276 = scmp.eq.s32.totalorder %s68, 0
    %p277 = por %p275, %p276
    %p278 = scmp.ne.s32.totalorder %s270, %s272
    %p279 = scmp.eq.s32.totalorder %s73, 1
    %p280 = por %p278, %p279
    %p281 = scmp.ne.s32.totalorder %s272, %s273
    %p282 = scmp.eq.s32.totalorder %s73, 0
    %p283 = por %p281, %p282
    %p284 = scmp.ne.s32.totalorder %s272, %s273
    %p285 = scmp.eq.s32.totalorder %s74, 1
    %p286 = por %p284, %p285
    %p288 = scmp.ne.s32.totalorder %s273, %s287
    %p289 = scmp.eq.s32.totalorder %s74, 0
    %p290 = por %p288, %p289
    %s292 = sadd.s32 %s291, 1
    %p295 = scmp.eq.s32.totalorder %s68, 1
    %p296 = scmp.ne.s32.totalorder %s291, %s293
    %p297 = scmp.eq.s32.totalorder %s68, 0
    %p298 = por %p296, %p297
    %p299 = scmp.ne.s32.totalorder %s291, %s293
    %p300 = scmp.eq.s32.totalorder %s73, 1
    %p301 = por %p299, %p300
    %p302 = scmp.ne.s32.totalorder %s293, %s294
    %p303 = scmp.eq.s32.totalorder %s73, 0
    %p304 = por %p302, %p303
    %p305 = scmp.ne.s32.totalorder %s293, %s294
    %p306 = scmp.eq.s32.totalorder %s74, 1
    %p307 = por %p305, %p306
    %p309 = scmp.ne.s32.totalorder %s294, %s308
    %p310 = scmp.eq.s32.totalorder %s74, 0
    %p311 = por %p309, %p310
    %s313 = sadd.s32 %s312, 1
    %p316 = scmp.eq.s32.totalorder %s68, 1
    %p317 = scmp.ne.s32.totalorder %s312, %s314
    %p318 = scmp.eq.s32.totalorder %s68, 0
    %p319 = por %p317, %p318
    %p320 = scmp.ne.s32.totalorder %s312, %s314
    %p321 = scmp.eq.s32.totalorder %s73, 1
    %p322 = por %p320, %p321
    %p323 = scmp.ne.s32.totalorder %s314, %s315
    %p324 = scmp.eq.s32.totalorder %s73, 0
    %p325 = por %p323, %p324
    %p326 = scmp.ne.s32.totalorder %s314, %s315
    %p327 = scmp.eq.s32.totalorder %s74, 1
    %p328 = por %p326, %p327
    %p330 = scmp.ne.s32.totalorder %s315, %s329
    %p331 = scmp.eq.s32.totalorder %s74, 0
    %p332 = por %p330, %p331
    %s334 = sadd.s32 %s333, 1
    %p337 = scmp.eq.s32.totalorder %s68, 1
    %p338 = scmp.ne.s32.totalorder %s333, %s335
    %p339 = scmp.eq.s32.totalorder %s68, 0
    %p340 = por %p338, %p339
    %p341 = scmp.ne.s32.totalorder %s333, %s335
    %p342 = scmp.eq.s32.totalorder %s73, 1
    %p343 = por %p341, %p342
    %p344 = scmp.ne.s32.totalorder %s335, %s336
    %p345 = scmp.eq.s32.totalorder %s73, 0
    %p346 = por %p344, %p345
    %p347 = scmp.ne.s32.totalorder %s335, %s336
    %p348 = scmp.eq.s32.totalorder %s74, 1
    %p349 = por %p347, %p348
    %p351 = scmp.ne.s32.totalorder %s336, %s350
    %p352 = scmp.eq.s32.totalorder %s74, 0
    %p353 = por %p351, %p352
    %s355 = sadd.s32 %s354, 1
    %p358 = scmp.eq.s32.totalorder %s68, 1
    %p359 = scmp.ne.s32.totalorder %s354, %s356
    %p360 = scmp.eq.s32.totalorder %s68, 0
    %p361 = por %p359, %p360
    %p362 = scmp.ne.s32.totalorder %s354, %s356
    %p363 = scmp.eq.s32.totalorder %s73, 1
    %p364 = por %p362, %p363
    %p365 = scmp.ne.s32.totalorder %s356, %s357
    %p366 = scmp.eq.s32.totalorder %s73, 0
    %p367 = por %p365, %p366
    %p368 = scmp.ne.s32.totalorder %s356, %s357
    %p369 = scmp.eq.s32.totalorder %s74, 1
    %p370 = por %p368, %p369
    %p372 = scmp.ne.s32.totalorder %s357, %s371
    %p373 = scmp.eq.s32.totalorder %s74, 0
    %p374 = por %p372, %p373
    %s376 = sadd.s32 %s375, 1
    %p379 = scmp.eq.s32.totalorder %s68, 1
    %p380 = scmp.ne.s32.totalorder %s375, %s377
    %p381 = scmp.eq.s32.totalorder %s68, 0
    %p382 = por %p380, %p381
    %p383 = scmp.ne.s32.totalorder %s375, %s377
    %p384 = scmp.eq.s32.totalorder %s73, 1
    %p385 = por %p383, %p384
    %p386 = scmp.ne.s32.totalorder %s377, %s378
    %p387 = scmp.eq.s32.totalorder %s73, 0
    %p388 = por %p386, %p387
    %p389 = scmp.ne.s32.totalorder %s377, %s378
    %p390 = scmp.eq.s32.totalorder %s74, 1
    %p391 = por %p389, %p390
    %p393 = scmp.ne.s32.totalorder %s378, %s392
    %p394 = scmp.eq.s32.totalorder %s74, 0
    %p395 = por %p393, %p394
    %s396 = ssub.s32 %s68, %s75
    %p397 = scmp.eq.s32.totalorder %s396, 0
    %s399 = sadd.s32 %s398, 1
    %s400 = scalar_select %p397, %s398, %s399
    %p403 = pneg %p397
    %p404 = scmp.eq.s32.totalorder %s68, 1
    %p405 = por %p403, %p404
    %p406 = scmp.ne.s32.totalorder %s398, %s401
    %p407 = scmp.eq.s32.totalorder %s68, 0
    %p408 = por %p406, %p407
    %p409 = scmp.ne.s32.totalorder %s398, %s401
    %p410 = scmp.eq.s32.totalorder %s73, 1
    %p411 = por %p409, %p410
    %p412 = scmp.ne.s32.totalorder %s401, %s402
    %p413 = scmp.eq.s32.totalorder %s73, 0
    %p414 = por %p412, %p413
    %p415 = scmp.ne.s32.totalorder %s401, %s402
    %p416 = scmp.eq.s32.totalorder %s74, 1
    %p417 = por %p415, %p416
    %p419 = scmp.ne.s32.totalorder %s402, %s418
    %p420 = scmp.eq.s32.totalorder %s74, 0
    %p421 = por %p419, %p420
    %s422 = ssub.s32 %s68, %s75
    %p423 = scmp.eq.s32.totalorder %s422, 0
    %s425 = sadd.s32 %s424, 1
    %s426 = scalar_select %p423, %s424, %s425
    %p429 = pneg %p423
    %p430 = scmp.eq.s32.totalorder %s68, 1
    %p431 = por %p429, %p430
    %p432 = scmp.ne.s32.totalorder %s424, %s427
    %p433 = scmp.eq.s32.totalorder %s68, 0
    %p434 = por %p432, %p433
    %p435 = scmp.ne.s32.totalorder %s424, %s427
    %p436 = scmp.eq.s32.totalorder %s73, 1
    %p437 = por %p435, %p436
    %p438 = scmp.ne.s32.totalorder %s427, %s428
    %p439 = scmp.eq.s32.totalorder %s73, 0
    %p440 = por %p438, %p439
    %p441 = scmp.ne.s32.totalorder %s427, %s428
    %p442 = scmp.eq.s32.totalorder %s74, 1
    %p443 = por %p441, %p442
    %p445 = scmp.ne.s32.totalorder %s428, %s444
    %p446 = scmp.eq.s32.totalorder %s74, 0
    %p447 = por %p445, %p446
    %s448 = ssub.s32 %s68, %s75
    %p449 = scmp.eq.s32.totalorder %s448, 0
    %s451 = sadd.s32 %s450, 1
    %s452 = scalar_select %p449, %s450, %s451
    %p455 = pneg %p449
    %p456 = scmp.eq.s32.totalorder %s68, 1
    %p457 = por %p455, %p456
    %p458 = scmp.ne.s32.totalorder %s450, %s453
    %p459 = scmp.eq.s32.totalorder %s68, 0
    %p460 = por %p458, %p459
    %p461 = scmp.ne.s32.totalorder %s450, %s453
    %p462 = scmp.eq.s32.totalorder %s73, 1
    %p463 = por %p461, %p462
    %p464 = scmp.ne.s32.totalorder %s453, %s454
    %p465 = scmp.eq.s32.totalorder %s73, 0
    %p466 = por %p464, %p465
    %p467 = scmp.ne.s32.totalorder %s453, %s454
    %p468 = scmp.eq.s32.totalorder %s74, 1
    %p469 = por %p467, %p468
    %p471 = scmp.ne.s32.totalorder %s454, %s470
    %p472 = scmp.eq.s32.totalorder %s74, 0
    %p473 = por %p471, %p472
    %s474 = ssub.s32 %s68, %s75
    %p475 = scmp.eq.s32.totalorder %s474, 0
    %s477 = sadd.s32 %s476, 1
    %s478 = scalar_select %p475, %s476, %s477
    %p481 = pneg %p475
    %p482 = scmp.eq.s32.totalorder %s68, 1
    %p483 = por %p481, %p482
    %p484 = scmp.ne.s32.totalorder %s476, %s479
    %p485 = scmp.eq.s32.totalorder %s68, 0
    %p486 = por %p484, %p485
    %p487 = scmp.ne.s32.totalorder %s476, %s479
    %p488 = scmp.eq.s32.totalorder %s73, 1
    %p489 = por %p487, %p488
    %p490 = scmp.ne.s32.totalorder %s479, %s480
    %p491 = scmp.eq.s32.totalorder %s73, 0
    %p492 = por %p490, %p491
    %p493 = scmp.ne.s32.totalorder %s479, %s480
    %p494 = scmp.eq.s32.totalorder %s74, 1
    %p495 = por %p493, %p494
    %p497 = scmp.ne.s32.totalorder %s480, %s496
    %p498 = scmp.eq.s32.totalorder %s74, 0
    %p499 = por %p497, %p498
    %s500 = ssub.s32 %s68, %s75
    %p501 = scmp.eq.s32.totalorder %s500, 0
    %s503 = sadd.s32 %s502, 1
    %s504 = scalar_select %p501, %s502, %s503
    %p507 = pneg %p501
    %p508 = scmp.eq.s32.totalorder %s68, 1
    %p509 = por %p507, %p508
    %p510 = scmp.ne.s32.totalorder %s502, %s505
    %p511 = scmp.eq.s32.totalorder %s68, 0
    %p512 = por %p510, %p511
    %p513 = scmp.ne.s32.totalorder %s502, %s505
    %p514 = scmp.eq.s32.totalorder %s73, 1
    %p515 = por %p513, %p514
    %p516 = scmp.ne.s32.totalorder %s505, %s506
    %p517 = scmp.eq.s32.totalorder %s73, 0
    %p518 = por %p516, %p517
    %p519 = scmp.ne.s32.totalorder %s505, %s506
    %p520 = scmp.eq.s32.totalorder %s74, 1
    %p521 = por %p519, %p520
    %p523 = scmp.ne.s32.totalorder %s506, %s522
    %p524 = scmp.eq.s32.totalorder %s74, 0
    %p525 = por %p523, %p524
    %s526 = ssub.s32 %s68, %s75
    %p527 = scmp.eq.s32.totalorder %s526, 0
    %s529 = sadd.s32 %s528, 1
    %s530 = scalar_select %p527, %s528, %s529
    %p533 = pneg %p527
    %p534 = scmp.eq.s32.totalorder %s68, 1
    %p535 = por %p533, %p534
    %p536 = scmp.ne.s32.totalorder %s528, %s531
    %p537 = scmp.eq.s32.totalorder %s68, 0
    %p538 = por %p536, %p537
    %p539 = scmp.ne.s32.totalorder %s528, %s531
    %p540 = scmp.eq.s32.totalorder %s73, 1
    %p541 = por %p539, %p540
    %p542 = scmp.ne.s32.totalorder %s531, %s532
    %p543 = scmp.eq.s32.totalorder %s73, 0
    %p544 = por %p542, %p543
    %p545 = scmp.ne.s32.totalorder %s531, %s532
    %p546 = scmp.eq.s32.totalorder %s74, 1
    %p547 = por %p545, %p546
    %p549 = scmp.ne.s32.totalorder %s532, %s548
    %p550 = scmp.eq.s32.totalorder %s74, 0
    %p551 = por %p549, %p550
    %s552 = ssub.s32 %s68, %s75
    %p553 = scmp.eq.s32.totalorder %s552, 0
    %s555 = sadd.s32 %s554, 1
    %s556 = scalar_select %p553, %s554, %s555
    %p559 = pneg %p553
    %p560 = scmp.eq.s32.totalorder %s68, 1
    %p561 = por %p559, %p560
    %p562 = scmp.ne.s32.totalorder %s554, %s557
    %p563 = scmp.eq.s32.totalorder %s68, 0
    %p564 = por %p562, %p563
    %p565 = scmp.ne.s32.totalorder %s554, %s557
    %p566 = scmp.eq.s32.totalorder %s73, 1
    %p567 = por %p565, %p566
    %p568 = scmp.ne.s32.totalorder %s557, %s558
    %p569 = scmp.eq.s32.totalorder %s73, 0
    %p570 = por %p568, %p569
    %p571 = scmp.ne.s32.totalorder %s557, %s558
    %p572 = scmp.eq.s32.totalorder %s74, 1
    %p573 = por %p571, %p572
    %p575 = scmp.ne.s32.totalorder %s558, %s574
    %p576 = scmp.eq.s32.totalorder %s74, 0
    %p577 = por %p575, %p576
    %s578 = ssub.s32 %s68, %s75
    %p579 = scmp.eq.s32.totalorder %s578, 0
    %s581 = sadd.s32 %s580, 1
    %s582 = scalar_select %p579, %s580, %s581
    %p585 = pneg %p579
    %p586 = scmp.eq.s32.totalorder %s68, 1
    %p587 = por %p585, %p586
    %p588 = scmp.ne.s32.totalorder %s580, %s583
    %p589 = scmp.eq.s32.totalorder %s68, 0
    %p590 = por %p588, %p589
    %p591 = scmp.ne.s32.totalorder %s580, %s583
    %p592 = scmp.eq.s32.totalorder %s73, 1
    %p593 = por %p591, %p592
    %p594 = scmp.ne.s32.totalorder %s583, %s584
    %p595 = scmp.eq.s32.totalorder %s73, 0
    %p596 = por %p594, %p595
    %p597 = scmp.ne.s32.totalorder %s583, %s584
    %p598 = scmp.eq.s32.totalorder %s74, 1
    %p599 = por %p597, %p598
    %p601 = scmp.ne.s32.totalorder %s584, %s600
    %p602 = scmp.eq.s32.totalorder %s74, 0
    %p603 = por %p601, %p602
    %s604 = ssub.s32 %s68, %s75
    %p605 = scmp.eq.s32.totalorder %s604, 0
    %s607 = sadd.s32 %s606, 1
    %s608 = scalar_select %p605, %s606, %s607
    %p611 = pneg %p605
    %p612 = scmp.eq.s32.totalorder %s68, 1
    %p613 = por %p611, %p612
    %p614 = scmp.ne.s32.totalorder %s606, %s609
    %p615 = scmp.eq.s32.totalorder %s68, 0
    %p616 = por %p614, %p615
    %p617 = scmp.ne.s32.totalorder %s606, %s609
    %p618 = scmp.eq.s32.totalorder %s73, 1
    %p619 = por %p617, %p618
    %p620 = scmp.ne.s32.totalorder %s609, %s610
    %p621 = scmp.eq.s32.totalorder %s73, 0
    %p622 = por %p620, %p621
    %p623 = scmp.ne.s32.totalorder %s609, %s610
    %p624 = scmp.eq.s32.totalorder %s74, 1
    %p625 = por %p623, %p624
    %p627 = scmp.ne.s32.totalorder %s610, %s626
    %p628 = scmp.eq.s32.totalorder %s74, 0
    %p629 = por %p627, %p628
    %s630 = ssub.s32 %s68, %s75
    %p631 = scmp.eq.s32.totalorder %s630, 0
    %s633 = sadd.s32 %s632, 1
    %s634 = scalar_select %p631, %s632, %s633
    %p637 = pneg %p631
    %p638 = scmp.eq.s32.totalorder %s68, 1
    %p639 = por %p637, %p638
    %p640 = scmp.ne.s32.totalorder %s632, %s635
    %p641 = scmp.eq.s32.totalorder %s68, 0
    %p642 = por %p640, %p641
    %p643 = scmp.ne.s32.totalorder %s632, %s635
    %p644 = scmp.eq.s32.totalorder %s73, 1
    %p645 = por %p643, %p644
    %p646 = scmp.ne.s32.totalorder %s635, %s636
    %p647 = scmp.eq.s32.totalorder %s73, 0
    %p648 = por %p646, %p647
    %p649 = scmp.ne.s32.totalorder %s635, %s636
    %p650 = scmp.eq.s32.totalorder %s74, 1
    %p651 = por %p649, %p650
    %p653 = scmp.ne.s32.totalorder %s636, %s652
    %p654 = scmp.eq.s32.totalorder %s74, 0
    %p655 = por %p653, %p654
    %s656 = ssub.s32 %s68, %s75
    %p657 = scmp.eq.s32.totalorder %s656, 0
    %s659 = sadd.s32 %s658, 1
    %s660 = scalar_select %p657, %s658, %s659
    %p663 = pneg %p657
    %p664 = scmp.eq.s32.totalorder %s68, 1
    %p665 = por %p663, %p664
    %p666 = scmp.ne.s32.totalorder %s658, %s661
    %p667 = scmp.eq.s32.totalorder %s68, 0
    %p668 = por %p666, %p667
    %p669 = scmp.ne.s32.totalorder %s658, %s661
    %p670 = scmp.eq.s32.totalorder %s73, 1
    %p671 = por %p669, %p670
    %p672 = scmp.ne.s32.totalorder %s661, %s662
    %p673 = scmp.eq.s32.totalorder %s73, 0
    %p674 = por %p672, %p673
    %p675 = scmp.ne.s32.totalorder %s661, %s662
    %p676 = scmp.eq.s32.totalorder %s74, 1
    %p677 = por %p675, %p676
    %p679 = scmp.ne.s32.totalorder %s662, %s678
    %p680 = scmp.eq.s32.totalorder %s74, 0
    %p681 = por %p679, %p680
    %s682 = ssub.s32 %s68, %s75
    %p683 = scmp.eq.s32.totalorder %s682, 0
    %s685 = sadd.s32 %s684, 1
    %s686 = scalar_select %p683, %s684, %s685
    %p689 = pneg %p683
    %p690 = scmp.eq.s32.totalorder %s68, 1
    %p691 = por %p689, %p690
    %p692 = scmp.ne.s32.totalorder %s684, %s687
    %p693 = scmp.eq.s32.totalorder %s68, 0
    %p694 = por %p692, %p693
    %p695 = scmp.ne.s32.totalorder %s684, %s687
    %p696 = scmp.eq.s32.totalorder %s73, 1
    %p697 = por %p695, %p696
    %p698 = scmp.ne.s32.totalorder %s687, %s688
    %p699 = scmp.eq.s32.totalorder %s73, 0
    %p700 = por %p698, %p699
    %p701 = scmp.ne.s32.totalorder %s687, %s688
    %p702 = scmp.eq.s32.totalorder %s74, 1
    %p703 = por %p701, %p702
    %p705 = scmp.ne.s32.totalorder %s688, %s704
    %p706 = scmp.eq.s32.totalorder %s74, 0
    %p707 = por %p705, %p706
    %s708 = ssub.s32 %s68, %s75
    %p709 = scmp.eq.s32.totalorder %s708, 0
    %s711 = sadd.s32 %s710, 1
    %s712 = scalar_select %p709, %s710, %s711
    %p715 = pneg %p709
    %p716 = scmp.eq.s32.totalorder %s68, 1
    %p717 = por %p715, %p716
    %p718 = scmp.ne.s32.totalorder %s710, %s713
    %p719 = scmp.eq.s32.totalorder %s68, 0
    %p720 = por %p718, %p719
    %p721 = scmp.ne.s32.totalorder %s710, %s713
    %p722 = scmp.eq.s32.totalorder %s73, 1
    %p723 = por %p721, %p722
    %p724 = scmp.ne.s32.totalorder %s713, %s714
    %p725 = scmp.eq.s32.totalorder %s73, 0
    %p726 = por %p724, %p725
    %p727 = scmp.ne.s32.totalorder %s713, %s714
    %p728 = scmp.eq.s32.totalorder %s74, 1
    %p729 = por %p727, %p728
    %p731 = scmp.ne.s32.totalorder %s714, %s730
    %p732 = scmp.eq.s32.totalorder %s74, 0
    %p733 = por %p731, %p732
    %s734 = ssub.s32 %s68, %s75
    %p735 = scmp.eq.s32.totalorder %s734, 0
    %s737 = sadd.s32 %s736, 1
    %s738 = scalar_select %p735, %s736, %s737
    %p741 = pneg %p735
    %p742 = scmp.eq.s32.totalorder %s68, 1
    %p743 = por %p741, %p742
    %p744 = scmp.ne.s32.totalorder %s736, %s739
    %p745 = scmp.eq.s32.totalorder %s68, 0
    %p746 = por %p744, %p745
    %p747 = scmp.ne.s32.totalorder %s736, %s739
    %p748 = scmp.eq.s32.totalorder %s73, 1
    %p749 = por %p747, %p748
    %p750 = scmp.ne.s32.totalorder %s739, %s740
    %p751 = scmp.eq.s32.totalorder %s73, 0
    %p752 = por %p750, %p751
    %p753 = scmp.ne.s32.totalorder %s739, %s740
    %p754 = scmp.eq.s32.totalorder %s74, 1
    %p755 = por %p753, %p754
    %p757 = scmp.ne.s32.totalorder %s740, %s756
    %p758 = scmp.eq.s32.totalorder %s74, 0
    %p759 = por %p757, %p758
    %s760 = ssub.s32 %s68, %s75
    %p761 = scmp.eq.s32.totalorder %s760, 0
    %s763 = sadd.s32 %s762, 1
    %s764 = scalar_select %p761, %s762, %s763
    %p767 = pneg %p761
    %p768 = scmp.eq.s32.totalorder %s68, 1
    %p769 = por %p767, %p768
    %p770 = scmp.ne.s32.totalorder %s762, %s765
    %p771 = scmp.eq.s32.totalorder %s68, 0
    %p772 = por %p770, %p771
    %p773 = scmp.ne.s32.totalorder %s762, %s765
    %p774 = scmp.eq.s32.totalorder %s73, 1
    %p775 = por %p773, %p774
    %p776 = scmp.ne.s32.totalorder %s765, %s766
    %p777 = scmp.eq.s32.totalorder %s73, 0
    %p778 = por %p776, %p777
    %p779 = scmp.ne.s32.totalorder %s765, %s766
    %p780 = scmp.eq.s32.totalorder %s74, 1
    %p781 = por %p779, %p780
    %p783 = scmp.ne.s32.totalorder %s766, %s782
    %p784 = scmp.eq.s32.totalorder %s74, 0
    %p785 = por %p783, %p784
    %s786 = ssub.s32 %s68, %s75
    %p787 = scmp.eq.s32.totalorder %s786, 0
    %s789 = sadd.s32 %s788, 1
    %s790 = scalar_select %p787, %s788, %s789
    %p793 = pneg %p787
    %p794 = scmp.eq.s32.totalorder %s68, 1
    %p795 = por %p793, %p794
    %p796 = scmp.ne.s32.totalorder %s788, %s791
    %p797 = scmp.eq.s32.totalorder %s68, 0
    %p798 = por %p796, %p797
    %p799 = scmp.ne.s32.totalorder %s788, %s791
    %p800 = scmp.eq.s32.totalorder %s73, 1
    %p801 = por %p799, %p800
    %p802 = scmp.ne.s32.totalorder %s791, %s792
    %p803 = scmp.eq.s32.totalorder %s73, 0
    %p804 = por %p802, %p803
    %p805 = scmp.ne.s32.totalorder %s791, %s792
    %p806 = scmp.eq.s32.totalorder %s74, 1
    %p807 = por %p805, %p806
    %p809 = scmp.ne.s32.totalorder %s792, %s808
    %p810 = scmp.eq.s32.totalorder %s74, 0
    %p811 = por %p809, %p810
    %p812 = scmp.le.s32.totalorder 1, %s68
    %p813 = scmp.lt.s32.totalorder %s68, 3
    %p814 = pnand %p812, %p813
    %p815 = pneg %p814
    // Predicated region
    $region9: #{attention_net_forward.1} parent=5 // pred_check
      _
    $region10: #{attention_net_forward.1} parent=5 // pred_check_branch
      %817 = sbr.rel (%p814) target = $region12
    $region11: #{attention_net_forward.1} parent=5 // pred_region
      %s818 = ssub.s32 %s68, 1
      // Predicated region
      $region13: #{attention_net_forward.1} parent=11 // pred_check
        %p819 = pneg %p115
      $region14: #{attention_net_forward.1} parent=11 // pred_check_branch
        %821 = sbr.rel (%p819) target = $region16
      $region15: #{attention_net_forward.1} parent=11 // pred_region
        _
      $region16: #{attention_net_forward.1} parent=11 // pred_fallthru
        _
      // Predicated region
      $region17: #{attention_net_forward.1} parent=11 // pred_check
        %p822 = pneg %p136
      $region18: #{attention_net_forward.1} parent=11 // pred_check_branch
        %824 = sbr.rel (%p822) target = $region20
      $region19: #{attention_net_forward.1} parent=11 // pred_region
        _
      $region20: #{attention_net_forward.1} parent=11 // pred_fallthru
        _
      // Predicated region
      $region21: #{attention_net_forward.1} parent=11 // pred_check
        %p825 = pneg %p157
      $region22: #{attention_net_forward.1} parent=11 // pred_check_branch
        %827 = sbr.rel (%p825) target = $region24
      $region23: #{attention_net_forward.1} parent=11 // pred_region
        _
      $region24: #{attention_net_forward.1} parent=11 // pred_fallthru
        _
      // Predicated region
      $region25: #{attention_net_forward.1} parent=11 // pred_check
        %p828 = pneg %p178
      $region26: #{attention_net_forward.1} parent=11 // pred_check_branch
        %830 = sbr.rel (%p828) target = $region28
      $region27: #{attention_net_forward.1} parent=11 // pred_region
        _
      $region28: #{attention_net_forward.1} parent=11 // pred_fallthru
        _
      // Predicated region
      $region29: #{attention_net_forward.1} parent=11 // pred_check
        %p831 = pneg %p199
      $region30: #{attention_net_forward.1} parent=11 // pred_check_branch
        %833 = sbr.rel (%p831) target = $region32
      $region31: #{attention_net_forward.1} parent=11 // pred_region
        _
      $region32: #{attention_net_forward.1} parent=11 // pred_fallthru
        _
      // Predicated region
      $region33: #{attention_net_forward.1} parent=11 // pred_check
        %p834 = pneg %p220
      $region34: #{attention_net_forward.1} parent=11 // pred_check_branch
        %836 = sbr.rel (%p834) target = $region36
      $region35: #{attention_net_forward.1} parent=11 // pred_region
        _
      $region36: #{attention_net_forward.1} parent=11 // pred_fallthru
        _
      // Predicated region
      $region37: #{attention_net_forward.1} parent=11 // pred_check
        %p837 = pneg %p241
      $region38: #{attention_net_forward.1} parent=11 // pred_check_branch
        %839 = sbr.rel (%p837) target = $region40
      $region39: #{attention_net_forward.1} parent=11 // pred_region
        _
      $region40: #{attention_net_forward.1} parent=11 // pred_fallthru
        _
      // Predicated region
      $region41: #{attention_net_forward.1} parent=11 // pred_check
        %p840 = pneg %p262
      $region42: #{attention_net_forward.1} parent=11 // pred_check_branch
        %842 = sbr.rel (%p840) target = $region44
      $region43: #{attention_net_forward.1} parent=11 // pred_region
        _
      $region44: #{attention_net_forward.1} parent=11 // pred_fallthru
        _
      // Predicated region
      $region45: #{attention_net_forward.1} parent=11 // pred_check
        %p843 = pneg %p283
      $region46: #{attention_net_forward.1} parent=11 // pred_check_branch
        %845 = sbr.rel (%p843) target = $region48
      $region47: #{attention_net_forward.1} parent=11 // pred_region
        _
      $region48: #{attention_net_forward.1} parent=11 // pred_fallthru
        _
      // Predicated region
      $region49: #{attention_net_forward.1} parent=11 // pred_check
        %p846 = pneg %p304
      $region50: #{attention_net_forward.1} parent=11 // pred_check_branch
        %848 = sbr.rel (%p846) target = $region52
      $region51: #{attention_net_forward.1} parent=11 // pred_region
        _
      $region52: #{attention_net_forward.1} parent=11 // pred_fallthru
        _
      // Predicated region
      $region53: #{attention_net_forward.1} parent=11 // pred_check
        %p849 = pneg %p325
      $region54: #{attention_net_forward.1} parent=11 // pred_check_branch
        %851 = sbr.rel (%p849) target = $region56
      $region55: #{attention_net_forward.1} parent=11 // pred_region
        _
      $region56: #{attention_net_forward.1} parent=11 // pred_fallthru
        _
      // Predicated region
      $region57: #{attention_net_forward.1} parent=11 // pred_check
        %p852 = pneg %p346
      $region58: #{attention_net_forward.1} parent=11 // pred_check_branch
        %854 = sbr.rel (%p852) target = $region60
      $region59: #{attention_net_forward.1} parent=11 // pred_region
        _
      $region60: #{attention_net_forward.1} parent=11 // pred_fallthru
        _
      // Predicated region
      $region61: #{attention_net_forward.1} parent=11 // pred_check
        %p855 = pneg %p367
      $region62: #{attention_net_forward.1} parent=11 // pred_check_branch
        %857 = sbr.rel (%p855) target = $region64
      $region63: #{attention_net_forward.1} parent=11 // pred_region
        _
      $region64: #{attention_net_forward.1} parent=11 // pred_fallthru
        _
      // Predicated region
      $region65: #{attention_net_forward.1} parent=11 // pred_check
        %p858 = pneg %p388
      $region66: #{attention_net_forward.1} parent=11 // pred_check_branch
        %860 = sbr.rel (%p858) target = $region68
      $region67: #{attention_net_forward.1} parent=11 // pred_region
        _
      $region68: #{attention_net_forward.1} parent=11 // pred_fallthru
        _
    $region12: #{attention_net_forward.1} parent=5 // pred_fallthru
      _
    %p861 = scmp.lt.s32.totalorder %s68, 2
    // Predicated region
    $region69: #{attention_net_forward.1} parent=5 // pred_check
      %p862 = pneg %p861
    $region70: #{attention_net_forward.1} parent=5 // pred_check_branch
      %864 = sbr.rel (%p862) target = $region72
    $region71: #{attention_net_forward.1} parent=5 // pred_region
      // Predicated region
      $region73: #{attention_net_forward.1} parent=71 // pred_check
        %p865 = pneg %p88
      $region74: #{attention_net_forward.1} parent=71 // pred_check_branch
        %867 = sbr.rel (%p865) target = $region76
      $region75: #{attention_net_forward.1} parent=71 // pred_region
        %p868 = scmp.lt.s32.totalorder %s68, 1
        %s869 = scalar_select %p868, %s68, 1
        %s870 = smul.addr %s869, 16
        %s871 = smul.addr %s870, 8
        %s872 = scalar_lea.vmem %s1, %s871
      $region76: #{attention_net_forward.1} parent=71 // pred_fallthru
        _
      // Predicated region
      $region77: #{attention_net_forward.1} parent=71 // pred_check
        %p873 = pneg %p408
      $region78: #{attention_net_forward.1} parent=71 // pred_check_branch
        %875 = sbr.rel (%p873) target = $region80
      $region79: #{attention_net_forward.1} parent=71 // pred_region
        %p876 = scmp.lt.s32.totalorder %s68, 1
        %s877 = scalar_select %p876, %s68, 1
        %s878 = smul.addr %s877, 4
        %s879 = smul.addr %s878, 8
        %s880 = scalar_lea.vmem %s31, %s879
      $region80: #{attention_net_forward.1} parent=71 // pred_fallthru
        _
      // Predicated region
      $region81: #{attention_net_forward.1} parent=71 // pred_check
        %p881 = pneg %p434
      $region82: #{attention_net_forward.1} parent=71 // pred_check_branch
        %883 = sbr.rel (%p881) target = $region84
      $region83: #{attention_net_forward.1} parent=71 // pred_region
        %p884 = scmp.lt.s32.totalorder %s68, 1
        %s885 = scalar_select %p884, %s68, 1
        %s886 = smul.addr %s885, 4
        %s887 = smul.addr %s886, 8
        %s888 = scalar_lea.vmem %s33, %s887
      $region84: #{attention_net_forward.1} parent=71 // pred_fallthru
        _
      // Predicated region
      $region85: #{attention_net_forward.1} parent=71 // pred_check
        %p889 = pneg %p460
      $region86: #{attention_net_forward.1} parent=71 // pred_check_branch
        %891 = sbr.rel (%p889) target = $region88
      $region87: #{attention_net_forward.1} parent=71 // pred_region
        %p892 = scmp.lt.s32.totalorder %s68, 1
        %s893 = scalar_select %p892, %s68, 1
        %s894 = smul.addr %s893, 4
        %s895 = smul.addr %s894, 8
        %s896 = scalar_lea.vmem %s35, %s895
      $region88: #{attention_net_forward.1} parent=71 // pred_fallthru
        _
      // Predicated region
      $region89: #{attention_net_forward.1} parent=71 // pred_check
        %p897 = pneg %p486
      $region90: #{attention_net_forward.1} parent=71 // pred_check_branch
        %899 = sbr.rel (%p897) target = $region92
      $region91: #{attention_net_forward.1} parent=71 // pred_region
        %p900 = scmp.lt.s32.totalorder %s68, 1
        %s901 = scalar_select %p900, %s68, 1
        %s902 = smul.addr %s901, 2
        %s903 = smul.addr %s902, 8
        %s904 = scalar_lea.vmem %s37, %s903
      $region92: #{attention_net_forward.1} parent=71 // pred_fallthru
        _
      // Predicated region
      $region93: #{attention_net_forward.1} parent=71 // pred_check
        %p905 = pneg %p512
      $region94: #{attention_net_forward.1} parent=71 // pred_check_branch
        %907 = sbr.rel (%p905) target = $region96
      $region95: #{attention_net_forward.1} parent=71 // pred_region
        %p908 = scmp.lt.s32.totalorder %s68, 1
        %s909 = scalar_select %p908, %s68, 1
        %s910 = smul.addr %s909, 2
        %s911 = smul.addr %s910, 8
        %s912 = scalar_lea.vmem %s39, %s911
      $region96: #{attention_net_forward.1} parent=71 // pred_fallthru
        _
      // Predicated region
      $region97: #{attention_net_forward.1} parent=71 // pred_check
        %p913 = pneg %p538
      $region98: #{attention_net_forward.1} parent=71 // pred_check_branch
        %915 = sbr.rel (%p913) target = $region100
      $region99: #{attention_net_forward.1} parent=71 // pred_region
        %p916 = scmp.lt.s32.totalorder %s68, 1
        %s917 = scalar_select %p916, %s68, 1
        %s918 = smul.addr %s917, 16
        %s919 = smul.addr %s918, 8
        %s920 = scalar_lea.vmem %s41, %s919
      $region100: #{attention_net_forward.1} parent=71 // pred_fallthru
        _
      // Predicated region
      $region101: #{attention_net_forward.1} parent=71 // pred_check
        %p921 = pneg %p564
      $region102: #{attention_net_forward.1} parent=71 // pred_check_branch
        %923 = sbr.rel (%p921) target = $region104
      $region103: #{attention_net_forward.1} parent=71 // pred_region
        %p924 = scmp.lt.s32.totalorder %s68, 1
        %s925 = scalar_select %p924, %s68, 1
        %s926 = smul.addr %s925, 16
        %s927 = smul.addr %s926, 8
        %s928 = scalar_lea.vmem %s43, %s927
      $region104: #{attention_net_forward.1} parent=71 // pred_fallthru
        _
      // Predicated region
      $region105: #{attention_net_forward.1} parent=71 // pred_check
        %p929 = pneg %p590
      $region106: #{attention_net_forward.1} parent=71 // pred_check_branch
        %931 = sbr.rel (%p929) target = $region108
      $region107: #{attention_net_forward.1} parent=71 // pred_region
        %p932 = scmp.lt.s32.totalorder %s68, 1
        %s933 = scalar_select %p932, %s68, 1
        %s934 = smul.addr %s933, 4
        %s935 = scalar_lea.vmem %s45, %s934
      $region108: #{attention_net_forward.1} parent=71 // pred_fallthru
        _
      // Predicated region
      $region109: #{attention_net_forward.1} parent=71 // pred_check
        %p936 = pneg %p616
      $region110: #{attention_net_forward.1} parent=71 // pred_check_branch
        %938 = sbr.rel (%p936) target = $region112
      $region111: #{attention_net_forward.1} parent=71 // pred_region
        %p939 = scmp.lt.s32.totalorder %s68, 1
        %s940 = scalar_select %p939, %s68, 1
        %s941 = smul.addr %s940, 4
        %s942 = scalar_lea.vmem %s47, %s941
      $region112: #{attention_net_forward.1} parent=71 // pred_fallthru
        _
      // Predicated region
      $region113: #{attention_net_forward.1} parent=71 // pred_check
        %p943 = pneg %p642
      $region114: #{attention_net_forward.1} parent=71 // pred_check_branch
        %945 = sbr.rel (%p943) target = $region116
      $region115: #{attention_net_forward.1} parent=71 // pred_region
        %p946 = scmp.lt.s32.totalorder %s68, 1
        %s947 = scalar_select %p946, %s68, 1
        %s948 = smul.addr %s947, 4
        %s949 = scalar_lea.vmem %s49, %s948
      $region116: #{attention_net_forward.1} parent=71 // pred_fallthru
        _
      // Predicated region
      $region117: #{attention_net_forward.1} parent=71 // pred_check
        %p950 = pneg %p668
      $region118: #{attention_net_forward.1} parent=71 // pred_check_branch
        %952 = sbr.rel (%p950) target = $region120
      $region119: #{attention_net_forward.1} parent=71 // pred_region
        %p953 = scmp.lt.s32.totalorder %s68, 1
        %s954 = scalar_select %p953, %s68, 1
        %s955 = scalar_lea.vmem %s51, %s954
      $region120: #{attention_net_forward.1} parent=71 // pred_fallthru
        _
      // Predicated region
      $region121: #{attention_net_forward.1} parent=71 // pred_check
        %p956 = pneg %p694
      $region122: #{attention_net_forward.1} parent=71 // pred_check_branch
        %958 = sbr.rel (%p956) target = $region124
      $region123: #{attention_net_forward.1} parent=71 // pred_region
        %p959 = scmp.lt.s32.totalorder %s68, 1
        %s960 = scalar_select %p959, %s68, 1
        %s961 = smul.addr %s960, 16
        %s962 = smul.addr %s961, 8
        %s963 = scalar_lea.vmem %s53, %s962
      $region124: #{attention_net_forward.1} parent=71 // pred_fallthru
        _
      // Predicated region
      $region125: #{attention_net_forward.1} parent=71 // pred_check
        %p964 = pneg %p720
      $region126: #{attention_net_forward.1} parent=71 // pred_check_branch
        %966 = sbr.rel (%p964) target = $region128
      $region127: #{attention_net_forward.1} parent=71 // pred_region
        %p967 = scmp.lt.s32.totalorder %s68, 1
        %s968 = scalar_select %p967, %s68, 1
        %s969 = smul.addr %s968, 8
        %s970 = scalar_lea.vmem %s55, %s969
      $region128: #{attention_net_forward.1} parent=71 // pred_fallthru
        _
      // Predicated region
      $region129: #{attention_net_forward.1} parent=71 // pred_check
        %p971 = pneg %p746
      $region130: #{attention_net_forward.1} parent=71 // pred_check_branch
        %973 = sbr.rel (%p971) target = $region132
      $region131: #{attention_net_forward.1} parent=71 // pred_region
        %p974 = scmp.lt.s32.totalorder %s68, 1
        %s975 = scalar_select %p974, %s68, 1
        %s976 = smul.addr %s975, 8
        %s977 = scalar_lea.vmem %s57, %s976
      $region132: #{attention_net_forward.1} parent=71 // pred_fallthru
        _
    $region72: #{attention_net_forward.1} parent=5 // pred_fallthru
      _
    %p978 = scmp.le.s32.totalorder 1, %s68
    %p979 = scmp.lt.s32.totalorder %s68, 3
    %p980 = pnand %p978, %p979
    %p981 = pneg %p980
    // Predicated region
    $region133: #{attention_net_forward.1} parent=5 // pred_check
      _
    $region134: #{attention_net_forward.1} parent=5 // pred_check_branch
      %983 = sbr.rel (%p980) target = $region136
    $region135: #{attention_net_forward.1} parent=5 // pred_region
      %s984 = ssub.s32 %s68, 1
      %p985 = scmp.lt.s32.totalorder %s73, 1
      %s986 = scalar_select %p985, %s73, 1
      %s987 = smul.addr %s986, 16
      %s988 = smul.addr %s987, 8
      %s989 = scalar_lea.vmem %s1, %s988
      %p990 = pneg %p94
      %p991 = pneg %p91
      %p992 = pneg %p115
      %p993 = pneg %p112
      %p994 = pneg %p136
      %p995 = pneg %p133
      %p996 = pneg %p157
      %p997 = pneg %p154
      %p998 = pneg %p178
      %p999 = pneg %p175
      %p1000 = pneg %p199
      %p1001 = pneg %p196
      %p1002 = pneg %p220
      %p1003 = pneg %p217
      %p1004 = pneg %p241
      %p1005 = pneg %p238
      %p1006 = pneg %p262
      %p1007 = pneg %p259
      %p1008 = pneg %p283
      %p1009 = pneg %p280
      %p1010 = pneg %p304
      %p1011 = pneg %p301
      %p1012 = pneg %p325
      %p1013 = pneg %p322
      %p1014 = pneg %p346
      %p1015 = pneg %p343
      %p1016 = pneg %p367
      %p1017 = pneg %p364
      %p1018 = pneg %p388
      %p1019 = pneg %p385
      %p1020 = scmp.lt.s32.totalorder %s73, 1
      %s1021 = scalar_select %p1020, %s73, 1
      %s1022 = smul.addr %s1021, 4
      %s1023 = smul.addr %s1022, 8
      %s1024 = scalar_lea.vmem %s31, %s1023
      %p1025 = pneg %p414
      %p1026 = pneg %p411
      %p1027 = scmp.lt.s32.totalorder %s73, 1
      %s1028 = scalar_select %p1027, %s73, 1
      %s1029 = smul.addr %s1028, 4
      %s1030 = smul.addr %s1029, 8
      %s1031 = scalar_lea.vmem %s33, %s1030
      %p1032 = pneg %p440
      %p1033 = pneg %p437
      %p1034 = scmp.lt.s32.totalorder %s73, 1
      %s1035 = scalar_select %p1034, %s73, 1
      %s1036 = smul.addr %s1035, 4
      %s1037 = smul.addr %s1036, 8
      %s1038 = scalar_lea.vmem %s35, %s1037
      %p1039 = pneg %p466
      %p1040 = pneg %p463
      %p1041 = scmp.lt.s32.totalorder %s73, 1
      %s1042 = scalar_select %p1041, %s73, 1
      %s1043 = smul.addr %s1042, 2
      %s1044 = smul.addr %s1043, 8
      %s1045 = scalar_lea.vmem %s37, %s1044
      %p1046 = pneg %p492
      %p1047 = pneg %p489
      %p1048 = scmp.lt.s32.totalorder %s73, 1
      %s1049 = scalar_select %p1048, %s73, 1
      %s1050 = smul.addr %s1049, 2
      %s1051 = smul.addr %s1050, 8
      %s1052 = scalar_lea.vmem %s39, %s1051
      %p1053 = pneg %p518
      %p1054 = pneg %p515
      %p1055 = scmp.lt.s32.totalorder %s73, 1
      %s1056 = scalar_select %p1055, %s73, 1
      %s1057 = smul.addr %s1056, 16
      %s1058 = smul.addr %s1057, 8
      %s1059 = scalar_lea.vmem %s41, %s1058
      %p1060 = pneg %p544
      %p1061 = pneg %p541
      %p1062 = scmp.lt.s32.totalorder %s73, 1
      %s1063 = scalar_select %p1062, %s73, 1
      %s1064 = smul.addr %s1063, 16
      %s1065 = smul.addr %s1064, 8
      %s1066 = scalar_lea.vmem %s43, %s1065
      %p1067 = pneg %p570
      %p1068 = pneg %p567
      %p1069 = scmp.lt.s32.totalorder %s73, 1
      %s1070 = scalar_select %p1069, %s73, 1
      %s1071 = smul.addr %s1070, 4
      %s1072 = scalar_lea.vmem %s45, %s1071
      %p1073 = pneg %p596
      %p1074 = pneg %p593
      %p1075 = scmp.lt.s32.totalorder %s73, 1
      %s1076 = scalar_select %p1075, %s73, 1
      %s1077 = smul.addr %s1076, 4
      %s1078 = scalar_lea.vmem %s47, %s1077
      %p1079 = pneg %p622
      %p1080 = pneg %p619
      %p1081 = scmp.lt.s32.totalorder %s73, 1
      %s1082 = scalar_select %p1081, %s73, 1
      %s1083 = smul.addr %s1082, 4
      %s1084 = scalar_lea.vmem %s49, %s1083
      %p1085 = pneg %p648
      %p1086 = pneg %p645
      %p1087 = scmp.lt.s32.totalorder %s73, 1
      %s1088 = scalar_select %p1087, %s73, 1
      %s1089 = scalar_lea.vmem %s51, %s1088
      %p1090 = pneg %p674
      %p1091 = pneg %p671
      %p1092 = scmp.lt.s32.totalorder %s73, 1
      %s1093 = scalar_select %p1092, %s73, 1
      %s1094 = smul.addr %s1093, 16
      %s1095 = smul.addr %s1094, 8
      %s1096 = scalar_lea.vmem %s53, %s1095
      %p1097 = pneg %p700
      %p1098 = pneg %p697
      %p1099 = scmp.lt.s32.totalorder %s73, 1
      %s1100 = scalar_select %p1099, %s73, 1
      %s1101 = smul.addr %s1100, 8
      %s1102 = scalar_lea.vmem %s55, %s1101
      %p1103 = pneg %p726
      %p1104 = pneg %p723
      %p1105 = scmp.lt.s32.totalorder %s73, 1
      %s1106 = scalar_select %p1105, %s73, 1
      %s1107 = smul.addr %s1106, 8
      %s1108 = scalar_lea.vmem %s57, %s1107
      %p1109 = pneg %p752
      %p1110 = pneg %p749
      %p1111 = pneg %p778
      %p1112 = pneg %p775
      %p1113 = scmp.lt.s32.totalorder %s73, 1
      %s1114 = scalar_select %p1113, %s73, 1
      %s1115 = smul.addr %s1114, 2
      %s1116 = smul.addr %s1115, 8
      %s1117 = scalar_lea.vmem %s59, %s1116
      %p1118 = pneg %p804
      %p1119 = pneg %p801
      %p1120 = scmp.lt.s32.totalorder %s73, 1
      %s1121 = scalar_select %p1120, %s73, 1
      %s1122 = smul.addr %s1121, 2
      %s1123 = smul.addr %s1122, 8
      %s1124 = scalar_lea.vmem %s61, %s1123
      %p1125 = scmp.lt.s32.totalorder %s73, 1
      %s1126 = scalar_select %p1125, %s73, 1
      %s1127 = smul.addr %s1126, 16
      %s1128 = smul.addr %s1127, 8
      %s1129 = scalar_lea.vmem %s1, %s1128
      %p1130 = scmp.lt.s32.totalorder %s73, 1
      %s1131 = scalar_select %p1130, %s73, 1
      %s1132 = smul.addr %s1131, 4
      %s1133 = smul.addr %s1132, 8
      %s1134 = scalar_lea.vmem %s31, %s1133
      %p1135 = scmp.lt.s32.totalorder %s73, 1
      %s1136 = scalar_select %p1135, %s73, 1
      %s1137 = smul.addr %s1136, 4
      %s1138 = smul.addr %s1137, 8
      %s1139 = scalar_lea.vmem %s33, %s1138
      %p1140 = scmp.lt.s32.totalorder %s73, 1
      %s1141 = scalar_select %p1140, %s73, 1
      %s1142 = smul.addr %s1141, 4
      %s1143 = smul.addr %s1142, 8
      %s1144 = scalar_lea.vmem %s35, %s1143
      %p1145 = scmp.lt.s32.totalorder %s73, 1
      %s1146 = scalar_select %p1145, %s73, 1
      %s1147 = smul.addr %s1146, 2
      %s1148 = smul.addr %s1147, 8
      %s1149 = scalar_lea.vmem %s37, %s1148
      %p1150 = scmp.lt.s32.totalorder %s73, 1
      %s1151 = scalar_select %p1150, %s73, 1
      %s1152 = smul.addr %s1151, 2
      %s1153 = smul.addr %s1152, 8
      %s1154 = scalar_lea.vmem %s39, %s1153
      %p1155 = scmp.lt.s32.totalorder %s73, 1
      %s1156 = scalar_select %p1155, %s73, 1
      %s1157 = smul.addr %s1156, 16
      %s1158 = smul.addr %s1157, 8
      %s1159 = scalar_lea.vmem %s41, %s1158
      %p1160 = scmp.lt.s32.totalorder %s73, 1
      %s1161 = scalar_select %p1160, %s73, 1
      %s1162 = smul.addr %s1161, 16
      %s1163 = smul.addr %s1162, 8
      %s1164 = scalar_lea.vmem %s43, %s1163
      %p1165 = scmp.lt.s32.totalorder %s73, 1
      %s1166 = scalar_select %p1165, %s73, 1
      %s1167 = smul.addr %s1166, 4
      %s1168 = scalar_lea.vmem %s45, %s1167
      %p1169 = scmp.lt.s32.totalorder %s73, 1
      %s1170 = scalar_select %p1169, %s73, 1
      %s1171 = smul.addr %s1170, 4
      %s1172 = scalar_lea.vmem %s47, %s1171
      %p1173 = scmp.lt.s32.totalorder %s73, 1
      %s1174 = scalar_select %p1173, %s73, 1
      %s1175 = smul.addr %s1174, 4
      %s1176 = scalar_lea.vmem %s49, %s1175
      %p1177 = scmp.lt.s32.totalorder %s73, 1
      %s1178 = scalar_select %p1177, %s73, 1
      %s1179 = scalar_lea.vmem %s51, %s1178
      %p1180 = scmp.lt.s32.totalorder %s73, 1
      %s1181 = scalar_select %p1180, %s73, 1
      %s1182 = smul.addr %s1181, 16
      %s1183 = smul.addr %s1182, 8
      %s1184 = scalar_lea.vmem %s53, %s1183
      %p1185 = scmp.lt.s32.totalorder %s73, 1
      %s1186 = scalar_select %p1185, %s73, 1
      %s1187 = smul.addr %s1186, 8
      %s1188 = scalar_lea.vmem %s55, %s1187
      %p1189 = scmp.lt.s32.totalorder %s73, 1
      %s1190 = scalar_select %p1189, %s73, 1
      %s1191 = smul.addr %s1190, 8
      %s1192 = scalar_lea.vmem %s57, %s1191
      %p1193 = scmp.lt.s32.totalorder %s73, 1
      %s1194 = scalar_select %p1193, %s73, 1
      %s1195 = smul.addr %s1194, 2
      %s1196 = smul.addr %s1195, 8
      %s1197 = scalar_lea.vmem %s59, %s1196
      %p1198 = scmp.lt.s32.totalorder %s73, 1
      %s1199 = scalar_select %p1198, %s73, 1
      %s1200 = smul.addr %s1199, 2
      %s1201 = smul.addr %s1200, 8
      %s1202 = scalar_lea.vmem %s61, %s1201
      %v1203 = vld [vmem:[%s1129] sm:$0xff]
      %v1204 = vld [vmem:[%s1129 + $0x8] sm:$0xff]
      %v1205 = vld [vmem:[%s1129 + $0x10] sm:$0xff]
      %v1206 = vld [vmem:[%s1129 + $0x18] sm:$0xff]
      %v1207 = vld [vmem:[%s1129 + $0x20] sm:$0xff]
      %v1208 = vld [vmem:[%s1129 + $0x28] sm:$0xff]
      %v1209 = vld [vmem:[%s1129 + $0x30] sm:$0xff]
      %v1210 = vld [vmem:[%s1129 + $0x38] sm:$0xff]
      %v1211 = vld [vmem:[%s1129 + $0x40] sm:$0xff]
      %v1212 = vld [vmem:[%s1129 + $0x48] sm:$0xff]
      %v1213 = vld [vmem:[%s1129 + $0x50] sm:$0xff]
      %v1214 = vld [vmem:[%s1129 + $0x58] sm:$0xff]
      %v1215 = vld [vmem:[%s1129 + $0x60] sm:$0xff]
      %v1216 = vld [vmem:[%s1129 + $0x68] sm:$0xff]
      %v1217 = vld [vmem:[%s1129 + $0x70] sm:$0xff]
      %v1218 = vld [vmem:[%s1129 + $0x78] sm:$0xff]
      %v1219 = vld [vmem:[%s3] sm:$0xff]
      %v1220 = vld [vmem:[%s3 + $0x8] sm:$0xff]
      %v1221 = vld [vmem:[%s9] sm:$0xff]
      %v1222 = vld [vmem:[%s9 + $0x8] sm:$0xff]
      %v1223 = vld [vmem:[%s11] sm:$0xff]
      %v1224 = vld [vmem:[%s11 + $0x8] sm:$0xff]
      %v1225 = vld [vmem:[%s11 + $0x10] sm:$0xff]
      %v1226 = vld [vmem:[%s11 + $0x18] sm:$0xff]
      %v1227 = vld [vmem:[%s13] sm:$0xff]
      %v1228 = vld [vmem:[%s13 + $0x8] sm:$0xff]
      %v1229 = vld [vmem:[%s15] sm:$0xff]
      %v1230 = vld [vmem:[%s15 + $0x8] sm:$0xff]
      %v1231 = vld [vmem:[%s17] sm:$0xff]
      %v1232 = vld [vmem:[%s17 + $0x8] sm:$0xff]
      %v1233 = vld [vmem:[%s17 + $0x10] sm:$0xff]
      %v1234 = vld [vmem:[%s17 + $0x18] sm:$0xff]
      %v1235 = vld [vmem:[%s17 + $0x20] sm:$0xff]
      %v1236 = vld [vmem:[%s17 + $0x28] sm:$0xff]
      %v1237 = vld [vmem:[%s17 + $0x30] sm:$0xff]
      %v1238 = vld [vmem:[%s17 + $0x38] sm:$0xff]
      %v1239 = vld [vmem:[%s17 + $0x40] sm:$0xff]
      %v1240 = vld [vmem:[%s17 + $0x48] sm:$0xff]
      %v1241 = vld [vmem:[%s17 + $0x50] sm:$0xff]
      %v1242 = vld [vmem:[%s17 + $0x58] sm:$0xff]
      %v1243 = vld [vmem:[%s17 + $0x60] sm:$0xff]
      %v1244 = vld [vmem:[%s17 + $0x68] sm:$0xff]
      %v1245 = vld [vmem:[%s17 + $0x70] sm:$0xff]
      %v1246 = vld [vmem:[%s17 + $0x78] sm:$0xff]
      %v1247 = vld [vmem:[%s19] sm:$0xff]
      %v1248 = vld [vmem:[%s19 + $0x8] sm:$0xff]
      %v1249 = vld [vmem:[%s21] sm:$0xff]
      %v1250 = vld [vmem:[%s21 + $0x8] sm:$0xff]
      %v1251 = vld [vmem:[%s21 + $0x10] sm:$0xff]
      %v1252 = vld [vmem:[%s21 + $0x18] sm:$0xff]
      %v1253 = vld [vmem:[%s21 + $0x20] sm:$0xff]
      %v1254 = vld [vmem:[%s21 + $0x28] sm:$0xff]
      %v1255 = vld [vmem:[%s21 + $0x30] sm:$0xff]
      %v1256 = vld [vmem:[%s21 + $0x38] sm:$0xff]
      %v1257 = vld [vmem:[%s21 + $0x40] sm:$0xff]
      %v1258 = vld [vmem:[%s21 + $0x48] sm:$0xff]
      %v1259 = vld [vmem:[%s21 + $0x50] sm:$0xff]
      %v1260 = vld [vmem:[%s21 + $0x58] sm:$0xff]
      %v1261 = vld [vmem:[%s21 + $0x60] sm:$0xff]
      %v1262 = vld [vmem:[%s21 + $0x68] sm:$0xff]
      %v1263 = vld [vmem:[%s21 + $0x70] sm:$0xff]
      %v1264 = vld [vmem:[%s21 + $0x78] sm:$0xff]
      %v1265 = vld [vmem:[%s23] sm:$0xff]
      %v1266 = vld [vmem:[%s25] sm:$0xff]
      %v1267 = vld [vmem:[%s25 + $0x8] sm:$0xff]
      %v1268 = vld [vmem:[%s25 + $0x10] sm:$0xff]
      %v1269 = vld [vmem:[%s25 + $0x18] sm:$0xff]
      %v1270 = vld [vmem:[%s25 + $0x20] sm:$0xff]
      %v1271 = vld [vmem:[%s25 + $0x28] sm:$0xff]
      %v1272 = vld [vmem:[%s25 + $0x30] sm:$0xff]
      %v1273 = vld [vmem:[%s25 + $0x38] sm:$0xff]
      %v1274 = vld [vmem:[%s25 + $0x40] sm:$0xff]
      %v1275 = vld [vmem:[%s25 + $0x48] sm:$0xff]
      %v1276 = vld [vmem:[%s25 + $0x50] sm:$0xff]
      %v1277 = vld [vmem:[%s25 + $0x58] sm:$0xff]
      %v1278 = vld [vmem:[%s25 + $0x60] sm:$0xff]
      %v1279 = vld [vmem:[%s25 + $0x68] sm:$0xff]
      %v1280 = vld [vmem:[%s25 + $0x70] sm:$0xff]
      %v1281 = vld [vmem:[%s25 + $0x78] sm:$0xff]
      %v1282 = vld [vmem:[%s27] sm:$0xff]
      %v1283 = vld [vmem:[%s27 + $0x8] sm:$0xff]
      %v1284 = vld [vmem:[%s1134] sm:$0xff]
      %v1285 = vld [vmem:[%s1134 + $0x8] sm:$0xff]
      %v1286 = vld [vmem:[%s1134 + $0x10] sm:$0xff]
      %v1287 = vld [vmem:[%s1134 + $0x18] sm:$0xff]
      %vm1288 = vcmask 261120
      %v1290 = vsel %vm1288, %v1219, 0
      %v1293 = vsel %vm1288, %v1220, 0
      %1295 = vmatprep.subr.mxu0 0.0
      %1296 = vmatpush1.msra.mxu0 %v1284
      %1297 = vmatprep.subr.mxu0 0.0
      %1298 = vmatpush1.msra.mxu0 %v1285
      %1299 = vmatprep.subr.mxu0 0.0
      %1300 = vmatpush1.msra.mxu0 %v1286
      %1301 = vmatprep.subr.mxu0 0.0
      %1302 = vmatpush1.msra.mxu0 %v1287
      %1303 = vmatprep.subr.mxu0 0.0
      %1304 = vmatpush1.msra.mxu0 0.0
      %1305 = vmatprep.subr.mxu0 0.0
      %1306 = vmatpush1.msra.mxu0 0.0
      %1307 = vmatprep.subr.mxu0 0.0
      %1308 = vmatpush1.msra.mxu0 0.0
      %1309 = vmatprep.subr.mxu0 0.0
      %1310 = vmatpush1.msra.mxu0 0.0
      %1311 = vmatprep.subr.mxu0 0.0
      %1312 = vmatpush1.msra.mxu0 0.0
      %1313 = vmatprep.subr.mxu0 0.0
      %1314 = vmatpush1.msra.mxu0 0.0
      %1315 = vmatprep.subr.mxu0 0.0
      %1316 = vmatpush1.msra.mxu0 0.0
      %1317 = vmatprep.subr.mxu0 0.0
      %1318 = vmatpush1.msra.mxu0 0.0
      %1319 = vmatprep.subr.mxu0 0.0
      %1320 = vmatpush1.msra.mxu0 0.0
      %1321 = vmatprep.subr.mxu0 0.0
      %1322 = vmatpush1.msra.mxu0 0.0
      %1323 = vmatprep.subr.mxu0 0.0
      %1324 = vmatpush1.msra.mxu0 0.0
      %1325 = vmatprep.subr.mxu0 0.0
      %1326 = vmatpush1.msra.mxu0 0.0
      %1327 = vmatprep.subr.mxu0 0.0
      %1328 = vmatpush1.msra.mxu0 0.0
      %1329 = vmatprep.subr.mxu0 0.0
      %1330 = vmatpush1.msra.mxu0 0.0
      %1331 = vmatprep.subr.mxu0 0.0
      %1332 = vmatpush1.msra.mxu0 0.0
      %1333 = vmatprep.subr.mxu0 0.0
      %1334 = vmatpush1.msra.mxu0 0.0
      %1335 = vmatprep.subr.mxu0 0.0
      %1336 = vmatpush1.msra.mxu0 0.0
      %1337 = vmatprep.subr.mxu0 0.0
      %1338 = vmatpush1.msra.mxu0 0.0
      %1339 = vmatprep.subr.mxu0 0.0
      %1340 = vmatpush1.msra.mxu0 0.0
      %1341 = vmatprep.subr.mxu0 0.0
      %1342 = vmatpush1.msra.mxu0 0.0
      %1343 = vmatprep.subr.mxu0 0.0
      %1344 = vmatpush1.msra.mxu0 0.0
      %1345 = vmatprep.subr.mxu0 0.0
      %1346 = vmatpush1.msra.mxu0 0.0
      %1347 = vmatprep.subr.mxu0 0.0
      %1348 = vmatpush1.msra.mxu0 0.0
      %1349 = vmatprep.subr.mxu0 0.0
      %1350 = vmatpush1.msra.mxu0 0.0
      %1351 = vmatprep.subr.mxu0 0.0
      %1352 = vmatpush1.msra.mxu0 0.0
      %1353 = vmatprep.subr.mxu0 0.0
      %1354 = vmatpush1.msra.mxu0 0.0
      %1355 = vmatprep.subr.mxu0 0.0
      %1356 = vmatpush1.msra.mxu0 0.0
      %1357 = vmatprep.subr.mxu0 0.0
      %1358 = vmatpush1.msra.mxu0 0.0
      %1359 = vmatprep.mubr.f32.mxu0 0.0
      %1360 = vmatmul.mubr.f32.gmra.mrb[0].mxu0 %v1290
      %v1361 = vpop.f32.mrb[0].mxu0
      %v1362 = vadd.f32 0.0, %v1361
      %v1363 = vpop.f32.mrb[0].mxu0
      %1364 = vmatprep.mubr.f32.mxu0 0.0
      %1365 = vmatmul.mubr.f32.gmra.mrb[0].mxu0 %v1293
      %v1366 = vpop.f32.mrb[0].mxu0
      %v1367 = vadd.f32 0.0, %v1366
      %v1368 = vpop.f32.mrb[0].mxu0
      %1369 = vdwg.mxu0
      %v1371 = vsel %vm1288, %v1362, 0
      %v1374 = vsel %vm1288, %v1367, 0
      %1376 = vmatprep.subr.mxu0 0.0
      %1377 = vmatpush1.msra.mxu0 %v1223
      %1378 = vmatprep.subr.mxu0 0.0
      %1379 = vmatpush1.msra.mxu0 %v1224
      %1380 = vmatprep.subr.mxu0 0.0
      %1381 = vmatpush1.msra.mxu0 %v1225
      %1382 = vmatprep.subr.mxu0 0.0
      %1383 = vmatpush1.msra.mxu0 %v1226
      %1384 = vmatprep.subr.mxu0 0.0
      %1385 = vmatpush1.msra.mxu0 0.0
      %1386 = vmatprep.subr.mxu0 0.0
      %1387 = vmatpush1.msra.mxu0 0.0
      %1388 = vmatprep.subr.mxu0 0.0
      %1389 = vmatpush1.msra.mxu0 0.0
      %1390 = vmatprep.subr.mxu0 0.0
      %1391 = vmatpush1.msra.mxu0 0.0
      %1392 = vmatprep.subr.mxu0 0.0
      %1393 = vmatpush1.msra.mxu0 0.0
      %1394 = vmatprep.subr.mxu0 0.0
      %1395 = vmatpush1.msra.mxu0 0.0
      %1396 = vmatprep.subr.mxu0 0.0
      %1397 = vmatpush1.msra.mxu0 0.0
      %1398 = vmatprep.subr.mxu0 0.0
      %1399 = vmatpush1.msra.mxu0 0.0
      %1400 = vmatprep.subr.mxu0 0.0
      %1401 = vmatpush1.msra.mxu0 0.0
      %1402 = vmatprep.subr.mxu0 0.0
      %1403 = vmatpush1.msra.mxu0 0.0
      %1404 = vmatprep.subr.mxu0 0.0
      %1405 = vmatpush1.msra.mxu0 0.0
      %1406 = vmatprep.subr.mxu0 0.0
      %1407 = vmatpush1.msra.mxu0 0.0
      %1408 = vmatprep.subr.mxu0 0.0
      %1409 = vmatpush1.msra.mxu0 0.0
      %1410 = vmatprep.subr.mxu0 0.0
      %1411 = vmatpush1.msra.mxu0 0.0
      %1412 = vmatprep.subr.mxu0 0.0
      %1413 = vmatpush1.msra.mxu0 0.0
      %1414 = vmatprep.subr.mxu0 0.0
      %1415 = vmatpush1.msra.mxu0 0.0
      %1416 = vmatprep.subr.mxu0 0.0
      %1417 = vmatpush1.msra.mxu0 0.0
      %1418 = vmatprep.subr.mxu0 0.0
      %1419 = vmatpush1.msra.mxu0 0.0
      %1420 = vmatprep.subr.mxu0 0.0
      %1421 = vmatpush1.msra.mxu0 0.0
      %1422 = vmatprep.subr.mxu0 0.0
      %1423 = vmatpush1.msra.mxu0 0.0
      %1424 = vmatprep.subr.mxu0 0.0
      %1425 = vmatpush1.msra.mxu0 0.0
      %1426 = vmatprep.subr.mxu0 0.0
      %1427 = vmatpush1.msra.mxu0 0.0
      %1428 = vmatprep.subr.mxu0 0.0
      %1429 = vmatpush1.msra.mxu0 0.0
      %1430 = vmatprep.subr.mxu0 0.0
      %1431 = vmatpush1.msra.mxu0 0.0
      %1432 = vmatprep.subr.mxu0 0.0
      %1433 = vmatpush1.msra.mxu0 0.0
      %1434 = vmatprep.subr.mxu0 0.0
      %1435 = vmatpush1.msra.mxu0 0.0
      %1436 = vmatprep.subr.mxu0 0.0
      %1437 = vmatpush1.msra.mxu0 0.0
      %1438 = vmatprep.subr.mxu0 0.0
      %1439 = vmatpush1.msra.mxu0 0.0
      %1440 = vmatprep.mubr.f32.mxu0 0.0
      %1441 = vmatmul.mubr.f32.gmra.mrb[0].mxu0 %v1371
      %v1442 = vpop.f32.mrb[0].mxu0
      %v1443 = vadd.f32 0.0, %v1442
      %v1444 = vpop.f32.mrb[0].mxu0
      %1445 = vmatprep.mubr.f32.mxu0 0.0
      %1446 = vmatmul.mubr.f32.gmra.mrb[0].mxu0 %v1374
      %v1447 = vpop.f32.mrb[0].mxu0
      %v1448 = vadd.f32 0.0, %v1447
      %v1449 = vpop.f32.mrb[0].mxu0
      %1450 = vdwg.mxu0
      %v1451 = vld [vmem:[%s1139] sm:$0xff]
      %v1452 = vld [vmem:[%s1139 + $0x8] sm:$0xff]
      %v1453 = vld [vmem:[%s1139 + $0x10] sm:$0xff]
      %v1454 = vld [vmem:[%s1139 + $0x18] sm:$0xff]
      %1455 = vmatprep.subr.mxu0 0.0
      %1456 = vmatpush1.msra.mxu0 %v1451
      %1457 = vmatprep.subr.mxu0 0.0
      %1458 = vmatpush1.msra.mxu0 %v1452
      %1459 = vmatprep.subr.mxu0 0.0
      %1460 = vmatpush1.msra.mxu0 %v1453
      %1461 = vmatprep.subr.mxu0 0.0
      %1462 = vmatpush1.msra.mxu0 %v1454
      %1463 = vmatprep.subr.mxu0 0.0
      %1464 = vmatpush1.msra.mxu0 0.0
      %1465 = vmatprep.subr.mxu0 0.0
      %1466 = vmatpush1.msra.mxu0 0.0
      %1467 = vmatprep.subr.mxu0 0.0
      %1468 = vmatpush1.msra.mxu0 0.0
      %1469 = vmatprep.subr.mxu0 0.0
      %1470 = vmatpush1.msra.mxu0 0.0
      %1471 = vmatprep.subr.mxu0 0.0
      %1472 = vmatpush1.msra.mxu0 0.0
      %1473 = vmatprep.subr.mxu0 0.0
      %1474 = vmatpush1.msra.mxu0 0.0
      %1475 = vmatprep.subr.mxu0 0.0
      %1476 = vmatpush1.msra.mxu0 0.0
      %1477 = vmatprep.subr.mxu0 0.0
      %1478 = vmatpush1.msra.mxu0 0.0
      %1479 = vmatprep.subr.mxu0 0.0
      %1480 = vmatpush1.msra.mxu0 0.0
      %1481 = vmatprep.subr.mxu0 0.0
      %1482 = vmatpush1.msra.mxu0 0.0
      %1483 = vmatprep.subr.mxu0 0.0
      %1484 = vmatpush1.msra.mxu0 0.0
      %1485 = vmatprep.subr.mxu0 0.0
      %1486 = vmatpush1.msra.mxu0 0.0
      %1487 = vmatprep.subr.mxu0 0.0
      %1488 = vmatpush1.msra.mxu0 0.0
      %1489 = vmatprep.subr.mxu0 0.0
      %1490 = vmatpush1.msra.mxu0 0.0
      %1491 = vmatprep.subr.mxu0 0.0
      %1492 = vmatpush1.msra.mxu0 0.0
      %1493 = vmatprep.subr.mxu0 0.0
      %1494 = vmatpush1.msra.mxu0 0.0
      %1495 = vmatprep.subr.mxu0 0.0
      %1496 = vmatpush1.msra.mxu0 0.0
      %1497 = vmatprep.subr.mxu0 0.0
      %1498 = vmatpush1.msra.mxu0 0.0
      %1499 = vmatprep.subr.mxu0 0.0
      %1500 = vmatpush1.msra.mxu0 0.0
      %1501 = vmatprep.subr.mxu0 0.0
      %1502 = vmatpush1.msra.mxu0 0.0
      %1503 = vmatprep.subr.mxu0 0.0
      %1504 = vmatpush1.msra.mxu0 0.0
      %1505 = vmatprep.subr.mxu0 0.0
      %1506 = vmatpush1.msra.mxu0 0.0
      %1507 = vmatprep.subr.mxu0 0.0
      %1508 = vmatpush1.msra.mxu0 0.0
      %1509 = vmatprep.subr.mxu0 0.0
      %1510 = vmatpush1.msra.mxu0 0.0
      %1511 = vmatprep.subr.mxu0 0.0
      %1512 = vmatpush1.msra.mxu0 0.0
      %1513 = vmatprep.subr.mxu0 0.0
      %1514 = vmatpush1.msra.mxu0 0.0
      %1515 = vmatprep.subr.mxu0 0.0
      %1516 = vmatpush1.msra.mxu0 0.0
      %1517 = vmatprep.subr.mxu0 0.0
      %1518 = vmatpush1.msra.mxu0 0.0
      %1519 = vmatprep.mubr.f32.mxu0 0.0
      %1520 = vmatmul.mubr.f32.gmra.mrb[0].mxu0 %v1290
      %v1521 = vpop.f32.mrb[0].mxu0
      %v1522 = vadd.f32 0.0, %v1521
      %v1523 = vpop.f32.mrb[0].mxu0
      %1524 = vmatprep.mubr.f32.mxu0 0.0
      %1525 = vmatmul.mubr.f32.gmra.mrb[0].mxu0 %v1293
      %v1526 = vpop.f32.mrb[0].mxu0
      %v1527 = vadd.f32 0.0, %v1526
      %v1528 = vpop.f32.mrb[0].mxu0
      %1529 = vdwg.mxu0
      %v1531 = vsel %vm1288, %v1522, 0
      %v1534 = vsel %vm1288, %v1527, 0
      %1536 = vmatprep.subr.mxu0 0.0
      %1537 = vmatpush1.msra.mxu0 %v1223
      %1538 = vmatprep.subr.mxu0 0.0
      %1539 = vmatpush1.msra.mxu0 %v1224
      %1540 = vmatprep.subr.mxu0 0.0
      %1541 = vmatpush1.msra.mxu0 %v1225
      %1542 = vmatprep.subr.mxu0 0.0
      %1543 = vmatpush1.msra.mxu0 %v1226
      %1544 = vmatprep.subr.mxu0 0.0
      %1545 = vmatpush1.msra.mxu0 0.0
      %1546 = vmatprep.subr.mxu0 0.0
      %1547 = vmatpush1.msra.mxu0 0.0
      %1548 = vmatprep.subr.mxu0 0.0
      %1549 = vmatpush1.msra.mxu0 0.0
      %1550 = vmatprep.subr.mxu0 0.0
      %1551 = vmatpush1.msra.mxu0 0.0
      %1552 = vmatprep.subr.mxu0 0.0
      %1553 = vmatpush1.msra.mxu0 0.0
      %1554 = vmatprep.subr.mxu0 0.0
      %1555 = vmatpush1.msra.mxu0 0.0
      %1556 = vmatprep.subr.mxu0 0.0
      %1557 = vmatpush1.msra.mxu0 0.0
      %1558 = vmatprep.subr.mxu0 0.0
      %1559 = vmatpush1.msra.mxu0 0.0
      %1560 = vmatprep.subr.mxu0 0.0
      %1561 = vmatpush1.msra.mxu0 0.0
      %1562 = vmatprep.subr.mxu0 0.0
      %1563 = vmatpush1.msra.mxu0 0.0
      %1564 = vmatprep.subr.mxu0 0.0
      %1565 = vmatpush1.msra.mxu0 0.0
      %1566 = vmatprep.subr.mxu0 0.0
      %1567 = vmatpush1.msra.mxu0 0.0
      %1568 = vmatprep.subr.mxu0 0.0
      %1569 = vmatpush1.msra.mxu0 0.0
      %1570 = vmatprep.subr.mxu0 0.0
      %1571 = vmatpush1.msra.mxu0 0.0
      %1572 = vmatprep.subr.mxu0 0.0
      %1573 = vmatpush1.msra.mxu0 0.0
      %1574 = vmatprep.subr.mxu0 0.0
      %1575 = vmatpush1.msra.mxu0 0.0
      %1576 = vmatprep.subr.mxu0 0.0
      %1577 = vmatpush1.msra.mxu0 0.0
      %1578 = vmatprep.subr.mxu0 0.0
      %1579 = vmatpush1.msra.mxu0 0.0
      %1580 = vmatprep.subr.mxu0 0.0
      %1581 = vmatpush1.msra.mxu0 0.0
      %1582 = vmatprep.subr.mxu0 0.0
      %1583 = vmatpush1.msra.mxu0 0.0
      %1584 = vmatprep.subr.mxu0 0.0
      %1585 = vmatpush1.msra.mxu0 0.0
      %1586 = vmatprep.subr.mxu0 0.0
      %1587 = vmatpush1.msra.mxu0 0.0
      %1588 = vmatprep.subr.mxu0 0.0
      %1589 = vmatpush1.msra.mxu0 0.0
      %1590 = vmatprep.subr.mxu0 0.0
      %1591 = vmatpush1.msra.mxu0 0.0
      %1592 = vmatprep.subr.mxu0 0.0
      %1593 = vmatpush1.msra.mxu0 0.0
      %1594 = vmatprep.subr.mxu0 0.0
      %1595 = vmatpush1.msra.mxu0 0.0
      %1596 = vmatprep.subr.mxu0 0.0
      %1597 = vmatpush1.msra.mxu0 0.0
      %1598 = vmatprep.subr.mxu0 0.0
      %1599 = vmatpush1.msra.mxu0 0.0
      %1600 = vmatprep.mubr.f32.mxu0 0.0
      %1601 = vmatmul.mubr.f32.gmra.mrb[0].mxu0 %v1531
      %v1602 = vpop.f32.mrb[0].mxu0
      %v1603 = vadd.f32 0.0, %v1602
      %v1604 = vpop.f32.mrb[0].mxu0
      %1605 = vmatprep.mubr.f32.mxu0 0.0
      %1606 = vmatmul.mubr.f32.gmra.mrb[0].mxu0 %v1534
      %v1607 = vpop.f32.mrb[0].mxu0
      %v1608 = vadd.f32 0.0, %v1607
      %v1609 = vpop.f32.mrb[0].mxu0
      %1610 = vdwg.mxu0
      %v1611 = vld [vmem:[%s1144] sm:$0xff]
      %v1612 = vld [vmem:[%s1144 + $0x8] sm:$0xff]
      %v1613 = vld [vmem:[%s1144 + $0x10] sm:$0xff]
      %v1614 = vld [vmem:[%s1144 + $0x18] sm:$0xff]
      %1615 = vmatprep.subr.mxu0 0.0
      %1616 = vmatpush1.msra.mxu0 %v1611
      %1617 = vmatprep.subr.mxu0 0.0
      %1618 = vmatpush1.msra.mxu0 %v1612
      %1619 = vmatprep.subr.mxu0 0.0
      %1620 = vmatpush1.msra.mxu0 %v1613
      %1621 = vmatprep.subr.mxu0 0.0
      %1622 = vmatpush1.msra.mxu0 %v1614
      %1623 = vmatprep.subr.mxu0 0.0
      %1624 = vmatpush1.msra.mxu0 0.0
      %1625 = vmatprep.subr.mxu0 0.0
      %1626 = vmatpush1.msra.mxu0 0.0
      %1627 = vmatprep.subr.mxu0 0.0
      %1628 = vmatpush1.msra.mxu0 0.0
      %1629 = vmatprep.subr.mxu0 0.0
      %1630 = vmatpush1.msra.mxu0 0.0
      %1631 = vmatprep.subr.mxu0 0.0
      %1632 = vmatpush1.msra.mxu0 0.0
      %1633 = vmatprep.subr.mxu0 0.0
      %1634 = vmatpush1.msra.mxu0 0.0
      %1635 = vmatprep.subr.mxu0 0.0
      %1636 = vmatpush1.msra.mxu0 0.0
      %1637 = vmatprep.subr.mxu0 0.0
      %1638 = vmatpush1.msra.mxu0 0.0
      %1639 = vmatprep.subr.mxu0 0.0
      %1640 = vmatpush1.msra.mxu0 0.0
      %1641 = vmatprep.subr.mxu0 0.0
      %1642 = vmatpush1.msra.mxu0 0.0
      %1643 = vmatprep.subr.mxu0 0.0
      %1644 = vmatpush1.msra.mxu0 0.0
      %1645 = vmatprep.subr.mxu0 0.0
      %1646 = vmatpush1.msra.mxu0 0.0
      %1647 = vmatprep.subr.mxu0 0.0
      %1648 = vmatpush1.msra.mxu0 0.0
      %1649 = vmatprep.subr.mxu0 0.0
      %1650 = vmatpush1.msra.mxu0 0.0
      %1651 = vmatprep.subr.mxu0 0.0
      %1652 = vmatpush1.msra.mxu0 0.0
      %1653 = vmatprep.subr.mxu0 0.0
      %1654 = vmatpush1.msra.mxu0 0.0
      %1655 = vmatprep.subr.mxu0 0.0
      %1656 = vmatpush1.msra.mxu0 0.0
      %1657 = vmatprep.subr.mxu0 0.0
      %1658 = vmatpush1.msra.mxu0 0.0
      %1659 = vmatprep.subr.mxu0 0.0
      %1660 = vmatpush1.msra.mxu0 0.0
      %1661 = vmatprep.subr.mxu0 0.0
      %1662 = vmatpush1.msra.mxu0 0.0
      %1663 = vmatprep.subr.mxu0 0.0
      %1664 = vmatpush1.msra.mxu0 0.0
      %1665 = vmatprep.subr.mxu0 0.0
      %1666 = vmatpush1.msra.mxu0 0.0
      %1667 = vmatprep.subr.mxu0 0.0
      %1668 = vmatpush1.msra.mxu0 0.0
      %1669 = vmatprep.subr.mxu0 0.0
      %1670 = vmatpush1.msra.mxu0 0.0
      %1671 = vmatprep.subr.mxu0 0.0
      %1672 = vmatpush1.msra.mxu0 0.0
      %1673 = vmatprep.subr.mxu0 0.0
      %1674 = vmatpush1.msra.mxu0 0.0
      %1675 = vmatprep.subr.mxu0 0.0
      %1676 = vmatpush1.msra.mxu0 0.0
      %1677 = vmatprep.subr.mxu0 0.0
      %1678 = vmatpush1.msra.mxu0 0.0
      %1679 = vmatprep.mubr.f32.mxu0 0.0
      %1680 = vmatmul.mubr.f32.gmra.mrb[0].mxu0 %v1290
      %v1681 = vpop.f32.mrb[0].mxu0
      %v1682 = vadd.f32 0.0, %v1681
      %v1683 = vpop.f32.mrb[0].mxu0
      %1684 = vmatprep.mubr.f32.mxu0 0.0
      %1685 = vmatmul.mubr.f32.gmra.mrb[0].mxu0 %v1293
      %v1686 = vpop.f32.mrb[0].mxu0
      %v1687 = vadd.f32 0.0, %v1686
      %v1688 = vpop.f32.mrb[0].mxu0
      %1689 = vdwg.mxu0
      %v1691 = vsel %vm1288, %v1682, 0
      %v1694 = vsel %vm1288, %v1687, 0
      %1696 = vmatprep.subr.mxu0 0.0
      %1697 = vmatpush1.msra.mxu0 %v1223
      %1698 = vmatprep.subr.mxu0 0.0
      %1699 = vmatpush1.msra.mxu0 %v1224
      %1700 = vmatprep.subr.mxu0 0.0
      %1701 = vmatpush1.msra.mxu0 %v1225
      %1702 = vmatprep.subr.mxu0 0.0
      %1703 = vmatpush1.msra.mxu0 %v1226
      %1704 = vmatprep.subr.mxu0 0.0
      %1705 = vmatpush1.msra.mxu0 0.0
      %1706 = vmatprep.subr.mxu0 0.0
      %1707 = vmatpush1.msra.mxu0 0.0
      %1708 = vmatprep.subr.mxu0 0.0
      %1709 = vmatpush1.msra.mxu0 0.0
      %1710 = vmatprep.subr.mxu0 0.0
      %1711 = vmatpush1.msra.mxu0 0.0
      %1712 = vmatprep.subr.mxu0 0.0
      %1713 = vmatpush1.msra.mxu0 0.0
      %1714 = vmatprep.subr.mxu0 0.0
      %1715 = vmatpush1.msra.mxu0 0.0
      %1716 = vmatprep.subr.mxu0 0.0
      %1717 = vmatpush1.msra.mxu0 0.0
      %1718 = vmatprep.subr.mxu0 0.0
      %1719 = vmatpush1.msra.mxu0 0.0
      %1720 = vmatprep.subr.mxu0 0.0
      %1721 = vmatpush1.msra.mxu0 0.0
      %1722 = vmatprep.subr.mxu0 0.0
      %1723 = vmatpush1.msra.mxu0 0.0
      %1724 = vmatprep.subr.mxu0 0.0
      %1725 = vmatpush1.msra.mxu0 0.0
      %1726 = vmatprep.subr.mxu0 0.0
      %1727 = vmatpush1.msra.mxu0 0.0
      %1728 = vmatprep.subr.mxu0 0.0
      %1729 = vmatpush1.msra.mxu0 0.0
      %1730 = vmatprep.subr.mxu0 0.0
      %1731 = vmatpush1.msra.mxu0 0.0
      %1732 = vmatprep.subr.mxu0 0.0
      %1733 = vmatpush1.msra.mxu0 0.0
      %1734 = vmatprep.subr.mxu0 0.0
      %1735 = vmatpush1.msra.mxu0 0.0
      %1736 = vmatprep.subr.mxu0 0.0
      %1737 = vmatpush1.msra.mxu0 0.0
      %1738 = vmatprep.subr.mxu0 0.0
      %1739 = vmatpush1.msra.mxu0 0.0
      %1740 = vmatprep.subr.mxu0 0.0
      %1741 = vmatpush1.msra.mxu0 0.0
      %1742 = vmatprep.subr.mxu0 0.0
      %1743 = vmatpush1.msra.mxu0 0.0
      %1744 = vmatprep.subr.mxu0 0.0
      %1745 = vmatpush1.msra.mxu0 0.0
      %1746 = vmatprep.subr.mxu0 0.0
      %1747 = vmatpush1.msra.mxu0 0.0
      %1748 = vmatprep.subr.mxu0 0.0
      %1749 = vmatpush1.msra.mxu0 0.0
      %1750 = vmatprep.subr.mxu0 0.0
      %1751 = vmatpush1.msra.mxu0 0.0
      %1752 = vmatprep.subr.mxu0 0.0
      %1753 = vmatpush1.msra.mxu0 0.0
      %1754 = vmatprep.subr.mxu0 0.0
      %1755 = vmatpush1.msra.mxu0 0.0
      %1756 = vmatprep.subr.mxu0 0.0
      %1757 = vmatpush1.msra.mxu0 0.0
      %1758 = vmatprep.subr.mxu0 0.0
      %1759 = vmatpush1.msra.mxu0 0.0
      %1760 = vmatprep.mubr.f32.mxu0 0.0
      %1761 = vmatmul.mubr.f32.gmra.mrb[0].mxu0 %v1691
      %v1762 = vpop.f32.mrb[0].mxu0
      %v1763 = vadd.f32 0.0, %v1762
      %v1764 = vpop.f32.mrb[0].mxu0
      %1765 = vmatprep.mubr.f32.mxu0 0.0
      %1766 = vmatmul.mubr.f32.gmra.mrb[0].mxu0 %v1694
      %v1767 = vpop.f32.mrb[0].mxu0
      %v1768 = vadd.f32 0.0, %v1767
      %v1769 = vpop.f32.mrb[0].mxu0
      %1770 = vdwg.mxu0
      %v1771 = vld [vmem:[%s7] sm:$0xff]
      %v1772 = vld [vmem:[%s7 + $0x8] sm:$0xff]
      %v1773 = vld [vmem:[%s1154] sm:$0xff]
      %v1774 = vld [vmem:[%s1154 + $0x8] sm:$0xff]
      %vm1775 = vcmask 130048
      %v1777 = vsel %vm1775, %v1771, 0
      %v1780 = vsel %vm1775, %v1772, 0
      %1782 = vmatprep.subr.mxu0 0.0
      %1783 = vmatpush1.msra.mxu0 %v1773
      %1784 = vmatprep.subr.mxu0 0.0
      %1785 = vmatpush1.msra.mxu0 %v1774
      %1786 = vmatprep.subr.mxu0 0.0
      %1787 = vmatpush1.msra.mxu0 0.0
      %1788 = vmatprep.subr.mxu0 0.0
      %1789 = vmatpush1.msra.mxu0 0.0
      %1790 = vmatprep.subr.mxu0 0.0
      %1791 = vmatpush1.msra.mxu0 0.0
      %1792 = vmatprep.subr.mxu0 0.0
      %1793 = vmatpush1.msra.mxu0 0.0
      %1794 = vmatprep.subr.mxu0 0.0
      %1795 = vmatpush1.msra.mxu0 0.0
      %1796 = vmatprep.subr.mxu0 0.0
      %1797 = vmatpush1.msra.mxu0 0.0
      %1798 = vmatprep.subr.mxu0 0.0
      %1799 = vmatpush1.msra.mxu0 0.0
      %1800 = vmatprep.subr.mxu0 0.0
      %1801 = vmatpush1.msra.mxu0 0.0
      %1802 = vmatprep.subr.mxu0 0.0
      %1803 = vmatpush1.msra.mxu0 0.0
      %1804 = vmatprep.subr.mxu0 0.0
      %1805 = vmatpush1.msra.mxu0 0.0
      %1806 = vmatprep.subr.mxu0 0.0
      %1807 = vmatpush1.msra.mxu0 0.0
      %1808 = vmatprep.subr.mxu0 0.0
      %1809 = vmatpush1.msra.mxu0 0.0
      %1810 = vmatprep.subr.mxu0 0.0
      %1811 = vmatpush1.msra.mxu0 0.0
      %1812 = vmatprep.subr.mxu0 0.0
      %1813 = vmatpush1.msra.mxu0 0.0
      %1814 = vmatprep.subr.mxu0 0.0
      %1815 = vmatpush1.msra.mxu0 0.0
      %1816 = vmatprep.subr.mxu0 0.0
      %1817 = vmatpush1.msra.mxu0 0.0
      %1818 = vmatprep.subr.mxu0 0.0
      %1819 = vmatpush1.msra.mxu0 0.0
      %1820 = vmatprep.subr.mxu0 0.0
      %1821 = vmatpush1.msra.mxu0 0.0
      %1822 = vmatprep.subr.mxu0 0.0
      %1823 = vmatpush1.msra.mxu0 0.0
      %1824 = vmatprep.subr.mxu0 0.0
      %1825 = vmatpush1.msra.mxu0 0.0
      %1826 = vmatprep.subr.mxu0 0.0
      %1827 = vmatpush1.msra.mxu0 0.0
      %1828 = vmatprep.subr.mxu0 0.0
      %1829 = vmatpush1.msra.mxu0 0.0
      %1830 = vmatprep.subr.mxu0 0.0
      %1831 = vmatpush1.msra.mxu0 0.0
      %1832 = vmatprep.subr.mxu0 0.0
      %1833 = vmatpush1.msra.mxu0 0.0
      %1834 = vmatprep.subr.mxu0 0.0
      %1835 = vmatpush1.msra.mxu0 0.0
      %1836 = vmatprep.subr.mxu0 0.0
      %1837 = vmatpush1.msra.mxu0 0.0
      %1838 = vmatprep.subr.mxu0 0.0
      %1839 = vmatpush1.msra.mxu0 0.0
      %1840 = vmatprep.subr.mxu0 0.0
      %1841 = vmatpush1.msra.mxu0 0.0
      %1842 = vmatprep.subr.mxu0 0.0
      %1843 = vmatpush1.msra.mxu0 0.0
      %1844 = vmatprep.subr.mxu0 0.0
      %1845 = vmatpush1.msra.mxu0 0.0
      %1846 = vmatprep.mubr.f32.mxu0 0.0
      %1847 = vmatmul.mubr.f32.gmra.mrb[0].mxu0 %v1777
      %v1848 = vpop.f32.mrb[0].mxu0
      %v1849 = vadd.f32 0.0, %v1848
      %v1850 = vpop.f32.mrb[0].mxu0
      %1851 = vmatprep.mubr.f32.mxu0 0.0
      %1852 = vmatmul.mubr.f32.gmra.mrb[0].mxu0 %v1780
      %v1853 = vpop.f32.mrb[0].mxu0
      %v1854 = vadd.f32 0.0, %v1853
      %v1855 = vpop.f32.mrb[0].mxu0
      %1856 = vdwg.mxu0
      %v1858 = vsel %vm1775, %v1849, 0
      %v1861 = vsel %vm1775, %v1854, 0
      %1863 = vmatprep.subr.mxu0 0.0
      %1864 = vmatpush1.msra.mxu0 %v1229
      %1865 = vmatprep.subr.mxu0 0.0
      %1866 = vmatpush1.msra.mxu0 %v1230
      %1867 = vmatprep.subr.mxu0 0.0
      %1868 = vmatpush1.msra.mxu0 0.0
      %1869 = vmatprep.subr.mxu0 0.0
      %1870 = vmatpush1.msra.mxu0 0.0
      %1871 = vmatprep.subr.mxu0 0.0
      %1872 = vmatpush1.msra.mxu0 0.0
      %1873 = vmatprep.subr.mxu0 0.0
      %1874 = vmatpush1.msra.mxu0 0.0
      %1875 = vmatprep.subr.mxu0 0.0
      %1876 = vmatpush1.msra.mxu0 0.0
      %1877 = vmatprep.subr.mxu0 0.0
      %1878 = vmatpush1.msra.mxu0 0.0
      %1879 = vmatprep.subr.mxu0 0.0
      %1880 = vmatpush1.msra.mxu0 0.0
      %1881 = vmatprep.subr.mxu0 0.0
      %1882 = vmatpush1.msra.mxu0 0.0
      %1883 = vmatprep.subr.mxu0 0.0
      %1884 = vmatpush1.msra.mxu0 0.0
      %1885 = vmatprep.subr.mxu0 0.0
      %1886 = vmatpush1.msra.mxu0 0.0
      %1887 = vmatprep.subr.mxu0 0.0
      %1888 = vmatpush1.msra.mxu0 0.0
      %1889 = vmatprep.subr.mxu0 0.0
      %1890 = vmatpush1.msra.mxu0 0.0
      %1891 = vmatprep.subr.mxu0 0.0
      %1892 = vmatpush1.msra.mxu0 0.0
      %1893 = vmatprep.subr.mxu0 0.0
      %1894 = vmatpush1.msra.mxu0 0.0
      %1895 = vmatprep.subr.mxu0 0.0
      %1896 = vmatpush1.msra.mxu0 0.0
      %1897 = vmatprep.subr.mxu0 0.0
      %1898 = vmatpush1.msra.mxu0 0.0
      %1899 = vmatprep.subr.mxu0 0.0
      %1900 = vmatpush1.msra.mxu0 0.0
      %1901 = vmatprep.subr.mxu0 0.0
      %1902 = vmatpush1.msra.mxu0 0.0
      %1903 = vmatprep.subr.mxu0 0.0
      %1904 = vmatpush1.msra.mxu0 0.0
      %1905 = vmatprep.subr.mxu0 0.0
      %1906 = vmatpush1.msra.mxu0 0.0
      %1907 = vmatprep.subr.mxu0 0.0
      %1908 = vmatpush1.msra.mxu0 0.0
      %1909 = vmatprep.subr.mxu0 0.0
      %1910 = vmatpush1.msra.mxu0 0.0
      %1911 = vmatprep.subr.mxu0 0.0
      %1912 = vmatpush1.msra.mxu0 0.0
      %1913 = vmatprep.subr.mxu0 0.0
      %1914 = vmatpush1.msra.mxu0 0.0
      %1915 = vmatprep.subr.mxu0 0.0
      %1916 = vmatpush1.msra.mxu0 0.0
      %1917 = vmatprep.subr.mxu0 0.0
      %1918 = vmatpush1.msra.mxu0 0.0
      %1919 = vmatprep.subr.mxu0 0.0
      %1920 = vmatpush1.msra.mxu0 0.0
      %1921 = vmatprep.subr.mxu0 0.0
      %1922 = vmatpush1.msra.mxu0 0.0
      %1923 = vmatprep.subr.mxu0 0.0
      %1924 = vmatpush1.msra.mxu0 0.0
      %1925 = vmatprep.subr.mxu0 0.0
      %1926 = vmatpush1.msra.mxu0 0.0
      %1927 = vmatprep.mubr.f32.mxu0 0.0
      %1928 = vmatmul.mubr.f32.gmra.mrb[0].mxu0 %v1858
      %v1929 = vpop.f32.mrb[0].mxu0
      %v1930 = vadd.f32 0.0, %v1929
      %v1931 = vpop.f32.mrb[0].mxu0
      %1932 = vmatprep.mubr.f32.mxu0 0.0
      %1933 = vmatmul.mubr.f32.gmra.mrb[0].mxu0 %v1861
      %v1934 = vpop.f32.mrb[0].mxu0
      %v1935 = vadd.f32 0.0, %v1934
      %v1936 = vpop.f32.mrb[0].mxu0
      %1937 = vdwg.mxu0
      %v1938 = vld [vmem:[%s5] sm:$0xff]
      %v1939 = vld [vmem:[%s5 + $0x8] sm:$0xff]
      %v1940 = vld [vmem:[%s1149] sm:$0xff]
      %v1941 = vld [vmem:[%s1149 + $0x8] sm:$0xff]
      %v1943 = vsel %vm1775, %v1938, 0
      %v1946 = vsel %vm1775, %v1939, 0
      %1948 = vmatprep.subr.mxu0 0.0
      %1949 = vmatpush1.msra.mxu0 %v1940
      %1950 = vmatprep.subr.mxu0 0.0
      %1951 = vmatpush1.msra.mxu0 %v1941
      %1952 = vmatprep.subr.mxu0 0.0
      %1953 = vmatpush1.msra.mxu0 0.0
      %1954 = vmatprep.subr.mxu0 0.0
      %1955 = vmatpush1.msra.mxu0 0.0
      %1956 = vmatprep.subr.mxu0 0.0
      %1957 = vmatpush1.msra.mxu0 0.0
      %1958 = vmatprep.subr.mxu0 0.0
      %1959 = vmatpush1.msra.mxu0 0.0
      %1960 = vmatprep.subr.mxu0 0.0
      %1961 = vmatpush1.msra.mxu0 0.0
      %1962 = vmatprep.subr.mxu0 0.0
      %1963 = vmatpush1.msra.mxu0 0.0
      %1964 = vmatprep.subr.mxu0 0.0
      %1965 = vmatpush1.msra.mxu0 0.0
      %1966 = vmatprep.subr.mxu0 0.0
      %1967 = vmatpush1.msra.mxu0 0.0
      %1968 = vmatprep.subr.mxu0 0.0
      %1969 = vmatpush1.msra.mxu0 0.0
      %1970 = vmatprep.subr.mxu0 0.0
      %1971 = vmatpush1.msra.mxu0 0.0
      %1972 = vmatprep.subr.mxu0 0.0
      %1973 = vmatpush1.msra.mxu0 0.0
      %1974 = vmatprep.subr.mxu0 0.0
      %1975 = vmatpush1.msra.mxu0 0.0
      %1976 = vmatprep.subr.mxu0 0.0
      %1977 = vmatpush1.msra.mxu0 0.0
      %1978 = vmatprep.subr.mxu0 0.0
      %1979 = vmatpush1.msra.mxu0 0.0
      %1980 = vmatprep.subr.mxu0 0.0
      %1981 = vmatpush1.msra.mxu0 0.0
      %1982 = vmatprep.subr.mxu0 0.0
      %1983 = vmatpush1.msra.mxu0 0.0
      %1984 = vmatprep.subr.mxu0 0.0
      %1985 = vmatpush1.msra.mxu0 0.0
      %1986 = vmatprep.subr.mxu0 0.0
      %1987 = vmatpush1.msra.mxu0 0.0
      %1988 = vmatprep.subr.mxu0 0.0
      %1989 = vmatpush1.msra.mxu0 0.0
      %1990 = vmatprep.subr.mxu0 0.0
      %1991 = vmatpush1.msra.mxu0 0.0
      %1992 = vmatprep.subr.mxu0 0.0
      %1993 = vmatpush1.msra.mxu0 0.0
      %1994 = vmatprep.subr.mxu0 0.0
      %1995 = vmatpush1.msra.mxu0 0.0
      %1996 = vmatprep.subr.mxu0 0.0
      %1997 = vmatpush1.msra.mxu0 0.0
      %1998 = vmatprep.subr.mxu0 0.0
      %1999 = vmatpush1.msra.mxu0 0.0
      %2000 = vmatprep.subr.mxu0 0.0
      %2001 = vmatpush1.msra.mxu0 0.0
      %2002 = vmatprep.subr.mxu0 0.0
      %2003 = vmatpush1.msra.mxu0 0.0
      %2004 = vmatprep.subr.mxu0 0.0
      %2005 = vmatpush1.msra.mxu0 0.0
      %2006 = vmatprep.subr.mxu0 0.0
      %2007 = vmatpush1.msra.mxu0 0.0
      %2008 = vmatprep.subr.mxu0 0.0
      %2009 = vmatpush1.msra.mxu0 0.0
      %2010 = vmatprep.subr.mxu0 0.0
      %2011 = vmatpush1.msra.mxu0 0.0
      %2012 = vmatprep.mubr.f32.mxu0 0.0
      %2013 = vmatmul.mubr.f32.gmra.mrb[0].mxu0 %v1943
      %v2014 = vpop.f32.mrb[0].mxu0
      %v2015 = vadd.f32 0.0, %v2014
      %v2016 = vpop.f32.mrb[0].mxu0
      %2017 = vmatprep.mubr.f32.mxu0 0.0
      %2018 = vmatmul.mubr.f32.gmra.mrb[0].mxu0 %v1946
      %v2019 = vpop.f32.mrb[0].mxu0
      %v2020 = vadd.f32 0.0, %v2019
      %v2021 = vpop.f32.mrb[0].mxu0
      %2022 = vdwg.mxu0
      %v2024 = vsel %vm1775, %v2015, 0
      %v2027 = vsel %vm1775, %v2020, 0
      %2029 = vmatprep.subr.mxu0 0.0
      %2030 = vmatpush1.msra.mxu0 %v1227
      %2031 = vmatprep.subr.mxu0 0.0
      %2032 = vmatpush1.msra.mxu0 %v1228
      %2033 = vmatprep.subr.mxu0 0.0
      %2034 = vmatpush1.msra.mxu0 0.0
      %2035 = vmatprep.subr.mxu0 0.0
      %2036 = vmatpush1.msra.mxu0 0.0
      %2037 = vmatprep.subr.mxu0 0.0
      %2038 = vmatpush1.msra.mxu0 0.0
      %2039 = vmatprep.subr.mxu0 0.0
      %2040 = vmatpush1.msra.mxu0 0.0
      %2041 = vmatprep.subr.mxu0 0.0
      %2042 = vmatpush1.msra.mxu0 0.0
      %2043 = vmatprep.subr.mxu0 0.0
      %2044 = vmatpush1.msra.mxu0 0.0
      %2045 = vmatprep.subr.mxu0 0.0
      %2046 = vmatpush1.msra.mxu0 0.0
      %2047 = vmatprep.subr.mxu0 0.0
      %2048 = vmatpush1.msra.mxu0 0.0
      %2049 = vmatprep.subr.mxu0 0.0
      %2050 = vmatpush1.msra.mxu0 0.0
      %2051 = vmatprep.subr.mxu0 0.0
      %2052 = vmatpush1.msra.mxu0 0.0
      %2053 = vmatprep.subr.mxu0 0.0
      %2054 = vmatpush1.msra.mxu0 0.0
      %2055 = vmatprep.subr.mxu0 0.0
      %2056 = vmatpush1.msra.mxu0 0.0
      %2057 = vmatprep.subr.mxu0 0.0
      %2058 = vmatpush1.msra.mxu0 0.0
      %2059 = vmatprep.subr.mxu0 0.0
      %2060 = vmatpush1.msra.mxu0 0.0
      %2061 = vmatprep.subr.mxu0 0.0
      %2062 = vmatpush1.msra.mxu0 0.0
      %2063 = vmatprep.subr.mxu0 0.0
      %2064 = vmatpush1.msra.mxu0 0.0
      %2065 = vmatprep.subr.mxu0 0.0
      %2066 = vmatpush1.msra.mxu0 0.0
      %2067 = vmatprep.subr.mxu0 0.0
      %2068 = vmatpush1.msra.mxu0 0.0
      %2069 = vmatprep.subr.mxu0 0.0
      %2070 = vmatpush1.msra.mxu0 0.0
      %2071 = vmatprep.subr.mxu0 0.0
      %2072 = vmatpush1.msra.mxu0 0.0
      %2073 = vmatprep.subr.mxu0 0.0
      %2074 = vmatpush1.msra.mxu0 0.0
      %2075 = vmatprep.subr.mxu0 0.0
      %2076 = vmatpush1.msra.mxu0 0.0
      %2077 = vmatprep.subr.mxu0 0.0
      %2078 = vmatpush1.msra.mxu0 0.0
      %2079 = vmatprep.subr.mxu0 0.0
      %2080 = vmatpush1.msra.mxu0 0.0
      %2081 = vmatprep.subr.mxu0 0.0
      %2082 = vmatpush1.msra.mxu0 0.0
      %2083 = vmatprep.subr.mxu0 0.0
      %2084 = vmatpush1.msra.mxu0 0.0
      %2085 = vmatprep.subr.mxu0 0.0
      %2086 = vmatpush1.msra.mxu0 0.0
      %2087 = vmatprep.subr.mxu0 0.0
      %2088 = vmatpush1.msra.mxu0 0.0
      %2089 = vmatprep.subr.mxu0 0.0
      %2090 = vmatpush1.msra.mxu0 0.0
      %2091 = vmatprep.subr.mxu0 0.0
      %2092 = vmatpush1.msra.mxu0 0.0
      %2093 = vmatprep.mubr.f32.mxu0 0.0
      %2094 = vmatmul.mubr.f32.gmra.mrb[0].mxu0 %v2024
      %v2095 = vpop.f32.mrb[0].mxu0
      %v2096 = vadd.f32 0.0, %v2095
      %v2097 = vpop.f32.mrb[0].mxu0
      %2098 = vmatprep.mubr.f32.mxu0 0.0
      %2099 = vmatmul.mubr.f32.gmra.mrb[0].mxu0 %v2027
      %v2100 = vpop.f32.mrb[0].mxu0
      %v2101 = vadd.f32 0.0, %v2100
      %v2102 = vpop.f32.mrb[0].mxu0
      %2103 = vdwg.mxu0
      %v2105 = vsel %vm1775, %v1203, 0
      %v2108 = vsel %vm1775, %v1204, 0
      %v2111 = vsel %vm1775, %v1205, 0
      %v2114 = vsel %vm1775, %v1206, 0
      %v2117 = vsel %vm1775, %v1207, 0
      %v2120 = vsel %vm1775, %v1208, 0
      %v2123 = vsel %vm1775, %v1209, 0
      %v2126 = vsel %vm1775, %v1210, 0
      %v2129 = vsel %vm1775, %v1211, 0
      %v2132 = vsel %vm1775, %v1212, 0
      %v2135 = vsel %vm1775, %v1213, 0
      %v2138 = vsel %vm1775, %v1214, 0
      %v2141 = vsel %vm1775, %v1215, 0
      %v2144 = vsel %vm1775, %v1216, 0
      %v2147 = vsel %vm1775, %v1217, 0
      %v2150 = vsel %vm1775, %v1218, 0
      %2152 = vmatprep.subr.mxu0 0.0
      %2153 = vmatpush1.msra.mxu0 %v1282
      %2154 = vmatprep.subr.mxu0 0.0
      %2155 = vmatpush1.msra.mxu0 %v1283
      %2156 = vmatprep.subr.mxu0 0.0
      %2157 = vmatpush1.msra.mxu0 0.0
      %2158 = vmatprep.subr.mxu0 0.0
      %2159 = vmatpush1.msra.mxu0 0.0
      %2160 = vmatprep.subr.mxu0 0.0
      %2161 = vmatpush1.msra.mxu0 0.0
      %2162 = vmatprep.subr.mxu0 0.0
      %2163 = vmatpush1.msra.mxu0 0.0
      %2164 = vmatprep.subr.mxu0 0.0
      %2165 = vmatpush1.msra.mxu0 0.0
      %2166 = vmatprep.subr.mxu0 0.0
      %2167 = vmatpush1.msra.mxu0 0.0
      %2168 = vmatprep.subr.mxu0 0.0
      %2169 = vmatpush1.msra.mxu0 0.0
      %2170 = vmatprep.subr.mxu0 0.0
      %2171 = vmatpush1.msra.mxu0 0.0
      %2172 = vmatprep.subr.mxu0 0.0
      %2173 = vmatpush1.msra.mxu0 0.0
      %2174 = vmatprep.subr.mxu0 0.0
      %2175 = vmatpush1.msra.mxu0 0.0
      %2176 = vmatprep.subr.mxu0 0.0
      %2177 = vmatpush1.msra.mxu0 0.0
      %2178 = vmatprep.subr.mxu0 0.0
      %2179 = vmatpush1.msra.mxu0 0.0
      %2180 = vmatprep.subr.mxu0 0.0
      %2181 = vmatpush1.msra.mxu0 0.0
      %2182 = vmatprep.subr.mxu0 0.0
      %2183 = vmatpush1.msra.mxu0 0.0
      %2184 = vmatprep.subr.mxu0 0.0
      %2185 = vmatpush1.msra.mxu0 0.0
      %2186 = vmatprep.subr.mxu0 0.0
      %2187 = vmatpush1.msra.mxu0 0.0
      %2188 = vmatprep.subr.mxu0 0.0
      %2189 = vmatpush1.msra.mxu0 0.0
      %2190 = vmatprep.subr.mxu0 0.0
      %2191 = vmatpush1.msra.mxu0 0.0
      %2192 = vmatprep.subr.mxu0 0.0
      %2193 = vmatpush1.msra.mxu0 0.0
      %2194 = vmatprep.subr.mxu0 0.0
      %2195 = vmatpush1.msra.mxu0 0.0
      %2196 = vmatprep.subr.mxu0 0.0
      %2197 = vmatpush1.msra.mxu0 0.0
      %2198 = vmatprep.subr.mxu0 0.0
      %2199 = vmatpush1.msra.mxu0 0.0
      %2200 = vmatprep.subr.mxu0 0.0
      %2201 = vmatpush1.msra.mxu0 0.0
      %2202 = vmatprep.subr.mxu0 0.0
      %2203 = vmatpush1.msra.mxu0 0.0
      %2204 = vmatprep.subr.mxu0 0.0
      %2205 = vmatpush1.msra.mxu0 0.0
      %2206 = vmatprep.subr.mxu0 0.0
      %2207 = vmatpush1.msra.mxu0 0.0
      %2208 = vmatprep.subr.mxu0 0.0
      %2209 = vmatpush1.msra.mxu0 0.0
      %2210 = vmatprep.subr.mxu0 0.0
      %2211 = vmatpush1.msra.mxu0 0.0
      %2212 = vmatprep.subr.mxu0 0.0
      %2213 = vmatpush1.msra.mxu0 0.0
      %2214 = vmatprep.subr.mxu0 0.0
      %2215 = vmatpush1.msra.mxu0 0.0
      %2216 = vmatprep.mubr.f32.mxu0 0.0
      %2217 = vmatmul.mubr.f32.gmra.mrb[0].mxu0 %v2105
      %v2218 = vpop.f32.mrb[0].mxu0
      %v2219 = vadd.f32 0.0, %v2218
      %v2220 = vpop.f32.mrb[0].mxu0
      %2221 = vmatprep.mubr.f32.mxu0 0.0
      %2222 = vmatmul.mubr.f32.gmra.mrb[0].mxu0 %v2108
      %v2223 = vpop.f32.mrb[0].mxu0
      %v2224 = vadd.f32 0.0, %v2223
      %v2225 = vpop.f32.mrb[0].mxu0
      %2226 = vmatprep.mubr.f32.mxu0 0.0
      %2227 = vmatmul.mubr.f32.gmra.mrb[0].mxu0 %v2111
      %v2228 = vpop.f32.mrb[0].mxu0
      %v2229 = vadd.f32 0.0, %v2228
      %v2230 = vpop.f32.mrb[0].mxu0
      %2231 = vmatprep.mubr.f32.mxu0 0.0
      %2232 = vmatmul.mubr.f32.gmra.mrb[0].mxu0 %v2114
      %v2233 = vpop.f32.mrb[0].mxu0
      %v2234 = vadd.f32 0.0, %v2233
      %v2235 = vpop.f32.mrb[0].mxu0
      %2236 = vmatprep.mubr.f32.mxu0 0.0
      %2237 = vmatmul.mubr.f32.gmra.mrb[0].mxu0 %v2117
      %v2238 = vpop.f32.mrb[0].mxu0
      %v2239 = vadd.f32 0.0, %v2238
      %v2240 = vpop.f32.mrb[0].mxu0
      %2241 = vmatprep.mubr.f32.mxu0 0.0
      %2242 = vmatmul.mubr.f32.gmra.mrb[0].mxu0 %v2120
      %v2243 = vpop.f32.mrb[0].mxu0
      %v2244 = vadd.f32 0.0, %v2243
      %v2245 = vpop.f32.mrb[0].mxu0
      %2246 = vmatprep.mubr.f32.mxu0 0.0
      %2247 = vmatmul.mubr.f32.gmra.mrb[0].mxu0 %v2123
      %v2248 = vpop.f32.mrb[0].mxu0
      %v2249 = vadd.f32 0.0, %v2248
      %v2250 = vpop.f32.mrb[0].mxu0
      %2251 = vmatprep.mubr.f32.mxu0 0.0
      %2252 = vmatmul.mubr.f32.gmra.mrb[0].mxu0 %v2126
      %v2253 = vpop.f32.mrb[0].mxu0
      %v2254 = vadd.f32 0.0, %v2253
      %v2255 = vpop.f32.mrb[0].mxu0
      %2256 = vmatprep.mubr.f32.mxu0 0.0
      %2257 = vmatmul.mubr.f32.gmra.mrb[0].mxu0 %v2129
      %v2258 = vpop.f32.mrb[0].mxu0
      %v2259 = vadd.f32 0.0, %v2258
      %v2260 = vpop.f32.mrb[0].mxu0
      %2261 = vmatprep.mubr.f32.mxu0 0.0
      %2262 = vmatmul.mubr.f32.gmra.mrb[0].mxu0 %v2132
      %v2263 = vpop.f32.mrb[0].mxu0
      %v2264 = vadd.f32 0.0, %v2263
      %v2265 = vpop.f32.mrb[0].mxu0
      %2266 = vmatprep.mubr.f32.mxu0 0.0
      %2267 = vmatmul.mubr.f32.gmra.mrb[0].mxu0 %v2135
      %v2268 = vpop.f32.mrb[0].mxu0
      %v2269 = vadd.f32 0.0, %v2268
      %v2270 = vpop.f32.mrb[0].mxu0
      %2271 = vmatprep.mubr.f32.mxu0 0.0
      %2272 = vmatmul.mubr.f32.gmra.mrb[0].mxu0 %v2138
      %v2273 = vpop.f32.mrb[0].mxu0
      %v2274 = vadd.f32 0.0, %v2273
      %v2275 = vpop.f32.mrb[0].mxu0
      %2276 = vmatprep.mubr.f32.mxu0 0.0
      %2277 = vmatmul.mubr.f32.gmra.mrb[0].mxu0 %v2141
      %v2278 = vpop.f32.mrb[0].mxu0
      %v2279 = vadd.f32 0.0, %v2278
      %v2280 = vpop.f32.mrb[0].mxu0
      %2281 = vmatprep.mubr.f32.mxu0 0.0
      %2282 = vmatmul.mubr.f32.gmra.mrb[0].mxu0 %v2144
      %v2283 = vpop.f32.mrb[0].mxu0
      %v2284 = vadd.f32 0.0, %v2283
      %v2285 = vpop.f32.mrb[0].mxu0
      %2286 = vmatprep.mubr.f32.mxu0 0.0
      %2287 = vmatmul.mubr.f32.gmra.mrb[0].mxu0 %v2147
      %v2288 = vpop.f32.mrb[0].mxu0
      %v2289 = vadd.f32 0.0, %v2288
      %v2290 = vpop.f32.mrb[0].mxu0
      %2291 = vmatprep.mubr.f32.mxu0 0.0
      %2292 = vmatmul.mubr.f32.gmra.mrb[0].mxu0 %v2150
      %v2293 = vpop.f32.mrb[0].mxu0
      %v2294 = vadd.f32 0.0, %v2293
      %v2295 = vpop.f32.mrb[0].mxu0
      %2296 = vdwg.mxu0
      %v2298 = vsel %vm1775, %v1231, 0
      %v2301 = vsel %vm1775, %v1232, 0
      %v2304 = vsel %vm1775, %v1233, 0
      %v2307 = vsel %vm1775, %v1234, 0
      %v2310 = vsel %vm1775, %v1235, 0
      %v2313 = vsel %vm1775, %v1236, 0
      %v2316 = vsel %vm1775, %v1237, 0
      %v2319 = vsel %vm1775, %v1238, 0
      %v2322 = vsel %vm1775, %v1239, 0
      %v2325 = vsel %vm1775, %v1240, 0
      %v2328 = vsel %vm1775, %v1241, 0
      %v2331 = vsel %vm1775, %v1242, 0
      %v2334 = vsel %vm1775, %v1243, 0
      %v2337 = vsel %vm1775, %v1244, 0
      %v2340 = vsel %vm1775, %v1245, 0
      %v2343 = vsel %vm1775, %v1246, 0
      %2345 = vmatprep.subr.mxu0 0.0
      %2346 = vmatpush1.msra.mxu0 %v2096
      %2347 = vmatprep.subr.mxu0 0.0
      %2348 = vmatpush1.msra.mxu0 %v2101
      %2349 = vmatprep.subr.mxu0 0.0
      %2350 = vmatpush1.msra.mxu0 0.0
      %2351 = vmatprep.subr.mxu0 0.0
      %2352 = vmatpush1.msra.mxu0 0.0
      %2353 = vmatprep.subr.mxu0 0.0
      %2354 = vmatpush1.msra.mxu0 0.0
      %2355 = vmatprep.subr.mxu0 0.0
      %2356 = vmatpush1.msra.mxu0 0.0
      %2357 = vmatprep.subr.mxu0 0.0
      %2358 = vmatpush1.msra.mxu0 0.0
      %2359 = vmatprep.subr.mxu0 0.0
      %2360 = vmatpush1.msra.mxu0 0.0
      %2361 = vmatprep.subr.mxu0 0.0
      %2362 = vmatpush1.msra.mxu0 0.0
      %2363 = vmatprep.subr.mxu0 0.0
      %2364 = vmatpush1.msra.mxu0 0.0
      %2365 = vmatprep.subr.mxu0 0.0
      %2366 = vmatpush1.msra.mxu0 0.0
      %2367 = vmatprep.subr.mxu0 0.0
      %2368 = vmatpush1.msra.mxu0 0.0
      %2369 = vmatprep.subr.mxu0 0.0
      %2370 = vmatpush1.msra.mxu0 0.0
      %2371 = vmatprep.subr.mxu0 0.0
      %2372 = vmatpush1.msra.mxu0 0.0
      %2373 = vmatprep.subr.mxu0 0.0
      %2374 = vmatpush1.msra.mxu0 0.0
      %2375 = vmatprep.subr.mxu0 0.0
      %2376 = vmatpush1.msra.mxu0 0.0
      %2377 = vmatprep.subr.mxu0 0.0
      %2378 = vmatpush1.msra.mxu0 0.0
      %2379 = vmatprep.subr.mxu0 0.0
      %2380 = vmatpush1.msra.mxu0 0.0
      %2381 = vmatprep.subr.mxu0 0.0
      %2382 = vmatpush1.msra.mxu0 0.0
      %2383 = vmatprep.subr.mxu0 0.0
      %2384 = vmatpush1.msra.mxu0 0.0
      %2385 = vmatprep.subr.mxu0 0.0
      %2386 = vmatpush1.msra.mxu0 0.0
      %2387 = vmatprep.subr.mxu0 0.0
      %2388 = vmatpush1.msra.mxu0 0.0
      %2389 = vmatprep.subr.mxu0 0.0
      %2390 = vmatpush1.msra.mxu0 0.0
      %2391 = vmatprep.subr.mxu0 0.0
      %2392 = vmatpush1.msra.mxu0 0.0
      %2393 = vmatprep.subr.mxu0 0.0
      %2394 = vmatpush1.msra.mxu0 0.0
      %2395 = vmatprep.subr.mxu0 0.0
      %2396 = vmatpush1.msra.mxu0 0.0
      %2397 = vmatprep.subr.mxu0 0.0
      %2398 = vmatpush1.msra.mxu0 0.0
      %2399 = vmatprep.subr.mxu0 0.0
      %2400 = vmatpush1.msra.mxu0 0.0
      %2401 = vmatprep.subr.mxu0 0.0
      %2402 = vmatpush1.msra.mxu0 0.0
      %2403 = vmatprep.subr.mxu0 0.0
      %2404 = vmatpush1.msra.mxu0 0.0
      %2405 = vmatprep.subr.mxu0 0.0
      %2406 = vmatpush1.msra.mxu0 0.0
      %2407 = vmatprep.subr.mxu0 0.0
      %2408 = vmatpush1.msra.mxu0 0.0
      %2409 = vmatprep.mubr.f32.mxu0 0.0
      %2410 = vmatmul.mubr.f32.gmra.mrb[0].mxu0 %v2298
      %v2411 = vpop.f32.mrb[0].mxu0
      %v2412 = vadd.f32 0.0, %v2411
      %v2413 = vpop.f32.mrb[0].mxu0
      %2414 = vmatprep.mubr.f32.mxu0 0.0
      %2415 = vmatmul.mubr.f32.gmra.mrb[0].mxu0 %v2301
      %v2416 = vpop.f32.mrb[0].mxu0
      %v2417 = vadd.f32 0.0, %v2416
      %v2418 = vpop.f32.mrb[0].mxu0
      %2419 = vmatprep.mubr.f32.mxu0 0.0
      %2420 = vmatmul.mubr.f32.gmra.mrb[0].mxu0 %v2304
      %v2421 = vpop.f32.mrb[0].mxu0
      %v2422 = vadd.f32 0.0, %v2421
      %v2423 = vpop.f32.mrb[0].mxu0
      %2424 = vmatprep.mubr.f32.mxu0 0.0
      %2425 = vmatmul.mubr.f32.gmra.mrb[0].mxu0 %v2307
      %v2426 = vpop.f32.mrb[0].mxu0
      %v2427 = vadd.f32 0.0, %v2426
      %v2428 = vpop.f32.mrb[0].mxu0
      %2429 = vmatprep.mubr.f32.mxu0 0.0
      %2430 = vmatmul.mubr.f32.gmra.mrb[0].mxu0 %v2310
      %v2431 = vpop.f32.mrb[0].mxu0
      %v2432 = vadd.f32 0.0, %v2431
      %v2433 = vpop.f32.mrb[0].mxu0
      %2434 = vmatprep.mubr.f32.mxu0 0.0
      %2435 = vmatmul.mubr.f32.gmra.mrb[0].mxu0 %v2313
      %v2436 = vpop.f32.mrb[0].mxu0
      %v2437 = vadd.f32 0.0, %v2436
      %v2438 = vpop.f32.mrb[0].mxu0
      %2439 = vmatprep.mubr.f32.mxu0 0.0
      %2440 = vmatmul.mubr.f32.gmra.mrb[0].mxu0 %v2316
      %v2441 = vpop.f32.mrb[0].mxu0
      %v2442 = vadd.f32 0.0, %v2441
      %v2443 = vpop.f32.mrb[0].mxu0
      %2444 = vmatprep.mubr.f32.mxu0 0.0
      %2445 = vmatmul.mubr.f32.gmra.mrb[0].mxu0 %v2319
      %v2446 = vpop.f32.mrb[0].mxu0
      %v2447 = vadd.f32 0.0, %v2446
      %v2448 = vpop.f32.mrb[0].mxu0
      %2449 = vmatprep.mubr.f32.mxu0 0.0
      %2450 = vmatmul.mubr.f32.gmra.mrb[0].mxu0 %v2322
      %v2451 = vpop.f32.mrb[0].mxu0
      %v2452 = vadd.f32 0.0, %v2451
      %v2453 = vpop.f32.mrb[0].mxu0
      %2454 = vmatprep.mubr.f32.mxu0 0.0
      %2455 = vmatmul.mubr.f32.gmra.mrb[0].mxu0 %v2325
      %v2456 = vpop.f32.mrb[0].mxu0
      %v2457 = vadd.f32 0.0, %v2456
      %v2458 = vpop.f32.mrb[0].mxu0
      %2459 = vmatprep.mubr.f32.mxu0 0.0
      %2460 = vmatmul.mubr.f32.gmra.mrb[0].mxu0 %v2328
      %v2461 = vpop.f32.mrb[0].mxu0
      %v2462 = vadd.f32 0.0, %v2461
      %v2463 = vpop.f32.mrb[0].mxu0
      %2464 = vmatprep.mubr.f32.mxu0 0.0
      %2465 = vmatmul.mubr.f32.gmra.mrb[0].mxu0 %v2331
      %v2466 = vpop.f32.mrb[0].mxu0
      %v2467 = vadd.f32 0.0, %v2466
      %v2468 = vpop.f32.mrb[0].mxu0
      %2469 = vmatprep.mubr.f32.mxu0 0.0
      %2470 = vmatmul.mubr.f32.gmra.mrb[0].mxu0 %v2334
      %v2471 = vpop.f32.mrb[0].mxu0
      %v2472 = vadd.f32 0.0, %v2471
      %v2473 = vpop.f32.mrb[0].mxu0
      %2474 = vmatprep.mubr.f32.mxu0 0.0
      %2475 = vmatmul.mubr.f32.gmra.mrb[0].mxu0 %v2337
      %v2476 = vpop.f32.mrb[0].mxu0
      %v2477 = vadd.f32 0.0, %v2476
      %v2478 = vpop.f32.mrb[0].mxu0
      %2479 = vmatprep.mubr.f32.mxu0 0.0
      %2480 = vmatmul.mubr.f32.gmra.mrb[0].mxu0 %v2340
      %v2481 = vpop.f32.mrb[0].mxu0
      %v2482 = vadd.f32 0.0, %v2481
      %v2483 = vpop.f32.mrb[0].mxu0
      %2484 = vmatprep.mubr.f32.mxu0 0.0
      %2485 = vmatmul.mubr.f32.gmra.mrb[0].mxu0 %v2343
      %v2486 = vpop.f32.mrb[0].mxu0
      %v2487 = vadd.f32 0.0, %v2486
      %v2488 = vpop.f32.mrb[0].mxu0
      %2489 = vdwg.mxu0
      %v2490 = vld [vmem:[%s29] sm:$0xff]
      %v2491 = vld [vmem:[%s29 + $0x8] sm:$0xff]
      %v2492 = vld [vmem:[%s29 + $0x10] sm:$0xff]
      %v2493 = vld [vmem:[%s29 + $0x18] sm:$0xff]
      %v2494 = vld [vmem:[%s29 + $0x20] sm:$0xff]
      %v2495 = vld [vmem:[%s29 + $0x28] sm:$0xff]
      %v2496 = vld [vmem:[%s29 + $0x30] sm:$0xff]
      %v2497 = vld [vmem:[%s29 + $0x38] sm:$0xff]
      %v2498 = vld [vmem:[%s29 + $0x40] sm:$0xff]
      %v2499 = vld [vmem:[%s29 + $0x48] sm:$0xff]
      %v2500 = vld [vmem:[%s29 + $0x50] sm:$0xff]
      %v2501 = vld [vmem:[%s29 + $0x58] sm:$0xff]
      %v2502 = vld [vmem:[%s29 + $0x60] sm:$0xff]
      %v2503 = vld [vmem:[%s29 + $0x68] sm:$0xff]
      %v2504 = vld [vmem:[%s29 + $0x70] sm:$0xff]
      %v2505 = vld [vmem:[%s29 + $0x78] sm:$0xff]
      %v2506 = vmul.f32 %v2412, %v2490
      %v2507 = vmul.f32 %v2417, %v2491
      %v2508 = vmul.f32 %v2422, %v2492
      %v2509 = vmul.f32 %v2427, %v2493
      %v2510 = vmul.f32 %v2432, %v2494
      %v2511 = vmul.f32 %v2437, %v2495
      %v2512 = vmul.f32 %v2442, %v2496
      %v2513 = vmul.f32 %v2447, %v2497
      %v2514 = vmul.f32 %v2452, %v2498
      %v2515 = vmul.f32 %v2457, %v2499
      %v2516 = vmul.f32 %v2462, %v2500
      %v2517 = vmul.f32 %v2467, %v2501
      %v2518 = vmul.f32 %v2472, %v2502
      %v2519 = vmul.f32 %v2477, %v2503
      %v2520 = vmul.f32 %v2482, %v2504
      %v2521 = vmul.f32 %v2487, %v2505
      %vm2522 = vcmask 64512
      %v2523 = vsel %vm2522, %v2506, 0.0
      %2524 = vadd.xlane.f32.xlu0 %v2523
      %v2525 = vpop.xlane.xlu0 %2524
      %v2526 = vsel %vm2522, %v2507, 0.0
      %2527 = vadd.xlane.f32.xlu0 %v2526
      %v2528 = vpop.xlane.xlu0 %2527
      %v2529 = vsel %vm2522, %v2508, 0.0
      %2530 = vadd.xlane.f32.xlu0 %v2529
      %v2531 = vpop.xlane.xlu0 %2530
      %v2532 = vsel %vm2522, %v2509, 0.0
      %2533 = vadd.xlane.f32.xlu0 %v2532
      %v2534 = vpop.xlane.xlu0 %2533
      %v2535 = vsel %vm2522, %v2510, 0.0
      %2536 = vadd.xlane.f32.xlu0 %v2535
      %v2537 = vpop.xlane.xlu0 %2536
      %v2538 = vsel %vm2522, %v2511, 0.0
      %2539 = vadd.xlane.f32.xlu0 %v2538
      %v2540 = vpop.xlane.xlu0 %2539
      %v2541 = vsel %vm2522, %v2512, 0.0
      %2542 = vadd.xlane.f32.xlu0 %v2541
      %v2543 = vpop.xlane.xlu0 %2542
      %v2544 = vsel %vm2522, %v2513, 0.0
      %2545 = vadd.xlane.f32.xlu0 %v2544
      %v2546 = vpop.xlane.xlu0 %2545
      %v2547 = vsel %vm2522, %v2514, 0.0
      %2548 = vadd.xlane.f32.xlu0 %v2547
      %v2549 = vpop.xlane.xlu0 %2548
      %v2550 = vsel %vm2522, %v2515, 0.0
      %2551 = vadd.xlane.f32.xlu0 %v2550
      %v2552 = vpop.xlane.xlu0 %2551
      %v2553 = vsel %vm2522, %v2516, 0.0
      %2554 = vadd.xlane.f32.xlu0 %v2553
      %v2555 = vpop.xlane.xlu0 %2554
      %v2556 = vsel %vm2522, %v2517, 0.0
      %2557 = vadd.xlane.f32.xlu0 %v2556
      %v2558 = vpop.xlane.xlu0 %2557
      %v2559 = vsel %vm2522, %v2518, 0.0
      %2560 = vadd.xlane.f32.xlu0 %v2559
      %v2561 = vpop.xlane.xlu0 %2560
      %v2562 = vsel %vm2522, %v2519, 0.0
      %2563 = vadd.xlane.f32.xlu0 %v2562
      %v2564 = vpop.xlane.xlu0 %2563
      %v2565 = vsel %vm2522, %v2520, 0.0
      %2566 = vadd.xlane.f32.xlu0 %v2565
      %v2567 = vpop.xlane.xlu0 %2566
      %v2568 = vsel %vm2522, %v2521, 0.0
      %2569 = vadd.xlane.f32.xlu0 %v2568
      %v2570 = vpop.xlane.xlu0 %2569
      %v2571 = vsel %vm1775, %v1203, 0.0
      %v2572 = vsel %vm1775, %v1204, 0.0
      %v2573 = vadd.f32 %v2571, %v2572
      %v2574 = vsel %vm1775, %v1205, 0.0
      %v2575 = vadd.f32 %v2573, %v2574
      %v2576 = vsel %vm1775, %v1206, 0.0
      %v2577 = vadd.f32 %v2575, %v2576
      %v2578 = vsel %vm1775, %v1207, 0.0
      %v2579 = vadd.f32 %v2577, %v2578
      %v2580 = vsel %vm1775, %v1208, 0.0
      %v2581 = vadd.f32 %v2579, %v2580
      %v2582 = vsel %vm1775, %v1209, 0.0
      %v2583 = vadd.f32 %v2581, %v2582
      %v2584 = vsel %vm1775, %v1210, 0.0
      %v2585 = vadd.f32 %v2583, %v2584
      %v2586 = vsel %vm1775, %v1211, 0.0
      %v2587 = vadd.f32 %v2585, %v2586
      %v2588 = vsel %vm1775, %v1212, 0.0
      %v2589 = vadd.f32 %v2587, %v2588
      %v2590 = vsel %vm1775, %v1213, 0.0
      %v2591 = vadd.f32 %v2589, %v2590
      %v2592 = vsel %vm1775, %v1214, 0.0
      %v2593 = vadd.f32 %v2591, %v2592
      %v2594 = vsel %vm1775, %v1215, 0.0
      %v2595 = vadd.f32 %v2593, %v2594
      %v2596 = vsel %vm1775, %v1216, 0.0
      %v2597 = vadd.f32 %v2595, %v2596
      %v2598 = vsel %vm1775, %v1217, 0.0
      %v2599 = vadd.f32 %v2597, %v2598
      %v2600 = vsel %vm1775, %v1218, 0.0
      %v2601 = vadd.f32 %v2599, %v2600
      %v2602 = vrot.slane %v2601, 4
      %v2603 = vadd.f32 %v2601, %v2602
      %v2604 = vrot.slane %v2603, 2
      %v2605 = vadd.f32 %v2603, %v2604
      %v2606 = vrot.slane %v2605, 1
      %v2607 = vadd.f32 %v2605, %v2606
      %v2608 = vmul.f32 %v1203, %v1203
      %v2609 = vmul.f32 %v1204, %v1204
      %v2610 = vmul.f32 %v1205, %v1205
      %v2611 = vmul.f32 %v1206, %v1206
      %v2612 = vmul.f32 %v1207, %v1207
      %v2613 = vmul.f32 %v1208, %v1208
      %v2614 = vmul.f32 %v1209, %v1209
      %v2615 = vmul.f32 %v1210, %v1210
      %v2616 = vmul.f32 %v1211, %v1211
      %v2617 = vmul.f32 %v1212, %v1212
      %v2618 = vmul.f32 %v1213, %v1213
      %v2619 = vmul.f32 %v1214, %v1214
      %v2620 = vmul.f32 %v1215, %v1215
      %v2621 = vmul.f32 %v1216, %v1216
      %v2622 = vmul.f32 %v1217, %v1217
      %v2623 = vmul.f32 %v1218, %v1218
      %v2624 = vsel %vm1775, %v2608, 0.0
      %v2625 = vsel %vm1775, %v2609, 0.0
      %v2626 = vadd.f32 %v2624, %v2625
      %v2627 = vsel %vm1775, %v2610, 0.0
      %v2628 = vadd.f32 %v2626, %v2627
      %v2629 = vsel %vm1775, %v2611, 0.0
      %v2630 = vadd.f32 %v2628, %v2629
      %v2631 = vsel %vm1775, %v2612, 0.0
      %v2632 = vadd.f32 %v2630, %v2631
      %v2633 = vsel %vm1775, %v2613, 0.0
      %v2634 = vadd.f32 %v2632, %v2633
      %v2635 = vsel %vm1775, %v2614, 0.0
      %v2636 = vadd.f32 %v2634, %v2635
      %v2637 = vsel %vm1775, %v2615, 0.0
      %v2638 = vadd.f32 %v2636, %v2637
      %v2639 = vsel %vm1775, %v2616, 0.0
      %v2640 = vadd.f32 %v2638, %v2639
      %v2641 = vsel %vm1775, %v2617, 0.0
      %v2642 = vadd.f32 %v2640, %v2641
      %v2643 = vsel %vm1775, %v2618, 0.0
      %v2644 = vadd.f32 %v2642, %v2643
      %v2645 = vsel %vm1775, %v2619, 0.0
      %v2646 = vadd.f32 %v2644, %v2645
      %v2647 = vsel %vm1775, %v2620, 0.0
      %v2648 = vadd.f32 %v2646, %v2647
      %v2649 = vsel %vm1775, %v2621, 0.0
      %v2650 = vadd.f32 %v2648, %v2649
      %v2651 = vsel %vm1775, %v2622, 0.0
      %v2652 = vadd.f32 %v2650, %v2651
      %v2653 = vsel %vm1775, %v2623, 0.0
      %v2654 = vadd.f32 %v2652, %v2653
      %v2655 = vrot.slane %v2654, 4
      %v2656 = vadd.f32 %v2654, %v2655
      %v2657 = vrot.slane %v2656, 2
      %v2658 = vadd.f32 %v2656, %v2657
      %v2659 = vrot.slane %v2658, 1
      %v2660 = vadd.f32 %v2658, %v2659
      %v2661 = vld [vmem:[%s1168] sm:$0x7]
      %v2662 = vsel %vm1775, %v1443, 0.0
      %v2663 = vsel %vm1775, %v1448, 0.0
      %v2664 = vadd.f32 %v2662, %v2663
      %v2665 = vrot.slane %v2664, 4
      %v2666 = vadd.f32 %v2664, %v2665
      %v2667 = vrot.slane %v2666, 2
      %v2668 = vadd.f32 %v2666, %v2667
      %v2669 = vrot.slane %v2668, 1
      %v2670 = vadd.f32 %v2668, %v2669
      %v2671 = vmul.f32 %v2670, 8.0
      %v2672 = vadd.f32 %v2671, %v2607
      %v2673 = vmul.f32 %v1443, %v1443
      %v2674 = vmul.f32 %v1448, %v1448
      %v2675 = vsel %vm1775, %v2673, 0.0
      %v2676 = vsel %vm1775, %v2674, 0.0
      %v2677 = vadd.f32 %v2675, %v2676
      %v2678 = vrot.slane %v2677, 4
      %v2679 = vadd.f32 %v2677, %v2678
      %v2680 = vrot.slane %v2679, 2
      %v2681 = vadd.f32 %v2679, %v2680
      %v2682 = vrot.slane %v2681, 1
      %v2683 = vadd.f32 %v2681, %v2682
      %v2684 = vmul.f32 %v2683, 8.0
      %v2685 = vadd.f32 %v2684, %v2660
      %v2686 = vmul.f32 %v2672, 0.00390625
      %v2687 = vmul.f32 %v2685, 0.00390625
      %v2688 = vmul.f32 %v2686, %v2686
      %v2689 = vsub.f32 %v2687, %v2688
      %v2690 = vadd.f32 %v2689, 1e-05
      %v2691 = vrsqrt.pop %v2690
      %v2693 = vsel %vm1775, %v2686, 0
      %2695 = vmatprep.subr.mxu0 0.0
      %2696 = vmatpush1.msra.mxu0 %v1282
      %2697 = vmatprep.subr.mxu0 0.0
      %2698 = vmatpush1.msra.mxu0 %v1283
      %2699 = vmatprep.subr.mxu0 0.0
      %2700 = vmatpush1.msra.mxu0 0.0
      %2701 = vmatprep.subr.mxu0 0.0
      %2702 = vmatpush1.msra.mxu0 0.0
      %2703 = vmatprep.subr.mxu0 0.0
      %2704 = vmatpush1.msra.mxu0 0.0
      %2705 = vmatprep.subr.mxu0 0.0
      %2706 = vmatpush1.msra.mxu0 0.0
      %2707 = vmatprep.subr.mxu0 0.0
      %2708 = vmatpush1.msra.mxu0 0.0
      %2709 = vmatprep.subr.mxu0 0.0
      %2710 = vmatpush1.msra.mxu0 0.0
      %2711 = vmatprep.subr.mxu0 0.0
      %2712 = vmatpush1.msra.mxu0 0.0
      %2713 = vmatprep.subr.mxu0 0.0
      %2714 = vmatpush1.msra.mxu0 0.0
      %2715 = vmatprep.subr.mxu0 0.0
      %2716 = vmatpush1.msra.mxu0 0.0
      %2717 = vmatprep.subr.mxu0 0.0
      %2718 = vmatpush1.msra.mxu0 0.0
      %2719 = vmatprep.subr.mxu0 0.0
      %2720 = vmatpush1.msra.mxu0 0.0
      %2721 = vmatprep.subr.mxu0 0.0
      %2722 = vmatpush1.msra.mxu0 0.0
      %2723 = vmatprep.subr.mxu0 0.0
      %2724 = vmatpush1.msra.mxu0 0.0
      %2725 = vmatprep.subr.mxu0 0.0
      %2726 = vmatpush1.msra.mxu0 0.0
      %2727 = vmatprep.subr.mxu0 0.0
      %2728 = vmatpush1.msra.mxu0 0.0
      %2729 = vmatprep.subr.mxu0 0.0
      %2730 = vmatpush1.msra.mxu0 0.0
      %2731 = vmatprep.subr.mxu0 0.0
      %2732 = vmatpush1.msra.mxu0 0.0
      %2733 = vmatprep.subr.mxu0 0.0
      %2734 = vmatpush1.msra.mxu0 0.0
      %2735 = vmatprep.subr.mxu0 0.0
      %2736 = vmatpush1.msra.mxu0 0.0
      %2737 = vmatprep.subr.mxu0 0.0
      %2738 = vmatpush1.msra.mxu0 0.0
      %2739 = vmatprep.subr.mxu0 0.0
      %2740 = vmatpush1.msra.mxu0 0.0
      %2741 = vmatprep.subr.mxu0 0.0
      %2742 = vmatpush1.msra.mxu0 0.0
      %2743 = vmatprep.subr.mxu0 0.0
      %2744 = vmatpush1.msra.mxu0 0.0
      %2745 = vmatprep.subr.mxu0 0.0
      %2746 = vmatpush1.msra.mxu0 0.0
      %2747 = vmatprep.subr.mxu0 0.0
      %2748 = vmatpush1.msra.mxu0 0.0
      %2749 = vmatprep.subr.mxu0 0.0
      %2750 = vmatpush1.msra.mxu0 0.0
      %2751 = vmatprep.subr.mxu0 0.0
      %2752 = vmatpush1.msra.mxu0 0.0
      %2753 = vmatprep.subr.mxu0 0.0
      %2754 = vmatpush1.msra.mxu0 0.0
      %2755 = vmatprep.subr.mxu0 0.0
      %2756 = vmatpush1.msra.mxu0 0.0
      %2757 = vmatprep.subr.mxu0 0.0
      %2758 = vmatpush1.msra.mxu0 0.0
      %2759 = vmatprep.mubr.f32.mxu0 0.0
      %2760 = vmatmul.mubr.f32.gmra.mrb[0].mxu0 %v2693
      %v2761 = vpop.f32.mrb[0].mxu0
      %v2762 = vadd.f32 0.0, %v2761
      %v2763 = vpop.f32.mrb[0].mxu0
      %2764 = vdwg.mxu0
      %v2766 = vsel %vm1775, %v2691, 0
      %2768 = vmatprep.subr.mxu0 0.0
      %2769 = vmatpush1.msra.mxu0 %v1282
      %2770 = vmatprep.subr.mxu0 0.0
      %2771 = vmatpush1.msra.mxu0 %v1283
      %2772 = vmatprep.subr.mxu0 0.0
      %2773 = vmatpush1.msra.mxu0 0.0
      %2774 = vmatprep.subr.mxu0 0.0
      %2775 = vmatpush1.msra.mxu0 0.0
      %2776 = vmatprep.subr.mxu0 0.0
      %2777 = vmatpush1.msra.mxu0 0.0
      %2778 = vmatprep.subr.mxu0 0.0
      %2779 = vmatpush1.msra.mxu0 0.0
      %2780 = vmatprep.subr.mxu0 0.0
      %2781 = vmatpush1.msra.mxu0 0.0
      %2782 = vmatprep.subr.mxu0 0.0
      %2783 = vmatpush1.msra.mxu0 0.0
      %2784 = vmatprep.subr.mxu0 0.0
      %2785 = vmatpush1.msra.mxu0 0.0
      %2786 = vmatprep.subr.mxu0 0.0
      %2787 = vmatpush1.msra.mxu0 0.0
      %2788 = vmatprep.subr.mxu0 0.0
      %2789 = vmatpush1.msra.mxu0 0.0
      %2790 = vmatprep.subr.mxu0 0.0
      %2791 = vmatpush1.msra.mxu0 0.0
      %2792 = vmatprep.subr.mxu0 0.0
      %2793 = vmatpush1.msra.mxu0 0.0
      %2794 = vmatprep.subr.mxu0 0.0
      %2795 = vmatpush1.msra.mxu0 0.0
      %2796 = vmatprep.subr.mxu0 0.0
      %2797 = vmatpush1.msra.mxu0 0.0
      %2798 = vmatprep.subr.mxu0 0.0
      %2799 = vmatpush1.msra.mxu0 0.0
      %2800 = vmatprep.subr.mxu0 0.0
      %2801 = vmatpush1.msra.mxu0 0.0
      %2802 = vmatprep.subr.mxu0 0.0
      %2803 = vmatpush1.msra.mxu0 0.0
      %2804 = vmatprep.subr.mxu0 0.0
      %2805 = vmatpush1.msra.mxu0 0.0
      %2806 = vmatprep.subr.mxu0 0.0
      %2807 = vmatpush1.msra.mxu0 0.0
      %2808 = vmatprep.subr.mxu0 0.0
      %2809 = vmatpush1.msra.mxu0 0.0
      %2810 = vmatprep.subr.mxu0 0.0
      %2811 = vmatpush1.msra.mxu0 0.0
      %2812 = vmatprep.subr.mxu0 0.0
      %2813 = vmatpush1.msra.mxu0 0.0
      %2814 = vmatprep.subr.mxu0 0.0
      %2815 = vmatpush1.msra.mxu0 0.0
      %2816 = vmatprep.subr.mxu0 0.0
      %2817 = vmatpush1.msra.mxu0 0.0
      %2818 = vmatprep.subr.mxu0 0.0
      %2819 = vmatpush1.msra.mxu0 0.0
      %2820 = vmatprep.subr.mxu0 0.0
      %2821 = vmatpush1.msra.mxu0 0.0
      %2822 = vmatprep.subr.mxu0 0.0
      %2823 = vmatpush1.msra.mxu0 0.0
      %2824 = vmatprep.subr.mxu0 0.0
      %2825 = vmatpush1.msra.mxu0 0.0
      %2826 = vmatprep.subr.mxu0 0.0
      %2827 = vmatpush1.msra.mxu0 0.0
      %2828 = vmatprep.subr.mxu0 0.0
      %2829 = vmatpush1.msra.mxu0 0.0
      %2830 = vmatprep.subr.mxu0 0.0
      %2831 = vmatpush1.msra.mxu0 0.0
      %2832 = vmatprep.mubr.f32.mxu0 0.0
      %2833 = vmatmul.mubr.f32.gmra.mrb[0].mxu0 %v2766
      %v2834 = vpop.f32.mrb[0].mxu0
      %v2835 = vadd.f32 0.0, %v2834
      %v2836 = vpop.f32.mrb[0].mxu0
      %2837 = vdwg.mxu0
      %v2839 = vsel %vm1775, %v1443, 0
      %v2842 = vsel %vm1775, %v1448, 0
      %2844 = vmatprep.subr.mxu0 0.0
      %2845 = vmatpush1.msra.mxu0 %v1282
      %2846 = vmatprep.subr.mxu0 0.0
      %2847 = vmatpush1.msra.mxu0 %v1283
      %2848 = vmatprep.subr.mxu0 0.0
      %2849 = vmatpush1.msra.mxu0 0.0
      %2850 = vmatprep.subr.mxu0 0.0
      %2851 = vmatpush1.msra.mxu0 0.0
      %2852 = vmatprep.subr.mxu0 0.0
      %2853 = vmatpush1.msra.mxu0 0.0
      %2854 = vmatprep.subr.mxu0 0.0
      %2855 = vmatpush1.msra.mxu0 0.0
      %2856 = vmatprep.subr.mxu0 0.0
      %2857 = vmatpush1.msra.mxu0 0.0
      %2858 = vmatprep.subr.mxu0 0.0
      %2859 = vmatpush1.msra.mxu0 0.0
      %2860 = vmatprep.subr.mxu0 0.0
      %2861 = vmatpush1.msra.mxu0 0.0
      %2862 = vmatprep.subr.mxu0 0.0
      %2863 = vmatpush1.msra.mxu0 0.0
      %2864 = vmatprep.subr.mxu0 0.0
      %2865 = vmatpush1.msra.mxu0 0.0
      %2866 = vmatprep.subr.mxu0 0.0
      %2867 = vmatpush1.msra.mxu0 0.0
      %2868 = vmatprep.subr.mxu0 0.0
      %2869 = vmatpush1.msra.mxu0 0.0
      %2870 = vmatprep.subr.mxu0 0.0
      %2871 = vmatpush1.msra.mxu0 0.0
      %2872 = vmatprep.subr.mxu0 0.0
      %2873 = vmatpush1.msra.mxu0 0.0
      %2874 = vmatprep.subr.mxu0 0.0
      %2875 = vmatpush1.msra.mxu0 0.0
      %2876 = vmatprep.subr.mxu0 0.0
      %2877 = vmatpush1.msra.mxu0 0.0
      %2878 = vmatprep.subr.mxu0 0.0
      %2879 = vmatpush1.msra.mxu0 0.0
      %2880 = vmatprep.subr.mxu0 0.0
      %2881 = vmatpush1.msra.mxu0 0.0
      %2882 = vmatprep.subr.mxu0 0.0
      %2883 = vmatpush1.msra.mxu0 0.0
      %2884 = vmatprep.subr.mxu0 0.0
      %2885 = vmatpush1.msra.mxu0 0.0
      %2886 = vmatprep.subr.mxu0 0.0
      %2887 = vmatpush1.msra.mxu0 0.0
      %2888 = vmatprep.subr.mxu0 0.0
      %2889 = vmatpush1.msra.mxu0 0.0
      %2890 = vmatprep.subr.mxu0 0.0
      %2891 = vmatpush1.msra.mxu0 0.0
      %2892 = vmatprep.subr.mxu0 0.0
      %2893 = vmatpush1.msra.mxu0 0.0
      %2894 = vmatprep.subr.mxu0 0.0
      %2895 = vmatpush1.msra.mxu0 0.0
      %2896 = vmatprep.subr.mxu0 0.0
      %2897 = vmatpush1.msra.mxu0 0.0
      %2898 = vmatprep.subr.mxu0 0.0
      %2899 = vmatpush1.msra.mxu0 0.0
      %2900 = vmatprep.subr.mxu0 0.0
      %2901 = vmatpush1.msra.mxu0 0.0
      %2902 = vmatprep.subr.mxu0 0.0
      %2903 = vmatpush1.msra.mxu0 0.0
      %2904 = vmatprep.subr.mxu0 0.0
      %2905 = vmatpush1.msra.mxu0 0.0
      %2906 = vmatprep.subr.mxu0 0.0
      %2907 = vmatpush1.msra.mxu0 0.0
      %2908 = vmatprep.mubr.f32.mxu0 0.0
      %2909 = vmatmul.mubr.f32.gmra.mrb[0].mxu0 %v2839
      %v2910 = vpop.f32.mrb[0].mxu0
      %v2911 = vadd.f32 0.0, %v2910
      %v2912 = vpop.f32.mrb[0].mxu0
      %2913 = vmatprep.mubr.f32.mxu0 0.0
      %2914 = vmatmul.mubr.f32.gmra.mrb[0].mxu0 %v2842
      %v2915 = vpop.f32.mrb[0].mxu0
      %v2916 = vadd.f32 0.0, %v2915
      %v2917 = vpop.f32.mrb[0].mxu0
      %2918 = vdwg.mxu0
      %v2919 = vlaneseq
      %v2920 = vshrl.u32 %v2919, 7
      %v2921 = vsub.s32 0, %v2920
      %v2922 = vrot.slane %v2661, %v2921
      %v2923 = vmul.f32 %v2911, %v2922
      %v2924 = vmul.f32 %v2916, %v2922
      %v2925 = vlaneseq
      %v2926 = vshrl.u32 %v2925, 7
      %v2927 = vsub.s32 1, %v2926
      %v2928 = vrot.slane %v2661, %v2927
      %v2929 = vmul.f32 %v2928, %v2219
      %v2930 = vmul.f32 %v2928, %v2224
      %v2931 = vmul.f32 %v2928, %v2229
      %v2932 = vmul.f32 %v2928, %v2234
      %v2933 = vmul.f32 %v2928, %v2239
      %v2934 = vmul.f32 %v2928, %v2244
      %v2935 = vmul.f32 %v2928, %v2249
      %v2936 = vmul.f32 %v2928, %v2254
      %v2937 = vmul.f32 %v2928, %v2259
      %v2938 = vmul.f32 %v2928, %v2264
      %v2939 = vmul.f32 %v2928, %v2269
      %v2940 = vmul.f32 %v2928, %v2274
      %v2941 = vmul.f32 %v2928, %v2279
      %v2942 = vmul.f32 %v2928, %v2284
      %v2943 = vmul.f32 %v2928, %v2289
      %v2944 = vmul.f32 %v2928, %v2294
      %2945 = vmatprep.subr.mxu0 0.0
      %2946 = vmatpush1.msra.mxu0 %v2923
      %2947 = vmatprep.subr.mxu0 0.0
      %2948 = vmatpush1.msra.mxu0 %v2924
      %2949 = vmatprep.subr.mxu0 0.0
      %2950 = vmatpush1.msra.mxu0 0.0
      %2951 = vmatprep.subr.mxu0 0.0
      %2952 = vmatpush1.msra.mxu0 0.0
      %2953 = vmatprep.subr.mxu0 0.0
      %2954 = vmatpush1.msra.mxu0 0.0
      %2955 = vmatprep.subr.mxu0 0.0
      %2956 = vmatpush1.msra.mxu0 0.0
      %2957 = vmatprep.subr.mxu0 0.0
      %2958 = vmatpush1.msra.mxu0 0.0
      %2959 = vmatprep.subr.mxu0 0.0
      %2960 = vmatpush1.msra.mxu0 0.0
      %2961 = vmatprep.subr.mxu0 0.0
      %2962 = vmatpush1.msra.mxu0 0.0
      %2963 = vmatprep.subr.mxu0 0.0
      %2964 = vmatpush1.msra.mxu0 0.0
      %2965 = vmatprep.subr.mxu0 0.0
      %2966 = vmatpush1.msra.mxu0 0.0
      %2967 = vmatprep.subr.mxu0 0.0
      %2968 = vmatpush1.msra.mxu0 0.0
      %2969 = vmatprep.subr.mxu0 0.0
      %2970 = vmatpush1.msra.mxu0 0.0
      %2971 = vmatprep.subr.mxu0 0.0
      %2972 = vmatpush1.msra.mxu0 0.0
      %2973 = vmatprep.subr.mxu0 0.0
      %2974 = vmatpush1.msra.mxu0 0.0
      %2975 = vmatprep.subr.mxu0 0.0
      %2976 = vmatpush1.msra.mxu0 0.0
      %2977 = vmatprep.subr.mxu0 0.0
      %2978 = vmatpush1.msra.mxu0 0.0
      %2979 = vmatprep.subr.mxu0 0.0
      %2980 = vmatpush1.msra.mxu0 0.0
      %2981 = vmatprep.subr.mxu0 0.0
      %2982 = vmatpush1.msra.mxu0 0.0
      %2983 = vmatprep.subr.mxu0 0.0
      %2984 = vmatpush1.msra.mxu0 0.0
      %2985 = vmatprep.subr.mxu0 0.0
      %2986 = vmatpush1.msra.mxu0 0.0
      %2987 = vmatprep.subr.mxu0 0.0
      %2988 = vmatpush1.msra.mxu0 0.0
      %2989 = vmatprep.subr.mxu0 0.0
      %2990 = vmatpush1.msra.mxu0 0.0
      %2991 = vmatprep.subr.mxu0 0.0
      %2992 = vmatpush1.msra.mxu0 0.0
      %2993 = vmatprep.subr.mxu0 0.0
      %2994 = vmatpush1.msra.mxu0 0.0
      %2995 = vmatprep.subr.mxu0 0.0
      %2996 = vmatpush1.msra.mxu0 0.0
      %2997 = vmatprep.subr.mxu0 0.0
      %2998 = vmatpush1.msra.mxu0 0.0
      %2999 = vmatprep.subr.mxu0 0.0
      %3000 = vmatpush1.msra.mxu0 0.0
      %3001 = vmatprep.subr.mxu0 0.0
      %3002 = vmatpush1.msra.mxu0 0.0
      %3003 = vmatprep.subr.mxu0 0.0
      %3004 = vmatpush1.msra.mxu0 0.0
      %3005 = vmatprep.subr.mxu0 0.0
      %3006 = vmatpush1.msra.mxu0 0.0
      %3007 = vmatprep.subr.mxu0 0.0
      %3008 = vmatpush1.msra.mxu0 0.0
      %3009 = vmatprep.mubr.f32.mxu0 0.0
      %3010 = vmatmul.mubr.f32.gmra.mrb[0].mxu0 %v2298
      %v3011 = vpop.f32.mrb[0].mxu0
      %v3012 = vadd.f32 %v2929, %v3011
      %v3013 = vpop.f32.mrb[0].mxu0
      %3014 = vmatprep.mubr.f32.mxu0 0.0
      %3015 = vmatmul.mubr.f32.gmra.mrb[0].mxu0 %v2301
      %v3016 = vpop.f32.mrb[0].mxu0
      %v3017 = vadd.f32 %v2930, %v3016
      %v3018 = vpop.f32.mrb[0].mxu0
      %3019 = vmatprep.mubr.f32.mxu0 0.0
      %3020 = vmatmul.mubr.f32.gmra.mrb[0].mxu0 %v2304
      %v3021 = vpop.f32.mrb[0].mxu0
      %v3022 = vadd.f32 %v2931, %v3021
      %v3023 = vpop.f32.mrb[0].mxu0
      %3024 = vmatprep.mubr.f32.mxu0 0.0
      %3025 = vmatmul.mubr.f32.gmra.mrb[0].mxu0 %v2307
      %v3026 = vpop.f32.mrb[0].mxu0
      %v3027 = vadd.f32 %v2932, %v3026
      %v3028 = vpop.f32.mrb[0].mxu0
      %3029 = vmatprep.mubr.f32.mxu0 0.0
      %3030 = vmatmul.mubr.f32.gmra.mrb[0].mxu0 %v2310
      %v3031 = vpop.f32.mrb[0].mxu0
      %v3032 = vadd.f32 %v2933, %v3031
      %v3033 = vpop.f32.mrb[0].mxu0
      %3034 = vmatprep.mubr.f32.mxu0 0.0
      %3035 = vmatmul.mubr.f32.gmra.mrb[0].mxu0 %v2313
      %v3036 = vpop.f32.mrb[0].mxu0
      %v3037 = vadd.f32 %v2934, %v3036
      %v3038 = vpop.f32.mrb[0].mxu0
      %3039 = vmatprep.mubr.f32.mxu0 0.0
      %3040 = vmatmul.mubr.f32.gmra.mrb[0].mxu0 %v2316
      %v3041 = vpop.f32.mrb[0].mxu0
      %v3042 = vadd.f32 %v2935, %v3041
      %v3043 = vpop.f32.mrb[0].mxu0
      %3044 = vmatprep.mubr.f32.mxu0 0.0
      %3045 = vmatmul.mubr.f32.gmra.mrb[0].mxu0 %v2319
      %v3046 = vpop.f32.mrb[0].mxu0
      %v3047 = vadd.f32 %v2936, %v3046
      %v3048 = vpop.f32.mrb[0].mxu0
      %3049 = vmatprep.mubr.f32.mxu0 0.0
      %3050 = vmatmul.mubr.f32.gmra.mrb[0].mxu0 %v2322
      %v3051 = vpop.f32.mrb[0].mxu0
      %v3052 = vadd.f32 %v2937, %v3051
      %v3053 = vpop.f32.mrb[0].mxu0
      %3054 = vmatprep.mubr.f32.mxu0 0.0
      %3055 = vmatmul.mubr.f32.gmra.mrb[0].mxu0 %v2325
      %v3056 = vpop.f32.mrb[0].mxu0
      %v3057 = vadd.f32 %v2938, %v3056
      %v3058 = vpop.f32.mrb[0].mxu0
      %3059 = vmatprep.mubr.f32.mxu0 0.0
      %3060 = vmatmul.mubr.f32.gmra.mrb[0].mxu0 %v2328
      %v3061 = vpop.f32.mrb[0].mxu0
      %v3062 = vadd.f32 %v2939, %v3061
      %v3063 = vpop.f32.mrb[0].mxu0
      %3064 = vmatprep.mubr.f32.mxu0 0.0
      %3065 = vmatmul.mubr.f32.gmra.mrb[0].mxu0 %v2331
      %v3066 = vpop.f32.mrb[0].mxu0
      %v3067 = vadd.f32 %v2940, %v3066
      %v3068 = vpop.f32.mrb[0].mxu0
      %3069 = vmatprep.mubr.f32.mxu0 0.0
      %3070 = vmatmul.mubr.f32.gmra.mrb[0].mxu0 %v2334
      %v3071 = vpop.f32.mrb[0].mxu0
      %v3072 = vadd.f32 %v2941, %v3071
      %v3073 = vpop.f32.mrb[0].mxu0
      %3074 = vmatprep.mubr.f32.mxu0 0.0
      %3075 = vmatmul.mubr.f32.gmra.mrb[0].mxu0 %v2337
      %v3076 = vpop.f32.mrb[0].mxu0
      %v3077 = vadd.f32 %v2942, %v3076
      %v3078 = vpop.f32.mrb[0].mxu0
      %3079 = vmatprep.mubr.f32.mxu0 0.0
      %3080 = vmatmul.mubr.f32.gmra.mrb[0].mxu0 %v2340
      %v3081 = vpop.f32.mrb[0].mxu0
      %v3082 = vadd.f32 %v2943, %v3081
      %v3083 = vpop.f32.mrb[0].mxu0
      %3084 = vmatprep.mubr.f32.mxu0 0.0
      %3085 = vmatmul.mubr.f32.gmra.mrb[0].mxu0 %v2343
      %v3086 = vpop.f32.mrb[0].mxu0
      %v3087 = vadd.f32 %v2944, %v3086
      %v3088 = vpop.f32.mrb[0].mxu0
      %3089 = vdwg.mxu0
      %v3090 = vlaneseq
      %v3091 = vshrl.u32 %v3090, 7
      %v3092 = vsub.s32 0, %v3091
      %v3093 = vrot.slane %v2835, %v3092
      %v3094 = vmul.f32 %v3093, %v3012
      %v3095 = vmul.f32 %v3093, %v3017
      %v3096 = vmul.f32 %v3093, %v3022
      %v3097 = vmul.f32 %v3093, %v3027
      %v3098 = vmul.f32 %v3093, %v3032
      %v3099 = vmul.f32 %v3093, %v3037
      %v3100 = vmul.f32 %v3093, %v3042
      %v3101 = vmul.f32 %v3093, %v3047
      %v3102 = vmul.f32 %v3093, %v3052
      %v3103 = vmul.f32 %v3093, %v3057
      %v3104 = vmul.f32 %v3093, %v3062
      %v3105 = vmul.f32 %v3093, %v3067
      %v3106 = vmul.f32 %v3093, %v3072
      %v3107 = vmul.f32 %v3093, %v3077
      %v3108 = vmul.f32 %v3093, %v3082
      %v3109 = vmul.f32 %v3093, %v3087
      %v3110 = vmul.f32 %v2835, %v2762
      %v3112 = vrot.slane %v2661, 1
      %v3114 = vadd.f32 %v2661, %v3112
      %v3115 = vmul.f32 %v3110, %v3114
      %v3117 = vrot.slane %v3115, 6
      %v3119 = vsub.f32 %v2661, %v3117
      %v3120 = vlaneseq
      %v3121 = vshrl.u32 %v3120, 7
      %v3122 = vsub.s32 2, %v3121
      %v3123 = vrot.slane %v3119, %v3122
      %v3124 = vadd.f32 %v3094, %v3123
      %v3125 = vadd.f32 %v3095, %v3123
      %v3126 = vadd.f32 %v3096, %v3123
      %v3127 = vadd.f32 %v3097, %v3123
      %v3128 = vadd.f32 %v3098, %v3123
      %v3129 = vadd.f32 %v3099, %v3123
      %v3130 = vadd.f32 %v3100, %v3123
      %v3131 = vadd.f32 %v3101, %v3123
      %v3132 = vadd.f32 %v3102, %v3123
      %v3133 = vadd.f32 %v3103, %v3123
      %v3134 = vadd.f32 %v3104, %v3123
      %v3135 = vadd.f32 %v3105, %v3123
      %v3136 = vadd.f32 %v3106, %v3123
      %v3137 = vadd.f32 %v3107, %v3123
      %v3138 = vadd.f32 %v3108, %v3123
      %v3139 = vadd.f32 %v3109, %v3123
      %v3140 = vtanh.pop %v3124
      %v3141 = vtanh.pop %v3125
      %v3142 = vtanh.pop %v3126
      %v3143 = vtanh.pop %v3127
      %v3144 = vtanh.pop %v3128
      %v3145 = vtanh.pop %v3129
      %v3146 = vtanh.pop %v3130
      %v3147 = vtanh.pop %v3131
      %v3148 = vtanh.pop %v3132
      %v3149 = vtanh.pop %v3133
      %v3150 = vtanh.pop %v3134
      %v3151 = vtanh.pop %v3135
      %v3152 = vtanh.pop %v3136
      %v3153 = vtanh.pop %v3137
      %v3154 = vtanh.pop %v3138
      %v3155 = vtanh.pop %v3139
      %v3156 = vld [vmem:[%s1159] sm:$0xff]
      %v3157 = vld [vmem:[%s1159 + $0x8] sm:$0xff]
      %v3158 = vld [vmem:[%s1159 + $0x10] sm:$0xff]
      %v3159 = vld [vmem:[%s1159 + $0x18] sm:$0xff]
      %v3160 = vld [vmem:[%s1159 + $0x20] sm:$0xff]
      %v3161 = vld [vmem:[%s1159 + $0x28] sm:$0xff]
      %v3162 = vld [vmem:[%s1159 + $0x30] sm:$0xff]
      %v3163 = vld [vmem:[%s1159 + $0x38] sm:$0xff]
      %v3164 = vld [vmem:[%s1159 + $0x40] sm:$0xff]
      %v3165 = vld [vmem:[%s1159 + $0x48] sm:$0xff]
      %v3166 = vld [vmem:[%s1159 + $0x50] sm:$0xff]
      %v3167 = vld [vmem:[%s1159 + $0x58] sm:$0xff]
      %v3168 = vld [vmem:[%s1159 + $0x60] sm:$0xff]
      %v3169 = vld [vmem:[%s1159 + $0x68] sm:$0xff]
      %v3170 = vld [vmem:[%s1159 + $0x70] sm:$0xff]
      %v3171 = vld [vmem:[%s1159 + $0x78] sm:$0xff]
      %3172 = vmatprep.subr.mxu0 0.0
      %3173 = vmatpush1.msra.mxu0 %v3156
      %3174 = vmatprep.subr.mxu0 0.0
      %3175 = vmatpush1.msra.mxu0 %v3157
      %3176 = vmatprep.subr.mxu0 0.0
      %3177 = vmatpush1.msra.mxu0 %v3158
      %3178 = vmatprep.subr.mxu0 0.0
      %3179 = vmatpush1.msra.mxu0 %v3159
      %3180 = vmatprep.subr.mxu0 0.0
      %3181 = vmatpush1.msra.mxu0 %v3160
      %3182 = vmatprep.subr.mxu0 0.0
      %3183 = vmatpush1.msra.mxu0 %v3161
      %3184 = vmatprep.subr.mxu0 0.0
      %3185 = vmatpush1.msra.mxu0 %v3162
      %3186 = vmatprep.subr.mxu0 0.0
      %3187 = vmatpush1.msra.mxu0 %v3163
      %3188 = vmatprep.subr.mxu0 0.0
      %3189 = vmatpush1.msra.mxu0 %v3164
      %3190 = vmatprep.subr.mxu0 0.0
      %3191 = vmatpush1.msra.mxu0 %v3165
      %3192 = vmatprep.subr.mxu0 0.0
      %3193 = vmatpush1.msra.mxu0 %v3166
      %3194 = vmatprep.subr.mxu0 0.0
      %3195 = vmatpush1.msra.mxu0 %v3167
      %3196 = vmatprep.subr.mxu0 0.0
      %3197 = vmatpush1.msra.mxu0 %v3168
      %3198 = vmatprep.subr.mxu0 0.0
      %3199 = vmatpush1.msra.mxu0 %v3169
      %3200 = vmatprep.subr.mxu0 0.0
      %3201 = vmatpush1.msra.mxu0 %v3170
      %3202 = vmatprep.subr.mxu0 0.0
      %3203 = vmatpush1.msra.mxu0 %v3171
      %3204 = vmatprep.subr.mxu0 0.0
      %3205 = vmatpush1.msra.mxu0 0.0
      %3206 = vmatprep.subr.mxu0 0.0
      %3207 = vmatpush1.msra.mxu0 0.0
      %3208 = vmatprep.subr.mxu0 0.0
      %3209 = vmatpush1.msra.mxu0 0.0
      %3210 = vmatprep.subr.mxu0 0.0
      %3211 = vmatpush1.msra.mxu0 0.0
      %3212 = vmatprep.subr.mxu0 0.0
      %3213 = vmatpush1.msra.mxu0 0.0
      %3214 = vmatprep.subr.mxu0 0.0
      %3215 = vmatpush1.msra.mxu0 0.0
      %3216 = vmatprep.subr.mxu0 0.0
      %3217 = vmatpush1.msra.mxu0 0.0
      %3218 = vmatprep.subr.mxu0 0.0
      %3219 = vmatpush1.msra.mxu0 0.0
      %3220 = vmatprep.subr.mxu0 0.0
      %3221 = vmatpush1.msra.mxu0 0.0
      %3222 = vmatprep.subr.mxu0 0.0
      %3223 = vmatpush1.msra.mxu0 0.0
      %3224 = vmatprep.subr.mxu0 0.0
      %3225 = vmatpush1.msra.mxu0 0.0
      %3226 = vmatprep.subr.mxu0 0.0
      %3227 = vmatpush1.msra.mxu0 0.0
      %3228 = vmatprep.subr.mxu0 0.0
      %3229 = vmatpush1.msra.mxu0 0.0
      %3230 = vmatprep.subr.mxu0 0.0
      %3231 = vmatpush1.msra.mxu0 0.0
      %3232 = vmatprep.subr.mxu0 0.0
      %3233 = vmatpush1.msra.mxu0 0.0
      %3234 = vmatprep.subr.mxu0 0.0
      %3235 = vmatpush1.msra.mxu0 0.0
      %3236 = vmatprep.mubr.f32.mxu0 0.0
      %3237 = vmatmul.mubr.f32.gmra.mrb[0].mxu0 %v3140
      %v3238 = vpop.f32.mrb[0].mxu0
      %v3239 = vadd.f32 0.0, %v3238
      %v3240 = vpop.f32.mrb[0].mxu0
      %3241 = vmatprep.mubr.f32.mxu0 0.0
      %3242 = vmatmul.mubr.f32.gmra.mrb[0].mxu0 %v3141
      %v3243 = vpop.f32.mrb[0].mxu0
      %v3244 = vadd.f32 0.0, %v3243
      %v3245 = vpop.f32.mrb[0].mxu0
      %3246 = vmatprep.mubr.f32.mxu0 0.0
      %3247 = vmatmul.mubr.f32.gmra.mrb[0].mxu0 %v3142
      %v3248 = vpop.f32.mrb[0].mxu0
      %v3249 = vadd.f32 0.0, %v3248
      %v3250 = vpop.f32.mrb[0].mxu0
      %3251 = vmatprep.mubr.f32.mxu0 0.0
      %3252 = vmatmul.mubr.f32.gmra.mrb[0].mxu0 %v3143
      %v3253 = vpop.f32.mrb[0].mxu0
      %v3254 = vadd.f32 0.0, %v3253
      %v3255 = vpop.f32.mrb[0].mxu0
      %3256 = vmatprep.mubr.f32.mxu0 0.0
      %3257 = vmatmul.mubr.f32.gmra.mrb[0].mxu0 %v3144
      %v3258 = vpop.f32.mrb[0].mxu0
      %v3259 = vadd.f32 0.0, %v3258
      %v3260 = vpop.f32.mrb[0].mxu0
      %3261 = vmatprep.mubr.f32.mxu0 0.0
      %3262 = vmatmul.mubr.f32.gmra.mrb[0].mxu0 %v3145
      %v3263 = vpop.f32.mrb[0].mxu0
      %v3264 = vadd.f32 0.0, %v3263
      %v3265 = vpop.f32.mrb[0].mxu0
      %3266 = vmatprep.mubr.f32.mxu0 0.0
      %3267 = vmatmul.mubr.f32.gmra.mrb[0].mxu0 %v3146
      %v3268 = vpop.f32.mrb[0].mxu0
      %v3269 = vadd.f32 0.0, %v3268
      %v3270 = vpop.f32.mrb[0].mxu0
      %3271 = vmatprep.mubr.f32.mxu0 0.0
      %3272 = vmatmul.mubr.f32.gmra.mrb[0].mxu0 %v3147
      %v3273 = vpop.f32.mrb[0].mxu0
      %v3274 = vadd.f32 0.0, %v3273
      %v3275 = vpop.f32.mrb[0].mxu0
      %3276 = vmatprep.mubr.f32.mxu0 0.0
      %3277 = vmatmul.mubr.f32.gmra.mrb[0].mxu0 %v3148
      %v3278 = vpop.f32.mrb[0].mxu0
      %v3279 = vadd.f32 0.0, %v3278
      %v3280 = vpop.f32.mrb[0].mxu0
      %3281 = vmatprep.mubr.f32.mxu0 0.0
      %3282 = vmatmul.mubr.f32.gmra.mrb[0].mxu0 %v3149
      %v3283 = vpop.f32.mrb[0].mxu0
      %v3284 = vadd.f32 0.0, %v3283
      %v3285 = vpop.f32.mrb[0].mxu0
      %3286 = vmatprep.mubr.f32.mxu0 0.0
      %3287 = vmatmul.mubr.f32.gmra.mrb[0].mxu0 %v3150
      %v3288 = vpop.f32.mrb[0].mxu0
      %v3289 = vadd.f32 0.0, %v3288
      %v3290 = vpop.f32.mrb[0].mxu0
      %3291 = vmatprep.mubr.f32.mxu0 0.0
      %3292 = vmatmul.mubr.f32.gmra.mrb[0].mxu0 %v3151
      %v3293 = vpop.f32.mrb[0].mxu0
      %v3294 = vadd.f32 0.0, %v3293
      %v3295 = vpop.f32.mrb[0].mxu0
      %3296 = vmatprep.mubr.f32.mxu0 0.0
      %3297 = vmatmul.mubr.f32.gmra.mrb[0].mxu0 %v3152
      %v3298 = vpop.f32.mrb[0].mxu0
      %v3299 = vadd.f32 0.0, %v3298
      %v3300 = vpop.f32.mrb[0].mxu0
      %3301 = vmatprep.mubr.f32.mxu0 0.0
      %3302 = vmatmul.mubr.f32.gmra.mrb[0].mxu0 %v3153
      %v3303 = vpop.f32.mrb[0].mxu0
      %v3304 = vadd.f32 0.0, %v3303
      %v3305 = vpop.f32.mrb[0].mxu0
      %3306 = vmatprep.mubr.f32.mxu0 0.0
      %3307 = vmatmul.mubr.f32.gmra.mrb[0].mxu0 %v3154
      %v3308 = vpop.f32.mrb[0].mxu0
      %v3309 = vadd.f32 0.0, %v3308
      %v3310 = vpop.f32.mrb[0].mxu0
      %3311 = vmatprep.mubr.f32.mxu0 0.0
      %3312 = vmatmul.mubr.f32.gmra.mrb[0].mxu0 %v3155
      %v3313 = vpop.f32.mrb[0].mxu0
      %v3314 = vadd.f32 0.0, %v3313
      %v3315 = vpop.f32.mrb[0].mxu0
      %3316 = vdwg.mxu0
      %3317 = vmax.xlane.f32.xlu0 %v3239
      %v3318 = vpop.xlane.xlu0 %3317
      %3319 = vmax.xlane.f32.xlu0 %v3244
      %v3320 = vpop.xlane.xlu0 %3319
      %3321 = vmax.xlane.f32.xlu0 %v3249
      %v3322 = vpop.xlane.xlu0 %3321
      %3323 = vmax.xlane.f32.xlu0 %v3254
      %v3324 = vpop.xlane.xlu0 %3323
      %3325 = vmax.xlane.f32.xlu0 %v3259
      %v3326 = vpop.xlane.xlu0 %3325
      %3327 = vmax.xlane.f32.xlu0 %v3264
      %v3328 = vpop.xlane.xlu0 %3327
      %3329 = vmax.xlane.f32.xlu0 %v3269
      %v3330 = vpop.xlane.xlu0 %3329
      %3331 = vmax.xlane.f32.xlu0 %v3274
      %v3332 = vpop.xlane.xlu0 %3331
      %3333 = vmax.xlane.f32.xlu0 %v3279
      %v3334 = vpop.xlane.xlu0 %3333
      %3335 = vmax.xlane.f32.xlu0 %v3284
      %v3336 = vpop.xlane.xlu0 %3335
      %3337 = vmax.xlane.f32.xlu0 %v3289
      %v3338 = vpop.xlane.xlu0 %3337
      %3339 = vmax.xlane.f32.xlu0 %v3294
      %v3340 = vpop.xlane.xlu0 %3339
      %3341 = vmax.xlane.f32.xlu0 %v3299
      %v3342 = vpop.xlane.xlu0 %3341
      %3343 = vmax.xlane.f32.xlu0 %v3304
      %v3344 = vpop.xlane.xlu0 %3343
      %3345 = vmax.xlane.f32.xlu0 %v3309
      %v3346 = vpop.xlane.xlu0 %3345
      %3347 = vmax.xlane.f32.xlu0 %v3314
      %v3348 = vpop.xlane.xlu0 %3347
      %v3349 = vmax.f32 %v3318, %v3326
      %v3350 = vmax.f32 %v3320, %v3328
      %v3351 = vmax.f32 %v3322, %v3330
      %v3352 = vmax.f32 %v3324, %v3332
      %v3353 = vmax.f32 %v3349, %v3334
      %v3354 = vmax.f32 %v3350, %v3336
      %v3355 = vmax.f32 %v3351, %v3338
      %v3356 = vmax.f32 %v3352, %v3340
      %v3357 = vmax.f32 %v3353, %v3342
      %v3358 = vmax.f32 %v3354, %v3344
      %v3359 = vmax.f32 %v3355, %v3346
      %v3360 = vmax.f32 %v3356, %v3348
      %v3361 = vmax.f32 %v3357, %v3358
      %v3362 = vmax.f32 %v3359, %v3360
      %v3363 = vmax.f32 %v3361, %v3362
      %v3364 = vrot.slane %v3363, 4
      %v3365 = vmax.f32 %v3363, %v3364
      %v3366 = vrot.slane %v3365, 2
      %v3367 = vmax.f32 %v3365, %v3366
      %v3368 = vrot.slane %v3367, 1
      %v3369 = vmax.f32 %v3367, %v3368
      %v3370 = vsub.f32 %v3239, %v3369
      %v3371 = vsub.f32 %v3244, %v3369
      %v3372 = vsub.f32 %v3249, %v3369
      %v3373 = vsub.f32 %v3254, %v3369
      %v3374 = vsub.f32 %v3259, %v3369
      %v3375 = vsub.f32 %v3264, %v3369
      %v3376 = vsub.f32 %v3269, %v3369
      %v3377 = vsub.f32 %v3274, %v3369
      %v3378 = vsub.f32 %v3279, %v3369
      %v3379 = vsub.f32 %v3284, %v3369
      %v3380 = vsub.f32 %v3289, %v3369
      %v3381 = vsub.f32 %v3294, %v3369
      %v3382 = vsub.f32 %v3299, %v3369
      %v3383 = vsub.f32 %v3304, %v3369
      %v3384 = vsub.f32 %v3309, %v3369
      %v3385 = vsub.f32 %v3314, %v3369
      %v3386 = vmul.f32 %v3370, 1.442695
      %v3387 = vpow.pop %v3386
      %v3388 = vmul.f32 %v3371, 1.442695
      %v3389 = vpow.pop %v3388
      %v3390 = vmul.f32 %v3372, 1.442695
      %v3391 = vpow.pop %v3390
      %v3392 = vmul.f32 %v3373, 1.442695
      %v3393 = vpow.pop %v3392
      %v3394 = vmul.f32 %v3374, 1.442695
      %v3395 = vpow.pop %v3394
      %v3396 = vmul.f32 %v3375, 1.442695
      %v3397 = vpow.pop %v3396
      %v3398 = vmul.f32 %v3376, 1.442695
      %v3399 = vpow.pop %v3398
      %v3400 = vmul.f32 %v3377, 1.442695
      %v3401 = vpow.pop %v3400
      %v3402 = vmul.f32 %v3378, 1.442695
      %v3403 = vpow.pop %v3402
      %v3404 = vmul.f32 %v3379, 1.442695
      %v3405 = vpow.pop %v3404
      %v3406 = vmul.f32 %v3380, 1.442695
      %v3407 = vpow.pop %v3406
      %v3408 = vmul.f32 %v3381, 1.442695
      %v3409 = vpow.pop %v3408
      %v3410 = vmul.f32 %v3382, 1.442695
      %v3411 = vpow.pop %v3410
      %v3412 = vmul.f32 %v3383, 1.442695
      %v3413 = vpow.pop %v3412
      %v3414 = vmul.f32 %v3384, 1.442695
      %v3415 = vpow.pop %v3414
      %v3416 = vmul.f32 %v3385, 1.442695
      %v3417 = vpow.pop %v3416
      %3418 = vmatprep.subr.mxu0 0.0
      %3419 = vmatpush1.msra.mxu0 %v1249
      %3420 = vmatprep.subr.mxu0 0.0
      %3421 = vmatpush1.msra.mxu0 %v1250
      %3422 = vmatprep.subr.mxu0 0.0
      %3423 = vmatpush1.msra.mxu0 %v1251
      %3424 = vmatprep.subr.mxu0 0.0
      %3425 = vmatpush1.msra.mxu0 %v1252
      %3426 = vmatprep.subr.mxu0 0.0
      %3427 = vmatpush1.msra.mxu0 %v1253
      %3428 = vmatprep.subr.mxu0 0.0
      %3429 = vmatpush1.msra.mxu0 %v1254
      %3430 = vmatprep.subr.mxu0 0.0
      %3431 = vmatpush1.msra.mxu0 %v1255
      %3432 = vmatprep.subr.mxu0 0.0
      %3433 = vmatpush1.msra.mxu0 %v1256
      %3434 = vmatprep.subr.mxu0 0.0
      %3435 = vmatpush1.msra.mxu0 %v1257
      %3436 = vmatprep.subr.mxu0 0.0
      %3437 = vmatpush1.msra.mxu0 %v1258
      %3438 = vmatprep.subr.mxu0 0.0
      %3439 = vmatpush1.msra.mxu0 %v1259
      %3440 = vmatprep.subr.mxu0 0.0
      %3441 = vmatpush1.msra.mxu0 %v1260
      %3442 = vmatprep.subr.mxu0 0.0
      %3443 = vmatpush1.msra.mxu0 %v1261
      %3444 = vmatprep.subr.mxu0 0.0
      %3445 = vmatpush1.msra.mxu0 %v1262
      %3446 = vmatprep.subr.mxu0 0.0
      %3447 = vmatpush1.msra.mxu0 %v1263
      %3448 = vmatprep.subr.mxu0 0.0
      %3449 = vmatpush1.msra.mxu0 %v1264
      %3450 = vmatprep.subr.mxu0 0.0
      %3451 = vmatpush1.msra.mxu0 0.0
      %3452 = vmatprep.subr.mxu0 0.0
      %3453 = vmatpush1.msra.mxu0 0.0
      %3454 = vmatprep.subr.mxu0 0.0
      %3455 = vmatpush1.msra.mxu0 0.0
      %3456 = vmatprep.subr.mxu0 0.0
      %3457 = vmatpush1.msra.mxu0 0.0
      %3458 = vmatprep.subr.mxu0 0.0
      %3459 = vmatpush1.msra.mxu0 0.0
      %3460 = vmatprep.subr.mxu0 0.0
      %3461 = vmatpush1.msra.mxu0 0.0
      %3462 = vmatprep.subr.mxu0 0.0
      %3463 = vmatpush1.msra.mxu0 0.0
      %3464 = vmatprep.subr.mxu0 0.0
      %3465 = vmatpush1.msra.mxu0 0.0
      %3466 = vmatprep.subr.mxu0 0.0
      %3467 = vmatpush1.msra.mxu0 0.0
      %3468 = vmatprep.subr.mxu0 0.0
      %3469 = vmatpush1.msra.mxu0 0.0
      %3470 = vmatprep.subr.mxu0 0.0
      %3471 = vmatpush1.msra.mxu0 0.0
      %3472 = vmatprep.subr.mxu0 0.0
      %3473 = vmatpush1.msra.mxu0 0.0
      %3474 = vmatprep.subr.mxu0 0.0
      %3475 = vmatpush1.msra.mxu0 0.0
      %3476 = vmatprep.subr.mxu0 0.0
      %3477 = vmatpush1.msra.mxu0 0.0
      %3478 = vmatprep.subr.mxu0 0.0
      %3479 = vmatpush1.msra.mxu0 0.0
      %3480 = vmatprep.subr.mxu0 0.0
      %3481 = vmatpush1.msra.mxu0 0.0
      %3482 = vmatprep.mubr.f32.mxu0 0.0
      %3483 = vmatmul.mubr.f32.gmra.mrb[0].mxu0 %v3387
      %v3484 = vpop.f32.mrb[0].mxu0
      %v3485 = vadd.f32 0.0, %v3484
      %v3486 = vpop.f32.mrb[0].mxu0
      %3487 = vmatprep.mubr.f32.mxu0 0.0
      %3488 = vmatmul.mubr.f32.gmra.mrb[0].mxu0 %v3389
      %v3489 = vpop.f32.mrb[0].mxu0
      %v3490 = vadd.f32 0.0, %v3489
      %v3491 = vpop.f32.mrb[0].mxu0
      %3492 = vmatprep.mubr.f32.mxu0 0.0
      %3493 = vmatmul.mubr.f32.gmra.mrb[0].mxu0 %v3391
      %v3494 = vpop.f32.mrb[0].mxu0
      %v3495 = vadd.f32 0.0, %v3494
      %v3496 = vpop.f32.mrb[0].mxu0
      %3497 = vmatprep.mubr.f32.mxu0 0.0
      %3498 = vmatmul.mubr.f32.gmra.mrb[0].mxu0 %v3393
      %v3499 = vpop.f32.mrb[0].mxu0
      %v3500 = vadd.f32 0.0, %v3499
      %v3501 = vpop.f32.mrb[0].mxu0
      %3502 = vmatprep.mubr.f32.mxu0 0.0
      %3503 = vmatmul.mubr.f32.gmra.mrb[0].mxu0 %v3395
      %v3504 = vpop.f32.mrb[0].mxu0
      %v3505 = vadd.f32 0.0, %v3504
      %v3506 = vpop.f32.mrb[0].mxu0
      %3507 = vmatprep.mubr.f32.mxu0 0.0
      %3508 = vmatmul.mubr.f32.gmra.mrb[0].mxu0 %v3397
      %v3509 = vpop.f32.mrb[0].mxu0
      %v3510 = vadd.f32 0.0, %v3509
      %v3511 = vpop.f32.mrb[0].mxu0
      %3512 = vmatprep.mubr.f32.mxu0 0.0
      %3513 = vmatmul.mubr.f32.gmra.mrb[0].mxu0 %v3399
      %v3514 = vpop.f32.mrb[0].mxu0
      %v3515 = vadd.f32 0.0, %v3514
      %v3516 = vpop.f32.mrb[0].mxu0
      %3517 = vmatprep.mubr.f32.mxu0 0.0
      %3518 = vmatmul.mubr.f32.gmra.mrb[0].mxu0 %v3401
      %v3519 = vpop.f32.mrb[0].mxu0
      %v3520 = vadd.f32 0.0, %v3519
      %v3521 = vpop.f32.mrb[0].mxu0
      %3522 = vmatprep.mubr.f32.mxu0 0.0
      %3523 = vmatmul.mubr.f32.gmra.mrb[0].mxu0 %v3403
      %v3524 = vpop.f32.mrb[0].mxu0
      %v3525 = vadd.f32 0.0, %v3524
      %v3526 = vpop.f32.mrb[0].mxu0
      %3527 = vmatprep.mubr.f32.mxu0 0.0
      %3528 = vmatmul.mubr.f32.gmra.mrb[0].mxu0 %v3405
      %v3529 = vpop.f32.mrb[0].mxu0
      %v3530 = vadd.f32 0.0, %v3529
      %v3531 = vpop.f32.mrb[0].mxu0
      %3532 = vmatprep.mubr.f32.mxu0 0.0
      %3533 = vmatmul.mubr.f32.gmra.mrb[0].mxu0 %v3407
      %v3534 = vpop.f32.mrb[0].mxu0
      %v3535 = vadd.f32 0.0, %v3534
      %v3536 = vpop.f32.mrb[0].mxu0
      %3537 = vmatprep.mubr.f32.mxu0 0.0
      %3538 = vmatmul.mubr.f32.gmra.mrb[0].mxu0 %v3409
      %v3539 = vpop.f32.mrb[0].mxu0
      %v3540 = vadd.f32 0.0, %v3539
      %v3541 = vpop.f32.mrb[0].mxu0
      %3542 = vmatprep.mubr.f32.mxu0 0.0
      %3543 = vmatmul.mubr.f32.gmra.mrb[0].mxu0 %v3411
      %v3544 = vpop.f32.mrb[0].mxu0
      %v3545 = vadd.f32 0.0, %v3544
      %v3546 = vpop.f32.mrb[0].mxu0
      %3547 = vmatprep.mubr.f32.mxu0 0.0
      %3548 = vmatmul.mubr.f32.gmra.mrb[0].mxu0 %v3413
      %v3549 = vpop.f32.mrb[0].mxu0
      %v3550 = vadd.f32 0.0, %v3549
      %v3551 = vpop.f32.mrb[0].mxu0
      %3552 = vmatprep.mubr.f32.mxu0 0.0
      %3553 = vmatmul.mubr.f32.gmra.mrb[0].mxu0 %v3415
      %v3554 = vpop.f32.mrb[0].mxu0
      %v3555 = vadd.f32 0.0, %v3554
      %v3556 = vpop.f32.mrb[0].mxu0
      %3557 = vmatprep.mubr.f32.mxu0 0.0
      %3558 = vmatmul.mubr.f32.gmra.mrb[0].mxu0 %v3417
      %v3559 = vpop.f32.mrb[0].mxu0
      %v3560 = vadd.f32 0.0, %v3559
      %v3561 = vpop.f32.mrb[0].mxu0
      %3562 = vdwg.mxu0
      %v3563 = vrcp.pop %v3485
      %v3564 = vrcp.pop %v3490
      %v3565 = vrcp.pop %v3495
      %v3566 = vrcp.pop %v3500
      %v3567 = vrcp.pop %v3505
      %v3568 = vrcp.pop %v3510
      %v3569 = vrcp.pop %v3515
      %v3570 = vrcp.pop %v3520
      %v3571 = vrcp.pop %v3525
      %v3572 = vrcp.pop %v3530
      %v3573 = vrcp.pop %v3535
      %v3574 = vrcp.pop %v3540
      %v3575 = vrcp.pop %v3545
      %v3576 = vrcp.pop %v3550
      %v3577 = vrcp.pop %v3555
      %v3578 = vrcp.pop %v3560
      %v3579 = vmul.f32 %v3485, %v3563
      %v3580 = vmul.f32 %v3490, %v3564
      %v3581 = vmul.f32 %v3495, %v3565
      %v3582 = vmul.f32 %v3500, %v3566
      %v3583 = vmul.f32 %v3505, %v3567
      %v3584 = vmul.f32 %v3510, %v3568
      %v3585 = vmul.f32 %v3515, %v3569
      %v3586 = vmul.f32 %v3520, %v3570
      %v3587 = vmul.f32 %v3525, %v3571
      %v3588 = vmul.f32 %v3530, %v3572
      %v3589 = vmul.f32 %v3535, %v3573
      %v3590 = vmul.f32 %v3540, %v3574
      %v3591 = vmul.f32 %v3545, %v3575
      %v3592 = vmul.f32 %v3550, %v3576
      %v3593 = vmul.f32 %v3555, %v3577
      %v3594 = vmul.f32 %v3560, %v3578
      %v3595 = vsub.f32 2.0, %v3579
      %v3596 = vsub.f32 2.0, %v3580
      %v3597 = vsub.f32 2.0, %v3581
      %v3598 = vsub.f32 2.0, %v3582
      %v3599 = vsub.f32 2.0, %v3583
      %v3600 = vsub.f32 2.0, %v3584
      %v3601 = vsub.f32 2.0, %v3585
      %v3602 = vsub.f32 2.0, %v3586
      %v3603 = vsub.f32 2.0, %v3587
      %v3604 = vsub.f32 2.0, %v3588
      %v3605 = vsub.f32 2.0, %v3589
      %v3606 = vsub.f32 2.0, %v3590
      %v3607 = vsub.f32 2.0, %v3591
      %v3608 = vsub.f32 2.0, %v3592
      %v3609 = vsub.f32 2.0, %v3593
      %v3610 = vsub.f32 2.0, %v3594
      %v3611 = vmul.f32 %v3563, %v3595
      %v3612 = vmul.f32 %v3564, %v3596
      %v3613 = vmul.f32 %v3565, %v3597
      %v3614 = vmul.f32 %v3566, %v3598
      %v3615 = vmul.f32 %v3567, %v3599
      %v3616 = vmul.f32 %v3568, %v3600
      %v3617 = vmul.f32 %v3569, %v3601
      %v3618 = vmul.f32 %v3570, %v3602
      %v3619 = vmul.f32 %v3571, %v3603
      %v3620 = vmul.f32 %v3572, %v3604
      %v3621 = vmul.f32 %v3573, %v3605
      %v3622 = vmul.f32 %v3574, %v3606
      %v3623 = vmul.f32 %v3575, %v3607
      %v3624 = vmul.f32 %v3576, %v3608
      %v3625 = vmul.f32 %v3577, %v3609
      %v3626 = vmul.f32 %v3578, %v3610
      %v3628 = vsel %vm2522, %v3611, 0
      %v3631 = vsel %vm2522, %v3612, 0
      %v3634 = vsel %vm2522, %v3613, 0
      %v3637 = vsel %vm2522, %v3614, 0
      %v3640 = vsel %vm2522, %v3615, 0
      %v3643 = vsel %vm2522, %v3616, 0
      %v3646 = vsel %vm2522, %v3617, 0
      %v3649 = vsel %vm2522, %v3618, 0
      %v3652 = vsel %vm2522, %v3619, 0
      %v3655 = vsel %vm2522, %v3620, 0
      %v3658 = vsel %vm2522, %v3621, 0
      %v3661 = vsel %vm2522, %v3622, 0
      %v3664 = vsel %vm2522, %v3623, 0
      %v3667 = vsel %vm2522, %v3624, 0
      %v3670 = vsel %vm2522, %v3625, 0
      %v3673 = vsel %vm2522, %v3626, 0
      %3675 = vmatprep.subr.mxu0 0.0
      %3676 = vmatpush1.msra.mxu0 %v1265
      %3677 = vmatprep.subr.mxu0 0.0
      %3678 = vmatpush1.msra.mxu0 0.0
      %3679 = vmatprep.subr.mxu0 0.0
      %3680 = vmatpush1.msra.mxu0 0.0
      %3681 = vmatprep.subr.mxu0 0.0
      %3682 = vmatpush1.msra.mxu0 0.0
      %3683 = vmatprep.subr.mxu0 0.0
      %3684 = vmatpush1.msra.mxu0 0.0
      %3685 = vmatprep.subr.mxu0 0.0
      %3686 = vmatpush1.msra.mxu0 0.0
      %3687 = vmatprep.subr.mxu0 0.0
      %3688 = vmatpush1.msra.mxu0 0.0
      %3689 = vmatprep.subr.mxu0 0.0
      %3690 = vmatpush1.msra.mxu0 0.0
      %3691 = vmatprep.subr.mxu0 0.0
      %3692 = vmatpush1.msra.mxu0 0.0
      %3693 = vmatprep.subr.mxu0 0.0
      %3694 = vmatpush1.msra.mxu0 0.0
      %3695 = vmatprep.subr.mxu0 0.0
      %3696 = vmatpush1.msra.mxu0 0.0
      %3697 = vmatprep.subr.mxu0 0.0
      %3698 = vmatpush1.msra.mxu0 0.0
      %3699 = vmatprep.subr.mxu0 0.0
      %3700 = vmatpush1.msra.mxu0 0.0
      %3701 = vmatprep.subr.mxu0 0.0
      %3702 = vmatpush1.msra.mxu0 0.0
      %3703 = vmatprep.subr.mxu0 0.0
      %3704 = vmatpush1.msra.mxu0 0.0
      %3705 = vmatprep.subr.mxu0 0.0
      %3706 = vmatpush1.msra.mxu0 0.0
      %3707 = vmatprep.subr.mxu0 0.0
      %3708 = vmatpush1.msra.mxu0 0.0
      %3709 = vmatprep.subr.mxu0 0.0
      %3710 = vmatpush1.msra.mxu0 0.0
      %3711 = vmatprep.subr.mxu0 0.0
      %3712 = vmatpush1.msra.mxu0 0.0
      %3713 = vmatprep.subr.mxu0 0.0
      %3714 = vmatpush1.msra.mxu0 0.0
      %3715 = vmatprep.subr.mxu0 0.0
      %3716 = vmatpush1.msra.mxu0 0.0
      %3717 = vmatprep.subr.mxu0 0.0
      %3718 = vmatpush1.msra.mxu0 0.0
      %3719 = vmatprep.subr.mxu0 0.0
      %3720 = vmatpush1.msra.mxu0 0.0
      %3721 = vmatprep.subr.mxu0 0.0
      %3722 = vmatpush1.msra.mxu0 0.0
      %3723 = vmatprep.subr.mxu0 0.0
      %3724 = vmatpush1.msra.mxu0 0.0
      %3725 = vmatprep.subr.mxu0 0.0
      %3726 = vmatpush1.msra.mxu0 0.0
      %3727 = vmatprep.subr.mxu0 0.0
      %3728 = vmatpush1.msra.mxu0 0.0
      %3729 = vmatprep.subr.mxu0 0.0
      %3730 = vmatpush1.msra.mxu0 0.0
      %3731 = vmatprep.subr.mxu0 0.0
      %3732 = vmatpush1.msra.mxu0 0.0
      %3733 = vmatprep.subr.mxu0 0.0
      %3734 = vmatpush1.msra.mxu0 0.0
      %3735 = vmatprep.subr.mxu0 0.0
      %3736 = vmatpush1.msra.mxu0 0.0
      %3737 = vmatprep.subr.mxu0 0.0
      %3738 = vmatpush1.msra.mxu0 0.0
      %3739 = vmatprep.mubr.f32.mxu0 0.0
      %3740 = vmatmul.mubr.f32.gmra.mrb[0].mxu0 %v3628
      %v3741 = vpop.f32.mrb[0].mxu0
      %v3742 = vadd.f32 0.0, %v3741
      %v3743 = vpop.f32.mrb[0].mxu0
      %3744 = vmatprep.mubr.f32.mxu0 0.0
      %3745 = vmatmul.mubr.f32.gmra.mrb[0].mxu0 %v3631
      %v3746 = vpop.f32.mrb[0].mxu0
      %v3747 = vadd.f32 0.0, %v3746
      %v3748 = vpop.f32.mrb[0].mxu0
      %3749 = vmatprep.mubr.f32.mxu0 0.0
      %3750 = vmatmul.mubr.f32.gmra.mrb[0].mxu0 %v3634
      %v3751 = vpop.f32.mrb[0].mxu0
      %v3752 = vadd.f32 0.0, %v3751
      %v3753 = vpop.f32.mrb[0].mxu0
      %3754 = vmatprep.mubr.f32.mxu0 0.0
      %3755 = vmatmul.mubr.f32.gmra.mrb[0].mxu0 %v3637
      %v3756 = vpop.f32.mrb[0].mxu0
      %v3757 = vadd.f32 0.0, %v3756
      %v3758 = vpop.f32.mrb[0].mxu0
      %3759 = vmatprep.mubr.f32.mxu0 0.0
      %3760 = vmatmul.mubr.f32.gmra.mrb[0].mxu0 %v3640
      %v3761 = vpop.f32.mrb[0].mxu0
      %v3762 = vadd.f32 0.0, %v3761
      %v3763 = vpop.f32.mrb[0].mxu0
      %3764 = vmatprep.mubr.f32.mxu0 0.0
      %3765 = vmatmul.mubr.f32.gmra.mrb[0].mxu0 %v3643
      %v3766 = vpop.f32.mrb[0].mxu0
      %v3767 = vadd.f32 0.0, %v3766
      %v3768 = vpop.f32.mrb[0].mxu0
      %3769 = vmatprep.mubr.f32.mxu0 0.0
      %3770 = vmatmul.mubr.f32.gmra.mrb[0].mxu0 %v3646
      %v3771 = vpop.f32.mrb[0].mxu0
      %v3772 = vadd.f32 0.0, %v3771
      %v3773 = vpop.f32.mrb[0].mxu0
      %3774 = vmatprep.mubr.f32.mxu0 0.0
      %3775 = vmatmul.mubr.f32.gmra.mrb[0].mxu0 %v3649
      %v3776 = vpop.f32.mrb[0].mxu0
      %v3777 = vadd.f32 0.0, %v3776
      %v3778 = vpop.f32.mrb[0].mxu0
      %3779 = vmatprep.mubr.f32.mxu0 0.0
      %3780 = vmatmul.mubr.f32.gmra.mrb[0].mxu0 %v3652
      %v3781 = vpop.f32.mrb[0].mxu0
      %v3782 = vadd.f32 0.0, %v3781
      %v3783 = vpop.f32.mrb[0].mxu0
      %3784 = vmatprep.mubr.f32.mxu0 0.0
      %3785 = vmatmul.mubr.f32.gmra.mrb[0].mxu0 %v3655
      %v3786 = vpop.f32.mrb[0].mxu0
      %v3787 = vadd.f32 0.0, %v3786
      %v3788 = vpop.f32.mrb[0].mxu0
      %3789 = vmatprep.mubr.f32.mxu0 0.0
      %3790 = vmatmul.mubr.f32.gmra.mrb[0].mxu0 %v3658
      %v3791 = vpop.f32.mrb[0].mxu0
      %v3792 = vadd.f32 0.0, %v3791
      %v3793 = vpop.f32.mrb[0].mxu0
      %3794 = vmatprep.mubr.f32.mxu0 0.0
      %3795 = vmatmul.mubr.f32.gmra.mrb[0].mxu0 %v3661
      %v3796 = vpop.f32.mrb[0].mxu0
      %v3797 = vadd.f32 0.0, %v3796
      %v3798 = vpop.f32.mrb[0].mxu0
      %3799 = vmatprep.mubr.f32.mxu0 0.0
      %3800 = vmatmul.mubr.f32.gmra.mrb[0].mxu0 %v3664
      %v3801 = vpop.f32.mrb[0].mxu0
      %v3802 = vadd.f32 0.0, %v3801
      %v3803 = vpop.f32.mrb[0].mxu0
      %3804 = vmatprep.mubr.f32.mxu0 0.0
      %3805 = vmatmul.mubr.f32.gmra.mrb[0].mxu0 %v3667
      %v3806 = vpop.f32.mrb[0].mxu0
      %v3807 = vadd.f32 0.0, %v3806
      %v3808 = vpop.f32.mrb[0].mxu0
      %3809 = vmatprep.mubr.f32.mxu0 0.0
      %3810 = vmatmul.mubr.f32.gmra.mrb[0].mxu0 %v3670
      %v3811 = vpop.f32.mrb[0].mxu0
      %v3812 = vadd.f32 0.0, %v3811
      %v3813 = vpop.f32.mrb[0].mxu0
      %3814 = vmatprep.mubr.f32.mxu0 0.0
      %3815 = vmatmul.mubr.f32.gmra.mrb[0].mxu0 %v3673
      %v3816 = vpop.f32.mrb[0].mxu0
      %v3817 = vadd.f32 0.0, %v3816
      %v3818 = vpop.f32.mrb[0].mxu0
      %3819 = vdwg.mxu0
      %v3820 = vmul.f32 %v3387, %v3742
      %v3821 = vmul.f32 %v3389, %v3747
      %v3822 = vmul.f32 %v3391, %v3752
      %v3823 = vmul.f32 %v3393, %v3757
      %v3824 = vmul.f32 %v3395, %v3762
      %v3825 = vmul.f32 %v3397, %v3767
      %v3826 = vmul.f32 %v3399, %v3772
      %v3827 = vmul.f32 %v3401, %v3777
      %v3828 = vmul.f32 %v3403, %v3782
      %v3829 = vmul.f32 %v3405, %v3787
      %v3830 = vmul.f32 %v3407, %v3792
      %v3831 = vmul.f32 %v3409, %v3797
      %v3832 = vmul.f32 %v3411, %v3802
      %v3833 = vmul.f32 %v3413, %v3807
      %v3834 = vmul.f32 %v3415, %v3812
      %v3835 = vmul.f32 %v3417, %v3817
      %v3836 = vld [vmem:[%s1172] sm:$0xf]
      %v3837 = vsel %vm2522, %v2096, 0.0
      %3838 = vadd.xlane.f32.xlu0 %v3837
      %v3839 = vpop.xlane.xlu0 %3838
      %v3840 = vsel %vm2522, %v2101, 0.0
      %3841 = vadd.xlane.f32.xlu0 %v3840
      %v3842 = vpop.xlane.xlu0 %3841
      %v3843 = vadd.f32 %v3839, %v3842
      %v3844 = vrot.slane %v3843, 4
      %v3845 = vadd.f32 %v3843, %v3844
      %v3846 = vrot.slane %v3845, 2
      %v3847 = vadd.f32 %v3845, %v3846
      %v3848 = vrot.slane %v3847, 1
      %v3849 = vadd.f32 %v3847, %v3848
      %v3850 = vmul.f32 %v2096, %v2096
      %v3851 = vmul.f32 %v2101, %v2101
      %v3852 = vsel %vm2522, %v3850, 0.0
      %3853 = vadd.xlane.f32.xlu0 %v3852
      %v3854 = vpop.xlane.xlu0 %3853
      %v3855 = vsel %vm2522, %v3851, 0.0
      %3856 = vadd.xlane.f32.xlu0 %v3855
      %v3857 = vpop.xlane.xlu0 %3856
      %v3858 = vadd.f32 %v3854, %v3857
      %v3859 = vrot.slane %v3858, 4
      %v3860 = vadd.f32 %v3858, %v3859
      %v3861 = vrot.slane %v3860, 2
      %v3862 = vadd.f32 %v3860, %v3861
      %v3863 = vrot.slane %v3862, 1
      %v3864 = vadd.f32 %v3862, %v3863
      %v3865 = vsel %vm1775, %v1603, 0.0
      %v3866 = vsel %vm1775, %v1608, 0.0
      %v3867 = vadd.f32 %v3865, %v3866
      %v3868 = vrot.slane %v3867, 4
      %v3869 = vadd.f32 %v3867, %v3868
      %v3870 = vrot.slane %v3869, 2
      %v3871 = vadd.f32 %v3869, %v3870
      %v3872 = vrot.slane %v3871, 1
      %v3873 = vadd.f32 %v3871, %v3872
      %v3874 = vmul.f32 %v3873, 8.0
      %v3875 = vadd.f32 %v3874, %v3849
      %v3876 = vadd.f32 %v3875, %v2607
      %v3877 = vmul.f32 %v1603, %v1603
      %v3878 = vmul.f32 %v1608, %v1608
      %v3879 = vsel %vm1775, %v3877, 0.0
      %v3880 = vsel %vm1775, %v3878, 0.0
      %v3881 = vadd.f32 %v3879, %v3880
      %v3882 = vrot.slane %v3881, 4
      %v3883 = vadd.f32 %v3881, %v3882
      %v3884 = vrot.slane %v3883, 2
      %v3885 = vadd.f32 %v3883, %v3884
      %v3886 = vrot.slane %v3885, 1
      %v3887 = vadd.f32 %v3885, %v3886
      %v3888 = vmul.f32 %v3887, 8.0
      %v3889 = vadd.f32 %v3888, %v3864
      %v3890 = vadd.f32 %v3889, %v2660
      %v3891 = vmul.f32 %v3876, 0.0026041667
      %v3892 = vmul.f32 %v3890, 0.0026041667
      %v3893 = vmul.f32 %v3891, %v3891
      %v3894 = vsub.f32 %v3892, %v3893
      %v3895 = vadd.f32 %v3894, 1e-05
      %v3896 = vrsqrt.pop %v3895
      %v3898 = vsel %vm1775, %v3891, 0
      %3900 = vmatprep.subr.mxu0 0.0
      %3901 = vmatpush1.msra.mxu0 %v1282
      %3902 = vmatprep.subr.mxu0 0.0
      %3903 = vmatpush1.msra.mxu0 %v1283
      %3904 = vmatprep.subr.mxu0 0.0
      %3905 = vmatpush1.msra.mxu0 0.0
      %3906 = vmatprep.subr.mxu0 0.0
      %3907 = vmatpush1.msra.mxu0 0.0
      %3908 = vmatprep.subr.mxu0 0.0
      %3909 = vmatpush1.msra.mxu0 0.0
      %3910 = vmatprep.subr.mxu0 0.0
      %3911 = vmatpush1.msra.mxu0 0.0
      %3912 = vmatprep.subr.mxu0 0.0
      %3913 = vmatpush1.msra.mxu0 0.0
      %3914 = vmatprep.subr.mxu0 0.0
      %3915 = vmatpush1.msra.mxu0 0.0
      %3916 = vmatprep.subr.mxu0 0.0
      %3917 = vmatpush1.msra.mxu0 0.0
      %3918 = vmatprep.subr.mxu0 0.0
      %3919 = vmatpush1.msra.mxu0 0.0
      %3920 = vmatprep.subr.mxu0 0.0
      %3921 = vmatpush1.msra.mxu0 0.0
      %3922 = vmatprep.subr.mxu0 0.0
      %3923 = vmatpush1.msra.mxu0 0.0
      %3924 = vmatprep.subr.mxu0 0.0
      %3925 = vmatpush1.msra.mxu0 0.0
      %3926 = vmatprep.subr.mxu0 0.0
      %3927 = vmatpush1.msra.mxu0 0.0
      %3928 = vmatprep.subr.mxu0 0.0
      %3929 = vmatpush1.msra.mxu0 0.0
      %3930 = vmatprep.subr.mxu0 0.0
      %3931 = vmatpush1.msra.mxu0 0.0
      %3932 = vmatprep.subr.mxu0 0.0
      %3933 = vmatpush1.msra.mxu0 0.0
      %3934 = vmatprep.subr.mxu0 0.0
      %3935 = vmatpush1.msra.mxu0 0.0
      %3936 = vmatprep.subr.mxu0 0.0
      %3937 = vmatpush1.msra.mxu0 0.0
      %3938 = vmatprep.subr.mxu0 0.0
      %3939 = vmatpush1.msra.mxu0 0.0
      %3940 = vmatprep.subr.mxu0 0.0
      %3941 = vmatpush1.msra.mxu0 0.0
      %3942 = vmatprep.subr.mxu0 0.0
      %3943 = vmatpush1.msra.mxu0 0.0
      %3944 = vmatprep.subr.mxu0 0.0
      %3945 = vmatpush1.msra.mxu0 0.0
      %3946 = vmatprep.subr.mxu0 0.0
      %3947 = vmatpush1.msra.mxu0 0.0
      %3948 = vmatprep.subr.mxu0 0.0
      %3949 = vmatpush1.msra.mxu0 0.0
      %3950 = vmatprep.subr.mxu0 0.0
      %3951 = vmatpush1.msra.mxu0 0.0
      %3952 = vmatprep.subr.mxu0 0.0
      %3953 = vmatpush1.msra.mxu0 0.0
      %3954 = vmatprep.subr.mxu0 0.0
      %3955 = vmatpush1.msra.mxu0 0.0
      %3956 = vmatprep.subr.mxu0 0.0
      %3957 = vmatpush1.msra.mxu0 0.0
      %3958 = vmatprep.subr.mxu0 0.0
      %3959 = vmatpush1.msra.mxu0 0.0
      %3960 = vmatprep.subr.mxu0 0.0
      %3961 = vmatpush1.msra.mxu0 0.0
      %3962 = vmatprep.subr.mxu0 0.0
      %3963 = vmatpush1.msra.mxu0 0.0
      %3964 = vmatprep.mubr.f32.mxu0 0.0
      %3965 = vmatmul.mubr.f32.gmra.mrb[0].mxu0 %v3898
      %v3966 = vpop.f32.mrb[0].mxu0
      %v3967 = vadd.f32 0.0, %v3966
      %v3968 = vpop.f32.mrb[0].mxu0
      %3969 = vdwg.mxu0
      %v3971 = vsel %vm1775, %v3896, 0
      %3973 = vmatprep.subr.mxu0 0.0
      %3974 = vmatpush1.msra.mxu0 %v1282
      %3975 = vmatprep.subr.mxu0 0.0
      %3976 = vmatpush1.msra.mxu0 %v1283
      %3977 = vmatprep.subr.mxu0 0.0
      %3978 = vmatpush1.msra.mxu0 0.0
      %3979 = vmatprep.subr.mxu0 0.0
      %3980 = vmatpush1.msra.mxu0 0.0
      %3981 = vmatprep.subr.mxu0 0.0
      %3982 = vmatpush1.msra.mxu0 0.0
      %3983 = vmatprep.subr.mxu0 0.0
      %3984 = vmatpush1.msra.mxu0 0.0
      %3985 = vmatprep.subr.mxu0 0.0
      %3986 = vmatpush1.msra.mxu0 0.0
      %3987 = vmatprep.subr.mxu0 0.0
      %3988 = vmatpush1.msra.mxu0 0.0
      %3989 = vmatprep.subr.mxu0 0.0
      %3990 = vmatpush1.msra.mxu0 0.0
      %3991 = vmatprep.subr.mxu0 0.0
      %3992 = vmatpush1.msra.mxu0 0.0
      %3993 = vmatprep.subr.mxu0 0.0
      %3994 = vmatpush1.msra.mxu0 0.0
      %3995 = vmatprep.subr.mxu0 0.0
      %3996 = vmatpush1.msra.mxu0 0.0
      %3997 = vmatprep.subr.mxu0 0.0
      %3998 = vmatpush1.msra.mxu0 0.0
      %3999 = vmatprep.subr.mxu0 0.0
      %4000 = vmatpush1.msra.mxu0 0.0
      %4001 = vmatprep.subr.mxu0 0.0
      %4002 = vmatpush1.msra.mxu0 0.0
      %4003 = vmatprep.subr.mxu0 0.0
      %4004 = vmatpush1.msra.mxu0 0.0
      %4005 = vmatprep.subr.mxu0 0.0
      %4006 = vmatpush1.msra.mxu0 0.0
      %4007 = vmatprep.subr.mxu0 0.0
      %4008 = vmatpush1.msra.mxu0 0.0
      %4009 = vmatprep.subr.mxu0 0.0
      %4010 = vmatpush1.msra.mxu0 0.0
      %4011 = vmatprep.subr.mxu0 0.0
      %4012 = vmatpush1.msra.mxu0 0.0
      %4013 = vmatprep.subr.mxu0 0.0
      %4014 = vmatpush1.msra.mxu0 0.0
      %4015 = vmatprep.subr.mxu0 0.0
      %4016 = vmatpush1.msra.mxu0 0.0
      %4017 = vmatprep.subr.mxu0 0.0
      %4018 = vmatpush1.msra.mxu0 0.0
      %4019 = vmatprep.subr.mxu0 0.0
      %4020 = vmatpush1.msra.mxu0 0.0
      %4021 = vmatprep.subr.mxu0 0.0
      %4022 = vmatpush1.msra.mxu0 0.0
      %4023 = vmatprep.subr.mxu0 0.0
      %4024 = vmatpush1.msra.mxu0 0.0
      %4025 = vmatprep.subr.mxu0 0.0
      %4026 = vmatpush1.msra.mxu0 0.0
      %4027 = vmatprep.subr.mxu0 0.0
      %4028 = vmatpush1.msra.mxu0 0.0
      %4029 = vmatprep.subr.mxu0 0.0
      %4030 = vmatpush1.msra.mxu0 0.0
      %4031 = vmatprep.subr.mxu0 0.0
      %4032 = vmatpush1.msra.mxu0 0.0
      %4033 = vmatprep.subr.mxu0 0.0
      %4034 = vmatpush1.msra.mxu0 0.0
      %4035 = vmatprep.subr.mxu0 0.0
      %4036 = vmatpush1.msra.mxu0 0.0
      %4037 = vmatprep.mubr.f32.mxu0 0.0
      %4038 = vmatmul.mubr.f32.gmra.mrb[0].mxu0 %v3971
      %v4039 = vpop.f32.mrb[0].mxu0
      %v4040 = vadd.f32 0.0, %v4039
      %v4041 = vpop.f32.mrb[0].mxu0
      %4042 = vdwg.mxu0
      %v4044 = vsel %vm1775, %v1603, 0
      %v4047 = vsel %vm1775, %v1608, 0
      %4049 = vmatprep.subr.mxu0 0.0
      %4050 = vmatpush1.msra.mxu0 %v1282
      %4051 = vmatprep.subr.mxu0 0.0
      %4052 = vmatpush1.msra.mxu0 %v1283
      %4053 = vmatprep.subr.mxu0 0.0
      %4054 = vmatpush1.msra.mxu0 0.0
      %4055 = vmatprep.subr.mxu0 0.0
      %4056 = vmatpush1.msra.mxu0 0.0
      %4057 = vmatprep.subr.mxu0 0.0
      %4058 = vmatpush1.msra.mxu0 0.0
      %4059 = vmatprep.subr.mxu0 0.0
      %4060 = vmatpush1.msra.mxu0 0.0
      %4061 = vmatprep.subr.mxu0 0.0
      %4062 = vmatpush1.msra.mxu0 0.0
      %4063 = vmatprep.subr.mxu0 0.0
      %4064 = vmatpush1.msra.mxu0 0.0
      %4065 = vmatprep.subr.mxu0 0.0
      %4066 = vmatpush1.msra.mxu0 0.0
      %4067 = vmatprep.subr.mxu0 0.0
      %4068 = vmatpush1.msra.mxu0 0.0
      %4069 = vmatprep.subr.mxu0 0.0
      %4070 = vmatpush1.msra.mxu0 0.0
      %4071 = vmatprep.subr.mxu0 0.0
      %4072 = vmatpush1.msra.mxu0 0.0
      %4073 = vmatprep.subr.mxu0 0.0
      %4074 = vmatpush1.msra.mxu0 0.0
      %4075 = vmatprep.subr.mxu0 0.0
      %4076 = vmatpush1.msra.mxu0 0.0
      %4077 = vmatprep.subr.mxu0 0.0
      %4078 = vmatpush1.msra.mxu0 0.0
      %4079 = vmatprep.subr.mxu0 0.0
      %4080 = vmatpush1.msra.mxu0 0.0
      %4081 = vmatprep.subr.mxu0 0.0
      %4082 = vmatpush1.msra.mxu0 0.0
      %4083 = vmatprep.subr.mxu0 0.0
      %4084 = vmatpush1.msra.mxu0 0.0
      %4085 = vmatprep.subr.mxu0 0.0
      %4086 = vmatpush1.msra.mxu0 0.0
      %4087 = vmatprep.subr.mxu0 0.0
      %4088 = vmatpush1.msra.mxu0 0.0
      %4089 = vmatprep.subr.mxu0 0.0
      %4090 = vmatpush1.msra.mxu0 0.0
      %4091 = vmatprep.subr.mxu0 0.0
      %4092 = vmatpush1.msra.mxu0 0.0
      %4093 = vmatprep.subr.mxu0 0.0
      %4094 = vmatpush1.msra.mxu0 0.0
      %4095 = vmatprep.subr.mxu0 0.0
      %4096 = vmatpush1.msra.mxu0 0.0
      %4097 = vmatprep.subr.mxu0 0.0
      %4098 = vmatpush1.msra.mxu0 0.0
      %4099 = vmatprep.subr.mxu0 0.0
      %4100 = vmatpush1.msra.mxu0 0.0
      %4101 = vmatprep.subr.mxu0 0.0
      %4102 = vmatpush1.msra.mxu0 0.0
      %4103 = vmatprep.subr.mxu0 0.0
      %4104 = vmatpush1.msra.mxu0 0.0
      %4105 = vmatprep.subr.mxu0 0.0
      %4106 = vmatpush1.msra.mxu0 0.0
      %4107 = vmatprep.subr.mxu0 0.0
      %4108 = vmatpush1.msra.mxu0 0.0
      %4109 = vmatprep.subr.mxu0 0.0
      %4110 = vmatpush1.msra.mxu0 0.0
      %4111 = vmatprep.subr.mxu0 0.0
      %4112 = vmatpush1.msra.mxu0 0.0
      %4113 = vmatprep.mubr.f32.mxu0 0.0
      %4114 = vmatmul.mubr.f32.gmra.mrb[0].mxu0 %v4044
      %v4115 = vpop.f32.mrb[0].mxu0
      %v4116 = vadd.f32 0.0, %v4115
      %v4117 = vpop.f32.mrb[0].mxu0
      %4118 = vmatprep.mubr.f32.mxu0 0.0
      %4119 = vmatmul.mubr.f32.gmra.mrb[0].mxu0 %v4047
      %v4120 = vpop.f32.mrb[0].mxu0
      %v4121 = vadd.f32 0.0, %v4120
      %v4122 = vpop.f32.mrb[0].mxu0
      %4123 = vdwg.mxu0
      %v4124 = vlaneseq
      %v4125 = vshrl.u32 %v4124, 7
      %v4126 = vsub.s32 0, %v4125
      %v4127 = vrot.slane %v3836, %v4126
      %v4128 = vmul.f32 %v4116, %v4127
      %v4129 = vmul.f32 %v4121, %v4127
      %v4130 = vlaneseq
      %v4131 = vshrl.u32 %v4130, 7
      %v4132 = vsub.s32 1, %v4131
      %v4133 = vrot.slane %v3836, %v4132
      %v4134 = vmul.f32 %v4133, %v2525
      %v4135 = vmul.f32 %v4133, %v2528
      %v4136 = vmul.f32 %v4133, %v2531
      %v4137 = vmul.f32 %v4133, %v2534
      %v4138 = vmul.f32 %v4133, %v2537
      %v4139 = vmul.f32 %v4133, %v2540
      %v4140 = vmul.f32 %v4133, %v2543
      %v4141 = vmul.f32 %v4133, %v2546
      %v4142 = vmul.f32 %v4133, %v2549
      %v4143 = vmul.f32 %v4133, %v2552
      %v4144 = vmul.f32 %v4133, %v2555
      %v4145 = vmul.f32 %v4133, %v2558
      %v4146 = vmul.f32 %v4133, %v2561
      %v4147 = vmul.f32 %v4133, %v2564
      %v4148 = vmul.f32 %v4133, %v2567
      %v4149 = vmul.f32 %v4133, %v2570
      %4150 = vmatprep.subr.mxu0 0.0
      %4151 = vmatpush1.msra.mxu0 %v4128
      %4152 = vmatprep.subr.mxu0 0.0
      %4153 = vmatpush1.msra.mxu0 %v4129
      %4154 = vmatprep.subr.mxu0 0.0
      %4155 = vmatpush1.msra.mxu0 0.0
      %4156 = vmatprep.subr.mxu0 0.0
      %4157 = vmatpush1.msra.mxu0 0.0
      %4158 = vmatprep.subr.mxu0 0.0
      %4159 = vmatpush1.msra.mxu0 0.0
      %4160 = vmatprep.subr.mxu0 0.0
      %4161 = vmatpush1.msra.mxu0 0.0
      %4162 = vmatprep.subr.mxu0 0.0
      %4163 = vmatpush1.msra.mxu0 0.0
      %4164 = vmatprep.subr.mxu0 0.0
      %4165 = vmatpush1.msra.mxu0 0.0
      %4166 = vmatprep.subr.mxu0 0.0
      %4167 = vmatpush1.msra.mxu0 0.0
      %4168 = vmatprep.subr.mxu0 0.0
      %4169 = vmatpush1.msra.mxu0 0.0
      %4170 = vmatprep.subr.mxu0 0.0
      %4171 = vmatpush1.msra.mxu0 0.0
      %4172 = vmatprep.subr.mxu0 0.0
      %4173 = vmatpush1.msra.mxu0 0.0
      %4174 = vmatprep.subr.mxu0 0.0
      %4175 = vmatpush1.msra.mxu0 0.0
      %4176 = vmatprep.subr.mxu0 0.0
      %4177 = vmatpush1.msra.mxu0 0.0
      %4178 = vmatprep.subr.mxu0 0.0
      %4179 = vmatpush1.msra.mxu0 0.0
      %4180 = vmatprep.subr.mxu0 0.0
      %4181 = vmatpush1.msra.mxu0 0.0
      %4182 = vmatprep.subr.mxu0 0.0
      %4183 = vmatpush1.msra.mxu0 0.0
      %4184 = vmatprep.subr.mxu0 0.0
      %4185 = vmatpush1.msra.mxu0 0.0
      %4186 = vmatprep.subr.mxu0 0.0
      %4187 = vmatpush1.msra.mxu0 0.0
      %4188 = vmatprep.subr.mxu0 0.0
      %4189 = vmatpush1.msra.mxu0 0.0
      %4190 = vmatprep.subr.mxu0 0.0
      %4191 = vmatpush1.msra.mxu0 0.0
      %4192 = vmatprep.subr.mxu0 0.0
      %4193 = vmatpush1.msra.mxu0 0.0
      %4194 = vmatprep.subr.mxu0 0.0
      %4195 = vmatpush1.msra.mxu0 0.0
      %4196 = vmatprep.subr.mxu0 0.0
      %4197 = vmatpush1.msra.mxu0 0.0
      %4198 = vmatprep.subr.mxu0 0.0
      %4199 = vmatpush1.msra.mxu0 0.0
      %4200 = vmatprep.subr.mxu0 0.0
      %4201 = vmatpush1.msra.mxu0 0.0
      %4202 = vmatprep.subr.mxu0 0.0
      %4203 = vmatpush1.msra.mxu0 0.0
      %4204 = vmatprep.subr.mxu0 0.0
      %4205 = vmatpush1.msra.mxu0 0.0
      %4206 = vmatprep.subr.mxu0 0.0
      %4207 = vmatpush1.msra.mxu0 0.0
      %4208 = vmatprep.subr.mxu0 0.0
      %4209 = vmatpush1.msra.mxu0 0.0
      %4210 = vmatprep.subr.mxu0 0.0
      %4211 = vmatpush1.msra.mxu0 0.0
      %4212 = vmatprep.subr.mxu0 0.0
      %4213 = vmatpush1.msra.mxu0 0.0
      %4214 = vmatprep.mubr.f32.mxu0 0.0
      %4215 = vmatmul.mubr.f32.gmra.mrb[0].mxu0 %v2298
      %v4216 = vpop.f32.mrb[0].mxu0
      %v4217 = vadd.f32 %v4134, %v4216
      %v4218 = vpop.f32.mrb[0].mxu0
      %4219 = vmatprep.mubr.f32.mxu0 0.0
      %4220 = vmatmul.mubr.f32.gmra.mrb[0].mxu0 %v2301
      %v4221 = vpop.f32.mrb[0].mxu0
      %v4222 = vadd.f32 %v4135, %v4221
      %v4223 = vpop.f32.mrb[0].mxu0
      %4224 = vmatprep.mubr.f32.mxu0 0.0
      %4225 = vmatmul.mubr.f32.gmra.mrb[0].mxu0 %v2304
      %v4226 = vpop.f32.mrb[0].mxu0
      %v4227 = vadd.f32 %v4136, %v4226
      %v4228 = vpop.f32.mrb[0].mxu0
      %4229 = vmatprep.mubr.f32.mxu0 0.0
      %4230 = vmatmul.mubr.f32.gmra.mrb[0].mxu0 %v2307
      %v4231 = vpop.f32.mrb[0].mxu0
      %v4232 = vadd.f32 %v4137, %v4231
      %v4233 = vpop.f32.mrb[0].mxu0
      %4234 = vmatprep.mubr.f32.mxu0 0.0
      %4235 = vmatmul.mubr.f32.gmra.mrb[0].mxu0 %v2310
      %v4236 = vpop.f32.mrb[0].mxu0
      %v4237 = vadd.f32 %v4138, %v4236
      %v4238 = vpop.f32.mrb[0].mxu0
      %4239 = vmatprep.mubr.f32.mxu0 0.0
      %4240 = vmatmul.mubr.f32.gmra.mrb[0].mxu0 %v2313
      %v4241 = vpop.f32.mrb[0].mxu0
      %v4242 = vadd.f32 %v4139, %v4241
      %v4243 = vpop.f32.mrb[0].mxu0
      %4244 = vmatprep.mubr.f32.mxu0 0.0
      %4245 = vmatmul.mubr.f32.gmra.mrb[0].mxu0 %v2316
      %v4246 = vpop.f32.mrb[0].mxu0
      %v4247 = vadd.f32 %v4140, %v4246
      %v4248 = vpop.f32.mrb[0].mxu0
      %4249 = vmatprep.mubr.f32.mxu0 0.0
      %4250 = vmatmul.mubr.f32.gmra.mrb[0].mxu0 %v2319
      %v4251 = vpop.f32.mrb[0].mxu0
      %v4252 = vadd.f32 %v4141, %v4251
      %v4253 = vpop.f32.mrb[0].mxu0
      %4254 = vmatprep.mubr.f32.mxu0 0.0
      %4255 = vmatmul.mubr.f32.gmra.mrb[0].mxu0 %v2322
      %v4256 = vpop.f32.mrb[0].mxu0
      %v4257 = vadd.f32 %v4142, %v4256
      %v4258 = vpop.f32.mrb[0].mxu0
      %4259 = vmatprep.mubr.f32.mxu0 0.0
      %4260 = vmatmul.mubr.f32.gmra.mrb[0].mxu0 %v2325
      %v4261 = vpop.f32.mrb[0].mxu0
      %v4262 = vadd.f32 %v4143, %v4261
      %v4263 = vpop.f32.mrb[0].mxu0
      %4264 = vmatprep.mubr.f32.mxu0 0.0
      %4265 = vmatmul.mubr.f32.gmra.mrb[0].mxu0 %v2328
      %v4266 = vpop.f32.mrb[0].mxu0
      %v4267 = vadd.f32 %v4144, %v4266
      %v4268 = vpop.f32.mrb[0].mxu0
      %4269 = vmatprep.mubr.f32.mxu0 0.0
      %4270 = vmatmul.mubr.f32.gmra.mrb[0].mxu0 %v2331
      %v4271 = vpop.f32.mrb[0].mxu0
      %v4272 = vadd.f32 %v4145, %v4271
      %v4273 = vpop.f32.mrb[0].mxu0
      %4274 = vmatprep.mubr.f32.mxu0 0.0
      %4275 = vmatmul.mubr.f32.gmra.mrb[0].mxu0 %v2334
      %v4276 = vpop.f32.mrb[0].mxu0
      %v4277 = vadd.f32 %v4146, %v4276
      %v4278 = vpop.f32.mrb[0].mxu0
      %4279 = vmatprep.mubr.f32.mxu0 0.0
      %4280 = vmatmul.mubr.f32.gmra.mrb[0].mxu0 %v2337
      %v4281 = vpop.f32.mrb[0].mxu0
      %v4282 = vadd.f32 %v4147, %v4281
      %v4283 = vpop.f32.mrb[0].mxu0
      %4284 = vmatprep.mubr.f32.mxu0 0.0
      %4285 = vmatmul.mubr.f32.gmra.mrb[0].mxu0 %v2340
      %v4286 = vpop.f32.mrb[0].mxu0
      %v4287 = vadd.f32 %v4148, %v4286
      %v4288 = vpop.f32.mrb[0].mxu0
      %4289 = vmatprep.mubr.f32.mxu0 0.0
      %4290 = vmatmul.mubr.f32.gmra.mrb[0].mxu0 %v2343
      %v4291 = vpop.f32.mrb[0].mxu0
      %v4292 = vadd.f32 %v4149, %v4291
      %v4293 = vpop.f32.mrb[0].mxu0
      %4294 = vdwg.mxu0
      %v4295 = vlaneseq
      %v4296 = vshrl.u32 %v4295, 7
      %v4297 = vsub.s32 2, %v4296
      %v4298 = vrot.slane %v3836, %v4297
      %v4299 = vmul.f32 %v4298, %v2219
      %v4300 = vmul.f32 %v4298, %v2224
      %v4301 = vmul.f32 %v4298, %v2229
      %v4302 = vmul.f32 %v4298, %v2234
      %v4303 = vmul.f32 %v4298, %v2239
      %v4304 = vmul.f32 %v4298, %v2244
      %v4305 = vmul.f32 %v4298, %v2249
      %v4306 = vmul.f32 %v4298, %v2254
      %v4307 = vmul.f32 %v4298, %v2259
      %v4308 = vmul.f32 %v4298, %v2264
      %v4309 = vmul.f32 %v4298, %v2269
      %v4310 = vmul.f32 %v4298, %v2274
      %v4311 = vmul.f32 %v4298, %v2279
      %v4312 = vmul.f32 %v4298, %v2284
      %v4313 = vmul.f32 %v4298, %v2289
      %v4314 = vmul.f32 %v4298, %v2294
      %v4315 = vadd.f32 %v4217, %v4299
      %v4316 = vadd.f32 %v4222, %v4300
      %v4317 = vadd.f32 %v4227, %v4301
      %v4318 = vadd.f32 %v4232, %v4302
      %v4319 = vadd.f32 %v4237, %v4303
      %v4320 = vadd.f32 %v4242, %v4304
      %v4321 = vadd.f32 %v4247, %v4305
      %v4322 = vadd.f32 %v4252, %v4306
      %v4323 = vadd.f32 %v4257, %v4307
      %v4324 = vadd.f32 %v4262, %v4308
      %v4325 = vadd.f32 %v4267, %v4309
      %v4326 = vadd.f32 %v4272, %v4310
      %v4327 = vadd.f32 %v4277, %v4311
      %v4328 = vadd.f32 %v4282, %v4312
      %v4329 = vadd.f32 %v4287, %v4313
      %v4330 = vadd.f32 %v4292, %v4314
      %v4331 = vlaneseq
      %v4332 = vshrl.u32 %v4331, 7
      %v4333 = vsub.s32 0, %v4332
      %v4334 = vrot.slane %v4040, %v4333
      %v4335 = vmul.f32 %v4334, %v4315
      %v4336 = vmul.f32 %v4334, %v4316
      %v4337 = vmul.f32 %v4334, %v4317
      %v4338 = vmul.f32 %v4334, %v4318
      %v4339 = vmul.f32 %v4334, %v4319
      %v4340 = vmul.f32 %v4334, %v4320
      %v4341 = vmul.f32 %v4334, %v4321
      %v4342 = vmul.f32 %v4334, %v4322
      %v4343 = vmul.f32 %v4334, %v4323
      %v4344 = vmul.f32 %v4334, %v4324
      %v4345 = vmul.f32 %v4334, %v4325
      %v4346 = vmul.f32 %v4334, %v4326
      %v4347 = vmul.f32 %v4334, %v4327
      %v4348 = vmul.f32 %v4334, %v4328
      %v4349 = vmul.f32 %v4334, %v4329
      %v4350 = vmul.f32 %v4334, %v4330
      %v4351 = vmul.f32 %v4040, %v3967
      %v4353 = vrot.slane %v3836, 1
      %v4355 = vadd.f32 %v3836, %v4353
      %v4356 = vrot.slane %v3836, 2
      %v4358 = vadd.f32 %v4355, %v4356
      %v4359 = vmul.f32 %v4351, %v4358
      %v4361 = vrot.slane %v4359, 5
      %v4363 = vsub.f32 %v3836, %v4361
      %v4364 = vlaneseq
      %v4365 = vshrl.u32 %v4364, 7
      %v4366 = vsub.s32 3, %v4365
      %v4367 = vrot.slane %v4363, %v4366
      %v4368 = vadd.f32 %v4335, %v4367
      %v4369 = vadd.f32 %v4336, %v4367
      %v4370 = vadd.f32 %v4337, %v4367
      %v4371 = vadd.f32 %v4338, %v4367
      %v4372 = vadd.f32 %v4339, %v4367
      %v4373 = vadd.f32 %v4340, %v4367
      %v4374 = vadd.f32 %v4341, %v4367
      %v4375 = vadd.f32 %v4342, %v4367
      %v4376 = vadd.f32 %v4343, %v4367
      %v4377 = vadd.f32 %v4344, %v4367
      %v4378 = vadd.f32 %v4345, %v4367
      %v4379 = vadd.f32 %v4346, %v4367
      %v4380 = vadd.f32 %v4347, %v4367
      %v4381 = vadd.f32 %v4348, %v4367
      %v4382 = vadd.f32 %v4349, %v4367
      %v4383 = vadd.f32 %v4350, %v4367
      %v4384 = vtanh.pop %v4368
      %v4385 = vtanh.pop %v4369
      %v4386 = vtanh.pop %v4370
      %v4387 = vtanh.pop %v4371
      %v4388 = vtanh.pop %v4372
      %v4389 = vtanh.pop %v4373
      %v4390 = vtanh.pop %v4374
      %v4391 = vtanh.pop %v4375
      %v4392 = vtanh.pop %v4376
      %v4393 = vtanh.pop %v4377
      %v4394 = vtanh.pop %v4378
      %v4395 = vtanh.pop %v4379
      %v4396 = vtanh.pop %v4380
      %v4397 = vtanh.pop %v4381
      %v4398 = vtanh.pop %v4382
      %v4399 = vtanh.pop %v4383
      %v4400 = vld [vmem:[%s1164] sm:$0xff]
      %v4401 = vld [vmem:[%s1164 + $0x8] sm:$0xff]
      %v4402 = vld [vmem:[%s1164 + $0x10] sm:$0xff]
      %v4403 = vld [vmem:[%s1164 + $0x18] sm:$0xff]
      %v4404 = vld [vmem:[%s1164 + $0x20] sm:$0xff]
      %v4405 = vld [vmem:[%s1164 + $0x28] sm:$0xff]
      %v4406 = vld [vmem:[%s1164 + $0x30] sm:$0xff]
      %v4407 = vld [vmem:[%s1164 + $0x38] sm:$0xff]
      %v4408 = vld [vmem:[%s1164 + $0x40] sm:$0xff]
      %v4409 = vld [vmem:[%s1164 + $0x48] sm:$0xff]
      %v4410 = vld [vmem:[%s1164 + $0x50] sm:$0xff]
      %v4411 = vld [vmem:[%s1164 + $0x58] sm:$0xff]
      %v4412 = vld [vmem:[%s1164 + $0x60] sm:$0xff]
      %v4413 = vld [vmem:[%s1164 + $0x68] sm:$0xff]
      %v4414 = vld [vmem:[%s1164 + $0x70] sm:$0xff]
      %v4415 = vld [vmem:[%s1164 + $0x78] sm:$0xff]
      %4416 = vmatprep.subr.mxu0 0.0
      %4417 = vmatpush1.msra.mxu0 %v4400
      %4418 = vmatprep.subr.mxu0 0.0
      %4419 = vmatpush1.msra.mxu0 %v4401
      %4420 = vmatprep.subr.mxu0 0.0
      %4421 = vmatpush1.msra.mxu0 %v4402
      %4422 = vmatprep.subr.mxu0 0.0
      %4423 = vmatpush1.msra.mxu0 %v4403
      %4424 = vmatprep.subr.mxu0 0.0
      %4425 = vmatpush1.msra.mxu0 %v4404
      %4426 = vmatprep.subr.mxu0 0.0
      %4427 = vmatpush1.msra.mxu0 %v4405
      %4428 = vmatprep.subr.mxu0 0.0
      %4429 = vmatpush1.msra.mxu0 %v4406
      %4430 = vmatprep.subr.mxu0 0.0
      %4431 = vmatpush1.msra.mxu0 %v4407
      %4432 = vmatprep.subr.mxu0 0.0
      %4433 = vmatpush1.msra.mxu0 %v4408
      %4434 = vmatprep.subr.mxu0 0.0
      %4435 = vmatpush1.msra.mxu0 %v4409
      %4436 = vmatprep.subr.mxu0 0.0
      %4437 = vmatpush1.msra.mxu0 %v4410
      %4438 = vmatprep.subr.mxu0 0.0
      %4439 = vmatpush1.msra.mxu0 %v4411
      %4440 = vmatprep.subr.mxu0 0.0
      %4441 = vmatpush1.msra.mxu0 %v4412
      %4442 = vmatprep.subr.mxu0 0.0
      %4443 = vmatpush1.msra.mxu0 %v4413
      %4444 = vmatprep.subr.mxu0 0.0
      %4445 = vmatpush1.msra.mxu0 %v4414
      %4446 = vmatprep.subr.mxu0 0.0
      %4447 = vmatpush1.msra.mxu0 %v4415
      %4448 = vmatprep.subr.mxu0 0.0
      %4449 = vmatpush1.msra.mxu0 0.0
      %4450 = vmatprep.subr.mxu0 0.0
      %4451 = vmatpush1.msra.mxu0 0.0
      %4452 = vmatprep.subr.mxu0 0.0
      %4453 = vmatpush1.msra.mxu0 0.0
      %4454 = vmatprep.subr.mxu0 0.0
      %4455 = vmatpush1.msra.mxu0 0.0
      %4456 = vmatprep.subr.mxu0 0.0
      %4457 = vmatpush1.msra.mxu0 0.0
      %4458 = vmatprep.subr.mxu0 0.0
      %4459 = vmatpush1.msra.mxu0 0.0
      %4460 = vmatprep.subr.mxu0 0.0
      %4461 = vmatpush1.msra.mxu0 0.0
      %4462 = vmatprep.subr.mxu0 0.0
      %4463 = vmatpush1.msra.mxu0 0.0
      %4464 = vmatprep.subr.mxu0 0.0
      %4465 = vmatpush1.msra.mxu0 0.0
      %4466 = vmatprep.subr.mxu0 0.0
      %4467 = vmatpush1.msra.mxu0 0.0
      %4468 = vmatprep.subr.mxu0 0.0
      %4469 = vmatpush1.msra.mxu0 0.0
      %4470 = vmatprep.subr.mxu0 0.0
      %4471 = vmatpush1.msra.mxu0 0.0
      %4472 = vmatprep.subr.mxu0 0.0
      %4473 = vmatpush1.msra.mxu0 0.0
      %4474 = vmatprep.subr.mxu0 0.0
      %4475 = vmatpush1.msra.mxu0 0.0
      %4476 = vmatprep.subr.mxu0 0.0
      %4477 = vmatpush1.msra.mxu0 0.0
      %4478 = vmatprep.subr.mxu0 0.0
      %4479 = vmatpush1.msra.mxu0 0.0
      %4480 = vmatprep.mubr.f32.mxu0 0.0
      %4481 = vmatmul.mubr.f32.gmra.mrb[0].mxu0 %v4384
      %v4482 = vpop.f32.mrb[0].mxu0
      %v4483 = vadd.f32 0.0, %v4482
      %v4484 = vpop.f32.mrb[0].mxu0
      %4485 = vmatprep.mubr.f32.mxu0 0.0
      %4486 = vmatmul.mubr.f32.gmra.mrb[0].mxu0 %v4385
      %v4487 = vpop.f32.mrb[0].mxu0
      %v4488 = vadd.f32 0.0, %v4487
      %v4489 = vpop.f32.mrb[0].mxu0
      %4490 = vmatprep.mubr.f32.mxu0 0.0
      %4491 = vmatmul.mubr.f32.gmra.mrb[0].mxu0 %v4386
      %v4492 = vpop.f32.mrb[0].mxu0
      %v4493 = vadd.f32 0.0, %v4492
      %v4494 = vpop.f32.mrb[0].mxu0
      %4495 = vmatprep.mubr.f32.mxu0 0.0
      %4496 = vmatmul.mubr.f32.gmra.mrb[0].mxu0 %v4387
      %v4497 = vpop.f32.mrb[0].mxu0
      %v4498 = vadd.f32 0.0, %v4497
      %v4499 = vpop.f32.mrb[0].mxu0
      %4500 = vmatprep.mubr.f32.mxu0 0.0
      %4501 = vmatmul.mubr.f32.gmra.mrb[0].mxu0 %v4388
      %v4502 = vpop.f32.mrb[0].mxu0
      %v4503 = vadd.f32 0.0, %v4502
      %v4504 = vpop.f32.mrb[0].mxu0
      %4505 = vmatprep.mubr.f32.mxu0 0.0
      %4506 = vmatmul.mubr.f32.gmra.mrb[0].mxu0 %v4389
      %v4507 = vpop.f32.mrb[0].mxu0
      %v4508 = vadd.f32 0.0, %v4507
      %v4509 = vpop.f32.mrb[0].mxu0
      %4510 = vmatprep.mubr.f32.mxu0 0.0
      %4511 = vmatmul.mubr.f32.gmra.mrb[0].mxu0 %v4390
      %v4512 = vpop.f32.mrb[0].mxu0
      %v4513 = vadd.f32 0.0, %v4512
      %v4514 = vpop.f32.mrb[0].mxu0
      %4515 = vmatprep.mubr.f32.mxu0 0.0
      %4516 = vmatmul.mubr.f32.gmra.mrb[0].mxu0 %v4391
      %v4517 = vpop.f32.mrb[0].mxu0
      %v4518 = vadd.f32 0.0, %v4517
      %v4519 = vpop.f32.mrb[0].mxu0
      %4520 = vmatprep.mubr.f32.mxu0 0.0
      %4521 = vmatmul.mubr.f32.gmra.mrb[0].mxu0 %v4392
      %v4522 = vpop.f32.mrb[0].mxu0
      %v4523 = vadd.f32 0.0, %v4522
      %v4524 = vpop.f32.mrb[0].mxu0
      %4525 = vmatprep.mubr.f32.mxu0 0.0
      %4526 = vmatmul.mubr.f32.gmra.mrb[0].mxu0 %v4393
      %v4527 = vpop.f32.mrb[0].mxu0
      %v4528 = vadd.f32 0.0, %v4527
      %v4529 = vpop.f32.mrb[0].mxu0
      %4530 = vmatprep.mubr.f32.mxu0 0.0
      %4531 = vmatmul.mubr.f32.gmra.mrb[0].mxu0 %v4394
      %v4532 = vpop.f32.mrb[0].mxu0
      %v4533 = vadd.f32 0.0, %v4532
      %v4534 = vpop.f32.mrb[0].mxu0
      %4535 = vmatprep.mubr.f32.mxu0 0.0
      %4536 = vmatmul.mubr.f32.gmra.mrb[0].mxu0 %v4395
      %v4537 = vpop.f32.mrb[0].mxu0
      %v4538 = vadd.f32 0.0, %v4537
      %v4539 = vpop.f32.mrb[0].mxu0
      %4540 = vmatprep.mubr.f32.mxu0 0.0
      %4541 = vmatmul.mubr.f32.gmra.mrb[0].mxu0 %v4396
      %v4542 = vpop.f32.mrb[0].mxu0
      %v4543 = vadd.f32 0.0, %v4542
      %v4544 = vpop.f32.mrb[0].mxu0
      %4545 = vmatprep.mubr.f32.mxu0 0.0
      %4546 = vmatmul.mubr.f32.gmra.mrb[0].mxu0 %v4397
      %v4547 = vpop.f32.mrb[0].mxu0
      %v4548 = vadd.f32 0.0, %v4547
      %v4549 = vpop.f32.mrb[0].mxu0
      %4550 = vmatprep.mubr.f32.mxu0 0.0
      %4551 = vmatmul.mubr.f32.gmra.mrb[0].mxu0 %v4398
      %v4552 = vpop.f32.mrb[0].mxu0
      %v4553 = vadd.f32 0.0, %v4552
      %v4554 = vpop.f32.mrb[0].mxu0
      %4555 = vmatprep.mubr.f32.mxu0 0.0
      %4556 = vmatmul.mubr.f32.gmra.mrb[0].mxu0 %v4399
      %v4557 = vpop.f32.mrb[0].mxu0
      %v4558 = vadd.f32 0.0, %v4557
      %v4559 = vpop.f32.mrb[0].mxu0
      %4560 = vdwg.mxu0
      %4561 = vmax.xlane.f32.xlu0 %v4483
      %v4562 = vpop.xlane.xlu0 %4561
      %4563 = vmax.xlane.f32.xlu0 %v4488
      %v4564 = vpop.xlane.xlu0 %4563
      %4565 = vmax.xlane.f32.xlu0 %v4493
      %v4566 = vpop.xlane.xlu0 %4565
      %4567 = vmax.xlane.f32.xlu0 %v4498
      %v4568 = vpop.xlane.xlu0 %4567
      %4569 = vmax.xlane.f32.xlu0 %v4503
      %v4570 = vpop.xlane.xlu0 %4569
      %4571 = vmax.xlane.f32.xlu0 %v4508
      %v4572 = vpop.xlane.xlu0 %4571
      %4573 = vmax.xlane.f32.xlu0 %v4513
      %v4574 = vpop.xlane.xlu0 %4573
      %4575 = vmax.xlane.f32.xlu0 %v4518
      %v4576 = vpop.xlane.xlu0 %4575
      %4577 = vmax.xlane.f32.xlu0 %v4523
      %v4578 = vpop.xlane.xlu0 %4577
      %4579 = vmax.xlane.f32.xlu0 %v4528
      %v4580 = vpop.xlane.xlu0 %4579
      %4581 = vmax.xlane.f32.xlu0 %v4533
      %v4582 = vpop.xlane.xlu0 %4581
      %4583 = vmax.xlane.f32.xlu0 %v4538
      %v4584 = vpop.xlane.xlu0 %4583
      %4585 = vmax.xlane.f32.xlu0 %v4543
      %v4586 = vpop.xlane.xlu0 %4585
      %4587 = vmax.xlane.f32.xlu0 %v4548
      %v4588 = vpop.xlane.xlu0 %4587
      %4589 = vmax.xlane.f32.xlu0 %v4553
      %v4590 = vpop.xlane.xlu0 %4589
      %4591 = vmax.xlane.f32.xlu0 %v4558
      %v4592 = vpop.xlane.xlu0 %4591
      %v4593 = vmax.f32 %v4562, %v4570
      %v4594 = vmax.f32 %v4564, %v4572
      %v4595 = vmax.f32 %v4566, %v4574
      %v4596 = vmax.f32 %v4568, %v4576
      %v4597 = vmax.f32 %v4593, %v4578
      %v4598 = vmax.f32 %v4594, %v4580
      %v4599 = vmax.f32 %v4595, %v4582
      %v4600 = vmax.f32 %v4596, %v4584
      %v4601 = vmax.f32 %v4597, %v4586
      %v4602 = vmax.f32 %v4598, %v4588
      %v4603 = vmax.f32 %v4599, %v4590
      %v4604 = vmax.f32 %v4600, %v4592
      %v4605 = vmax.f32 %v4601, %v4602
      %v4606 = vmax.f32 %v4603, %v4604
      %v4607 = vmax.f32 %v4605, %v4606
      %v4608 = vrot.slane %v4607, 4
      %v4609 = vmax.f32 %v4607, %v4608
      %v4610 = vrot.slane %v4609, 2
      %v4611 = vmax.f32 %v4609, %v4610
      %v4612 = vrot.slane %v4611, 1
      %v4613 = vmax.f32 %v4611, %v4612
      %v4614 = vsub.f32 %v4483, %v4613
      %v4615 = vsub.f32 %v4488, %v4613
      %v4616 = vsub.f32 %v4493, %v4613
      %v4617 = vsub.f32 %v4498, %v4613
      %v4618 = vsub.f32 %v4503, %v4613
      %v4619 = vsub.f32 %v4508, %v4613
      %v4620 = vsub.f32 %v4513, %v4613
      %v4621 = vsub.f32 %v4518, %v4613
      %v4622 = vsub.f32 %v4523, %v4613
      %v4623 = vsub.f32 %v4528, %v4613
      %v4624 = vsub.f32 %v4533, %v4613
      %v4625 = vsub.f32 %v4538, %v4613
      %v4626 = vsub.f32 %v4543, %v4613
      %v4627 = vsub.f32 %v4548, %v4613
      %v4628 = vsub.f32 %v4553, %v4613
      %v4629 = vsub.f32 %v4558, %v4613
      %v4630 = vmul.f32 %v4614, 1.442695
      %v4631 = vpow.pop %v4630
      %v4632 = vmul.f32 %v4615, 1.442695
      %v4633 = vpow.pop %v4632
      %v4634 = vmul.f32 %v4616, 1.442695
      %v4635 = vpow.pop %v4634
      %v4636 = vmul.f32 %v4617, 1.442695
      %v4637 = vpow.pop %v4636
      %v4638 = vmul.f32 %v4618, 1.442695
      %v4639 = vpow.pop %v4638
      %v4640 = vmul.f32 %v4619, 1.442695
      %v4641 = vpow.pop %v4640
      %v4642 = vmul.f32 %v4620, 1.442695
      %v4643 = vpow.pop %v4642
      %v4644 = vmul.f32 %v4621, 1.442695
      %v4645 = vpow.pop %v4644
      %v4646 = vmul.f32 %v4622, 1.442695
      %v4647 = vpow.pop %v4646
      %v4648 = vmul.f32 %v4623, 1.442695
      %v4649 = vpow.pop %v4648
      %v4650 = vmul.f32 %v4624, 1.442695
      %v4651 = vpow.pop %v4650
      %v4652 = vmul.f32 %v4625, 1.442695
      %v4653 = vpow.pop %v4652
      %v4654 = vmul.f32 %v4626, 1.442695
      %v4655 = vpow.pop %v4654
      %v4656 = vmul.f32 %v4627, 1.442695
      %v4657 = vpow.pop %v4656
      %v4658 = vmul.f32 %v4628, 1.442695
      %v4659 = vpow.pop %v4658
      %v4660 = vmul.f32 %v4629, 1.442695
      %v4661 = vpow.pop %v4660
      %4662 = vmatprep.subr.mxu0 0.0
      %4663 = vmatpush1.msra.mxu0 %v4631
      %4664 = vmatprep.subr.mxu0 0.0
      %4665 = vmatpush1.msra.mxu0 %v4633
      %4666 = vmatprep.subr.mxu0 0.0
      %4667 = vmatpush1.msra.mxu0 %v4635
      %4668 = vmatprep.subr.mxu0 0.0
      %4669 = vmatpush1.msra.mxu0 %v4637
      %4670 = vmatprep.subr.mxu0 0.0
      %4671 = vmatpush1.msra.mxu0 %v4639
      %4672 = vmatprep.subr.mxu0 0.0
      %4673 = vmatpush1.msra.mxu0 %v4641
      %4674 = vmatprep.subr.mxu0 0.0
      %4675 = vmatpush1.msra.mxu0 %v4643
      %4676 = vmatprep.subr.mxu0 0.0
      %4677 = vmatpush1.msra.mxu0 %v4645
      %4678 = vmatprep.subr.mxu0 0.0
      %4679 = vmatpush1.msra.mxu0 %v4647
      %4680 = vmatprep.subr.mxu0 0.0
      %4681 = vmatpush1.msra.mxu0 %v4649
      %4682 = vmatprep.subr.mxu0 0.0
      %4683 = vmatpush1.msra.mxu0 %v4651
      %4684 = vmatprep.subr.mxu0 0.0
      %4685 = vmatpush1.msra.mxu0 %v4653
      %4686 = vmatprep.subr.mxu0 0.0
      %4687 = vmatpush1.msra.mxu0 %v4655
      %4688 = vmatprep.subr.mxu0 0.0
      %4689 = vmatpush1.msra.mxu0 %v4657
      %4690 = vmatprep.subr.mxu0 0.0
      %4691 = vmatpush1.msra.mxu0 %v4659
      %4692 = vmatprep.subr.mxu0 0.0
      %4693 = vmatpush1.msra.mxu0 %v4661
      %4694 = vmatprep.subr.mxu0 0.0
      %4695 = vmatpush1.msra.mxu0 0.0
      %4696 = vmatprep.subr.mxu0 0.0
      %4697 = vmatpush1.msra.mxu0 0.0
      %4698 = vmatprep.subr.mxu0 0.0
      %4699 = vmatpush1.msra.mxu0 0.0
      %4700 = vmatprep.subr.mxu0 0.0
      %4701 = vmatpush1.msra.mxu0 0.0
      %4702 = vmatprep.subr.mxu0 0.0
      %4703 = vmatpush1.msra.mxu0 0.0
      %4704 = vmatprep.subr.mxu0 0.0
      %4705 = vmatpush1.msra.mxu0 0.0
      %4706 = vmatprep.subr.mxu0 0.0
      %4707 = vmatpush1.msra.mxu0 0.0
      %4708 = vmatprep.subr.mxu0 0.0
      %4709 = vmatpush1.msra.mxu0 0.0
      %4710 = vmatprep.subr.mxu0 0.0
      %4711 = vmatpush1.msra.mxu0 0.0
      %4712 = vmatprep.subr.mxu0 0.0
      %4713 = vmatpush1.msra.mxu0 0.0
      %4714 = vmatprep.subr.mxu0 0.0
      %4715 = vmatpush1.msra.mxu0 0.0
      %4716 = vmatprep.subr.mxu0 0.0
      %4717 = vmatpush1.msra.mxu0 0.0
      %4718 = vmatprep.subr.mxu0 0.0
      %4719 = vmatpush1.msra.mxu0 0.0
      %4720 = vmatprep.subr.mxu0 0.0
      %4721 = vmatpush1.msra.mxu0 0.0
      %4722 = vmatprep.subr.mxu0 0.0
      %4723 = vmatpush1.msra.mxu0 0.0
      %4724 = vmatprep.subr.mxu0 0.0
      %4725 = vmatpush1.msra.mxu0 0.0
      %4726 = vmatprep.mubr.f32.mxu0 0.0
      %4727 = vmatmul.mubr.f32.gmra.mrb[0].mxu0 %v1247
      %v4728 = vpop.f32.mrb[0].mxu0
      %v4729 = vadd.f32 0.0, %v4728
      %v4730 = vpop.f32.mrb[0].mxu0
      %4731 = vmatprep.mubr.f32.mxu0 0.0
      %4732 = vmatmul.mubr.f32.gmra.mrb[0].mxu0 %v1248
      %v4733 = vpop.f32.mrb[0].mxu0
      %v4734 = vadd.f32 0.0, %v4733
      %v4735 = vpop.f32.mrb[0].mxu0
      %4736 = vdwg.mxu0
      %v4737 = vrcp.pop %v4729
      %v4738 = vrcp.pop %v4734
      %v4739 = vmul.f32 %v4729, %v4737
      %v4740 = vmul.f32 %v4734, %v4738
      %v4741 = vsub.f32 2.0, %v4739
      %v4742 = vsub.f32 2.0, %v4740
      %v4743 = vmul.f32 %v4737, %v4741
      %v4744 = vmul.f32 %v4738, %v4742
      %4745 = vmatprep.subr.mxu0 0.0
      %4746 = vmatpush1.msra.mxu0 %v4743
      %4747 = vmatprep.subr.mxu0 0.0
      %4748 = vmatpush1.msra.mxu0 %v4744
      %4749 = vmatprep.subr.mxu0 0.0
      %4750 = vmatpush1.msra.mxu0 0.0
      %4751 = vmatprep.subr.mxu0 0.0
      %4752 = vmatpush1.msra.mxu0 0.0
      %4753 = vmatprep.subr.mxu0 0.0
      %4754 = vmatpush1.msra.mxu0 0.0
      %4755 = vmatprep.subr.mxu0 0.0
      %4756 = vmatpush1.msra.mxu0 0.0
      %4757 = vmatprep.subr.mxu0 0.0
      %4758 = vmatpush1.msra.mxu0 0.0
      %4759 = vmatprep.subr.mxu0 0.0
      %4760 = vmatpush1.msra.mxu0 0.0
      %4761 = vmatprep.subr.mxu0 0.0
      %4762 = vmatpush1.msra.mxu0 0.0
      %4763 = vmatprep.subr.mxu0 0.0
      %4764 = vmatpush1.msra.mxu0 0.0
      %4765 = vmatprep.subr.mxu0 0.0
      %4766 = vmatpush1.msra.mxu0 0.0
      %4767 = vmatprep.subr.mxu0 0.0
      %4768 = vmatpush1.msra.mxu0 0.0
      %4769 = vmatprep.subr.mxu0 0.0
      %4770 = vmatpush1.msra.mxu0 0.0
      %4771 = vmatprep.subr.mxu0 0.0
      %4772 = vmatpush1.msra.mxu0 0.0
      %4773 = vmatprep.subr.mxu0 0.0
      %4774 = vmatpush1.msra.mxu0 0.0
      %4775 = vmatprep.subr.mxu0 0.0
      %4776 = vmatpush1.msra.mxu0 0.0
      %4777 = vmatprep.subr.mxu0 0.0
      %4778 = vmatpush1.msra.mxu0 0.0
      %4779 = vmatprep.subr.mxu0 0.0
      %4780 = vmatpush1.msra.mxu0 0.0
      %4781 = vmatprep.subr.mxu0 0.0
      %4782 = vmatpush1.msra.mxu0 0.0
      %4783 = vmatprep.subr.mxu0 0.0
      %4784 = vmatpush1.msra.mxu0 0.0
      %4785 = vmatprep.subr.mxu0 0.0
      %4786 = vmatpush1.msra.mxu0 0.0
      %4787 = vmatprep.subr.mxu0 0.0
      %4788 = vmatpush1.msra.mxu0 0.0
      %4789 = vmatprep.subr.mxu0 0.0
      %4790 = vmatpush1.msra.mxu0 0.0
      %4791 = vmatprep.subr.mxu0 0.0
      %4792 = vmatpush1.msra.mxu0 0.0
      %4793 = vmatprep.subr.mxu0 0.0
      %4794 = vmatpush1.msra.mxu0 0.0
      %4795 = vmatprep.subr.mxu0 0.0
      %4796 = vmatpush1.msra.mxu0 0.0
      %4797 = vmatprep.subr.mxu0 0.0
      %4798 = vmatpush1.msra.mxu0 0.0
      %4799 = vmatprep.subr.mxu0 0.0
      %4800 = vmatpush1.msra.mxu0 0.0
      %4801 = vmatprep.subr.mxu0 0.0
      %4802 = vmatpush1.msra.mxu0 0.0
      %4803 = vmatprep.subr.mxu0 0.0
      %4804 = vmatpush1.msra.mxu0 0.0
      %4805 = vmatprep.subr.mxu0 0.0
      %4806 = vmatpush1.msra.mxu0 0.0
      %4807 = vmatprep.subr.mxu0 0.0
      %4808 = vmatpush1.msra.mxu0 0.0
      %4809 = vmatprep.mubr.f32.mxu0 0.0
      %4810 = vmatmul.mubr.f32.gmra.mrb[0].mxu0 %v2298
      %v4811 = vpop.f32.mrb[0].mxu0
      %v4812 = vadd.f32 0.0, %v4811
      %v4813 = vpop.f32.mrb[0].mxu0
      %4814 = vmatprep.mubr.f32.mxu0 0.0
      %4815 = vmatmul.mubr.f32.gmra.mrb[0].mxu0 %v2301
      %v4816 = vpop.f32.mrb[0].mxu0
      %v4817 = vadd.f32 0.0, %v4816
      %v4818 = vpop.f32.mrb[0].mxu0
      %4819 = vmatprep.mubr.f32.mxu0 0.0
      %4820 = vmatmul.mubr.f32.gmra.mrb[0].mxu0 %v2304
      %v4821 = vpop.f32.mrb[0].mxu0
      %v4822 = vadd.f32 0.0, %v4821
      %v4823 = vpop.f32.mrb[0].mxu0
      %4824 = vmatprep.mubr.f32.mxu0 0.0
      %4825 = vmatmul.mubr.f32.gmra.mrb[0].mxu0 %v2307
      %v4826 = vpop.f32.mrb[0].mxu0
      %v4827 = vadd.f32 0.0, %v4826
      %v4828 = vpop.f32.mrb[0].mxu0
      %4829 = vmatprep.mubr.f32.mxu0 0.0
      %4830 = vmatmul.mubr.f32.gmra.mrb[0].mxu0 %v2310
      %v4831 = vpop.f32.mrb[0].mxu0
      %v4832 = vadd.f32 0.0, %v4831
      %v4833 = vpop.f32.mrb[0].mxu0
      %4834 = vmatprep.mubr.f32.mxu0 0.0
      %4835 = vmatmul.mubr.f32.gmra.mrb[0].mxu0 %v2313
      %v4836 = vpop.f32.mrb[0].mxu0
      %v4837 = vadd.f32 0.0, %v4836
      %v4838 = vpop.f32.mrb[0].mxu0
      %4839 = vmatprep.mubr.f32.mxu0 0.0
      %4840 = vmatmul.mubr.f32.gmra.mrb[0].mxu0 %v2316
      %v4841 = vpop.f32.mrb[0].mxu0
      %v4842 = vadd.f32 0.0, %v4841
      %v4843 = vpop.f32.mrb[0].mxu0
      %4844 = vmatprep.mubr.f32.mxu0 0.0
      %4845 = vmatmul.mubr.f32.gmra.mrb[0].mxu0 %v2319
      %v4846 = vpop.f32.mrb[0].mxu0
      %v4847 = vadd.f32 0.0, %v4846
      %v4848 = vpop.f32.mrb[0].mxu0
      %4849 = vmatprep.mubr.f32.mxu0 0.0
      %4850 = vmatmul.mubr.f32.gmra.mrb[0].mxu0 %v2322
      %v4851 = vpop.f32.mrb[0].mxu0
      %v4852 = vadd.f32 0.0, %v4851
      %v4853 = vpop.f32.mrb[0].mxu0
      %4854 = vmatprep.mubr.f32.mxu0 0.0
      %4855 = vmatmul.mubr.f32.gmra.mrb[0].mxu0 %v2325
      %v4856 = vpop.f32.mrb[0].mxu0
      %v4857 = vadd.f32 0.0, %v4856
      %v4858 = vpop.f32.mrb[0].mxu0
      %4859 = vmatprep.mubr.f32.mxu0 0.0
      %4860 = vmatmul.mubr.f32.gmra.mrb[0].mxu0 %v2328
      %v4861 = vpop.f32.mrb[0].mxu0
      %v4862 = vadd.f32 0.0, %v4861
      %v4863 = vpop.f32.mrb[0].mxu0
      %4864 = vmatprep.mubr.f32.mxu0 0.0
      %4865 = vmatmul.mubr.f32.gmra.mrb[0].mxu0 %v2331
      %v4866 = vpop.f32.mrb[0].mxu0
      %v4867 = vadd.f32 0.0, %v4866
      %v4868 = vpop.f32.mrb[0].mxu0
      %4869 = vmatprep.mubr.f32.mxu0 0.0
      %4870 = vmatmul.mubr.f32.gmra.mrb[0].mxu0 %v2334
      %v4871 = vpop.f32.mrb[0].mxu0
      %v4872 = vadd.f32 0.0, %v4871
      %v4873 = vpop.f32.mrb[0].mxu0
      %4874 = vmatprep.mubr.f32.mxu0 0.0
      %4875 = vmatmul.mubr.f32.gmra.mrb[0].mxu0 %v2337
      %v4876 = vpop.f32.mrb[0].mxu0
      %v4877 = vadd.f32 0.0, %v4876
      %v4878 = vpop.f32.mrb[0].mxu0
      %4879 = vmatprep.mubr.f32.mxu0 0.0
      %4880 = vmatmul.mubr.f32.gmra.mrb[0].mxu0 %v2340
      %v4881 = vpop.f32.mrb[0].mxu0
      %v4882 = vadd.f32 0.0, %v4881
      %v4883 = vpop.f32.mrb[0].mxu0
      %4884 = vmatprep.mubr.f32.mxu0 0.0
      %4885 = vmatmul.mubr.f32.gmra.mrb[0].mxu0 %v2343
      %v4886 = vpop.f32.mrb[0].mxu0
      %v4887 = vadd.f32 0.0, %v4886
      %v4888 = vpop.f32.mrb[0].mxu0
      %4889 = vdwg.mxu0
      %v4890 = vmul.f32 %v4631, %v4812
      %v4891 = vmul.f32 %v4633, %v4817
      %v4892 = vmul.f32 %v4635, %v4822
      %v4893 = vmul.f32 %v4637, %v4827
      %v4894 = vmul.f32 %v4639, %v4832
      %v4895 = vmul.f32 %v4641, %v4837
      %v4896 = vmul.f32 %v4643, %v4842
      %v4897 = vmul.f32 %v4645, %v4847
      %v4898 = vmul.f32 %v4647, %v4852
      %v4899 = vmul.f32 %v4649, %v4857
      %v4900 = vmul.f32 %v4651, %v4862
      %v4901 = vmul.f32 %v4653, %v4867
      %v4902 = vmul.f32 %v4655, %v4872
      %v4903 = vmul.f32 %v4657, %v4877
      %v4904 = vmul.f32 %v4659, %v4882
      %v4905 = vmul.f32 %v4661, %v4887
      %v4906 = vld [vmem:[%s1176] sm:$0xf]
      %v4907 = vadd.f32 %v1763, %v1930
      %v4908 = vadd.f32 %v1768, %v1935
      %v4909 = vsel %vm1775, %v4907, 0.0
      %v4910 = vsel %vm1775, %v4908, 0.0
      %v4911 = vadd.f32 %v4909, %v4910
      %v4912 = vrot.slane %v4911, 4
      %v4913 = vadd.f32 %v4911, %v4912
      %v4914 = vrot.slane %v4913, 2
      %v4915 = vadd.f32 %v4913, %v4914
      %v4916 = vrot.slane %v4915, 1
      %v4917 = vadd.f32 %v4915, %v4916
      %v4918 = vmul.f32 %v4917, 8.0
      %v4919 = vadd.f32 %v4918, %v2607
      %v4920 = vmul.f32 %v1763, %v1763
      %v4921 = vmul.f32 %v1768, %v1768
      %v4922 = vmul.f32 %v1930, %v1930
      %v4923 = vmul.f32 %v1935, %v1935
      %v4924 = vadd.f32 %v4920, %v4922
      %v4925 = vadd.f32 %v4921, %v4923
      %v4926 = vsel %vm1775, %v4924, 0.0
      %v4927 = vsel %vm1775, %v4925, 0.0
      %v4928 = vadd.f32 %v4926, %v4927
      %v4929 = vrot.slane %v4928, 4
      %v4930 = vadd.f32 %v4928, %v4929
      %v4931 = vrot.slane %v4930, 2
      %v4932 = vadd.f32 %v4930, %v4931
      %v4933 = vrot.slane %v4932, 1
      %v4934 = vadd.f32 %v4932, %v4933
      %v4935 = vmul.f32 %v4934, 8.0
      %v4936 = vadd.f32 %v4935, %v2660
      %v4937 = vmul.f32 %v4919, 0.0026041667
      %v4938 = vmul.f32 %v4936, 0.0026041667
      %v4939 = vmul.f32 %v4937, %v4937
      %v4940 = vsub.f32 %v4938, %v4939
      %v4941 = vadd.f32 %v4940, 1e-05
      %v4942 = vrsqrt.pop %v4941
      %v4944 = vsel %vm1775, %v4937, 0
      %4946 = vmatprep.subr.mxu0 0.0
      %4947 = vmatpush1.msra.mxu0 %v1282
      %4948 = vmatprep.subr.mxu0 0.0
      %4949 = vmatpush1.msra.mxu0 %v1283
      %4950 = vmatprep.subr.mxu0 0.0
      %4951 = vmatpush1.msra.mxu0 0.0
      %4952 = vmatprep.subr.mxu0 0.0
      %4953 = vmatpush1.msra.mxu0 0.0
      %4954 = vmatprep.subr.mxu0 0.0
      %4955 = vmatpush1.msra.mxu0 0.0
      %4956 = vmatprep.subr.mxu0 0.0
      %4957 = vmatpush1.msra.mxu0 0.0
      %4958 = vmatprep.subr.mxu0 0.0
      %4959 = vmatpush1.msra.mxu0 0.0
      %4960 = vmatprep.subr.mxu0 0.0
      %4961 = vmatpush1.msra.mxu0 0.0
      %4962 = vmatprep.subr.mxu0 0.0
      %4963 = vmatpush1.msra.mxu0 0.0
      %4964 = vmatprep.subr.mxu0 0.0
      %4965 = vmatpush1.msra.mxu0 0.0
      %4966 = vmatprep.subr.mxu0 0.0
      %4967 = vmatpush1.msra.mxu0 0.0
      %4968 = vmatprep.subr.mxu0 0.0
      %4969 = vmatpush1.msra.mxu0 0.0
      %4970 = vmatprep.subr.mxu0 0.0
      %4971 = vmatpush1.msra.mxu0 0.0
      %4972 = vmatprep.subr.mxu0 0.0
      %4973 = vmatpush1.msra.mxu0 0.0
      %4974 = vmatprep.subr.mxu0 0.0
      %4975 = vmatpush1.msra.mxu0 0.0
      %4976 = vmatprep.subr.mxu0 0.0
      %4977 = vmatpush1.msra.mxu0 0.0
      %4978 = vmatprep.subr.mxu0 0.0
      %4979 = vmatpush1.msra.mxu0 0.0
      %4980 = vmatprep.subr.mxu0 0.0
      %4981 = vmatpush1.msra.mxu0 0.0
      %4982 = vmatprep.subr.mxu0 0.0
      %4983 = vmatpush1.msra.mxu0 0.0
      %4984 = vmatprep.subr.mxu0 0.0
      %4985 = vmatpush1.msra.mxu0 0.0
      %4986 = vmatprep.subr.mxu0 0.0
      %4987 = vmatpush1.msra.mxu0 0.0
      %4988 = vmatprep.subr.mxu0 0.0
      %4989 = vmatpush1.msra.mxu0 0.0
      %4990 = vmatprep.subr.mxu0 0.0
      %4991 = vmatpush1.msra.mxu0 0.0
      %4992 = vmatprep.subr.mxu0 0.0
      %4993 = vmatpush1.msra.mxu0 0.0
      %4994 = vmatprep.subr.mxu0 0.0
      %4995 = vmatpush1.msra.mxu0 0.0
      %4996 = vmatprep.subr.mxu0 0.0
      %4997 = vmatpush1.msra.mxu0 0.0
      %4998 = vmatprep.subr.mxu0 0.0
      %4999 = vmatpush1.msra.mxu0 0.0
      %5000 = vmatprep.subr.mxu0 0.0
      %5001 = vmatpush1.msra.mxu0 0.0
      %5002 = vmatprep.subr.mxu0 0.0
      %5003 = vmatpush1.msra.mxu0 0.0
      %5004 = vmatprep.subr.mxu0 0.0
      %5005 = vmatpush1.msra.mxu0 0.0
      %5006 = vmatprep.subr.mxu0 0.0
      %5007 = vmatpush1.msra.mxu0 0.0
      %5008 = vmatprep.subr.mxu0 0.0
      %5009 = vmatpush1.msra.mxu0 0.0
      %5010 = vmatprep.mubr.f32.mxu0 0.0
      %5011 = vmatmul.mubr.f32.gmra.mrb[0].mxu0 %v4944
      %v5012 = vpop.f32.mrb[0].mxu0
      %v5013 = vadd.f32 0.0, %v5012
      %v5014 = vpop.f32.mrb[0].mxu0
      %5015 = vdwg.mxu0
      %v5017 = vsel %vm1775, %v4942, 0
      %5019 = vmatprep.subr.mxu0 0.0
      %5020 = vmatpush1.msra.mxu0 %v1282
      %5021 = vmatprep.subr.mxu0 0.0
      %5022 = vmatpush1.msra.mxu0 %v1283
      %5023 = vmatprep.subr.mxu0 0.0
      %5024 = vmatpush1.msra.mxu0 0.0
      %5025 = vmatprep.subr.mxu0 0.0
      %5026 = vmatpush1.msra.mxu0 0.0
      %5027 = vmatprep.subr.mxu0 0.0
      %5028 = vmatpush1.msra.mxu0 0.0
      %5029 = vmatprep.subr.mxu0 0.0
      %5030 = vmatpush1.msra.mxu0 0.0
      %5031 = vmatprep.subr.mxu0 0.0
      %5032 = vmatpush1.msra.mxu0 0.0
      %5033 = vmatprep.subr.mxu0 0.0
      %5034 = vmatpush1.msra.mxu0 0.0
      %5035 = vmatprep.subr.mxu0 0.0
      %5036 = vmatpush1.msra.mxu0 0.0
      %5037 = vmatprep.subr.mxu0 0.0
      %5038 = vmatpush1.msra.mxu0 0.0
      %5039 = vmatprep.subr.mxu0 0.0
      %5040 = vmatpush1.msra.mxu0 0.0
      %5041 = vmatprep.subr.mxu0 0.0
      %5042 = vmatpush1.msra.mxu0 0.0
      %5043 = vmatprep.subr.mxu0 0.0
      %5044 = vmatpush1.msra.mxu0 0.0
      %5045 = vmatprep.subr.mxu0 0.0
      %5046 = vmatpush1.msra.mxu0 0.0
      %5047 = vmatprep.subr.mxu0 0.0
      %5048 = vmatpush1.msra.mxu0 0.0
      %5049 = vmatprep.subr.mxu0 0.0
      %5050 = vmatpush1.msra.mxu0 0.0
      %5051 = vmatprep.subr.mxu0 0.0
      %5052 = vmatpush1.msra.mxu0 0.0
      %5053 = vmatprep.subr.mxu0 0.0
      %5054 = vmatpush1.msra.mxu0 0.0
      %5055 = vmatprep.subr.mxu0 0.0
      %5056 = vmatpush1.msra.mxu0 0.0
      %5057 = vmatprep.subr.mxu0 0.0
      %5058 = vmatpush1.msra.mxu0 0.0
      %5059 = vmatprep.subr.mxu0 0.0
      %5060 = vmatpush1.msra.mxu0 0.0
      %5061 = vmatprep.subr.mxu0 0.0
      %5062 = vmatpush1.msra.mxu0 0.0
      %5063 = vmatprep.subr.mxu0 0.0
      %5064 = vmatpush1.msra.mxu0 0.0
      %5065 = vmatprep.subr.mxu0 0.0
      %5066 = vmatpush1.msra.mxu0 0.0
      %5067 = vmatprep.subr.mxu0 0.0
      %5068 = vmatpush1.msra.mxu0 0.0
      %5069 = vmatprep.subr.mxu0 0.0
      %5070 = vmatpush1.msra.mxu0 0.0
      %5071 = vmatprep.subr.mxu0 0.0
      %5072 = vmatpush1.msra.mxu0 0.0
      %5073 = vmatprep.subr.mxu0 0.0
      %5074 = vmatpush1.msra.mxu0 0.0
      %5075 = vmatprep.subr.mxu0 0.0
      %5076 = vmatpush1.msra.mxu0 0.0
      %5077 = vmatprep.subr.mxu0 0.0
      %5078 = vmatpush1.msra.mxu0 0.0
      %5079 = vmatprep.subr.mxu0 0.0
      %5080 = vmatpush1.msra.mxu0 0.0
      %5081 = vmatprep.subr.mxu0 0.0
      %5082 = vmatpush1.msra.mxu0 0.0
      %5083 = vmatprep.mubr.f32.mxu0 0.0
      %5084 = vmatmul.mubr.f32.gmra.mrb[0].mxu0 %v5017
      %v5085 = vpop.f32.mrb[0].mxu0
      %v5086 = vadd.f32 0.0, %v5085
      %v5087 = vpop.f32.mrb[0].mxu0
      %5088 = vdwg.mxu0
      %v5090 = vsel %vm1775, %v1763, 0
      %v5093 = vsel %vm1775, %v1768, 0
      %5095 = vmatprep.subr.mxu0 0.0
      %5096 = vmatpush1.msra.mxu0 %v1282
      %5097 = vmatprep.subr.mxu0 0.0
      %5098 = vmatpush1.msra.mxu0 %v1283
      %5099 = vmatprep.subr.mxu0 0.0
      %5100 = vmatpush1.msra.mxu0 0.0
      %5101 = vmatprep.subr.mxu0 0.0
      %5102 = vmatpush1.msra.mxu0 0.0
      %5103 = vmatprep.subr.mxu0 0.0
      %5104 = vmatpush1.msra.mxu0 0.0
      %5105 = vmatprep.subr.mxu0 0.0
      %5106 = vmatpush1.msra.mxu0 0.0
      %5107 = vmatprep.subr.mxu0 0.0
      %5108 = vmatpush1.msra.mxu0 0.0
      %5109 = vmatprep.subr.mxu0 0.0
      %5110 = vmatpush1.msra.mxu0 0.0
      %5111 = vmatprep.subr.mxu0 0.0
      %5112 = vmatpush1.msra.mxu0 0.0
      %5113 = vmatprep.subr.mxu0 0.0
      %5114 = vmatpush1.msra.mxu0 0.0
      %5115 = vmatprep.subr.mxu0 0.0
      %5116 = vmatpush1.msra.mxu0 0.0
      %5117 = vmatprep.subr.mxu0 0.0
      %5118 = vmatpush1.msra.mxu0 0.0
      %5119 = vmatprep.subr.mxu0 0.0
      %5120 = vmatpush1.msra.mxu0 0.0
      %5121 = vmatprep.subr.mxu0 0.0
      %5122 = vmatpush1.msra.mxu0 0.0
      %5123 = vmatprep.subr.mxu0 0.0
      %5124 = vmatpush1.msra.mxu0 0.0
      %5125 = vmatprep.subr.mxu0 0.0
      %5126 = vmatpush1.msra.mxu0 0.0
      %5127 = vmatprep.subr.mxu0 0.0
      %5128 = vmatpush1.msra.mxu0 0.0
      %5129 = vmatprep.subr.mxu0 0.0
      %5130 = vmatpush1.msra.mxu0 0.0
      %5131 = vmatprep.subr.mxu0 0.0
      %5132 = vmatpush1.msra.mxu0 0.0
      %5133 = vmatprep.subr.mxu0 0.0
      %5134 = vmatpush1.msra.mxu0 0.0
      %5135 = vmatprep.subr.mxu0 0.0
      %5136 = vmatpush1.msra.mxu0 0.0
      %5137 = vmatprep.subr.mxu0 0.0
      %5138 = vmatpush1.msra.mxu0 0.0
      %5139 = vmatprep.subr.mxu0 0.0
      %5140 = vmatpush1.msra.mxu0 0.0
      %5141 = vmatprep.subr.mxu0 0.0
      %5142 = vmatpush1.msra.mxu0 0.0
      %5143 = vmatprep.subr.mxu0 0.0
      %5144 = vmatpush1.msra.mxu0 0.0
      %5145 = vmatprep.subr.mxu0 0.0
      %5146 = vmatpush1.msra.mxu0 0.0
      %5147 = vmatprep.subr.mxu0 0.0
      %5148 = vmatpush1.msra.mxu0 0.0
      %5149 = vmatprep.subr.mxu0 0.0
      %5150 = vmatpush1.msra.mxu0 0.0
      %5151 = vmatprep.subr.mxu0 0.0
      %5152 = vmatpush1.msra.mxu0 0.0
      %5153 = vmatprep.subr.mxu0 0.0
      %5154 = vmatpush1.msra.mxu0 0.0
      %5155 = vmatprep.subr.mxu0 0.0
      %5156 = vmatpush1.msra.mxu0 0.0
      %5157 = vmatprep.subr.mxu0 0.0
      %5158 = vmatpush1.msra.mxu0 0.0
      %5159 = vmatprep.mubr.f32.mxu0 0.0
      %5160 = vmatmul.mubr.f32.gmra.mrb[0].mxu0 %v5090
      %v5161 = vpop.f32.mrb[0].mxu0
      %v5162 = vadd.f32 0.0, %v5161
      %v5163 = vpop.f32.mrb[0].mxu0
      %5164 = vmatprep.mubr.f32.mxu0 0.0
      %5165 = vmatmul.mubr.f32.gmra.mrb[0].mxu0 %v5093
      %v5166 = vpop.f32.mrb[0].mxu0
      %v5167 = vadd.f32 0.0, %v5166
      %v5168 = vpop.f32.mrb[0].mxu0
      %5169 = vdwg.mxu0
      %v5170 = vlaneseq
      %v5171 = vshrl.u32 %v5170, 7
      %v5172 = vsub.s32 0, %v5171
      %v5173 = vrot.slane %v4906, %v5172
      %v5174 = vmul.f32 %v5162, %v5173
      %v5175 = vmul.f32 %v5167, %v5173
      %v5177 = vsel %vm1775, %v1930, 0
      %v5180 = vsel %vm1775, %v1935, 0
      %5182 = vmatprep.subr.mxu0 0.0
      %5183 = vmatpush1.msra.mxu0 %v1282
      %5184 = vmatprep.subr.mxu0 0.0
      %5185 = vmatpush1.msra.mxu0 %v1283
      %5186 = vmatprep.subr.mxu0 0.0
      %5187 = vmatpush1.msra.mxu0 0.0
      %5188 = vmatprep.subr.mxu0 0.0
      %5189 = vmatpush1.msra.mxu0 0.0
      %5190 = vmatprep.subr.mxu0 0.0
      %5191 = vmatpush1.msra.mxu0 0.0
      %5192 = vmatprep.subr.mxu0 0.0
      %5193 = vmatpush1.msra.mxu0 0.0
      %5194 = vmatprep.subr.mxu0 0.0
      %5195 = vmatpush1.msra.mxu0 0.0
      %5196 = vmatprep.subr.mxu0 0.0
      %5197 = vmatpush1.msra.mxu0 0.0
      %5198 = vmatprep.subr.mxu0 0.0
      %5199 = vmatpush1.msra.mxu0 0.0
      %5200 = vmatprep.subr.mxu0 0.0
      %5201 = vmatpush1.msra.mxu0 0.0
      %5202 = vmatprep.subr.mxu0 0.0
      %5203 = vmatpush1.msra.mxu0 0.0
      %5204 = vmatprep.subr.mxu0 0.0
      %5205 = vmatpush1.msra.mxu0 0.0
      %5206 = vmatprep.subr.mxu0 0.0
      %5207 = vmatpush1.msra.mxu0 0.0
      %5208 = vmatprep.subr.mxu0 0.0
      %5209 = vmatpush1.msra.mxu0 0.0
      %5210 = vmatprep.subr.mxu0 0.0
      %5211 = vmatpush1.msra.mxu0 0.0
      %5212 = vmatprep.subr.mxu0 0.0
      %5213 = vmatpush1.msra.mxu0 0.0
      %5214 = vmatprep.subr.mxu0 0.0
      %5215 = vmatpush1.msra.mxu0 0.0
      %5216 = vmatprep.subr.mxu0 0.0
      %5217 = vmatpush1.msra.mxu0 0.0
      %5218 = vmatprep.subr.mxu0 0.0
      %5219 = vmatpush1.msra.mxu0 0.0
      %5220 = vmatprep.subr.mxu0 0.0
      %5221 = vmatpush1.msra.mxu0 0.0
      %5222 = vmatprep.subr.mxu0 0.0
      %5223 = vmatpush1.msra.mxu0 0.0
      %5224 = vmatprep.subr.mxu0 0.0
      %5225 = vmatpush1.msra.mxu0 0.0
      %5226 = vmatprep.subr.mxu0 0.0
      %5227 = vmatpush1.msra.mxu0 0.0
      %5228 = vmatprep.subr.mxu0 0.0
      %5229 = vmatpush1.msra.mxu0 0.0
      %5230 = vmatprep.subr.mxu0 0.0
      %5231 = vmatpush1.msra.mxu0 0.0
      %5232 = vmatprep.subr.mxu0 0.0
      %5233 = vmatpush1.msra.mxu0 0.0
      %5234 = vmatprep.subr.mxu0 0.0
      %5235 = vmatpush1.msra.mxu0 0.0
      %5236 = vmatprep.subr.mxu0 0.0
      %5237 = vmatpush1.msra.mxu0 0.0
      %5238 = vmatprep.subr.mxu0 0.0
      %5239 = vmatpush1.msra.mxu0 0.0
      %5240 = vmatprep.subr.mxu0 0.0
      %5241 = vmatpush1.msra.mxu0 0.0
      %5242 = vmatprep.subr.mxu0 0.0
      %5243 = vmatpush1.msra.mxu0 0.0
      %5244 = vmatprep.subr.mxu0 0.0
      %5245 = vmatpush1.msra.mxu0 0.0
      %5246 = vmatprep.mubr.f32.mxu0 0.0
      %5247 = vmatmul.mubr.f32.gmra.mrb[0].mxu0 %v5177
      %v5248 = vpop.f32.mrb[0].mxu0
      %v5249 = vadd.f32 0.0, %v5248
      %v5250 = vpop.f32.mrb[0].mxu0
      %5251 = vmatprep.mubr.f32.mxu0 0.0
      %5252 = vmatmul.mubr.f32.gmra.mrb[0].mxu0 %v5180
      %v5253 = vpop.f32.mrb[0].mxu0
      %v5254 = vadd.f32 0.0, %v5253
      %v5255 = vpop.f32.mrb[0].mxu0
      %5256 = vdwg.mxu0
      %v5257 = vlaneseq
      %v5258 = vshrl.u32 %v5257, 7
      %v5259 = vsub.s32 1, %v5258
      %v5260 = vrot.slane %v4906, %v5259
      %v5261 = vmul.f32 %v5249, %v5260
      %v5262 = vmul.f32 %v5254, %v5260
      %v5263 = vadd.f32 %v5174, %v5261
      %v5264 = vadd.f32 %v5175, %v5262
      %v5265 = vlaneseq
      %v5266 = vshrl.u32 %v5265, 7
      %v5267 = vsub.s32 2, %v5266
      %v5268 = vrot.slane %v4906, %v5267
      %v5269 = vmul.f32 %v5268, %v2219
      %v5270 = vmul.f32 %v5268, %v2224
      %v5271 = vmul.f32 %v5268, %v2229
      %v5272 = vmul.f32 %v5268, %v2234
      %v5273 = vmul.f32 %v5268, %v2239
      %v5274 = vmul.f32 %v5268, %v2244
      %v5275 = vmul.f32 %v5268, %v2249
      %v5276 = vmul.f32 %v5268, %v2254
      %v5277 = vmul.f32 %v5268, %v2259
      %v5278 = vmul.f32 %v5268, %v2264
      %v5279 = vmul.f32 %v5268, %v2269
      %v5280 = vmul.f32 %v5268, %v2274
      %v5281 = vmul.f32 %v5268, %v2279
      %v5282 = vmul.f32 %v5268, %v2284
      %v5283 = vmul.f32 %v5268, %v2289
      %v5284 = vmul.f32 %v5268, %v2294
      %5285 = vmatprep.subr.mxu0 0.0
      %5286 = vmatpush1.msra.mxu0 %v5263
      %5287 = vmatprep.subr.mxu0 0.0
      %5288 = vmatpush1.msra.mxu0 %v5264
      %5289 = vmatprep.subr.mxu0 0.0
      %5290 = vmatpush1.msra.mxu0 0.0
      %5291 = vmatprep.subr.mxu0 0.0
      %5292 = vmatpush1.msra.mxu0 0.0
      %5293 = vmatprep.subr.mxu0 0.0
      %5294 = vmatpush1.msra.mxu0 0.0
      %5295 = vmatprep.subr.mxu0 0.0
      %5296 = vmatpush1.msra.mxu0 0.0
      %5297 = vmatprep.subr.mxu0 0.0
      %5298 = vmatpush1.msra.mxu0 0.0
      %5299 = vmatprep.subr.mxu0 0.0
      %5300 = vmatpush1.msra.mxu0 0.0
      %5301 = vmatprep.subr.mxu0 0.0
      %5302 = vmatpush1.msra.mxu0 0.0
      %5303 = vmatprep.subr.mxu0 0.0
      %5304 = vmatpush1.msra.mxu0 0.0
      %5305 = vmatprep.subr.mxu0 0.0
      %5306 = vmatpush1.msra.mxu0 0.0
      %5307 = vmatprep.subr.mxu0 0.0
      %5308 = vmatpush1.msra.mxu0 0.0
      %5309 = vmatprep.subr.mxu0 0.0
      %5310 = vmatpush1.msra.mxu0 0.0
      %5311 = vmatprep.subr.mxu0 0.0
      %5312 = vmatpush1.msra.mxu0 0.0
      %5313 = vmatprep.subr.mxu0 0.0
      %5314 = vmatpush1.msra.mxu0 0.0
      %5315 = vmatprep.subr.mxu0 0.0
      %5316 = vmatpush1.msra.mxu0 0.0
      %5317 = vmatprep.subr.mxu0 0.0
      %5318 = vmatpush1.msra.mxu0 0.0
      %5319 = vmatprep.subr.mxu0 0.0
      %5320 = vmatpush1.msra.mxu0 0.0
      %5321 = vmatprep.subr.mxu0 0.0
      %5322 = vmatpush1.msra.mxu0 0.0
      %5323 = vmatprep.subr.mxu0 0.0
      %5324 = vmatpush1.msra.mxu0 0.0
      %5325 = vmatprep.subr.mxu0 0.0
      %5326 = vmatpush1.msra.mxu0 0.0
      %5327 = vmatprep.subr.mxu0 0.0
      %5328 = vmatpush1.msra.mxu0 0.0
      %5329 = vmatprep.subr.mxu0 0.0
      %5330 = vmatpush1.msra.mxu0 0.0
      %5331 = vmatprep.subr.mxu0 0.0
      %5332 = vmatpush1.msra.mxu0 0.0
      %5333 = vmatprep.subr.mxu0 0.0
      %5334 = vmatpush1.msra.mxu0 0.0
      %5335 = vmatprep.subr.mxu0 0.0
      %5336 = vmatpush1.msra.mxu0 0.0
      %5337 = vmatprep.subr.mxu0 0.0
      %5338 = vmatpush1.msra.mxu0 0.0
      %5339 = vmatprep.subr.mxu0 0.0
      %5340 = vmatpush1.msra.mxu0 0.0
      %5341 = vmatprep.subr.mxu0 0.0
      %5342 = vmatpush1.msra.mxu0 0.0
      %5343 = vmatprep.subr.mxu0 0.0
      %5344 = vmatpush1.msra.mxu0 0.0
      %5345 = vmatprep.subr.mxu0 0.0
      %5346 = vmatpush1.msra.mxu0 0.0
      %5347 = vmatprep.subr.mxu0 0.0
      %5348 = vmatpush1.msra.mxu0 0.0
      %5349 = vmatprep.mubr.f32.mxu0 0.0
      %5350 = vmatmul.mubr.f32.gmra.mrb[0].mxu0 %v2298
      %v5351 = vpop.f32.mrb[0].mxu0
      %v5352 = vadd.f32 %v5269, %v5351
      %v5353 = vpop.f32.mrb[0].mxu0
      %5354 = vmatprep.mubr.f32.mxu0 0.0
      %5355 = vmatmul.mubr.f32.gmra.mrb[0].mxu0 %v2301
      %v5356 = vpop.f32.mrb[0].mxu0
      %v5357 = vadd.f32 %v5270, %v5356
      %v5358 = vpop.f32.mrb[0].mxu0
      %5359 = vmatprep.mubr.f32.mxu0 0.0
      %5360 = vmatmul.mubr.f32.gmra.mrb[0].mxu0 %v2304
      %v5361 = vpop.f32.mrb[0].mxu0
      %v5362 = vadd.f32 %v5271, %v5361
      %v5363 = vpop.f32.mrb[0].mxu0
      %5364 = vmatprep.mubr.f32.mxu0 0.0
      %5365 = vmatmul.mubr.f32.gmra.mrb[0].mxu0 %v2307
      %v5366 = vpop.f32.mrb[0].mxu0
      %v5367 = vadd.f32 %v5272, %v5366
      %v5368 = vpop.f32.mrb[0].mxu0
      %5369 = vmatprep.mubr.f32.mxu0 0.0
      %5370 = vmatmul.mubr.f32.gmra.mrb[0].mxu0 %v2310
      %v5371 = vpop.f32.mrb[0].mxu0
      %v5372 = vadd.f32 %v5273, %v5371
      %v5373 = vpop.f32.mrb[0].mxu0
      %5374 = vmatprep.mubr.f32.mxu0 0.0
      %5375 = vmatmul.mubr.f32.gmra.mrb[0].mxu0 %v2313
      %v5376 = vpop.f32.mrb[0].mxu0
      %v5377 = vadd.f32 %v5274, %v5376
      %v5378 = vpop.f32.mrb[0].mxu0
      %5379 = vmatprep.mubr.f32.mxu0 0.0
      %5380 = vmatmul.mubr.f32.gmra.mrb[0].mxu0 %v2316
      %v5381 = vpop.f32.mrb[0].mxu0
      %v5382 = vadd.f32 %v5275, %v5381
      %v5383 = vpop.f32.mrb[0].mxu0
      %5384 = vmatprep.mubr.f32.mxu0 0.0
      %5385 = vmatmul.mubr.f32.gmra.mrb[0].mxu0 %v2319
      %v5386 = vpop.f32.mrb[0].mxu0
      %v5387 = vadd.f32 %v5276, %v5386
      %v5388 = vpop.f32.mrb[0].mxu0
      %5389 = vmatprep.mubr.f32.mxu0 0.0
      %5390 = vmatmul.mubr.f32.gmra.mrb[0].mxu0 %v2322
      %v5391 = vpop.f32.mrb[0].mxu0
      %v5392 = vadd.f32 %v5277, %v5391
      %v5393 = vpop.f32.mrb[0].mxu0
      %5394 = vmatprep.mubr.f32.mxu0 0.0
      %5395 = vmatmul.mubr.f32.gmra.mrb[0].mxu0 %v2325
      %v5396 = vpop.f32.mrb[0].mxu0
      %v5397 = vadd.f32 %v5278, %v5396
      %v5398 = vpop.f32.mrb[0].mxu0
      %5399 = vmatprep.mubr.f32.mxu0 0.0
      %5400 = vmatmul.mubr.f32.gmra.mrb[0].mxu0 %v2328
      %v5401 = vpop.f32.mrb[0].mxu0
      %v5402 = vadd.f32 %v5279, %v5401
      %v5403 = vpop.f32.mrb[0].mxu0
      %5404 = vmatprep.mubr.f32.mxu0 0.0
      %5405 = vmatmul.mubr.f32.gmra.mrb[0].mxu0 %v2331
      %v5406 = vpop.f32.mrb[0].mxu0
      %v5407 = vadd.f32 %v5280, %v5406
      %v5408 = vpop.f32.mrb[0].mxu0
      %5409 = vmatprep.mubr.f32.mxu0 0.0
      %5410 = vmatmul.mubr.f32.gmra.mrb[0].mxu0 %v2334
      %v5411 = vpop.f32.mrb[0].mxu0
      %v5412 = vadd.f32 %v5281, %v5411
      %v5413 = vpop.f32.mrb[0].mxu0
      %5414 = vmatprep.mubr.f32.mxu0 0.0
      %5415 = vmatmul.mubr.f32.gmra.mrb[0].mxu0 %v2337
      %v5416 = vpop.f32.mrb[0].mxu0
      %v5417 = vadd.f32 %v5282, %v5416
      %v5418 = vpop.f32.mrb[0].mxu0
      %5419 = vmatprep.mubr.f32.mxu0 0.0
      %5420 = vmatmul.mubr.f32.gmra.mrb[0].mxu0 %v2340
      %v5421 = vpop.f32.mrb[0].mxu0
      %v5422 = vadd.f32 %v5283, %v5421
      %v5423 = vpop.f32.mrb[0].mxu0
      %5424 = vmatprep.mubr.f32.mxu0 0.0
      %5425 = vmatmul.mubr.f32.gmra.mrb[0].mxu0 %v2343
      %v5426 = vpop.f32.mrb[0].mxu0
      %v5427 = vadd.f32 %v5284, %v5426
      %v5428 = vpop.f32.mrb[0].mxu0
      %5429 = vdwg.mxu0
      %v5430 = vlaneseq
      %v5431 = vshrl.u32 %v5430, 7
      %v5432 = vsub.s32 0, %v5431
      %v5433 = vrot.slane %v5086, %v5432
      %v5434 = vmul.f32 %v5433, %v5352
      %v5435 = vmul.f32 %v5433, %v5357
      %v5436 = vmul.f32 %v5433, %v5362
      %v5437 = vmul.f32 %v5433, %v5367
      %v5438 = vmul.f32 %v5433, %v5372
      %v5439 = vmul.f32 %v5433, %v5377
      %v5440 = vmul.f32 %v5433, %v5382
      %v5441 = vmul.f32 %v5433, %v5387
      %v5442 = vmul.f32 %v5433, %v5392
      %v5443 = vmul.f32 %v5433, %v5397
      %v5444 = vmul.f32 %v5433, %v5402
      %v5445 = vmul.f32 %v5433, %v5407
      %v5446 = vmul.f32 %v5433, %v5412
      %v5447 = vmul.f32 %v5433, %v5417
      %v5448 = vmul.f32 %v5433, %v5422
      %v5449 = vmul.f32 %v5433, %v5427
      %v5450 = vmul.f32 %v5086, %v5013
      %v5452 = vrot.slane %v4906, 1
      %v5454 = vadd.f32 %v4906, %v5452
      %v5455 = vrot.slane %v4906, 2
      %v5457 = vadd.f32 %v5454, %v5455
      %v5458 = vmul.f32 %v5450, %v5457
      %v5460 = vrot.slane %v5458, 5
      %v5462 = vsub.f32 %v4906, %v5460
      %v5463 = vlaneseq
      %v5464 = vshrl.u32 %v5463, 7
      %v5465 = vsub.s32 3, %v5464
      %v5466 = vrot.slane %v5462, %v5465
      %v5467 = vadd.f32 %v5434, %v5466
      %v5468 = vadd.f32 %v5435, %v5466
      %v5469 = vadd.f32 %v5436, %v5466
      %v5470 = vadd.f32 %v5437, %v5466
      %v5471 = vadd.f32 %v5438, %v5466
      %v5472 = vadd.f32 %v5439, %v5466
      %v5473 = vadd.f32 %v5440, %v5466
      %v5474 = vadd.f32 %v5441, %v5466
      %v5475 = vadd.f32 %v5442, %v5466
      %v5476 = vadd.f32 %v5443, %v5466
      %v5477 = vadd.f32 %v5444, %v5466
      %v5478 = vadd.f32 %v5445, %v5466
      %v5479 = vadd.f32 %v5446, %v5466
      %v5480 = vadd.f32 %v5447, %v5466
      %v5481 = vadd.f32 %v5448, %v5466
      %v5482 = vadd.f32 %v5449, %v5466
      %v5483 = vtanh.pop %v5467
      %v5484 = vtanh.pop %v5468
      %v5485 = vtanh.pop %v5469
      %v5486 = vtanh.pop %v5470
      %v5487 = vtanh.pop %v5471
      %v5488 = vtanh.pop %v5472
      %v5489 = vtanh.pop %v5473
      %v5490 = vtanh.pop %v5474
      %v5491 = vtanh.pop %v5475
      %v5492 = vtanh.pop %v5476
      %v5493 = vtanh.pop %v5477
      %v5494 = vtanh.pop %v5478
      %v5495 = vtanh.pop %v5479
      %v5496 = vtanh.pop %v5480
      %v5497 = vtanh.pop %v5481
      %v5498 = vtanh.pop %v5482
      %5499 = vmatprep.subr.mxu0 0.0
      %5500 = vmatpush1.msra.mxu0 %v4400
      %5501 = vmatprep.subr.mxu0 0.0
      %5502 = vmatpush1.msra.mxu0 %v4401
      %5503 = vmatprep.subr.mxu0 0.0
      %5504 = vmatpush1.msra.mxu0 %v4402
      %5505 = vmatprep.subr.mxu0 0.0
      %5506 = vmatpush1.msra.mxu0 %v4403
      %5507 = vmatprep.subr.mxu0 0.0
      %5508 = vmatpush1.msra.mxu0 %v4404
      %5509 = vmatprep.subr.mxu0 0.0
      %5510 = vmatpush1.msra.mxu0 %v4405
      %5511 = vmatprep.subr.mxu0 0.0
      %5512 = vmatpush1.msra.mxu0 %v4406
      %5513 = vmatprep.subr.mxu0 0.0
      %5514 = vmatpush1.msra.mxu0 %v4407
      %5515 = vmatprep.subr.mxu0 0.0
      %5516 = vmatpush1.msra.mxu0 %v4408
      %5517 = vmatprep.subr.mxu0 0.0
      %5518 = vmatpush1.msra.mxu0 %v4409
      %5519 = vmatprep.subr.mxu0 0.0
      %5520 = vmatpush1.msra.mxu0 %v4410
      %5521 = vmatprep.subr.mxu0 0.0
      %5522 = vmatpush1.msra.mxu0 %v4411
      %5523 = vmatprep.subr.mxu0 0.0
      %5524 = vmatpush1.msra.mxu0 %v4412
      %5525 = vmatprep.subr.mxu0 0.0
      %5526 = vmatpush1.msra.mxu0 %v4413
      %5527 = vmatprep.subr.mxu0 0.0
      %5528 = vmatpush1.msra.mxu0 %v4414
      %5529 = vmatprep.subr.mxu0 0.0
      %5530 = vmatpush1.msra.mxu0 %v4415
      %5531 = vmatprep.subr.mxu0 0.0
      %5532 = vmatpush1.msra.mxu0 0.0
      %5533 = vmatprep.subr.mxu0 0.0
      %5534 = vmatpush1.msra.mxu0 0.0
      %5535 = vmatprep.subr.mxu0 0.0
      %5536 = vmatpush1.msra.mxu0 0.0
      %5537 = vmatprep.subr.mxu0 0.0
      %5538 = vmatpush1.msra.mxu0 0.0
      %5539 = vmatprep.subr.mxu0 0.0
      %5540 = vmatpush1.msra.mxu0 0.0
      %5541 = vmatprep.subr.mxu0 0.0
      %5542 = vmatpush1.msra.mxu0 0.0
      %5543 = vmatprep.subr.mxu0 0.0
      %5544 = vmatpush1.msra.mxu0 0.0
      %5545 = vmatprep.subr.mxu0 0.0
      %5546 = vmatpush1.msra.mxu0 0.0
      %5547 = vmatprep.subr.mxu0 0.0
      %5548 = vmatpush1.msra.mxu0 0.0
      %5549 = vmatprep.subr.mxu0 0.0
      %5550 = vmatpush1.msra.mxu0 0.0
      %5551 = vmatprep.subr.mxu0 0.0
      %5552 = vmatpush1.msra.mxu0 0.0
      %5553 = vmatprep.subr.mxu0 0.0
      %5554 = vmatpush1.msra.mxu0 0.0
      %5555 = vmatprep.subr.mxu0 0.0
      %5556 = vmatpush1.msra.mxu0 0.0
      %5557 = vmatprep.subr.mxu0 0.0
      %5558 = vmatpush1.msra.mxu0 0.0
      %5559 = vmatprep.subr.mxu0 0.0
      %5560 = vmatpush1.msra.mxu0 0.0
      %5561 = vmatprep.subr.mxu0 0.0
      %5562 = vmatpush1.msra.mxu0 0.0
      %5563 = vmatprep.mubr.f32.mxu0 0.0
      %5564 = vmatmul.mubr.f32.gmra.mrb[0].mxu0 %v5483
      %v5565 = vpop.f32.mrb[0].mxu0
      %v5566 = vadd.f32 0.0, %v5565
      %v5567 = vpop.f32.mrb[0].mxu0
      %5568 = vmatprep.mubr.f32.mxu0 0.0
      %5569 = vmatmul.mubr.f32.gmra.mrb[0].mxu0 %v5484
      %v5570 = vpop.f32.mrb[0].mxu0
      %v5571 = vadd.f32 0.0, %v5570
      %v5572 = vpop.f32.mrb[0].mxu0
      %5573 = vmatprep.mubr.f32.mxu0 0.0
      %5574 = vmatmul.mubr.f32.gmra.mrb[0].mxu0 %v5485
      %v5575 = vpop.f32.mrb[0].mxu0
      %v5576 = vadd.f32 0.0, %v5575
      %v5577 = vpop.f32.mrb[0].mxu0
      %5578 = vmatprep.mubr.f32.mxu0 0.0
      %5579 = vmatmul.mubr.f32.gmra.mrb[0].mxu0 %v5486
      %v5580 = vpop.f32.mrb[0].mxu0
      %v5581 = vadd.f32 0.0, %v5580
      %v5582 = vpop.f32.mrb[0].mxu0
      %5583 = vmatprep.mubr.f32.mxu0 0.0
      %5584 = vmatmul.mubr.f32.gmra.mrb[0].mxu0 %v5487
      %v5585 = vpop.f32.mrb[0].mxu0
      %v5586 = vadd.f32 0.0, %v5585
      %v5587 = vpop.f32.mrb[0].mxu0
      %5588 = vmatprep.mubr.f32.mxu0 0.0
      %5589 = vmatmul.mubr.f32.gmra.mrb[0].mxu0 %v5488
      %v5590 = vpop.f32.mrb[0].mxu0
      %v5591 = vadd.f32 0.0, %v5590
      %v5592 = vpop.f32.mrb[0].mxu0
      %5593 = vmatprep.mubr.f32.mxu0 0.0
      %5594 = vmatmul.mubr.f32.gmra.mrb[0].mxu0 %v5489
      %v5595 = vpop.f32.mrb[0].mxu0
      %v5596 = vadd.f32 0.0, %v5595
      %v5597 = vpop.f32.mrb[0].mxu0
      %5598 = vmatprep.mubr.f32.mxu0 0.0
      %5599 = vmatmul.mubr.f32.gmra.mrb[0].mxu0 %v5490
      %v5600 = vpop.f32.mrb[0].mxu0
      %v5601 = vadd.f32 0.0, %v5600
      %v5602 = vpop.f32.mrb[0].mxu0
      %5603 = vmatprep.mubr.f32.mxu0 0.0
      %5604 = vmatmul.mubr.f32.gmra.mrb[0].mxu0 %v5491
      %v5605 = vpop.f32.mrb[0].mxu0
      %v5606 = vadd.f32 0.0, %v5605
      %v5607 = vpop.f32.mrb[0].mxu0
      %5608 = vmatprep.mubr.f32.mxu0 0.0
      %5609 = vmatmul.mubr.f32.gmra.mrb[0].mxu0 %v5492
      %v5610 = vpop.f32.mrb[0].mxu0
      %v5611 = vadd.f32 0.0, %v5610
      %v5612 = vpop.f32.mrb[0].mxu0
      %5613 = vmatprep.mubr.f32.mxu0 0.0
      %5614 = vmatmul.mubr.f32.gmra.mrb[0].mxu0 %v5493
      %v5615 = vpop.f32.mrb[0].mxu0
      %v5616 = vadd.f32 0.0, %v5615
      %v5617 = vpop.f32.mrb[0].mxu0
      %5618 = vmatprep.mubr.f32.mxu0 0.0
      %5619 = vmatmul.mubr.f32.gmra.mrb[0].mxu0 %v5494
      %v5620 = vpop.f32.mrb[0].mxu0
      %v5621 = vadd.f32 0.0, %v5620
      %v5622 = vpop.f32.mrb[0].mxu0
      %5623 = vmatprep.mubr.f32.mxu0 0.0
      %5624 = vmatmul.mubr.f32.gmra.mrb[0].mxu0 %v5495
      %v5625 = vpop.f32.mrb[0].mxu0
      %v5626 = vadd.f32 0.0, %v5625
      %v5627 = vpop.f32.mrb[0].mxu0
      %5628 = vmatprep.mubr.f32.mxu0 0.0
      %5629 = vmatmul.mubr.f32.gmra.mrb[0].mxu0 %v5496
      %v5630 = vpop.f32.mrb[0].mxu0
      %v5631 = vadd.f32 0.0, %v5630
      %v5632 = vpop.f32.mrb[0].mxu0
      %5633 = vmatprep.mubr.f32.mxu0 0.0
      %5634 = vmatmul.mubr.f32.gmra.mrb[0].mxu0 %v5497
      %v5635 = vpop.f32.mrb[0].mxu0
      %v5636 = vadd.f32 0.0, %v5635
      %v5637 = vpop.f32.mrb[0].mxu0
      %5638 = vmatprep.mubr.f32.mxu0 0.0
      %5639 = vmatmul.mubr.f32.gmra.mrb[0].mxu0 %v5498
      %v5640 = vpop.f32.mrb[0].mxu0
      %v5641 = vadd.f32 0.0, %v5640
      %v5642 = vpop.f32.mrb[0].mxu0
      %5643 = vdwg.mxu0
      %5644 = vmax.xlane.f32.xlu0 %v5566
      %v5645 = vpop.xlane.xlu0 %5644
      %5646 = vmax.xlane.f32.xlu0 %v5571
      %v5647 = vpop.xlane.xlu0 %5646
      %5648 = vmax.xlane.f32.xlu0 %v5576
      %v5649 = vpop.xlane.xlu0 %5648
      %5650 = vmax.xlane.f32.xlu0 %v5581
      %v5651 = vpop.xlane.xlu0 %5650
      %5652 = vmax.xlane.f32.xlu0 %v5586
      %v5653 = vpop.xlane.xlu0 %5652
      %5654 = vmax.xlane.f32.xlu0 %v5591
      %v5655 = vpop.xlane.xlu0 %5654
      %5656 = vmax.xlane.f32.xlu0 %v5596
      %v5657 = vpop.xlane.xlu0 %5656
      %5658 = vmax.xlane.f32.xlu0 %v5601
      %v5659 = vpop.xlane.xlu0 %5658
      %5660 = vmax.xlane.f32.xlu0 %v5606
      %v5661 = vpop.xlane.xlu0 %5660
      %5662 = vmax.xlane.f32.xlu0 %v5611
      %v5663 = vpop.xlane.xlu0 %5662
      %5664 = vmax.xlane.f32.xlu0 %v5616
      %v5665 = vpop.xlane.xlu0 %5664
      %5666 = vmax.xlane.f32.xlu0 %v5621
      %v5667 = vpop.xlane.xlu0 %5666
      %5668 = vmax.xlane.f32.xlu0 %v5626
      %v5669 = vpop.xlane.xlu0 %5668
      %5670 = vmax.xlane.f32.xlu0 %v5631
      %v5671 = vpop.xlane.xlu0 %5670
      %5672 = vmax.xlane.f32.xlu0 %v5636
      %v5673 = vpop.xlane.xlu0 %5672
      %5674 = vmax.xlane.f32.xlu0 %v5641
      %v5675 = vpop.xlane.xlu0 %5674
      %v5676 = vmax.f32 %v5645, %v5653
      %v5677 = vmax.f32 %v5647, %v5655
      %v5678 = vmax.f32 %v5649, %v5657
      %v5679 = vmax.f32 %v5651, %v5659
      %v5680 = vmax.f32 %v5676, %v5661
      %v5681 = vmax.f32 %v5677, %v5663
      %v5682 = vmax.f32 %v5678, %v5665
      %v5683 = vmax.f32 %v5679, %v5667
      %v5684 = vmax.f32 %v5680, %v5669
      %v5685 = vmax.f32 %v5681, %v5671
      %v5686 = vmax.f32 %v5682, %v5673
      %v5687 = vmax.f32 %v5683, %v5675
      %v5688 = vmax.f32 %v5684, %v5685
      %v5689 = vmax.f32 %v5686, %v5687
      %v5690 = vmax.f32 %v5688, %v5689
      %v5691 = vrot.slane %v5690, 4
      %v5692 = vmax.f32 %v5690, %v5691
      %v5693 = vrot.slane %v5692, 2
      %v5694 = vmax.f32 %v5692, %v5693
      %v5695 = vrot.slane %v5694, 1
      %v5696 = vmax.f32 %v5694, %v5695
      %v5697 = vsub.f32 %v5566, %v5696
      %v5698 = vsub.f32 %v5571, %v5696
      %v5699 = vsub.f32 %v5576, %v5696
      %v5700 = vsub.f32 %v5581, %v5696
      %v5701 = vsub.f32 %v5586, %v5696
      %v5702 = vsub.f32 %v5591, %v5696
      %v5703 = vsub.f32 %v5596, %v5696
      %v5704 = vsub.f32 %v5601, %v5696
      %v5705 = vsub.f32 %v5606, %v5696
      %v5706 = vsub.f32 %v5611, %v5696
      %v5707 = vsub.f32 %v5616, %v5696
      %v5708 = vsub.f32 %v5621, %v5696
      %v5709 = vsub.f32 %v5626, %v5696
      %v5710 = vsub.f32 %v5631, %v5696
      %v5711 = vsub.f32 %v5636, %v5696
      %v5712 = vsub.f32 %v5641, %v5696
      %v5713 = vmul.f32 %v5697, 1.442695
      %v5714 = vpow.pop %v5713
      %v5715 = vmul.f32 %v5698, 1.442695
      %v5716 = vpow.pop %v5715
      %v5717 = vmul.f32 %v5699, 1.442695
      %v5718 = vpow.pop %v5717
      %v5719 = vmul.f32 %v5700, 1.442695
      %v5720 = vpow.pop %v5719
      %v5721 = vmul.f32 %v5701, 1.442695
      %v5722 = vpow.pop %v5721
      %v5723 = vmul.f32 %v5702, 1.442695
      %v5724 = vpow.pop %v5723
      %v5725 = vmul.f32 %v5703, 1.442695
      %v5726 = vpow.pop %v5725
      %v5727 = vmul.f32 %v5704, 1.442695
      %v5728 = vpow.pop %v5727
      %v5729 = vmul.f32 %v5705, 1.442695
      %v5730 = vpow.pop %v5729
      %v5731 = vmul.f32 %v5706, 1.442695
      %v5732 = vpow.pop %v5731
      %v5733 = vmul.f32 %v5707, 1.442695
      %v5734 = vpow.pop %v5733
      %v5735 = vmul.f32 %v5708, 1.442695
      %v5736 = vpow.pop %v5735
      %v5737 = vmul.f32 %v5709, 1.442695
      %v5738 = vpow.pop %v5737
      %v5739 = vmul.f32 %v5710, 1.442695
      %v5740 = vpow.pop %v5739
      %v5741 = vmul.f32 %v5711, 1.442695
      %v5742 = vpow.pop %v5741
      %v5743 = vmul.f32 %v5712, 1.442695
      %v5744 = vpow.pop %v5743
      %5745 = vmatprep.subr.mxu0 0.0
      %5746 = vmatpush1.msra.mxu0 %v1249
      %5747 = vmatprep.subr.mxu0 0.0
      %5748 = vmatpush1.msra.mxu0 %v1250
      %5749 = vmatprep.subr.mxu0 0.0
      %5750 = vmatpush1.msra.mxu0 %v1251
      %5751 = vmatprep.subr.mxu0 0.0
      %5752 = vmatpush1.msra.mxu0 %v1252
      %5753 = vmatprep.subr.mxu0 0.0
      %5754 = vmatpush1.msra.mxu0 %v1253
      %5755 = vmatprep.subr.mxu0 0.0
      %5756 = vmatpush1.msra.mxu0 %v1254
      %5757 = vmatprep.subr.mxu0 0.0
      %5758 = vmatpush1.msra.mxu0 %v1255
      %5759 = vmatprep.subr.mxu0 0.0
      %5760 = vmatpush1.msra.mxu0 %v1256
      %5761 = vmatprep.subr.mxu0 0.0
      %5762 = vmatpush1.msra.mxu0 %v1257
      %5763 = vmatprep.subr.mxu0 0.0
      %5764 = vmatpush1.msra.mxu0 %v1258
      %5765 = vmatprep.subr.mxu0 0.0
      %5766 = vmatpush1.msra.mxu0 %v1259
      %5767 = vmatprep.subr.mxu0 0.0
      %5768 = vmatpush1.msra.mxu0 %v1260
      %5769 = vmatprep.subr.mxu0 0.0
      %5770 = vmatpush1.msra.mxu0 %v1261
      %5771 = vmatprep.subr.mxu0 0.0
      %5772 = vmatpush1.msra.mxu0 %v1262
      %5773 = vmatprep.subr.mxu0 0.0
      %5774 = vmatpush1.msra.mxu0 %v1263
      %5775 = vmatprep.subr.mxu0 0.0
      %5776 = vmatpush1.msra.mxu0 %v1264
      %5777 = vmatprep.subr.mxu0 0.0
      %5778 = vmatpush1.msra.mxu0 0.0
      %5779 = vmatprep.subr.mxu0 0.0
      %5780 = vmatpush1.msra.mxu0 0.0
      %5781 = vmatprep.subr.mxu0 0.0
      %5782 = vmatpush1.msra.mxu0 0.0
      %5783 = vmatprep.subr.mxu0 0.0
      %5784 = vmatpush1.msra.mxu0 0.0
      %5785 = vmatprep.subr.mxu0 0.0
      %5786 = vmatpush1.msra.mxu0 0.0
      %5787 = vmatprep.subr.mxu0 0.0
      %5788 = vmatpush1.msra.mxu0 0.0
      %5789 = vmatprep.subr.mxu0 0.0
      %5790 = vmatpush1.msra.mxu0 0.0
      %5791 = vmatprep.subr.mxu0 0.0
      %5792 = vmatpush1.msra.mxu0 0.0
      %5793 = vmatprep.subr.mxu0 0.0
      %5794 = vmatpush1.msra.mxu0 0.0
      %5795 = vmatprep.subr.mxu0 0.0
      %5796 = vmatpush1.msra.mxu0 0.0
      %5797 = vmatprep.subr.mxu0 0.0
      %5798 = vmatpush1.msra.mxu0 0.0
      %5799 = vmatprep.subr.mxu0 0.0
      %5800 = vmatpush1.msra.mxu0 0.0
      %5801 = vmatprep.subr.mxu0 0.0
      %5802 = vmatpush1.msra.mxu0 0.0
      %5803 = vmatprep.subr.mxu0 0.0
      %5804 = vmatpush1.msra.mxu0 0.0
      %5805 = vmatprep.subr.mxu0 0.0
      %5806 = vmatpush1.msra.mxu0 0.0
      %5807 = vmatprep.subr.mxu0 0.0
      %5808 = vmatpush1.msra.mxu0 0.0
      %5809 = vmatprep.mubr.f32.mxu0 0.0
      %5810 = vmatmul.mubr.f32.gmra.mrb[0].mxu0 %v5714
      %v5811 = vpop.f32.mrb[0].mxu0
      %v5812 = vadd.f32 0.0, %v5811
      %v5813 = vpop.f32.mrb[0].mxu0
      %5814 = vmatprep.mubr.f32.mxu0 0.0
      %5815 = vmatmul.mubr.f32.gmra.mrb[0].mxu0 %v5716
      %v5816 = vpop.f32.mrb[0].mxu0
      %v5817 = vadd.f32 0.0, %v5816
      %v5818 = vpop.f32.mrb[0].mxu0
      %5819 = vmatprep.mubr.f32.mxu0 0.0
      %5820 = vmatmul.mubr.f32.gmra.mrb[0].mxu0 %v5718
      %v5821 = vpop.f32.mrb[0].mxu0
      %v5822 = vadd.f32 0.0, %v5821
      %v5823 = vpop.f32.mrb[0].mxu0
      %5824 = vmatprep.mubr.f32.mxu0 0.0
      %5825 = vmatmul.mubr.f32.gmra.mrb[0].mxu0 %v5720
      %v5826 = vpop.f32.mrb[0].mxu0
      %v5827 = vadd.f32 0.0, %v5826
      %v5828 = vpop.f32.mrb[0].mxu0
      %5829 = vmatprep.mubr.f32.mxu0 0.0
      %5830 = vmatmul.mubr.f32.gmra.mrb[0].mxu0 %v5722
      %v5831 = vpop.f32.mrb[0].mxu0
      %v5832 = vadd.f32 0.0, %v5831
      %v5833 = vpop.f32.mrb[0].mxu0
      %5834 = vmatprep.mubr.f32.mxu0 0.0
      %5835 = vmatmul.mubr.f32.gmra.mrb[0].mxu0 %v5724
      %v5836 = vpop.f32.mrb[0].mxu0
      %v5837 = vadd.f32 0.0, %v5836
      %v5838 = vpop.f32.mrb[0].mxu0
      %5839 = vmatprep.mubr.f32.mxu0 0.0
      %5840 = vmatmul.mubr.f32.gmra.mrb[0].mxu0 %v5726
      %v5841 = vpop.f32.mrb[0].mxu0
      %v5842 = vadd.f32 0.0, %v5841
      %v5843 = vpop.f32.mrb[0].mxu0
      %5844 = vmatprep.mubr.f32.mxu0 0.0
      %5845 = vmatmul.mubr.f32.gmra.mrb[0].mxu0 %v5728
      %v5846 = vpop.f32.mrb[0].mxu0
      %v5847 = vadd.f32 0.0, %v5846
      %v5848 = vpop.f32.mrb[0].mxu0
      %5849 = vmatprep.mubr.f32.mxu0 0.0
      %5850 = vmatmul.mubr.f32.gmra.mrb[0].mxu0 %v5730
      %v5851 = vpop.f32.mrb[0].mxu0
      %v5852 = vadd.f32 0.0, %v5851
      %v5853 = vpop.f32.mrb[0].mxu0
      %5854 = vmatprep.mubr.f32.mxu0 0.0
      %5855 = vmatmul.mubr.f32.gmra.mrb[0].mxu0 %v5732
      %v5856 = vpop.f32.mrb[0].mxu0
      %v5857 = vadd.f32 0.0, %v5856
      %v5858 = vpop.f32.mrb[0].mxu0
      %5859 = vmatprep.mubr.f32.mxu0 0.0
      %5860 = vmatmul.mubr.f32.gmra.mrb[0].mxu0 %v5734
      %v5861 = vpop.f32.mrb[0].mxu0
      %v5862 = vadd.f32 0.0, %v5861
      %v5863 = vpop.f32.mrb[0].mxu0
      %5864 = vmatprep.mubr.f32.mxu0 0.0
      %5865 = vmatmul.mubr.f32.gmra.mrb[0].mxu0 %v5736
      %v5866 = vpop.f32.mrb[0].mxu0
      %v5867 = vadd.f32 0.0, %v5866
      %v5868 = vpop.f32.mrb[0].mxu0
      %5869 = vmatprep.mubr.f32.mxu0 0.0
      %5870 = vmatmul.mubr.f32.gmra.mrb[0].mxu0 %v5738
      %v5871 = vpop.f32.mrb[0].mxu0
      %v5872 = vadd.f32 0.0, %v5871
      %v5873 = vpop.f32.mrb[0].mxu0
      %5874 = vmatprep.mubr.f32.mxu0 0.0
      %5875 = vmatmul.mubr.f32.gmra.mrb[0].mxu0 %v5740
      %v5876 = vpop.f32.mrb[0].mxu0
      %v5877 = vadd.f32 0.0, %v5876
      %v5878 = vpop.f32.mrb[0].mxu0
      %5879 = vmatprep.mubr.f32.mxu0 0.0
      %5880 = vmatmul.mubr.f32.gmra.mrb[0].mxu0 %v5742
      %v5881 = vpop.f32.mrb[0].mxu0
      %v5882 = vadd.f32 0.0, %v5881
      %v5883 = vpop.f32.mrb[0].mxu0
      %5884 = vmatprep.mubr.f32.mxu0 0.0
      %5885 = vmatmul.mubr.f32.gmra.mrb[0].mxu0 %v5744
      %v5886 = vpop.f32.mrb[0].mxu0
      %v5887 = vadd.f32 0.0, %v5886
      %v5888 = vpop.f32.mrb[0].mxu0
      %5889 = vdwg.mxu0
      %v5890 = vrcp.pop %v5812
      %v5891 = vrcp.pop %v5817
      %v5892 = vrcp.pop %v5822
      %v5893 = vrcp.pop %v5827
      %v5894 = vrcp.pop %v5832
      %v5895 = vrcp.pop %v5837
      %v5896 = vrcp.pop %v5842
      %v5897 = vrcp.pop %v5847
      %v5898 = vrcp.pop %v5852
      %v5899 = vrcp.pop %v5857
      %v5900 = vrcp.pop %v5862
      %v5901 = vrcp.pop %v5867
      %v5902 = vrcp.pop %v5872
      %v5903 = vrcp.pop %v5877
      %v5904 = vrcp.pop %v5882
      %v5905 = vrcp.pop %v5887
      %v5906 = vmul.f32 %v5812, %v5890
      %v5907 = vmul.f32 %v5817, %v5891
      %v5908 = vmul.f32 %v5822, %v5892
      %v5909 = vmul.f32 %v5827, %v5893
      %v5910 = vmul.f32 %v5832, %v5894
      %v5911 = vmul.f32 %v5837, %v5895
      %v5912 = vmul.f32 %v5842, %v5896
      %v5913 = vmul.f32 %v5847, %v5897
      %v5914 = vmul.f32 %v5852, %v5898
      %v5915 = vmul.f32 %v5857, %v5899
      %v5916 = vmul.f32 %v5862, %v5900
      %v5917 = vmul.f32 %v5867, %v5901
      %v5918 = vmul.f32 %v5872, %v5902
      %v5919 = vmul.f32 %v5877, %v5903
      %v5920 = vmul.f32 %v5882, %v5904
      %v5921 = vmul.f32 %v5887, %v5905
      %v5922 = vsub.f32 2.0, %v5906
      %v5923 = vsub.f32 2.0, %v5907
      %v5924 = vsub.f32 2.0, %v5908
      %v5925 = vsub.f32 2.0, %v5909
      %v5926 = vsub.f32 2.0, %v5910
      %v5927 = vsub.f32 2.0, %v5911
      %v5928 = vsub.f32 2.0, %v5912
      %v5929 = vsub.f32 2.0, %v5913
      %v5930 = vsub.f32 2.0, %v5914
      %v5931 = vsub.f32 2.0, %v5915
      %v5932 = vsub.f32 2.0, %v5916
      %v5933 = vsub.f32 2.0, %v5917
      %v5934 = vsub.f32 2.0, %v5918
      %v5935 = vsub.f32 2.0, %v5919
      %v5936 = vsub.f32 2.0, %v5920
      %v5937 = vsub.f32 2.0, %v5921
      %v5938 = vmul.f32 %v5890, %v5922
      %v5939 = vmul.f32 %v5891, %v5923
      %v5940 = vmul.f32 %v5892, %v5924
      %v5941 = vmul.f32 %v5893, %v5925
      %v5942 = vmul.f32 %v5894, %v5926
      %v5943 = vmul.f32 %v5895, %v5927
      %v5944 = vmul.f32 %v5896, %v5928
      %v5945 = vmul.f32 %v5897, %v5929
      %v5946 = vmul.f32 %v5898, %v5930
      %v5947 = vmul.f32 %v5899, %v5931
      %v5948 = vmul.f32 %v5900, %v5932
      %v5949 = vmul.f32 %v5901, %v5933
      %v5950 = vmul.f32 %v5902, %v5934
      %v5951 = vmul.f32 %v5903, %v5935
      %v5952 = vmul.f32 %v5904, %v5936
      %v5953 = vmul.f32 %v5905, %v5937
      %v5955 = vsel %vm2522, %v5938, 0
      %v5958 = vsel %vm2522, %v5939, 0
      %v5961 = vsel %vm2522, %v5940, 0
      %v5964 = vsel %vm2522, %v5941, 0
      %v5967 = vsel %vm2522, %v5942, 0
      %v5970 = vsel %vm2522, %v5943, 0
      %v5973 = vsel %vm2522, %v5944, 0
      %v5976 = vsel %vm2522, %v5945, 0
      %v5979 = vsel %vm2522, %v5946, 0
      %v5982 = vsel %vm2522, %v5947, 0
      %v5985 = vsel %vm2522, %v5948, 0
      %v5988 = vsel %vm2522, %v5949, 0
      %v5991 = vsel %vm2522, %v5950, 0
      %v5994 = vsel %vm2522, %v5951, 0
      %v5997 = vsel %vm2522, %v5952, 0
      %v6000 = vsel %vm2522, %v5953, 0
      %6002 = vmatprep.subr.mxu0 0.0
      %6003 = vmatpush1.msra.mxu0 %v1265
      %6004 = vmatprep.subr.mxu0 0.0
      %6005 = vmatpush1.msra.mxu0 0.0
      %6006 = vmatprep.subr.mxu0 0.0
      %6007 = vmatpush1.msra.mxu0 0.0
      %6008 = vmatprep.subr.mxu0 0.0
      %6009 = vmatpush1.msra.mxu0 0.0
      %6010 = vmatprep.subr.mxu0 0.0
      %6011 = vmatpush1.msra.mxu0 0.0
      %6012 = vmatprep.subr.mxu0 0.0
      %6013 = vmatpush1.msra.mxu0 0.0
      %6014 = vmatprep.subr.mxu0 0.0
      %6015 = vmatpush1.msra.mxu0 0.0
      %6016 = vmatprep.subr.mxu0 0.0
      %6017 = vmatpush1.msra.mxu0 0.0
      %6018 = vmatprep.subr.mxu0 0.0
      %6019 = vmatpush1.msra.mxu0 0.0
      %6020 = vmatprep.subr.mxu0 0.0
      %6021 = vmatpush1.msra.mxu0 0.0
      %6022 = vmatprep.subr.mxu0 0.0
      %6023 = vmatpush1.msra.mxu0 0.0
      %6024 = vmatprep.subr.mxu0 0.0
      %6025 = vmatpush1.msra.mxu0 0.0
      %6026 = vmatprep.subr.mxu0 0.0
      %6027 = vmatpush1.msra.mxu0 0.0
      %6028 = vmatprep.subr.mxu0 0.0
      %6029 = vmatpush1.msra.mxu0 0.0
      %6030 = vmatprep.subr.mxu0 0.0
      %6031 = vmatpush1.msra.mxu0 0.0
      %6032 = vmatprep.subr.mxu0 0.0
      %6033 = vmatpush1.msra.mxu0 0.0
      %6034 = vmatprep.subr.mxu0 0.0
      %6035 = vmatpush1.msra.mxu0 0.0
      %6036 = vmatprep.subr.mxu0 0.0
      %6037 = vmatpush1.msra.mxu0 0.0
      %6038 = vmatprep.subr.mxu0 0.0
      %6039 = vmatpush1.msra.mxu0 0.0
      %6040 = vmatprep.subr.mxu0 0.0
      %6041 = vmatpush1.msra.mxu0 0.0
      %6042 = vmatprep.subr.mxu0 0.0
      %6043 = vmatpush1.msra.mxu0 0.0
      %6044 = vmatprep.subr.mxu0 0.0
      %6045 = vmatpush1.msra.mxu0 0.0
      %6046 = vmatprep.subr.mxu0 0.0
      %6047 = vmatpush1.msra.mxu0 0.0
      %6048 = vmatprep.subr.mxu0 0.0
      %6049 = vmatpush1.msra.mxu0 0.0
      %6050 = vmatprep.subr.mxu0 0.0
      %6051 = vmatpush1.msra.mxu0 0.0
      %6052 = vmatprep.subr.mxu0 0.0
      %6053 = vmatpush1.msra.mxu0 0.0
      %6054 = vmatprep.subr.mxu0 0.0
      %6055 = vmatpush1.msra.mxu0 0.0
      %6056 = vmatprep.subr.mxu0 0.0
      %6057 = vmatpush1.msra.mxu0 0.0
      %6058 = vmatprep.subr.mxu0 0.0
      %6059 = vmatpush1.msra.mxu0 0.0
      %6060 = vmatprep.subr.mxu0 0.0
      %6061 = vmatpush1.msra.mxu0 0.0
      %6062 = vmatprep.subr.mxu0 0.0
      %6063 = vmatpush1.msra.mxu0 0.0
      %6064 = vmatprep.subr.mxu0 0.0
      %6065 = vmatpush1.msra.mxu0 0.0
      %6066 = vmatprep.mubr.f32.mxu0 0.0
      %6067 = vmatmul.mubr.f32.gmra.mrb[0].mxu0 %v5955
      %v6068 = vpop.f32.mrb[0].mxu0
      %v6069 = vadd.f32 0.0, %v6068
      %v6070 = vpop.f32.mrb[0].mxu0
      %6071 = vmatprep.mubr.f32.mxu0 0.0
      %6072 = vmatmul.mubr.f32.gmra.mrb[0].mxu0 %v5958
      %v6073 = vpop.f32.mrb[0].mxu0
      %v6074 = vadd.f32 0.0, %v6073
      %v6075 = vpop.f32.mrb[0].mxu0
      %6076 = vmatprep.mubr.f32.mxu0 0.0
      %6077 = vmatmul.mubr.f32.gmra.mrb[0].mxu0 %v5961
      %v6078 = vpop.f32.mrb[0].mxu0
      %v6079 = vadd.f32 0.0, %v6078
      %v6080 = vpop.f32.mrb[0].mxu0
      %6081 = vmatprep.mubr.f32.mxu0 0.0
      %6082 = vmatmul.mubr.f32.gmra.mrb[0].mxu0 %v5964
      %v6083 = vpop.f32.mrb[0].mxu0
      %v6084 = vadd.f32 0.0, %v6083
      %v6085 = vpop.f32.mrb[0].mxu0
      %6086 = vmatprep.mubr.f32.mxu0 0.0
      %6087 = vmatmul.mubr.f32.gmra.mrb[0].mxu0 %v5967
      %v6088 = vpop.f32.mrb[0].mxu0
      %v6089 = vadd.f32 0.0, %v6088
      %v6090 = vpop.f32.mrb[0].mxu0
      %6091 = vmatprep.mubr.f32.mxu0 0.0
      %6092 = vmatmul.mubr.f32.gmra.mrb[0].mxu0 %v5970
      %v6093 = vpop.f32.mrb[0].mxu0
      %v6094 = vadd.f32 0.0, %v6093
      %v6095 = vpop.f32.mrb[0].mxu0
      %6096 = vmatprep.mubr.f32.mxu0 0.0
      %6097 = vmatmul.mubr.f32.gmra.mrb[0].mxu0 %v5973
      %v6098 = vpop.f32.mrb[0].mxu0
      %v6099 = vadd.f32 0.0, %v6098
      %v6100 = vpop.f32.mrb[0].mxu0
      %6101 = vmatprep.mubr.f32.mxu0 0.0
      %6102 = vmatmul.mubr.f32.gmra.mrb[0].mxu0 %v5976
      %v6103 = vpop.f32.mrb[0].mxu0
      %v6104 = vadd.f32 0.0, %v6103
      %v6105 = vpop.f32.mrb[0].mxu0
      %6106 = vmatprep.mubr.f32.mxu0 0.0
      %6107 = vmatmul.mubr.f32.gmra.mrb[0].mxu0 %v5979
      %v6108 = vpop.f32.mrb[0].mxu0
      %v6109 = vadd.f32 0.0, %v6108
      %v6110 = vpop.f32.mrb[0].mxu0
      %6111 = vmatprep.mubr.f32.mxu0 0.0
      %6112 = vmatmul.mubr.f32.gmra.mrb[0].mxu0 %v5982
      %v6113 = vpop.f32.mrb[0].mxu0
      %v6114 = vadd.f32 0.0, %v6113
      %v6115 = vpop.f32.mrb[0].mxu0
      %6116 = vmatprep.mubr.f32.mxu0 0.0
      %6117 = vmatmul.mubr.f32.gmra.mrb[0].mxu0 %v5985
      %v6118 = vpop.f32.mrb[0].mxu0
      %v6119 = vadd.f32 0.0, %v6118
      %v6120 = vpop.f32.mrb[0].mxu0
      %6121 = vmatprep.mubr.f32.mxu0 0.0
      %6122 = vmatmul.mubr.f32.gmra.mrb[0].mxu0 %v5988
      %v6123 = vpop.f32.mrb[0].mxu0
      %v6124 = vadd.f32 0.0, %v6123
      %v6125 = vpop.f32.mrb[0].mxu0
      %6126 = vmatprep.mubr.f32.mxu0 0.0
      %6127 = vmatmul.mubr.f32.gmra.mrb[0].mxu0 %v5991
      %v6128 = vpop.f32.mrb[0].mxu0
      %v6129 = vadd.f32 0.0, %v6128
      %v6130 = vpop.f32.mrb[0].mxu0
      %6131 = vmatprep.mubr.f32.mxu0 0.0
      %6132 = vmatmul.mubr.f32.gmra.mrb[0].mxu0 %v5994
      %v6133 = vpop.f32.mrb[0].mxu0
      %v6134 = vadd.f32 0.0, %v6133
      %v6135 = vpop.f32.mrb[0].mxu0
      %6136 = vmatprep.mubr.f32.mxu0 0.0
      %6137 = vmatmul.mubr.f32.gmra.mrb[0].mxu0 %v5997
      %v6138 = vpop.f32.mrb[0].mxu0
      %v6139 = vadd.f32 0.0, %v6138
      %v6140 = vpop.f32.mrb[0].mxu0
      %6141 = vmatprep.mubr.f32.mxu0 0.0
      %6142 = vmatmul.mubr.f32.gmra.mrb[0].mxu0 %v6000
      %v6143 = vpop.f32.mrb[0].mxu0
      %v6144 = vadd.f32 0.0, %v6143
      %v6145 = vpop.f32.mrb[0].mxu0
      %6146 = vdwg.mxu0
      %v6147 = vmul.f32 %v5714, %v6069
      %v6148 = vmul.f32 %v5716, %v6074
      %v6149 = vmul.f32 %v5718, %v6079
      %v6150 = vmul.f32 %v5720, %v6084
      %v6151 = vmul.f32 %v5722, %v6089
      %v6152 = vmul.f32 %v5724, %v6094
      %v6153 = vmul.f32 %v5726, %v6099
      %v6154 = vmul.f32 %v5728, %v6104
      %v6155 = vmul.f32 %v5730, %v6109
      %v6156 = vmul.f32 %v5732, %v6114
      %v6157 = vmul.f32 %v5734, %v6119
      %v6158 = vmul.f32 %v5736, %v6124
      %v6159 = vmul.f32 %v5738, %v6129
      %v6160 = vmul.f32 %v5740, %v6134
      %v6161 = vmul.f32 %v5742, %v6139
      %v6162 = vmul.f32 %v5744, %v6144
      %v6163 = vmul.f32 %v3820, %v2219
      %v6164 = vmul.f32 %v3821, %v2224
      %v6165 = vmul.f32 %v3822, %v2229
      %v6166 = vmul.f32 %v3823, %v2234
      %v6167 = vmul.f32 %v3824, %v2239
      %v6168 = vmul.f32 %v3825, %v2244
      %v6169 = vmul.f32 %v3826, %v2249
      %v6170 = vmul.f32 %v3827, %v2254
      %v6171 = vmul.f32 %v3828, %v2259
      %v6172 = vmul.f32 %v3829, %v2264
      %v6173 = vmul.f32 %v3830, %v2269
      %v6174 = vmul.f32 %v3831, %v2274
      %v6175 = vmul.f32 %v3832, %v2279
      %v6176 = vmul.f32 %v3833, %v2284
      %v6177 = vmul.f32 %v3834, %v2289
      %v6178 = vmul.f32 %v3835, %v2294
      %6179 = vmatprep.subr.mxu0 0.0
      %6180 = vmatpush1.msra.mxu0 %v6163
      %6181 = vmatprep.subr.mxu0 0.0
      %6182 = vmatpush1.msra.mxu0 %v6164
      %6183 = vmatprep.subr.mxu0 0.0
      %6184 = vmatpush1.msra.mxu0 %v6165
      %6185 = vmatprep.subr.mxu0 0.0
      %6186 = vmatpush1.msra.mxu0 %v6166
      %6187 = vmatprep.subr.mxu0 0.0
      %6188 = vmatpush1.msra.mxu0 %v6167
      %6189 = vmatprep.subr.mxu0 0.0
      %6190 = vmatpush1.msra.mxu0 %v6168
      %6191 = vmatprep.subr.mxu0 0.0
      %6192 = vmatpush1.msra.mxu0 %v6169
      %6193 = vmatprep.subr.mxu0 0.0
      %6194 = vmatpush1.msra.mxu0 %v6170
      %6195 = vmatprep.subr.mxu0 0.0
      %6196 = vmatpush1.msra.mxu0 %v6171
      %6197 = vmatprep.subr.mxu0 0.0
      %6198 = vmatpush1.msra.mxu0 %v6172
      %6199 = vmatprep.subr.mxu0 0.0
      %6200 = vmatpush1.msra.mxu0 %v6173
      %6201 = vmatprep.subr.mxu0 0.0
      %6202 = vmatpush1.msra.mxu0 %v6174
      %6203 = vmatprep.subr.mxu0 0.0
      %6204 = vmatpush1.msra.mxu0 %v6175
      %6205 = vmatprep.subr.mxu0 0.0
      %6206 = vmatpush1.msra.mxu0 %v6176
      %6207 = vmatprep.subr.mxu0 0.0
      %6208 = vmatpush1.msra.mxu0 %v6177
      %6209 = vmatprep.subr.mxu0 0.0
      %6210 = vmatpush1.msra.mxu0 %v6178
      %6211 = vmatprep.subr.mxu0 0.0
      %6212 = vmatpush1.msra.mxu0 0.0
      %6213 = vmatprep.subr.mxu0 0.0
      %6214 = vmatpush1.msra.mxu0 0.0
      %6215 = vmatprep.subr.mxu0 0.0
      %6216 = vmatpush1.msra.mxu0 0.0
      %6217 = vmatprep.subr.mxu0 0.0
      %6218 = vmatpush1.msra.mxu0 0.0
      %6219 = vmatprep.subr.mxu0 0.0
      %6220 = vmatpush1.msra.mxu0 0.0
      %6221 = vmatprep.subr.mxu0 0.0
      %6222 = vmatpush1.msra.mxu0 0.0
      %6223 = vmatprep.subr.mxu0 0.0
      %6224 = vmatpush1.msra.mxu0 0.0
      %6225 = vmatprep.subr.mxu0 0.0
      %6226 = vmatpush1.msra.mxu0 0.0
      %6227 = vmatprep.subr.mxu0 0.0
      %6228 = vmatpush1.msra.mxu0 0.0
      %6229 = vmatprep.subr.mxu0 0.0
      %6230 = vmatpush1.msra.mxu0 0.0
      %6231 = vmatprep.subr.mxu0 0.0
      %6232 = vmatpush1.msra.mxu0 0.0
      %6233 = vmatprep.subr.mxu0 0.0
      %6234 = vmatpush1.msra.mxu0 0.0
      %6235 = vmatprep.subr.mxu0 0.0
      %6236 = vmatpush1.msra.mxu0 0.0
      %6237 = vmatprep.subr.mxu0 0.0
      %6238 = vmatpush1.msra.mxu0 0.0
      %6239 = vmatprep.subr.mxu0 0.0
      %6240 = vmatpush1.msra.mxu0 0.0
      %6241 = vmatprep.subr.mxu0 0.0
      %6242 = vmatpush1.msra.mxu0 0.0
      %6243 = vmatprep.mubr.f32.mxu0 0.0
      %6244 = vmatmul.mubr.f32.gmra.mrb[0].mxu0 %v1247
      %v6245 = vpop.f32.mrb[0].mxu0
      %v6246 = vadd.f32 0.0, %v6245
      %v6247 = vpop.f32.mrb[0].mxu0
      %6248 = vmatprep.mubr.f32.mxu0 0.0
      %6249 = vmatmul.mubr.f32.gmra.mrb[0].mxu0 %v1248
      %v6250 = vpop.f32.mrb[0].mxu0
      %v6251 = vadd.f32 0.0, %v6250
      %v6252 = vpop.f32.mrb[0].mxu0
      %6253 = vdwg.mxu0
      %v6254 = vmul.f32 %v4890, %v2219
      %v6255 = vmul.f32 %v4891, %v2224
      %v6256 = vmul.f32 %v4892, %v2229
      %v6257 = vmul.f32 %v4893, %v2234
      %v6258 = vmul.f32 %v4894, %v2239
      %v6259 = vmul.f32 %v4895, %v2244
      %v6260 = vmul.f32 %v4896, %v2249
      %v6261 = vmul.f32 %v4897, %v2254
      %v6262 = vmul.f32 %v4898, %v2259
      %v6263 = vmul.f32 %v4899, %v2264
      %v6264 = vmul.f32 %v4900, %v2269
      %v6265 = vmul.f32 %v4901, %v2274
      %v6266 = vmul.f32 %v4902, %v2279
      %v6267 = vmul.f32 %v4903, %v2284
      %v6268 = vmul.f32 %v4904, %v2289
      %v6269 = vmul.f32 %v4905, %v2294
      %6270 = vmatprep.subr.mxu0 0.0
      %6271 = vmatpush1.msra.mxu0 %v6254
      %6272 = vmatprep.subr.mxu0 0.0
      %6273 = vmatpush1.msra.mxu0 %v6255
      %6274 = vmatprep.subr.mxu0 0.0
      %6275 = vmatpush1.msra.mxu0 %v6256
      %6276 = vmatprep.subr.mxu0 0.0
      %6277 = vmatpush1.msra.mxu0 %v6257
      %6278 = vmatprep.subr.mxu0 0.0
      %6279 = vmatpush1.msra.mxu0 %v6258
      %6280 = vmatprep.subr.mxu0 0.0
      %6281 = vmatpush1.msra.mxu0 %v6259
      %6282 = vmatprep.subr.mxu0 0.0
      %6283 = vmatpush1.msra.mxu0 %v6260
      %6284 = vmatprep.subr.mxu0 0.0
      %6285 = vmatpush1.msra.mxu0 %v6261
      %6286 = vmatprep.subr.mxu0 0.0
      %6287 = vmatpush1.msra.mxu0 %v6262
      %6288 = vmatprep.subr.mxu0 0.0
      %6289 = vmatpush1.msra.mxu0 %v6263
      %6290 = vmatprep.subr.mxu0 0.0
      %6291 = vmatpush1.msra.mxu0 %v6264
      %6292 = vmatprep.subr.mxu0 0.0
      %6293 = vmatpush1.msra.mxu0 %v6265
      %6294 = vmatprep.subr.mxu0 0.0
      %6295 = vmatpush1.msra.mxu0 %v6266
      %6296 = vmatprep.subr.mxu0 0.0
      %6297 = vmatpush1.msra.mxu0 %v6267
      %6298 = vmatprep.subr.mxu0 0.0
      %6299 = vmatpush1.msra.mxu0 %v6268
      %6300 = vmatprep.subr.mxu0 0.0
      %6301 = vmatpush1.msra.mxu0 %v6269
      %6302 = vmatprep.subr.mxu0 0.0
      %6303 = vmatpush1.msra.mxu0 0.0
      %6304 = vmatprep.subr.mxu0 0.0
      %6305 = vmatpush1.msra.mxu0 0.0
      %6306 = vmatprep.subr.mxu0 0.0
      %6307 = vmatpush1.msra.mxu0 0.0
      %6308 = vmatprep.subr.mxu0 0.0
      %6309 = vmatpush1.msra.mxu0 0.0
      %6310 = vmatprep.subr.mxu0 0.0
      %6311 = vmatpush1.msra.mxu0 0.0
      %6312 = vmatprep.subr.mxu0 0.0
      %6313 = vmatpush1.msra.mxu0 0.0
      %6314 = vmatprep.subr.mxu0 0.0
      %6315 = vmatpush1.msra.mxu0 0.0
      %6316 = vmatprep.subr.mxu0 0.0
      %6317 = vmatpush1.msra.mxu0 0.0
      %6318 = vmatprep.subr.mxu0 0.0
      %6319 = vmatpush1.msra.mxu0 0.0
      %6320 = vmatprep.subr.mxu0 0.0
      %6321 = vmatpush1.msra.mxu0 0.0
      %6322 = vmatprep.subr.mxu0 0.0
      %6323 = vmatpush1.msra.mxu0 0.0
      %6324 = vmatprep.subr.mxu0 0.0
      %6325 = vmatpush1.msra.mxu0 0.0
      %6326 = vmatprep.subr.mxu0 0.0
      %6327 = vmatpush1.msra.mxu0 0.0
      %6328 = vmatprep.subr.mxu0 0.0
      %6329 = vmatpush1.msra.mxu0 0.0
      %6330 = vmatprep.subr.mxu0 0.0
      %6331 = vmatpush1.msra.mxu0 0.0
      %6332 = vmatprep.subr.mxu0 0.0
      %6333 = vmatpush1.msra.mxu0 0.0
      %6334 = vmatprep.mubr.f32.mxu0 0.0
      %6335 = vmatmul.mubr.f32.gmra.mrb[0].mxu0 %v1247
      %v6336 = vpop.f32.mrb[0].mxu0
      %v6337 = vadd.f32 0.0, %v6336
      %v6338 = vpop.f32.mrb[0].mxu0
      %6339 = vmatprep.mubr.f32.mxu0 0.0
      %6340 = vmatmul.mubr.f32.gmra.mrb[0].mxu0 %v1248
      %v6341 = vpop.f32.mrb[0].mxu0
      %v6342 = vadd.f32 0.0, %v6341
      %v6343 = vpop.f32.mrb[0].mxu0
      %6344 = vdwg.mxu0
      %v6345 = vmul.f32 %v6147, %v2219
      %v6346 = vmul.f32 %v6148, %v2224
      %v6347 = vmul.f32 %v6149, %v2229
      %v6348 = vmul.f32 %v6150, %v2234
      %v6349 = vmul.f32 %v6151, %v2239
      %v6350 = vmul.f32 %v6152, %v2244
      %v6351 = vmul.f32 %v6153, %v2249
      %v6352 = vmul.f32 %v6154, %v2254
      %v6353 = vmul.f32 %v6155, %v2259
      %v6354 = vmul.f32 %v6156, %v2264
      %v6355 = vmul.f32 %v6157, %v2269
      %v6356 = vmul.f32 %v6158, %v2274
      %v6357 = vmul.f32 %v6159, %v2279
      %v6358 = vmul.f32 %v6160, %v2284
      %v6359 = vmul.f32 %v6161, %v2289
      %v6360 = vmul.f32 %v6162, %v2294
      %6361 = vmatprep.subr.mxu0 0.0
      %6362 = vmatpush1.msra.mxu0 %v6345
      %6363 = vmatprep.subr.mxu0 0.0
      %6364 = vmatpush1.msra.mxu0 %v6346
      %6365 = vmatprep.subr.mxu0 0.0
      %6366 = vmatpush1.msra.mxu0 %v6347
      %6367 = vmatprep.subr.mxu0 0.0
      %6368 = vmatpush1.msra.mxu0 %v6348
      %6369 = vmatprep.subr.mxu0 0.0
      %6370 = vmatpush1.msra.mxu0 %v6349
      %6371 = vmatprep.subr.mxu0 0.0
      %6372 = vmatpush1.msra.mxu0 %v6350
      %6373 = vmatprep.subr.mxu0 0.0
      %6374 = vmatpush1.msra.mxu0 %v6351
      %6375 = vmatprep.subr.mxu0 0.0
      %6376 = vmatpush1.msra.mxu0 %v6352
      %6377 = vmatprep.subr.mxu0 0.0
      %6378 = vmatpush1.msra.mxu0 %v6353
      %6379 = vmatprep.subr.mxu0 0.0
      %6380 = vmatpush1.msra.mxu0 %v6354
      %6381 = vmatprep.subr.mxu0 0.0
      %6382 = vmatpush1.msra.mxu0 %v6355
      %6383 = vmatprep.subr.mxu0 0.0
      %6384 = vmatpush1.msra.mxu0 %v6356
      %6385 = vmatprep.subr.mxu0 0.0
      %6386 = vmatpush1.msra.mxu0 %v6357
      %6387 = vmatprep.subr.mxu0 0.0
      %6388 = vmatpush1.msra.mxu0 %v6358
      %6389 = vmatprep.subr.mxu0 0.0
      %6390 = vmatpush1.msra.mxu0 %v6359
      %6391 = vmatprep.subr.mxu0 0.0
      %6392 = vmatpush1.msra.mxu0 %v6360
      %6393 = vmatprep.subr.mxu0 0.0
      %6394 = vmatpush1.msra.mxu0 0.0
      %6395 = vmatprep.subr.mxu0 0.0
      %6396 = vmatpush1.msra.mxu0 0.0
      %6397 = vmatprep.subr.mxu0 0.0
      %6398 = vmatpush1.msra.mxu0 0.0
      %6399 = vmatprep.subr.mxu0 0.0
      %6400 = vmatpush1.msra.mxu0 0.0
      %6401 = vmatprep.subr.mxu0 0.0
      %6402 = vmatpush1.msra.mxu0 0.0
      %6403 = vmatprep.subr.mxu0 0.0
      %6404 = vmatpush1.msra.mxu0 0.0
      %6405 = vmatprep.subr.mxu0 0.0
      %6406 = vmatpush1.msra.mxu0 0.0
      %6407 = vmatprep.subr.mxu0 0.0
      %6408 = vmatpush1.msra.mxu0 0.0
      %6409 = vmatprep.subr.mxu0 0.0
      %6410 = vmatpush1.msra.mxu0 0.0
      %6411 = vmatprep.subr.mxu0 0.0
      %6412 = vmatpush1.msra.mxu0 0.0
      %6413 = vmatprep.subr.mxu0 0.0
      %6414 = vmatpush1.msra.mxu0 0.0
      %6415 = vmatprep.subr.mxu0 0.0
      %6416 = vmatpush1.msra.mxu0 0.0
      %6417 = vmatprep.subr.mxu0 0.0
      %6418 = vmatpush1.msra.mxu0 0.0
      %6419 = vmatprep.subr.mxu0 0.0
      %6420 = vmatpush1.msra.mxu0 0.0
      %6421 = vmatprep.subr.mxu0 0.0
      %6422 = vmatpush1.msra.mxu0 0.0
      %6423 = vmatprep.subr.mxu0 0.0
      %6424 = vmatpush1.msra.mxu0 0.0
      %6425 = vmatprep.mubr.f32.mxu0 0.0
      %6426 = vmatmul.mubr.f32.gmra.mrb[0].mxu0 %v1247
      %v6427 = vpop.f32.mrb[0].mxu0
      %v6428 = vadd.f32 0.0, %v6427
      %v6429 = vpop.f32.mrb[0].mxu0
      %6430 = vmatprep.mubr.f32.mxu0 0.0
      %6431 = vmatmul.mubr.f32.gmra.mrb[0].mxu0 %v1248
      %v6432 = vpop.f32.mrb[0].mxu0
      %v6433 = vadd.f32 0.0, %v6432
      %v6434 = vpop.f32.mrb[0].mxu0
      %6435 = vdwg.mxu0
      %v6436 = vld [vmem:[%s1179] sm:$0x1]
      %v6437 = vadd.f32 %v6246, %v6337
      %v6438 = vadd.f32 %v6251, %v6342
      %v6439 = vadd.f32 %v6437, %v6428
      %v6440 = vadd.f32 %v6438, %v6433
      %v6441 = vadd.f32 %v6439, %v6440
      %v6442 = vrot.slane %v6441, 4
      %v6443 = vadd.f32 %v6441, %v6442
      %v6444 = vrot.slane %v6443, 2
      %v6445 = vadd.f32 %v6443, %v6444
      %v6446 = vrot.slane %v6445, 1
      %v6447 = vadd.f32 %v6445, %v6446
      %6448 = vmatprep.subr.mxu0 0.0
      %6449 = vmatpush1.msra.mxu0 %v1266
      %6450 = vmatprep.subr.mxu0 0.0
      %6451 = vmatpush1.msra.mxu0 %v1267
      %6452 = vmatprep.subr.mxu0 0.0
      %6453 = vmatpush1.msra.mxu0 %v1268
      %6454 = vmatprep.subr.mxu0 0.0
      %6455 = vmatpush1.msra.mxu0 %v1269
      %6456 = vmatprep.subr.mxu0 0.0
      %6457 = vmatpush1.msra.mxu0 %v1270
      %6458 = vmatprep.subr.mxu0 0.0
      %6459 = vmatpush1.msra.mxu0 %v1271
      %6460 = vmatprep.subr.mxu0 0.0
      %6461 = vmatpush1.msra.mxu0 %v1272
      %6462 = vmatprep.subr.mxu0 0.0
      %6463 = vmatpush1.msra.mxu0 %v1273
      %6464 = vmatprep.subr.mxu0 0.0
      %6465 = vmatpush1.msra.mxu0 %v1274
      %6466 = vmatprep.subr.mxu0 0.0
      %6467 = vmatpush1.msra.mxu0 %v1275
      %6468 = vmatprep.subr.mxu0 0.0
      %6469 = vmatpush1.msra.mxu0 %v1276
      %6470 = vmatprep.subr.mxu0 0.0
      %6471 = vmatpush1.msra.mxu0 %v1277
      %6472 = vmatprep.subr.mxu0 0.0
      %6473 = vmatpush1.msra.mxu0 %v1278
      %6474 = vmatprep.subr.mxu0 0.0
      %6475 = vmatpush1.msra.mxu0 %v1279
      %6476 = vmatprep.subr.mxu0 0.0
      %6477 = vmatpush1.msra.mxu0 %v1280
      %6478 = vmatprep.subr.mxu0 0.0
      %6479 = vmatpush1.msra.mxu0 %v1281
      %6480 = vmatprep.subr.mxu0 0.0
      %6481 = vmatpush1.msra.mxu0 0.0
      %6482 = vmatprep.subr.mxu0 0.0
      %6483 = vmatpush1.msra.mxu0 0.0
      %6484 = vmatprep.subr.mxu0 0.0
      %6485 = vmatpush1.msra.mxu0 0.0
      %6486 = vmatprep.subr.mxu0 0.0
      %6487 = vmatpush1.msra.mxu0 0.0
      %6488 = vmatprep.subr.mxu0 0.0
      %6489 = vmatpush1.msra.mxu0 0.0
      %6490 = vmatprep.subr.mxu0 0.0
      %6491 = vmatpush1.msra.mxu0 0.0
      %6492 = vmatprep.subr.mxu0 0.0
      %6493 = vmatpush1.msra.mxu0 0.0
      %6494 = vmatprep.subr.mxu0 0.0
      %6495 = vmatpush1.msra.mxu0 0.0
      %6496 = vmatprep.subr.mxu0 0.0
      %6497 = vmatpush1.msra.mxu0 0.0
      %6498 = vmatprep.subr.mxu0 0.0
      %6499 = vmatpush1.msra.mxu0 0.0
      %6500 = vmatprep.subr.mxu0 0.0
      %6501 = vmatpush1.msra.mxu0 0.0
      %6502 = vmatprep.subr.mxu0 0.0
      %6503 = vmatpush1.msra.mxu0 0.0
      %6504 = vmatprep.subr.mxu0 0.0
      %6505 = vmatpush1.msra.mxu0 0.0
      %6506 = vmatprep.subr.mxu0 0.0
      %6507 = vmatpush1.msra.mxu0 0.0
      %6508 = vmatprep.subr.mxu0 0.0
      %6509 = vmatpush1.msra.mxu0 0.0
      %6510 = vmatprep.subr.mxu0 0.0
      %6511 = vmatpush1.msra.mxu0 0.0
      %6512 = vmatprep.mubr.f32.mxu0 0.0
      %6513 = vmatmul.mubr.f32.gmra.mrb[0].mxu0 %v6447
      %v6514 = vpop.f32.mrb[0].mxu0
      %v6515 = vadd.f32 0.0, %v6514
      %v6516 = vpop.f32.mrb[0].mxu0
      %6517 = vdwg.mxu0
      %v6518 = vmul.f32 %v6515, 0.0026041667
      %v6519 = vmul.f32 %v6246, %v6246
      %v6520 = vmul.f32 %v6251, %v6251
      %v6521 = vmul.f32 %v6337, %v6337
      %v6522 = vmul.f32 %v6342, %v6342
      %v6523 = vadd.f32 %v6519, %v6521
      %v6524 = vadd.f32 %v6520, %v6522
      %v6525 = vmul.f32 %v6428, %v6428
      %v6526 = vmul.f32 %v6433, %v6433
      %v6527 = vadd.f32 %v6523, %v6525
      %v6528 = vadd.f32 %v6524, %v6526
      %v6529 = vadd.f32 %v6527, %v6528
      %v6530 = vrot.slane %v6529, 4
      %v6531 = vadd.f32 %v6529, %v6530
      %v6532 = vrot.slane %v6531, 2
      %v6533 = vadd.f32 %v6531, %v6532
      %v6534 = vrot.slane %v6533, 1
      %v6535 = vadd.f32 %v6533, %v6534
      %6536 = vmatprep.subr.mxu0 0.0
      %6537 = vmatpush1.msra.mxu0 %v1266
      %6538 = vmatprep.subr.mxu0 0.0
      %6539 = vmatpush1.msra.mxu0 %v1267
      %6540 = vmatprep.subr.mxu0 0.0
      %6541 = vmatpush1.msra.mxu0 %v1268
      %6542 = vmatprep.subr.mxu0 0.0
      %6543 = vmatpush1.msra.mxu0 %v1269
      %6544 = vmatprep.subr.mxu0 0.0
      %6545 = vmatpush1.msra.mxu0 %v1270
      %6546 = vmatprep.subr.mxu0 0.0
      %6547 = vmatpush1.msra.mxu0 %v1271
      %6548 = vmatprep.subr.mxu0 0.0
      %6549 = vmatpush1.msra.mxu0 %v1272
      %6550 = vmatprep.subr.mxu0 0.0
      %6551 = vmatpush1.msra.mxu0 %v1273
      %6552 = vmatprep.subr.mxu0 0.0
      %6553 = vmatpush1.msra.mxu0 %v1274
      %6554 = vmatprep.subr.mxu0 0.0
      %6555 = vmatpush1.msra.mxu0 %v1275
      %6556 = vmatprep.subr.mxu0 0.0
      %6557 = vmatpush1.msra.mxu0 %v1276
      %6558 = vmatprep.subr.mxu0 0.0
      %6559 = vmatpush1.msra.mxu0 %v1277
      %6560 = vmatprep.subr.mxu0 0.0
      %6561 = vmatpush1.msra.mxu0 %v1278
      %6562 = vmatprep.subr.mxu0 0.0
      %6563 = vmatpush1.msra.mxu0 %v1279
      %6564 = vmatprep.subr.mxu0 0.0
      %6565 = vmatpush1.msra.mxu0 %v1280
      %6566 = vmatprep.subr.mxu0 0.0
      %6567 = vmatpush1.msra.mxu0 %v1281
      %6568 = vmatprep.subr.mxu0 0.0
      %6569 = vmatpush1.msra.mxu0 0.0
      %6570 = vmatprep.subr.mxu0 0.0
      %6571 = vmatpush1.msra.mxu0 0.0
      %6572 = vmatprep.subr.mxu0 0.0
      %6573 = vmatpush1.msra.mxu0 0.0
      %6574 = vmatprep.subr.mxu0 0.0
      %6575 = vmatpush1.msra.mxu0 0.0
      %6576 = vmatprep.subr.mxu0 0.0
      %6577 = vmatpush1.msra.mxu0 0.0
      %6578 = vmatprep.subr.mxu0 0.0
      %6579 = vmatpush1.msra.mxu0 0.0
      %6580 = vmatprep.subr.mxu0 0.0
      %6581 = vmatpush1.msra.mxu0 0.0
      %6582 = vmatprep.subr.mxu0 0.0
      %6583 = vmatpush1.msra.mxu0 0.0
      %6584 = vmatprep.subr.mxu0 0.0
      %6585 = vmatpush1.msra.mxu0 0.0
      %6586 = vmatprep.subr.mxu0 0.0
      %6587 = vmatpush1.msra.mxu0 0.0
      %6588 = vmatprep.subr.mxu0 0.0
      %6589 = vmatpush1.msra.mxu0 0.0
      %6590 = vmatprep.subr.mxu0 0.0
      %6591 = vmatpush1.msra.mxu0 0.0
      %6592 = vmatprep.subr.mxu0 0.0
      %6593 = vmatpush1.msra.mxu0 0.0
      %6594 = vmatprep.subr.mxu0 0.0
      %6595 = vmatpush1.msra.mxu0 0.0
      %6596 = vmatprep.subr.mxu0 0.0
      %6597 = vmatpush1.msra.mxu0 0.0
      %6598 = vmatprep.subr.mxu0 0.0
      %6599 = vmatpush1.msra.mxu0 0.0
      %6600 = vmatprep.mubr.f32.mxu0 0.0
      %6601 = vmatmul.mubr.f32.gmra.mrb[0].mxu0 %v6535
      %v6602 = vpop.f32.mrb[0].mxu0
      %v6603 = vadd.f32 0.0, %v6602
      %v6604 = vpop.f32.mrb[0].mxu0
      %6605 = vdwg.mxu0
      %v6606 = vmul.f32 %v6603, 0.0026041667
      %v6607 = vmul.f32 %v6518, %v6518
      %v6608 = vsub.f32 %v6606, %v6607
      %v6609 = vadd.f32 %v6608, 1e-05
      %v6610 = vrsqrt.pop %v6609
      %v6612 = vsel %vm1775, %v6518, 0
      %6614 = vmatprep.subr.mxu0 0.0
      %6615 = vmatpush1.msra.mxu0 %v1282
      %6616 = vmatprep.subr.mxu0 0.0
      %6617 = vmatpush1.msra.mxu0 %v1283
      %6618 = vmatprep.subr.mxu0 0.0
      %6619 = vmatpush1.msra.mxu0 0.0
      %6620 = vmatprep.subr.mxu0 0.0
      %6621 = vmatpush1.msra.mxu0 0.0
      %6622 = vmatprep.subr.mxu0 0.0
      %6623 = vmatpush1.msra.mxu0 0.0
      %6624 = vmatprep.subr.mxu0 0.0
      %6625 = vmatpush1.msra.mxu0 0.0
      %6626 = vmatprep.subr.mxu0 0.0
      %6627 = vmatpush1.msra.mxu0 0.0
      %6628 = vmatprep.subr.mxu0 0.0
      %6629 = vmatpush1.msra.mxu0 0.0
      %6630 = vmatprep.subr.mxu0 0.0
      %6631 = vmatpush1.msra.mxu0 0.0
      %6632 = vmatprep.subr.mxu0 0.0
      %6633 = vmatpush1.msra.mxu0 0.0
      %6634 = vmatprep.subr.mxu0 0.0
      %6635 = vmatpush1.msra.mxu0 0.0
      %6636 = vmatprep.subr.mxu0 0.0
      %6637 = vmatpush1.msra.mxu0 0.0
      %6638 = vmatprep.subr.mxu0 0.0
      %6639 = vmatpush1.msra.mxu0 0.0
      %6640 = vmatprep.subr.mxu0 0.0
      %6641 = vmatpush1.msra.mxu0 0.0
      %6642 = vmatprep.subr.mxu0 0.0
      %6643 = vmatpush1.msra.mxu0 0.0
      %6644 = vmatprep.subr.mxu0 0.0
      %6645 = vmatpush1.msra.mxu0 0.0
      %6646 = vmatprep.subr.mxu0 0.0
      %6647 = vmatpush1.msra.mxu0 0.0
      %6648 = vmatprep.subr.mxu0 0.0
      %6649 = vmatpush1.msra.mxu0 0.0
      %6650 = vmatprep.subr.mxu0 0.0
      %6651 = vmatpush1.msra.mxu0 0.0
      %6652 = vmatprep.subr.mxu0 0.0
      %6653 = vmatpush1.msra.mxu0 0.0
      %6654 = vmatprep.subr.mxu0 0.0
      %6655 = vmatpush1.msra.mxu0 0.0
      %6656 = vmatprep.subr.mxu0 0.0
      %6657 = vmatpush1.msra.mxu0 0.0
      %6658 = vmatprep.subr.mxu0 0.0
      %6659 = vmatpush1.msra.mxu0 0.0
      %6660 = vmatprep.subr.mxu0 0.0
      %6661 = vmatpush1.msra.mxu0 0.0
      %6662 = vmatprep.subr.mxu0 0.0
      %6663 = vmatpush1.msra.mxu0 0.0
      %6664 = vmatprep.subr.mxu0 0.0
      %6665 = vmatpush1.msra.mxu0 0.0
      %6666 = vmatprep.subr.mxu0 0.0
      %6667 = vmatpush1.msra.mxu0 0.0
      %6668 = vmatprep.subr.mxu0 0.0
      %6669 = vmatpush1.msra.mxu0 0.0
      %6670 = vmatprep.subr.mxu0 0.0
      %6671 = vmatpush1.msra.mxu0 0.0
      %6672 = vmatprep.subr.mxu0 0.0
      %6673 = vmatpush1.msra.mxu0 0.0
      %6674 = vmatprep.subr.mxu0 0.0
      %6675 = vmatpush1.msra.mxu0 0.0
      %6676 = vmatprep.subr.mxu0 0.0
      %6677 = vmatpush1.msra.mxu0 0.0
      %6678 = vmatprep.mubr.f32.mxu0 0.0
      %6679 = vmatmul.mubr.f32.gmra.mrb[0].mxu0 %v6612
      %v6680 = vpop.f32.mrb[0].mxu0
      %v6681 = vadd.f32 0.0, %v6680
      %v6682 = vpop.f32.mrb[0].mxu0
      %6683 = vdwg.mxu0
      %v6685 = vsel %vm1775, %v6610, 0
      %6687 = vmatprep.subr.mxu0 0.0
      %6688 = vmatpush1.msra.mxu0 %v1282
      %6689 = vmatprep.subr.mxu0 0.0
      %6690 = vmatpush1.msra.mxu0 %v1283
      %6691 = vmatprep.subr.mxu0 0.0
      %6692 = vmatpush1.msra.mxu0 0.0
      %6693 = vmatprep.subr.mxu0 0.0
      %6694 = vmatpush1.msra.mxu0 0.0
      %6695 = vmatprep.subr.mxu0 0.0
      %6696 = vmatpush1.msra.mxu0 0.0
      %6697 = vmatprep.subr.mxu0 0.0
      %6698 = vmatpush1.msra.mxu0 0.0
      %6699 = vmatprep.subr.mxu0 0.0
      %6700 = vmatpush1.msra.mxu0 0.0
      %6701 = vmatprep.subr.mxu0 0.0
      %6702 = vmatpush1.msra.mxu0 0.0
      %6703 = vmatprep.subr.mxu0 0.0
      %6704 = vmatpush1.msra.mxu0 0.0
      %6705 = vmatprep.subr.mxu0 0.0
      %6706 = vmatpush1.msra.mxu0 0.0
      %6707 = vmatprep.subr.mxu0 0.0
      %6708 = vmatpush1.msra.mxu0 0.0
      %6709 = vmatprep.subr.mxu0 0.0
      %6710 = vmatpush1.msra.mxu0 0.0
      %6711 = vmatprep.subr.mxu0 0.0
      %6712 = vmatpush1.msra.mxu0 0.0
      %6713 = vmatprep.subr.mxu0 0.0
      %6714 = vmatpush1.msra.mxu0 0.0
      %6715 = vmatprep.subr.mxu0 0.0
      %6716 = vmatpush1.msra.mxu0 0.0
      %6717 = vmatprep.subr.mxu0 0.0
      %6718 = vmatpush1.msra.mxu0 0.0
      %6719 = vmatprep.subr.mxu0 0.0
      %6720 = vmatpush1.msra.mxu0 0.0
      %6721 = vmatprep.subr.mxu0 0.0
      %6722 = vmatpush1.msra.mxu0 0.0
      %6723 = vmatprep.subr.mxu0 0.0
      %6724 = vmatpush1.msra.mxu0 0.0
      %6725 = vmatprep.subr.mxu0 0.0
      %6726 = vmatpush1.msra.mxu0 0.0
      %6727 = vmatprep.subr.mxu0 0.0
      %6728 = vmatpush1.msra.mxu0 0.0
      %6729 = vmatprep.subr.mxu0 0.0
      %6730 = vmatpush1.msra.mxu0 0.0
      %6731 = vmatprep.subr.mxu0 0.0
      %6732 = vmatpush1.msra.mxu0 0.0
      %6733 = vmatprep.subr.mxu0 0.0
      %6734 = vmatpush1.msra.mxu0 0.0
      %6735 = vmatprep.subr.mxu0 0.0
      %6736 = vmatpush1.msra.mxu0 0.0
      %6737 = vmatprep.subr.mxu0 0.0
      %6738 = vmatpush1.msra.mxu0 0.0
      %6739 = vmatprep.subr.mxu0 0.0
      %6740 = vmatpush1.msra.mxu0 0.0
      %6741 = vmatprep.subr.mxu0 0.0
      %6742 = vmatpush1.msra.mxu0 0.0
      %6743 = vmatprep.subr.mxu0 0.0
      %6744 = vmatpush1.msra.mxu0 0.0
      %6745 = vmatprep.subr.mxu0 0.0
      %6746 = vmatpush1.msra.mxu0 0.0
      %6747 = vmatprep.subr.mxu0 0.0
      %6748 = vmatpush1.msra.mxu0 0.0
      %6749 = vmatprep.subr.mxu0 0.0
      %6750 = vmatpush1.msra.mxu0 0.0
      %6751 = vmatprep.mubr.f32.mxu0 0.0
      %6752 = vmatmul.mubr.f32.gmra.mrb[0].mxu0 %v6685
      %v6753 = vpop.f32.mrb[0].mxu0
      %v6754 = vadd.f32 0.0, %v6753
      %v6755 = vpop.f32.mrb[0].mxu0
      %6756 = vdwg.mxu0
      %v6758 = vlaneseq
      %v6759 = vshrl.u32 %v6758, 7
      %v6760 = vsub.s32 0, %v6759
      %v6761 = vrot.slane %v6436, %v6760
      %6762 = vset.pattern.permute.xlu0 0
      %6763 = vperm.xlu0 %6762, %v6761
      %v6764 = vpop.permute.xlu0 %6763
      %v6766 = vmul.f32 %v6764, %v6246
      %v6767 = vmul.f32 %v6764, %v6251
      %6768 = vset.pattern.permute.xlu0 1
      %6769 = vperm.xlu0 %6768, %v6761
      %v6770 = vpop.permute.xlu0 %6769
      %v6772 = vmul.f32 %v6770, %v6337
      %v6773 = vmul.f32 %v6770, %v6342
      %v6774 = vadd.f32 %v6766, %v6772
      %v6775 = vadd.f32 %v6767, %v6773
      %6776 = vset.pattern.permute.xlu0 2
      %6777 = vperm.xlu0 %6776, %v6761
      %v6778 = vpop.permute.xlu0 %6777
      %v6780 = vmul.f32 %v6778, %v6428
      %v6781 = vmul.f32 %v6778, %v6433
      %v6782 = vadd.f32 %v6774, %v6780
      %v6783 = vadd.f32 %v6775, %v6781
      %v6784 = vlaneseq
      %v6785 = vshrl.u32 %v6784, 7
      %v6786 = vsub.s32 0, %v6785
      %v6787 = vrot.slane %v6754, %v6786
      %v6788 = vmul.f32 %v6787, %v6782
      %v6789 = vmul.f32 %v6787, %v6783
      %v6790 = vmul.f32 %v6754, %v6681
      %6791 = vrot.lane.b32.xlu0 %v6436, 127
      %v6792 = vpop.permute.xlu0 %6791
      %v6794 = vadd.f32 %v6436, %v6792
      %6795 = vrot.lane.b32.xlu0 %v6436, 126
      %v6796 = vpop.permute.xlu0 %6795
      %v6798 = vadd.f32 %v6794, %v6796
      %6800 = vset.pattern.permute.xlu0 0
      %6801 = vperm.xlu0 %6800, %v6798
      %v6802 = vpop.permute.xlu0 %6801
      %v6804 = vlaneseq
      %v6805 = vshrl.u32 %v6804, 7
      %v6806 = vsub.s32 0, %v6805
      %v6807 = vrot.slane %v6802, %v6806
      %v6808 = vmul.f32 %v6790, %v6807
      %6809 = vset.pattern.permute.xlu0 3
      %6810 = vperm.xlu0 %6809, %v6436
      %v6811 = vpop.permute.xlu0 %6810
      %v6813 = vlaneseq
      %v6814 = vshrl.u32 %v6813, 7
      %v6815 = vsub.s32 0, %v6814
      %v6816 = vrot.slane %v6811, %v6815
      %v6817 = vsub.f32 %v6816, %v6808
      %v6818 = vlaneseq
      %v6819 = vshrl.u32 %v6818, 7
      %v6820 = vsub.s32 0, %v6819
      %v6821 = vrot.slane %v6817, %v6820
      %v6822 = vadd.f32 %v6788, %v6821
      %v6823 = vadd.f32 %v6789, %v6821
      %v6824 = vmax.f32 %v6822, 0.0
      %v6825 = vmax.f32 %v6823, 0.0
      %6826 = vst [vmem:[%s1197] sm:$0xff] %v6824
      %6827 = vst [vmem:[%s1197 + $0x8] sm:$0xff] %v6825
      %v6828 = vld [vmem:[%s1188] sm:$0x1f]
      %v6829 = vadd.f32 %v6824, %v6825
      %v6830 = vrot.slane %v6829, 4
      %v6831 = vadd.f32 %v6829, %v6830
      %v6832 = vrot.slane %v6831, 2
      %v6833 = vadd.f32 %v6831, %v6832
      %v6834 = vrot.slane %v6833, 1
      %v6835 = vadd.f32 %v6833, %v6834
      %v6836 = vmul.f32 %v6835, 0.0625
      %v6837 = vsub.f32 %v6824, %v6836
      %v6838 = vsub.f32 %v6825, %v6836
      %v6839 = vmul.f32 %v6837, %v6837
      %v6840 = vmul.f32 %v6838, %v6838
      %v6841 = vadd.f32 %v6839, %v6840
      %v6842 = vrot.slane %v6841, 4
      %v6843 = vadd.f32 %v6841, %v6842
      %v6844 = vrot.slane %v6843, 2
      %v6845 = vadd.f32 %v6843, %v6844
      %v6846 = vrot.slane %v6845, 1
      %v6847 = vadd.f32 %v6845, %v6846
      %v6848 = vmul.f32 %v6847, 0.0625
      %v6849 = vadd.f32 %v6848, 1e-05
      %v6850 = vrsqrt.pop %v6849
      %v6851 = vmul.f32 %v6837, %v6850
      %v6852 = vmul.f32 %v6838, %v6850
      %v6853 = vld [vmem:[%s1184] sm:$0xff]
      %v6854 = vld [vmem:[%s1184 + $0x8] sm:$0xff]
      %v6855 = vld [vmem:[%s1184 + $0x10] sm:$0xff]
      %v6856 = vld [vmem:[%s1184 + $0x18] sm:$0xff]
      %v6857 = vld [vmem:[%s1184 + $0x20] sm:$0xff]
      %v6858 = vld [vmem:[%s1184 + $0x28] sm:$0xff]
      %v6859 = vld [vmem:[%s1184 + $0x30] sm:$0xff]
      %v6860 = vld [vmem:[%s1184 + $0x38] sm:$0xff]
      %v6861 = vld [vmem:[%s1184 + $0x40] sm:$0xff]
      %v6862 = vld [vmem:[%s1184 + $0x48] sm:$0xff]
      %v6863 = vld [vmem:[%s1184 + $0x50] sm:$0xff]
      %v6864 = vld [vmem:[%s1184 + $0x58] sm:$0xff]
      %v6865 = vld [vmem:[%s1184 + $0x60] sm:$0xff]
      %v6866 = vld [vmem:[%s1184 + $0x68] sm:$0xff]
      %v6867 = vld [vmem:[%s1184 + $0x70] sm:$0xff]
      %v6868 = vld [vmem:[%s1184 + $0x78] sm:$0xff]
      %vm6869 = vcmask 31744
      %v6870 = vsel %vm6869, %v1221, 0.0
      %v6871 = vsel %vm6869, %v1222, 0.0
      %v6872 = vadd.f32 %v6870, %v6871
      %v6873 = vrot.slane %v6872, 4
      %v6874 = vadd.f32 %v6872, %v6873
      %v6875 = vrot.slane %v6874, 2
      %v6876 = vadd.f32 %v6874, %v6875
      %v6877 = vrot.slane %v6876, 1
      %v6878 = vadd.f32 %v6876, %v6877
      %v6879 = vmul.f32 %v6878, 0.0625
      %v6880 = vsub.f32 %v1221, %v6879
      %v6881 = vsub.f32 %v1222, %v6879
      %v6882 = vmul.f32 %v6880, %v6880
      %v6883 = vmul.f32 %v6881, %v6881
      %v6884 = vsel %vm6869, %v6882, 0.0
      %v6885 = vsel %vm6869, %v6883, 0.0
      %v6886 = vadd.f32 %v6884, %v6885
      %v6887 = vrot.slane %v6886, 4
      %v6888 = vadd.f32 %v6886, %v6887
      %v6889 = vrot.slane %v6888, 2
      %v6890 = vadd.f32 %v6888, %v6889
      %v6891 = vrot.slane %v6890, 1
      %v6892 = vadd.f32 %v6890, %v6891
      %v6893 = vmul.f32 %v6892, 0.0625
      %v6894 = vadd.f32 %v6893, 1e-05
      %v6895 = vrsqrt.pop %v6894
      %v6896 = vmul.f32 %v6880, %v6895
      %v6897 = vmul.f32 %v6881, %v6895
      %v6899 = vsel %vm6869, %v6896, 0
      %v6902 = vsel %vm6869, %v6897, 0
      %vm6904 = vcmask 1043456
      %v6906 = vsel %vm6904, %v6828, 0
      %6908 = vmatprep.subr.mxu0 0.0
      %6909 = vmatpush1.msra.mxu0 %v6906
      %6910 = vmatprep.subr.mxu0 0.0
      %6911 = vmatpush1.msra.mxu0 0.0
      %6912 = vmatprep.subr.mxu0 0.0
      %6913 = vmatpush1.msra.mxu0 0.0
      %6914 = vmatprep.subr.mxu0 0.0
      %6915 = vmatpush1.msra.mxu0 0.0
      %6916 = vmatprep.subr.mxu0 0.0
      %6917 = vmatpush1.msra.mxu0 0.0
      %6918 = vmatprep.subr.mxu0 0.0
      %6919 = vmatpush1.msra.mxu0 0.0
      %6920 = vmatprep.subr.mxu0 0.0
      %6921 = vmatpush1.msra.mxu0 0.0
      %6922 = vmatprep.subr.mxu0 0.0
      %6923 = vmatpush1.msra.mxu0 0.0
      %6924 = vmatprep.subr.mxu0 0.0
      %6925 = vmatpush1.msra.mxu0 0.0
      %6926 = vmatprep.subr.mxu0 0.0
      %6927 = vmatpush1.msra.mxu0 0.0
      %6928 = vmatprep.subr.mxu0 0.0
      %6929 = vmatpush1.msra.mxu0 0.0
      %6930 = vmatprep.subr.mxu0 0.0
      %6931 = vmatpush1.msra.mxu0 0.0
      %6932 = vmatprep.subr.mxu0 0.0
      %6933 = vmatpush1.msra.mxu0 0.0
      %6934 = vmatprep.subr.mxu0 0.0
      %6935 = vmatpush1.msra.mxu0 0.0
      %6936 = vmatprep.subr.mxu0 0.0
      %6937 = vmatpush1.msra.mxu0 0.0
      %6938 = vmatprep.subr.mxu0 0.0
      %6939 = vmatpush1.msra.mxu0 0.0
      %6940 = vmatprep.subr.mxu0 0.0
      %6941 = vmatpush1.msra.mxu0 0.0
      %6942 = vmatprep.subr.mxu0 0.0
      %6943 = vmatpush1.msra.mxu0 0.0
      %6944 = vmatprep.subr.mxu0 0.0
      %6945 = vmatpush1.msra.mxu0 0.0
      %6946 = vmatprep.subr.mxu0 0.0
      %6947 = vmatpush1.msra.mxu0 0.0
      %6948 = vmatprep.subr.mxu0 0.0
      %6949 = vmatpush1.msra.mxu0 0.0
      %6950 = vmatprep.subr.mxu0 0.0
      %6951 = vmatpush1.msra.mxu0 0.0
      %6952 = vmatprep.subr.mxu0 0.0
      %6953 = vmatpush1.msra.mxu0 0.0
      %6954 = vmatprep.subr.mxu0 0.0
      %6955 = vmatpush1.msra.mxu0 0.0
      %6956 = vmatprep.subr.mxu0 0.0
      %6957 = vmatpush1.msra.mxu0 0.0
      %6958 = vmatprep.subr.mxu0 0.0
      %6959 = vmatpush1.msra.mxu0 0.0
      %6960 = vmatprep.subr.mxu0 0.0
      %6961 = vmatpush1.msra.mxu0 0.0
      %6962 = vmatprep.subr.mxu0 0.0
      %6963 = vmatpush1.msra.mxu0 0.0
      %6964 = vmatprep.subr.mxu0 0.0
      %6965 = vmatpush1.msra.mxu0 0.0
      %6966 = vmatprep.subr.mxu0 0.0
      %6967 = vmatpush1.msra.mxu0 0.0
      %6968 = vmatprep.subr.mxu0 0.0
      %6969 = vmatpush1.msra.mxu0 0.0
      %6970 = vmatprep.subr.mxu0 0.0
      %6971 = vmatpush1.msra.mxu0 0.0
      %6972 = vmatprep.mubr.f32.mxu0 0.0
      %6973 = vmatmul.mubr.f32.gmra.mrb[0].mxu0 %v6899
      %v6974 = vpop.f32.mrb[0].mxu0
      %v6975 = vadd.f32 0.0, %v6974
      %v6976 = vpop.f32.mrb[0].mxu0
      %6977 = vmatprep.mubr.f32.mxu0 0.0
      %6978 = vmatmul.mubr.f32.gmra.mrb[0].mxu0 %v6902
      %v6979 = vpop.f32.mrb[0].mxu0
      %v6980 = vadd.f32 0.0, %v6979
      %v6981 = vpop.f32.mrb[0].mxu0
      %6982 = vdwg.mxu0
      %6983 = vmatprep.subr.mxu0 0.0
      %6984 = vmatpush1.msra.mxu0 %v6853
      %6985 = vmatprep.subr.mxu0 0.0
      %6986 = vmatpush1.msra.mxu0 %v6854
      %6987 = vmatprep.subr.mxu0 0.0
      %6988 = vmatpush1.msra.mxu0 %v6855
      %6989 = vmatprep.subr.mxu0 0.0
      %6990 = vmatpush1.msra.mxu0 %v6856
      %6991 = vmatprep.subr.mxu0 0.0
      %6992 = vmatpush1.msra.mxu0 %v6857
      %6993 = vmatprep.subr.mxu0 0.0
      %6994 = vmatpush1.msra.mxu0 %v6858
      %6995 = vmatprep.subr.mxu0 0.0
      %6996 = vmatpush1.msra.mxu0 %v6859
      %6997 = vmatprep.subr.mxu0 0.0
      %6998 = vmatpush1.msra.mxu0 %v6860
      %6999 = vmatprep.subr.mxu0 0.0
      %7000 = vmatpush1.msra.mxu0 %v6861
      %7001 = vmatprep.subr.mxu0 0.0
      %7002 = vmatpush1.msra.mxu0 %v6862
      %7003 = vmatprep.subr.mxu0 0.0
      %7004 = vmatpush1.msra.mxu0 %v6863
      %7005 = vmatprep.subr.mxu0 0.0
      %7006 = vmatpush1.msra.mxu0 %v6864
      %7007 = vmatprep.subr.mxu0 0.0
      %7008 = vmatpush1.msra.mxu0 %v6865
      %7009 = vmatprep.subr.mxu0 0.0
      %7010 = vmatpush1.msra.mxu0 %v6866
      %7011 = vmatprep.subr.mxu0 0.0
      %7012 = vmatpush1.msra.mxu0 %v6867
      %7013 = vmatprep.subr.mxu0 0.0
      %7014 = vmatpush1.msra.mxu0 %v6868
      %7015 = vmatprep.subr.mxu0 0.0
      %7016 = vmatpush1.msra.mxu0 0.0
      %7017 = vmatprep.subr.mxu0 0.0
      %7018 = vmatpush1.msra.mxu0 0.0
      %7019 = vmatprep.subr.mxu0 0.0
      %7020 = vmatpush1.msra.mxu0 0.0
      %7021 = vmatprep.subr.mxu0 0.0
      %7022 = vmatpush1.msra.mxu0 0.0
      %7023 = vmatprep.subr.mxu0 0.0
      %7024 = vmatpush1.msra.mxu0 0.0
      %7025 = vmatprep.subr.mxu0 0.0
      %7026 = vmatpush1.msra.mxu0 0.0
      %7027 = vmatprep.subr.mxu0 0.0
      %7028 = vmatpush1.msra.mxu0 0.0
      %7029 = vmatprep.subr.mxu0 0.0
      %7030 = vmatpush1.msra.mxu0 0.0
      %7031 = vmatprep.subr.mxu0 0.0
      %7032 = vmatpush1.msra.mxu0 0.0
      %7033 = vmatprep.subr.mxu0 0.0
      %7034 = vmatpush1.msra.mxu0 0.0
      %7035 = vmatprep.subr.mxu0 0.0
      %7036 = vmatpush1.msra.mxu0 0.0
      %7037 = vmatprep.subr.mxu0 0.0
      %7038 = vmatpush1.msra.mxu0 0.0
      %7039 = vmatprep.subr.mxu0 0.0
      %7040 = vmatpush1.msra.mxu0 0.0
      %7041 = vmatprep.subr.mxu0 0.0
      %7042 = vmatpush1.msra.mxu0 0.0
      %7043 = vmatprep.subr.mxu0 0.0
      %7044 = vmatpush1.msra.mxu0 0.0
      %7045 = vmatprep.subr.mxu0 0.0
      %7046 = vmatpush1.msra.mxu0 0.0
      %7047 = vmatprep.mubr.f32.mxu0 0.0
      %7048 = vmatmul.mubr.f32.gmra.mrb[0].mxu0 %v6851
      %v7049 = vpop.f32.mrb[0].mxu0
      %v7050 = vadd.f32 %v6975, %v7049
      %v7051 = vpop.f32.mrb[0].mxu0
      %7052 = vmatprep.mubr.f32.mxu0 0.0
      %7053 = vmatmul.mubr.f32.gmra.mrb[0].mxu0 %v6852
      %v7054 = vpop.f32.mrb[0].mxu0
      %v7055 = vadd.f32 %v6980, %v7054
      %v7056 = vpop.f32.mrb[0].mxu0
      %7057 = vdwg.mxu0
      %v7058 = vlaneseq
      %v7059 = vshrl.u32 %v7058, 7
      %v7060 = vsub.s32 4, %v7059
      %v7061 = vrot.slane %v6828, %v7060
      %v7062 = vadd.f32 %v7050, %v7061
      %v7063 = vadd.f32 %v7055, %v7061
      %v7064 = vmax.f32 %v7062, 0.0
      %v7065 = vmax.f32 %v7063, 0.0
      %v7066 = vsel %vm2522, %v7064, 0.0
      %v7067 = vsel %vm2522, %v7065, 0.0
      %v7068 = vadd.f32 %v7066, %v7067
      %v7069 = vrot.slane %v7068, 4
      %v7070 = vadd.f32 %v7068, %v7069
      %v7071 = vrot.slane %v7070, 2
      %v7072 = vadd.f32 %v7070, %v7071
      %v7073 = vrot.slane %v7072, 1
      %v7074 = vadd.f32 %v7072, %v7073
      %v7075 = vmul.f32 %v7074, 0.0625
      %v7076 = vsub.f32 %v7064, %v7075
      %v7077 = vsub.f32 %v7065, %v7075
      %v7078 = vmul.f32 %v7076, %v7076
      %v7079 = vmul.f32 %v7077, %v7077
      %v7080 = vsel %vm2522, %v7078, 0.0
      %v7081 = vsel %vm2522, %v7079, 0.0
      %v7082 = vadd.f32 %v7080, %v7081
      %v7083 = vrot.slane %v7082, 4
      %v7084 = vadd.f32 %v7082, %v7083
      %v7085 = vrot.slane %v7084, 2
      %v7086 = vadd.f32 %v7084, %v7085
      %v7087 = vrot.slane %v7086, 1
      %v7088 = vadd.f32 %v7086, %v7087
      %v7089 = vmul.f32 %v7088, 0.0625
      %v7090 = vadd.f32 %v7089, 1e-05
      %v7091 = vrsqrt.pop %v7090
      %v7092 = vmul.f32 %v7076, %v7091
      %v7093 = vmul.f32 %v7077, %v7091
      %v7094 = vld [vmem:[%s1192] sm:$0xff]
      %v7096 = vsel %vm2522, %v7092, 0
      %v7099 = vsel %vm2522, %v7093, 0
      %7101 = vmatprep.subr.mxu0 0.0
      %7102 = vmatpush1.msra.mxu0 %v7094
      %7103 = vmatprep.subr.mxu0 0.0
      %7104 = vmatpush1.msra.mxu0 0.0
      %7105 = vmatprep.subr.mxu0 0.0
      %7106 = vmatpush1.msra.mxu0 0.0
      %7107 = vmatprep.subr.mxu0 0.0
      %7108 = vmatpush1.msra.mxu0 0.0
      %7109 = vmatprep.subr.mxu0 0.0
      %7110 = vmatpush1.msra.mxu0 0.0
      %7111 = vmatprep.subr.mxu0 0.0
      %7112 = vmatpush1.msra.mxu0 0.0
      %7113 = vmatprep.subr.mxu0 0.0
      %7114 = vmatpush1.msra.mxu0 0.0
      %7115 = vmatprep.subr.mxu0 0.0
      %7116 = vmatpush1.msra.mxu0 0.0
      %7117 = vmatprep.subr.mxu0 0.0
      %7118 = vmatpush1.msra.mxu0 0.0
      %7119 = vmatprep.subr.mxu0 0.0
      %7120 = vmatpush1.msra.mxu0 0.0
      %7121 = vmatprep.subr.mxu0 0.0
      %7122 = vmatpush1.msra.mxu0 0.0
      %7123 = vmatprep.subr.mxu0 0.0
      %7124 = vmatpush1.msra.mxu0 0.0
      %7125 = vmatprep.subr.mxu0 0.0
      %7126 = vmatpush1.msra.mxu0 0.0
      %7127 = vmatprep.subr.mxu0 0.0
      %7128 = vmatpush1.msra.mxu0 0.0
      %7129 = vmatprep.subr.mxu0 0.0
      %7130 = vmatpush1.msra.mxu0 0.0
      %7131 = vmatprep.subr.mxu0 0.0
      %7132 = vmatpush1.msra.mxu0 0.0
      %7133 = vmatprep.subr.mxu0 0.0
      %7134 = vmatpush1.msra.mxu0 0.0
      %7135 = vmatprep.subr.mxu0 0.0
      %7136 = vmatpush1.msra.mxu0 0.0
      %7137 = vmatprep.subr.mxu0 0.0
      %7138 = vmatpush1.msra.mxu0 0.0
      %7139 = vmatprep.subr.mxu0 0.0
      %7140 = vmatpush1.msra.mxu0 0.0
      %7141 = vmatprep.subr.mxu0 0.0
      %7142 = vmatpush1.msra.mxu0 0.0
      %7143 = vmatprep.subr.mxu0 0.0
      %7144 = vmatpush1.msra.mxu0 0.0
      %7145 = vmatprep.subr.mxu0 0.0
      %7146 = vmatpush1.msra.mxu0 0.0
      %7147 = vmatprep.subr.mxu0 0.0
      %7148 = vmatpush1.msra.mxu0 0.0
      %7149 = vmatprep.subr.mxu0 0.0
      %7150 = vmatpush1.msra.mxu0 0.0
      %7151 = vmatprep.subr.mxu0 0.0
      %7152 = vmatpush1.msra.mxu0 0.0
      %7153 = vmatprep.subr.mxu0 0.0
      %7154 = vmatpush1.msra.mxu0 0.0
      %7155 = vmatprep.subr.mxu0 0.0
      %7156 = vmatpush1.msra.mxu0 0.0
      %7157 = vmatprep.subr.mxu0 0.0
      %7158 = vmatpush1.msra.mxu0 0.0
      %7159 = vmatprep.subr.mxu0 0.0
      %7160 = vmatpush1.msra.mxu0 0.0
      %7161 = vmatprep.subr.mxu0 0.0
      %7162 = vmatpush1.msra.mxu0 0.0
      %7163 = vmatprep.subr.mxu0 0.0
      %7164 = vmatpush1.msra.mxu0 0.0
      %7165 = vmatprep.mubr.f32.mxu0 0.0
      %7166 = vmatmul.mubr.f32.gmra.mrb[0].mxu0 %v7096
      %v7167 = vpop.f32.mrb[0].mxu0
      %v7168 = vadd.f32 0.0, %v7167
      %v7169 = vpop.f32.mrb[0].mxu0
      %7170 = vmatprep.mubr.f32.mxu0 0.0
      %7171 = vmatmul.mubr.f32.gmra.mrb[0].mxu0 %v7099
      %v7172 = vpop.f32.mrb[0].mxu0
      %v7173 = vadd.f32 0.0, %v7172
      %v7174 = vpop.f32.mrb[0].mxu0
      %7175 = vdwg.mxu0
      %vm7176 = vcmask 7168
      %7177 = vst.msk [vmem:[%s1202] sm:$0xff] %vm7176, %v7168
      %7178 = vst.msk [vmem:[%s1202 + $0x8] sm:$0xff] %vm7176, %v7173
      %p7179 = scmp.lt.s32.totalorder %s73, 1
      %s7180 = scalar_select %p7179, %s73, 1
      %s7181 = smul.addr %s7180, 2
      %s7182 = smul.addr %s7181, 8
      %s7183 = scalar_lea.vmem %s59, %s7182
      %p7184 = scmp.lt.s32.totalorder %s73, 1
      %s7185 = scalar_select %p7184, %s73, 1
      %s7186 = smul.addr %s7185, 2
      %s7187 = smul.addr %s7186, 8
      %s7188 = scalar_lea.vmem %s61, %s7187
      // Predicated region
      $region137: #{attention_net_forward.1} parent=135 // pred_check
        %p7189 = pneg %p775
      $region138: #{attention_net_forward.1} parent=135 // pred_check_branch
        %7191 = sbr.rel (%p7189) target = $region140
      $region139: #{attention_net_forward.1} parent=135 // pred_region
        _
      $region140: #{attention_net_forward.1} parent=135 // pred_fallthru
        _
      // Predicated region
      $region141: #{attention_net_forward.1} parent=135 // pred_check
        %p7192 = pneg %p801
      $region142: #{attention_net_forward.1} parent=135 // pred_check_branch
        %7194 = sbr.rel (%p7192) target = $region144
      $region143: #{attention_net_forward.1} parent=135 // pred_region
        _
      $region144: #{attention_net_forward.1} parent=135 // pred_fallthru
        _
    $region136: #{attention_net_forward.1} parent=5 // pred_fallthru
      _
    %p7195 = scmp.le.s32.totalorder 2, %s68
    // Predicated region
    $region145: #{attention_net_forward.1} parent=5 // pred_check
      %p7196 = pneg %p7195
    $region146: #{attention_net_forward.1} parent=5 // pred_check_branch
      %7198 = sbr.rel (%p7196) target = $region148
    $region147: #{attention_net_forward.1} parent=5 // pred_region
      %s7199 = ssub.s32 %s68, 2
      // Predicated region
      $region149: #{attention_net_forward.1} parent=147 // pred_check
        %p7200 = pneg %p781
      $region150: #{attention_net_forward.1} parent=147 // pred_check_branch
        %7202 = sbr.rel (%p7200) target = $region152
      $region151: #{attention_net_forward.1} parent=147 // pred_region
        %p7203 = scmp.lt.s32.totalorder %s74, 1
        %s7204 = scalar_select %p7203, %s74, 1
        %s7205 = smul.addr %s7204, 2
        %s7206 = smul.addr %s7205, 8
        %s7207 = scalar_lea.vmem %s59, %s7206
      $region152: #{attention_net_forward.1} parent=147 // pred_fallthru
        _
      // Predicated region
      $region153: #{attention_net_forward.1} parent=147 // pred_check
        %p7208 = pneg %p807
      $region154: #{attention_net_forward.1} parent=147 // pred_check_branch
        %7210 = sbr.rel (%p7208) target = $region156
      $region155: #{attention_net_forward.1} parent=147 // pred_region
        %p7211 = scmp.lt.s32.totalorder %s74, 1
        %s7212 = scalar_select %p7211, %s74, 1
        %s7213 = smul.addr %s7212, 2
        %s7214 = smul.addr %s7213, 8
        %s7215 = scalar_lea.vmem %s61, %s7214
      $region156: #{attention_net_forward.1} parent=147 // pred_fallthru
        _
    $region148: #{attention_net_forward.1} parent=5 // pred_fallthru
      _
  $region6: #{attention_net_forward.1} parent=0 // loop_footer
    %s72 = sadd.s32 1, %s68
  $region7: #{attention_net_forward.1} parent=0 // loop_footer_branch
    %67 = sbr.rel target = $region3
  $region8: #{attention_net_forward.1} parent=0 // loop_exit
    _

</llo_original>
